<compile_context>
chip_gen: v7x
topology: tpu7x:2x2x1
jax: 0.10.0
libtpu: 0.0.40
codegen_flags: <defaults>
</compile_context>

<pallas_src>
import jax
import jax.numpy as jnp
from jax import lax
from jax.experimental import pallas as pl
from jax.experimental.pallas import tpu as pltpu


def _cdiv(a, b):
    return -(-a // b)


def _round_up(x, m):
    return _cdiv(x, m) * m


def _sigmoid(x):
    # Explicit form (exp + div) for guaranteed Mosaic lowering; exp runs on EUP.
    return 1.0 / (1.0 + jnp.exp(-x))


# ----------------------------------------------------------------------------
# LSTM kernel: one layer, full sequence, one tile of rows (on the LANE axis)
# per grid step.
#   x_ref   : [T, Din, tile_n]   time-major, features on sublanes, rows on lanes
#   wih_ref : [4H, Din]          (torch weight_ih layout)
#   whh_ref : [4H, H]            (torch weight_hh layout)
#   b_ref   : [4H, 1]            b_ih + b_hh (column vector)
#   out_ref : [tile_n, T*H]      lane-dense output (cols t*H:(t+1)*H = h_t)
#   hbuf    : [T*H, tile_n]      VMEM scratch (transposed h history)
# PyTorch gate order: i, f, g, o.
# ----------------------------------------------------------------------------
def lstm_layer_kernel(x_ref, wih_ref, whh_ref, b_ref, out_ref, hbuf):
    T, Din, Nt = x_ref.shape
    Hh = whh_ref.shape[1]

    wih = wih_ref[...].astype(jnp.bfloat16)          # [4H, Din]
    whh = whh_ref[...].astype(jnp.bfloat16)          # [4H, H]  (hoisted cast)
    b = b_ref[...]                                   # [4H, 1] f32

    # (1) Hoisted input projection: T independent [4H,Din]x[Din,Nt] MXU
    #     matmuls, all off the recurrence critical path (bf16 in, f32 acc).
    #     TODO(synk): for production T, cast gx to bf16 after the bias add to
    #     halve its live VMEM footprint (v7x 64 MiB budget).
    gx = [
        jnp.dot(wih, x_ref[t].astype(jnp.bfloat16),
                preferred_element_type=jnp.float32) + b
        for t in range(T)
    ]                                                # each [4H, Nt] f32

    # (2) Recurrence, transposed layout: state [H, lanes], gates [4H, lanes].
    #     Independent 128-lane row groups are interleaved per step for ILP
    #     (>=2 groups when tile_n >= 256; fills the 256-wide MXU on v6e/v7x).
    gsz = 128 if Nt % 128 == 0 else Nt
    n_grp = Nt // gsz
    h = [jnp.zeros((Hh, gsz), jnp.float32) for _ in range(n_grp)]
    c = [jnp.zeros((Hh, gsz), jnp.float32) for _ in range(n_grp)]

    # Statically unrolled time loop (T = feature-map width, known at trace
    # time) -> scheduler can overlap step-t MXU work with step-(t-1) EUP work.
    # TODO(synk): for large T switch to lax.fori_loop(..., unroll=4..8) with
    # pl.ds offsets wrapped in pl.multiple_of to bound code size / spills.
    for t in range(T):
        for grp in range(n_grp):
            lo = grp * gsz
            gates = gx[t][:, lo:lo + gsz] + jnp.dot(
                whh, h[grp].astype(jnp.bfloat16),
                preferred_element_type=jnp.float32)          # [4H, gsz]
            i_g = _sigmoid(gates[0 * Hh:1 * Hh])             # sublane slices,
            f_g = _sigmoid(gates[1 * Hh:2 * Hh])             # full 128 lanes
            g_g = jnp.tanh(gates[2 * Hh:3 * Hh])
            o_g = _sigmoid(gates[3 * Hh:4 * Hh])
            c[grp] = f_g * c[grp] + i_g * g_g
            h[grp] = o_g * jnp.tanh(c[grp])
            # aligned sublane-offset, lane-dense store into the scratch
            hbuf[t * Hh:(t + 1) * Hh, lo:lo + gsz] = h[grp]

    # (3) One XLU transpose per tile -> lane-dense [tile_n, T*H] output block.
    out_ref[...] = hbuf[...].T


def run_lstm_layer(x_tdn, w_ih, w_hh, bias_col, *, max_tile_n=256):
    """x_tdn: [T, Din, N] -> [N, T*H] (reshapes for free to NHWC)."""
    T, Din, N = x_tdn.shape
    Hh = w_hh.shape[1]

    n_tiles = max(1, _cdiv(N, max_tile_n))
    tile_n = _round_up(_cdiv(N, n_tiles), 128)       # lane-dim tile
    n_pad = tile_n * n_tiles
    if n_pad != N:
        x_tdn = jnp.pad(x_tdn, ((0, 0), (0, 0), (0, n_pad - N)))

    out = pl.pallas_call(
        lstm_layer_kernel,
        out_shape=jax.ShapeDtypeStruct((n_pad, T * Hh), jnp.float32),
        grid_spec=pltpu.PrefetchScalarGridSpec(
            num_scalar_prefetch=0,
            grid=(n_tiles,),
            in_specs=[
                pl.BlockSpec((T, Din, tile_n), lambda n: (0, 0, n)),
                pl.BlockSpec((4 * Hh, Din), lambda n: (0, 0)),
                pl.BlockSpec((4 * Hh, Hh), lambda n: (0, 0)),
                pl.BlockSpec((4 * Hh, 1), lambda n: (0, 0)),
            ],
            out_specs=pl.BlockSpec((tile_n, T * Hh), lambda n: (n, 0)),
            scratch_shapes=[pltpu.VMEM((T * Hh, tile_n), jnp.float32)],
        ),
        compiler_params=pltpu.CompilerParams(
            dimension_semantics=("parallel",),
            vmem_limit_bytes=32 * 1024 * 1024),
    )(x_tdn, w_ih, w_hh, bias_col)
    return out[:N]                                   # [N, T*H]


# ----------------------------------------------------------------------------
# Fused conv1(3x3,pad=1) + ReLU + conv2(3x3,pad=1) kernel (NHWC), `bt` images
# per grid step.  Zero padding is folded into VMEM scratch halos; each conv is
# a single K = 9*Cin MXU matmul via a bf16 im2col scratch.
#   x_ref  : [bt, H, W, C1]
#   w1_ref : [9*C1, Cm], b1_ref: [1, Cm]
#   w2_ref : [9*Cm, Cout], b2_ref: [1, Cout]
#   out_ref: [bt, H, W, Cout]
# ----------------------------------------------------------------------------
def fused_conv_kernel(x_ref, w1_ref, b1_ref, w2_ref, b2_ref, out_ref,
                      xpad, col1, midpad, col2):
    bt, Hr, W, C1 = x_ref.shape
    Cm = w1_ref.shape[-1]

    # Re-zero the halo scratches every step (scratch is uninitialized and each
    # TensorCore has its own copy under megacore sharding); cost is trivial.
    xpad[...] = jnp.zeros_like(xpad)
    midpad[...] = jnp.zeros_like(midpad)

    # Interior of the zero-padded input (single bf16 cast on the way in).
    xpad[:, 1:Hr + 1, 1:W + 1, :] = x_ref[...].astype(jnp.bfloat16)

    # im2col #1: pack the 9 shifted taps along the lane (channel) axis (bf16).
    for k in range(9):
        dh, dw = k // 3, k % 3
        col1[:, :, :, k * C1:(k + 1) * C1] = xpad[:, dh:dh + Hr, dw:dw + W, :]

    w1 = w1_ref[...].astype(jnp.bfloat16)
    acc1 = jnp.einsum('bhwc,cd->bhwd', col1[...], w1,
                      preferred_element_type=jnp.float32)
    acc1 = jnp.maximum(acc1 + b1_ref[...], 0.0)              # ReLU fused
    # Intermediate feature map never leaves VMEM (bf16, with halo).
    midpad[:, 1:Hr + 1, 1:W + 1, :] = acc1.astype(jnp.bfloat16)

    # im2col #2
    for k in range(9):
        dh, dw = k // 3, k % 3
        col2[:, :, :, k * Cm:(k + 1) * Cm] = midpad[:, dh:dh + Hr, dw:dw + W, :]

    w2 = w2_ref[...].astype(jnp.bfloat16)
    acc2 = jnp.einsum('bhwc,cd->bhwd', col2[...], w2,
                      preferred_element_type=jnp.float32)
    out_ref[...] = (acc2 + b2_ref[...]).astype(out_ref.dtype)


def run_fused_convs(x_nhwc, w1_9, b1, w2_9, b2):
    """x_nhwc: [B, H, W, C1] -> conv1+relu+conv2 -> [B, H, W, Cout]."""
    B, Hr, W, C1 = x_nhwc.shape
    Cm = w1_9.shape[-1]
    Cout = w2_9.shape[-1]

    # Several images per grid step so the matmul M-dim (bt*H*W) is >= ~256.
    bt = max(1, min(B, 256 // max(1, Hr * W)))
    Bp = _round_up(B, bt)
    if Bp != B:
        x_nhwc = jnp.pad(x_nhwc, ((0, Bp - B), (0, 0), (0, 0), (0, 0)))

    w1_flat = w1_9.reshape(9 * C1, Cm)
    w2_flat = w2_9.reshape(9 * Cm, Cout)

    out = pl.pallas_call(
        fused_conv_kernel,
        out_shape=jax.ShapeDtypeStruct((Bp, Hr, W, Cout), jnp.float32),
        grid_spec=pltpu.PrefetchScalarGridSpec(
            num_scalar_prefetch=0,
            grid=(Bp // bt,),
            in_specs=[
                pl.BlockSpec((bt, Hr, W, C1), lambda b: (b, 0, 0, 0)),
                pl.BlockSpec((9 * C1, Cm), lambda b: (0, 0)),
                pl.BlockSpec((1, Cm), lambda b: (0, 0)),
                pl.BlockSpec((9 * Cm, Cout), lambda b: (0, 0)),
                pl.BlockSpec((1, Cout), lambda b: (0, 0)),
            ],
            out_specs=pl.BlockSpec((bt, Hr, W, Cout), lambda b: (b, 0, 0, 0)),
            scratch_shapes=[
                pltpu.VMEM((bt, Hr + 2, W + 2, C1), jnp.bfloat16),   # xpad
                pltpu.VMEM((bt, Hr, W, 9 * C1), jnp.bfloat16),       # col1
                pltpu.VMEM((bt, Hr + 2, W + 2, Cm), jnp.bfloat16),   # midpad
                pltpu.VMEM((bt, Hr, W, 9 * Cm), jnp.bfloat16),       # col2
            ],
        ),
        compiler_params=pltpu.CompilerParams(
            dimension_semantics=("parallel",),
            vmem_limit_bytes=32 * 1024 * 1024),
    )(x_nhwc, w1_flat, b1, w2_flat, b2)
    return out[:B]


# ----------------------------------------------------------------------------
# Full forward pass (matches PositionAwareModule.forward, NCHW in / NCHW out).
# ----------------------------------------------------------------------------
@jax.jit
def position_aware_forward(features_nchw, params):
    B, C, H, W = features_nchw.shape
    # Single layout pass: NCHW -> [T=W, Din=C, N=B*H] (rows on the lane axis).
    x = jnp.transpose(features_nchw, (3, 1, 0, 2)).reshape(W, C, B * H)

    n_layers = len(params["lstm"])
    y = None
    Hh = params["lstm"][-1][1].shape[1]
    for li, (w_ih, w_hh, b_col) in enumerate(params["lstm"]):
        y = run_lstm_layer(x, w_ih, w_hh, b_col)          # [N, W*Hh]
        Hh = w_hh.shape[1]
        if li + 1 < n_layers:                             # re-layout for next layer
            x = jnp.transpose(y.reshape(B * H, W, Hh), (1, 2, 0))

    lstm_nhwc = y.reshape(B, H, W, Hh)                    # free reshape (NHWC)

    out_nhwc = run_fused_convs(lstm_nhwc,
                               params["conv1_w"], params["conv1_b"],
                               params["conv2_w"], params["conv2_b"])
    return jnp.transpose(out_nhwc, (0, 3, 1, 2))          # NCHW


# ----------------------------------------------------------------------------
# Pure-JAX f32 reference (correctness checking only).
# ----------------------------------------------------------------------------
def reference_forward(features_nchw, params):
    B, C, H, W = features_nchw.shape
    x = jnp.transpose(features_nchw, (0, 2, 3, 1)).reshape(B * H, W, C)

    def lstm_ref(x_ntf, w_ih, w_hh, b_col):
        N = x_ntf.shape[0]
        Hh = w_hh.shape[1]

        def step(carry, xt):
            h, c = carry
            gates = xt @ w_ih.T + h @ w_hh.T + b_col[:, 0]
            i = jax.nn.sigmoid(gates[:, :Hh])
            f = jax.nn.sigmoid(gates[:, Hh:2 * Hh])
            g = jnp.tanh(gates[:, 2 * Hh:3 * Hh])
            o = jax.nn.sigmoid(gates[:, 3 * Hh:])
            c = f * c + i * g
            h = o * jnp.tanh(c)
            return (h, c), h

        init = (jnp.zeros((N, Hh)), jnp.zeros((N, Hh)))
        _, hs = lax.scan(step, init, jnp.transpose(x_ntf, (1, 0, 2)))
        return jnp.transpose(hs, (1, 0, 2))

    h = x
    for (w_ih, w_hh, b_col) in params["lstm"]:
        h = lstm_ref(h, w_ih, w_hh, b_col)
    fmap = h.reshape(B, H, W, -1)

    def conv_ref(xin, w9, b, relu):
        Cin, Cout = w9.shape[1], w9.shape[2]
        w_hwio = w9.reshape(3, 3, Cin, Cout)
        y = lax.conv_general_dilated(
            xin, w_hwio, (1, 1), 'SAME',
            dimension_numbers=('NHWC', 'HWIO', 'NHWC'))
        y = y + b.reshape(1, 1, 1, Cout)
        return jnp.maximum(y, 0.0) if relu else y

    y = conv_ref(fmap, params["conv1_w"], params["conv1_b"], True)
    y = conv_ref(y, params["conv2_w"], params["conv2_b"], False)
    return jnp.transpose(y, (0, 3, 1, 2))


# ----------------------------------------------------------------------------
def make_params(key, input_size, hidden_size, output_size, lstm_layers):
    # LSTM weights use torch nn.LSTM's native layouts: w_ih [4H, Din],
    # w_hh [4H, H]; bias is (b_ih + b_hh) as a [4H, 1] column vector.
    # Conv weights are [9, Cin, Cout] with tap k = dh*3+dw (torch conv weight
    # [Cout, Cin, 3, 3] ports via transpose(2,3,1,0).reshape(9, Cin, Cout)).
    keys = jax.random.split(key, 3 * lstm_layers + 4)
    params = {"lstm": []}
    k = 0
    din = input_size
    for _ in range(lstm_layers):
        w_ih = 0.1 * jax.random.normal(keys[k], (4 * hidden_size, din),
                                       jnp.float32); k += 1
        w_hh = 0.1 * jax.random.normal(keys[k], (4 * hidden_size, hidden_size),
                                       jnp.float32); k += 1
        b = 0.1 * jax.random.normal(keys[k], (4 * hidden_size, 1),
                                    jnp.float32); k += 1
        params["lstm"].append((w_ih, w_hh, b))
        din = hidden_size
    params["conv1_w"] = 0.1 * jax.random.normal(
        keys[k], (9, hidden_size, hidden_size), jnp.float32); k += 1
    params["conv1_b"] = 0.1 * jax.random.normal(
        keys[k], (1, hidden_size), jnp.float32); k += 1
    params["conv2_w"] = 0.1 * jax.random.normal(
        keys[k], (9, hidden_size, output_size), jnp.float32); k += 1
    params["conv2_b"] = 0.1 * jax.random.normal(
        keys[k], (1, output_size), jnp.float32); k += 1
    return params


if __name__ == "__main__":
    B, input_size, Hrows, Wcols = 2, 8, 8, 8
    hidden_size, output_size, lstm_layers = 32, 16, 1

    key = jax.random.PRNGKey(0)
    k_x, k_p = jax.random.split(key)
    features = jax.random.normal(k_x, (B, input_size, Hrows, Wcols), jnp.float32)
    params = make_params(k_p, input_size, hidden_size, output_size, lstm_layers)

    out = position_aware_forward(features, params)
    out = jax.block_until_ready(out)

    ref = reference_forward(features, params)
    assert out.shape == (B, output_size, Hrows, Wcols), out.shape
    err = jnp.max(jnp.abs(out - ref))
    # bf16 MXU operands (f32 accumulation, f32 gate math) vs f32 reference.
    assert jnp.allclose(out, ref, atol=6e-2, rtol=6e-2), f"max abs err {err}"

    print("KERNEL_OK")
</pallas_src>

<mosaic_0001>
module attributes {stable_mosaic.version = 11 : i64} {
  func.func @lstm_layer_kernel(%arg0: i32, %arg1: memref<8x8x128xf32, #tpu.memory_space<vmem>>, %arg2: memref<128x8xf32, #tpu.memory_space<vmem>>, %arg3: memref<128x32xf32, #tpu.memory_space<vmem>>, %arg4: memref<128x1xf32, #tpu.memory_space<vmem>>, %arg5: memref<128x256xf32, #tpu.memory_space<vmem>>, %arg6: memref<256x128xf32, #tpu.memory_space<vmem>>) attributes {dimension_semantics = [#tpu.dimension_semantics<parallel>], iteration_bounds = array<i64: 1>, scalar_prefetch = 0 : i64, scratch_operands = 1 : i64, tpu.core_type = #tpu.core_type<tc>, window_params = [{transform_indices = @transform_0, window_bounds = array<i64: 8, 8, 128>}, {pipeline_mode = #tpu.pipeline_mode<synchronous>, transform_indices = @transform_1, window_bounds = array<i64: 128, 8>}, {pipeline_mode = #tpu.pipeline_mode<synchronous>, transform_indices = @transform_2, window_bounds = array<i64: 128, 32>}, {pipeline_mode = #tpu.pipeline_mode<synchronous>, transform_indices = @transform_3, window_bounds = array<i64: 128, 1>}, {transform_indices = @transform_4, window_bounds = array<i64: 128, 256>}]} {
    %c0 = arith.constant 0 : index
    %c0_0 = arith.constant 0 : index
    %0 = vector.load %arg2[%c0, %c0_0] : memref<128x8xf32, #tpu.memory_space<vmem>>, vector<128x8xf32>
    %1 = arith.truncf %0 : vector<128x8xf32> to vector<128x8xbf16>
    %c0_1 = arith.constant 0 : index
    %c0_2 = arith.constant 0 : index
    %2 = vector.load %arg3[%c0_1, %c0_2] : memref<128x32xf32, #tpu.memory_space<vmem>>, vector<128x32xf32>
    %3 = arith.truncf %2 : vector<128x32xf32> to vector<128x32xbf16>
    %c0_3 = arith.constant 0 : index
    %c0_4 = arith.constant 0 : index
    %4 = vector.load %arg4[%c0_3, %c0_4] : memref<128x1xf32, #tpu.memory_space<vmem>>, vector<128x1xf32>
    %c0_5 = arith.constant 0 : index
    %c0_6 = arith.constant 0 : index
    %c0_7 = arith.constant 0 : index
    %5 = vector.load %arg1[%c0_5, %c0_6, %c0_7] : memref<8x8x128xf32, #tpu.memory_space<vmem>>, vector<1x8x128xf32>
    %6 = vector.shape_cast %5 : vector<1x8x128xf32> to vector<8x128xf32>
    %7 = arith.truncf %6 : vector<8x128xf32> to vector<8x128xbf16>
    %cst = arith.constant dense<0.000000e+00> : vector<128x128xf32>
    %8 = tpu.matmul %1, %7, %cst {dimension_numbers = #tpu.dot_dimension_numbers<[1], [0], [0], [1], [0, 0, 1, 1], [], []>} : vector<128x8xbf16>, vector<8x128xbf16>, vector<128x128xf32> -> vector<128x128xf32>
    %9 = vector.broadcast %4 : vector<128x1xf32> to vector<128x128xf32>
    %10 = arith.addf %8, %9 : vector<128x128xf32>
    %c1 = arith.constant 1 : index
    %c0_8 = arith.constant 0 : index
    %c0_9 = arith.constant 0 : index
    %11 = vector.load %arg1[%c1, %c0_8, %c0_9] : memref<8x8x128xf32, #tpu.memory_space<vmem>>, vector<1x8x128xf32>
    %12 = vector.shape_cast %11 : vector<1x8x128xf32> to vector<8x128xf32>
    %13 = arith.truncf %12 : vector<8x128xf32> to vector<8x128xbf16>
    %cst_10 = arith.constant dense<0.000000e+00> : vector<128x128xf32>
    %14 = tpu.matmul %1, %13, %cst_10 {dimension_numbers = #tpu.dot_dimension_numbers<[1], [0], [0], [1], [0, 0, 1, 1], [], []>} : vector<128x8xbf16>, vector<8x128xbf16>, vector<128x128xf32> -> vector<128x128xf32>
    %15 = vector.broadcast %4 : vector<128x1xf32> to vector<128x128xf32>
    %16 = arith.addf %14, %15 : vector<128x128xf32>
    %c2 = arith.constant 2 : index
    %c0_11 = arith.constant 0 : index
    %c0_12 = arith.constant 0 : index
    %17 = vector.load %arg1[%c2, %c0_11, %c0_12] : memref<8x8x128xf32, #tpu.memory_space<vmem>>, vector<1x8x128xf32>
    %18 = vector.shape_cast %17 : vector<1x8x128xf32> to vector<8x128xf32>
    %19 = arith.truncf %18 : vector<8x128xf32> to vector<8x128xbf16>
    %cst_13 = arith.constant dense<0.000000e+00> : vector<128x128xf32>
    %20 = tpu.matmul %1, %19, %cst_13 {dimension_numbers = #tpu.dot_dimension_numbers<[1], [0], [0], [1], [0, 0, 1, 1], [], []>} : vector<128x8xbf16>, vector<8x128xbf16>, vector<128x128xf32> -> vector<128x128xf32>
    %21 = vector.broadcast %4 : vector<128x1xf32> to vector<128x128xf32>
    %22 = arith.addf %20, %21 : vector<128x128xf32>
    %c3 = arith.constant 3 : index
    %c0_14 = arith.constant 0 : index
    %c0_15 = arith.constant 0 : index
    %23 = vector.load %arg1[%c3, %c0_14, %c0_15] : memref<8x8x128xf32, #tpu.memory_space<vmem>>, vector<1x8x128xf32>
    %24 = vector.shape_cast %23 : vector<1x8x128xf32> to vector<8x128xf32>
    %25 = arith.truncf %24 : vector<8x128xf32> to vector<8x128xbf16>
    %cst_16 = arith.constant dense<0.000000e+00> : vector<128x128xf32>
    %26 = tpu.matmul %1, %25, %cst_16 {dimension_numbers = #tpu.dot_dimension_numbers<[1], [0], [0], [1], [0, 0, 1, 1], [], []>} : vector<128x8xbf16>, vector<8x128xbf16>, vector<128x128xf32> -> vector<128x128xf32>
    %27 = vector.broadcast %4 : vector<128x1xf32> to vector<128x128xf32>
    %28 = arith.addf %26, %27 : vector<128x128xf32>
    %c4 = arith.constant 4 : index
    %c0_17 = arith.constant 0 : index
    %c0_18 = arith.constant 0 : index
    %29 = vector.load %arg1[%c4, %c0_17, %c0_18] : memref<8x8x128xf32, #tpu.memory_space<vmem>>, vector<1x8x128xf32>
    %30 = vector.shape_cast %29 : vector<1x8x128xf32> to vector<8x128xf32>
    %31 = arith.truncf %30 : vector<8x128xf32> to vector<8x128xbf16>
    %cst_19 = arith.constant dense<0.000000e+00> : vector<128x128xf32>
    %32 = tpu.matmul %1, %31, %cst_19 {dimension_numbers = #tpu.dot_dimension_numbers<[1], [0], [0], [1], [0, 0, 1, 1], [], []>} : vector<128x8xbf16>, vector<8x128xbf16>, vector<128x128xf32> -> vector<128x128xf32>
    %33 = vector.broadcast %4 : vector<128x1xf32> to vector<128x128xf32>
    %34 = arith.addf %32, %33 : vector<128x128xf32>
    %c5 = arith.constant 5 : index
    %c0_20 = arith.constant 0 : index
    %c0_21 = arith.constant 0 : index
    %35 = vector.load %arg1[%c5, %c0_20, %c0_21] : memref<8x8x128xf32, #tpu.memory_space<vmem>>, vector<1x8x128xf32>
    %36 = vector.shape_cast %35 : vector<1x8x128xf32> to vector<8x128xf32>
    %37 = arith.truncf %36 : vector<8x128xf32> to vector<8x128xbf16>
    %cst_22 = arith.constant dense<0.000000e+00> : vector<128x128xf32>
    %38 = tpu.matmul %1, %37, %cst_22 {dimension_numbers = #tpu.dot_dimension_numbers<[1], [0], [0], [1], [0, 0, 1, 1], [], []>} : vector<128x8xbf16>, vector<8x128xbf16>, vector<128x128xf32> -> vector<128x128xf32>
    %39 = vector.broadcast %4 : vector<128x1xf32> to vector<128x128xf32>
    %40 = arith.addf %38, %39 : vector<128x128xf32>
    %c6 = arith.constant 6 : index
    %c0_23 = arith.constant 0 : index
    %c0_24 = arith.constant 0 : index
    %41 = vector.load %arg1[%c6, %c0_23, %c0_24] : memref<8x8x128xf32, #tpu.memory_space<vmem>>, vector<1x8x128xf32>
    %42 = vector.shape_cast %41 : vector<1x8x128xf32> to vector<8x128xf32>
    %43 = arith.truncf %42 : vector<8x128xf32> to vector<8x128xbf16>
    %cst_25 = arith.constant dense<0.000000e+00> : vector<128x128xf32>
    %44 = tpu.matmul %1, %43, %cst_25 {dimension_numbers = #tpu.dot_dimension_numbers<[1], [0], [0], [1], [0, 0, 1, 1], [], []>} : vector<128x8xbf16>, vector<8x128xbf16>, vector<128x128xf32> -> vector<128x128xf32>
    %45 = vector.broadcast %4 : vector<128x1xf32> to vector<128x128xf32>
    %46 = arith.addf %44, %45 : vector<128x128xf32>
    %c7 = arith.constant 7 : index
    %c0_26 = arith.constant 0 : index
    %c0_27 = arith.constant 0 : index
    %47 = vector.load %arg1[%c7, %c0_26, %c0_27] : memref<8x8x128xf32, #tpu.memory_space<vmem>>, vector<1x8x128xf32>
    %48 = vector.shape_cast %47 : vector<1x8x128xf32> to vector<8x128xf32>
    %49 = arith.truncf %48 : vector<8x128xf32> to vector<8x128xbf16>
    %cst_28 = arith.constant dense<0.000000e+00> : vector<128x128xf32>
    %50 = tpu.matmul %1, %49, %cst_28 {dimension_numbers = #tpu.dot_dimension_numbers<[1], [0], [0], [1], [0, 0, 1, 1], [], []>} : vector<128x8xbf16>, vector<8x128xbf16>, vector<128x128xf32> -> vector<128x128xf32>
    %51 = vector.broadcast %4 : vector<128x1xf32> to vector<128x128xf32>
    %52 = arith.addf %50, %51 : vector<128x128xf32>
    %cst_29 = arith.constant 0.000000e+00 : f32
    %53 = vector.broadcast %cst_29 : f32 to vector<32x128xf32>
    %cst_30 = arith.constant 0.000000e+00 : f32
    %54 = vector.broadcast %cst_30 : f32 to vector<32x128xf32>
    %55 = arith.truncf %53 : vector<32x128xf32> to vector<32x128xbf16>
    %cst_31 = arith.constant dense<0.000000e+00> : vector<128x128xf32>
    %56 = tpu.matmul %3, %55, %cst_31 {dimension_numbers = #tpu.dot_dimension_numbers<[1], [0], [0], [1], [0, 0, 1, 1], [], []>} : vector<128x32xbf16>, vector<32x128xbf16>, vector<128x128xf32> -> vector<128x128xf32>
    %57 = arith.addf %10, %56 : vector<128x128xf32>
    %58 = vector.extract_strided_slice %57 {offsets = [0, 0], sizes = [32, 128], strides = [1, 1]} : vector<128x128xf32> to vector<32x128xf32>
    %cst_32 = arith.constant 0.000000e+00 : f32
    %59 = vector.broadcast %cst_32 : f32 to vector<32x128xf32>
    %60 = arith.subf %59, %58 : vector<32x128xf32>
    %61 = math.exp %60 : vector<32x128xf32>
    %cst_33 = arith.constant 1.000000e+00 : f32
    %62 = vector.broadcast %cst_33 : f32 to vector<32x128xf32>
    %63 = arith.addf %62, %61 : vector<32x128xf32>
    %cst_34 = arith.constant 1.000000e+00 : f32
    %64 = vector.broadcast %cst_34 : f32 to vector<32x128xf32>
    %65 = arith.divf %64, %63 : vector<32x128xf32>
    %66 = vector.extract_strided_slice %57 {offsets = [32, 0], sizes = [32, 128], strides = [1, 1]} : vector<128x128xf32> to vector<32x128xf32>
    %cst_35 = arith.constant 0.000000e+00 : f32
    %67 = vector.broadcast %cst_35 : f32 to vector<32x128xf32>
    %68 = arith.subf %67, %66 : vector<32x128xf32>
    %69 = math.exp %68 : vector<32x128xf32>
    %cst_36 = arith.constant 1.000000e+00 : f32
    %70 = vector.broadcast %cst_36 : f32 to vector<32x128xf32>
    %71 = arith.addf %70, %69 : vector<32x128xf32>
    %cst_37 = arith.constant 1.000000e+00 : f32
    %72 = vector.broadcast %cst_37 : f32 to vector<32x128xf32>
    %73 = arith.divf %72, %71 : vector<32x128xf32>
    %74 = vector.extract_strided_slice %57 {offsets = [64, 0], sizes = [32, 128], strides = [1, 1]} : vector<128x128xf32> to vector<32x128xf32>
    %75 = math.tanh %74 : vector<32x128xf32>
    %76 = vector.extract_strided_slice %57 {offsets = [96, 0], sizes = [32, 128], strides = [1, 1]} : vector<128x128xf32> to vector<32x128xf32>
    %cst_38 = arith.constant 0.000000e+00 : f32
    %77 = vector.broadcast %cst_38 : f32 to vector<32x128xf32>
    %78 = arith.subf %77, %76 : vector<32x128xf32>
    %79 = math.exp %78 : vector<32x128xf32>
    %cst_39 = arith.constant 1.000000e+00 : f32
    %80 = vector.broadcast %cst_39 : f32 to vector<32x128xf32>
    %81 = arith.addf %80, %79 : vector<32x128xf32>
    %cst_40 = arith.constant 1.000000e+00 : f32
    %82 = vector.broadcast %cst_40 : f32 to vector<32x128xf32>
    %83 = arith.divf %82, %81 : vector<32x128xf32>
    %84 = arith.mulf %73, %54 : vector<32x128xf32>
    %85 = arith.mulf %65, %75 : vector<32x128xf32>
    %86 = arith.addf %84, %85 : vector<32x128xf32>
    %87 = math.tanh %86 : vector<32x128xf32>
    %88 = arith.mulf %83, %87 : vector<32x128xf32>
    %c0_41 = arith.constant 0 : index
    %c0_42 = arith.constant 0 : index
    %89 = vector.load %arg6[%c0_41, %c0_42] : memref<256x128xf32, #tpu.memory_space<vmem>>, vector<32x128xf32>
    tpu.vector_store %arg6[%c0_41, %c0_42], %88 {strides = array<i32>} : memref<256x128xf32, #tpu.memory_space<vmem>>, vector<32x128xf32>,
    %90 = arith.truncf %88 : vector<32x128xf32> to vector<32x128xbf16>
    %cst_43 = arith.constant dense<0.000000e+00> : vector<128x128xf32>
    %91 = tpu.matmul %3, %90, %cst_43 {dimension_numbers = #tpu.dot_dimension_numbers<[1], [0], [0], [1], [0, 0, 1, 1], [], []>} : vector<128x32xbf16>, vector<32x128xbf16>, vector<128x128xf32> -> vector<128x128xf32>
    %92 = arith.addf %16, %91 : vector<128x128xf32>
    %93 = vector.extract_strided_slice %92 {offsets = [0, 0], sizes = [32, 128], strides = [1, 1]} : vector<128x128xf32> to vector<32x128xf32>
    %cst_44 = arith.constant 0.000000e+00 : f32
    %94 = vector.broadcast %cst_44 : f32 to vector<32x128xf32>
    %95 = arith.subf %94, %93 : vector<32x128xf32>
    %96 = math.exp %95 : vector<32x128xf32>
    %cst_45 = arith.constant 1.000000e+00 : f32
    %97 = vector.broadcast %cst_45 : f32 to vector<32x128xf32>
    %98 = arith.addf %97, %96 : vector<32x128xf32>
    %cst_46 = arith.constant 1.000000e+00 : f32
    %99 = vector.broadcast %cst_46 : f32 to vector<32x128xf32>
    %100 = arith.divf %99, %98 : vector<32x128xf32>
    %101 = vector.extract_strided_slice %92 {offsets = [32, 0], sizes = [32, 128], strides = [1, 1]} : vector<128x128xf32> to vector<32x128xf32>
    %cst_47 = arith.constant 0.000000e+00 : f32
    %102 = vector.broadcast %cst_47 : f32 to vector<32x128xf32>
    %103 = arith.subf %102, %101 : vector<32x128xf32>
    %104 = math.exp %103 : vector<32x128xf32>
    %cst_48 = arith.constant 1.000000e+00 : f32
    %105 = vector.broadcast %cst_48 : f32 to vector<32x128xf32>
    %106 = arith.addf %105, %104 : vector<32x128xf32>
    %cst_49 = arith.constant 1.000000e+00 : f32
    %107 = vector.broadcast %cst_49 : f32 to vector<32x128xf32>
    %108 = arith.divf %107, %106 : vector<32x128xf32>
    %109 = vector.extract_strided_slice %92 {offsets = [64, 0], sizes = [32, 128], strides = [1, 1]} : vector<128x128xf32> to vector<32x128xf32>
    %110 = math.tanh %109 : vector<32x128xf32>
    %111 = vector.extract_strided_slice %92 {offsets = [96, 0], sizes = [32, 128], strides = [1, 1]} : vector<128x128xf32> to vector<32x128xf32>
    %cst_50 = arith.constant 0.000000e+00 : f32
    %112 = vector.broadcast %cst_50 : f32 to vector<32x128xf32>
    %113 = arith.subf %112, %111 : vector<32x128xf32>
    %114 = math.exp %113 : vector<32x128xf32>
    %cst_51 = arith.constant 1.000000e+00 : f32
    %115 = vector.broadcast %cst_51 : f32 to vector<32x128xf32>
    %116 = arith.addf %115, %114 : vector<32x128xf32>
    %cst_52 = arith.constant 1.000000e+00 : f32
    %117 = vector.broadcast %cst_52 : f32 to vector<32x128xf32>
    %118 = arith.divf %117, %116 : vector<32x128xf32>
    %119 = arith.mulf %108, %86 : vector<32x128xf32>
    %120 = arith.mulf %100, %110 : vector<32x128xf32>
    %121 = arith.addf %119, %120 : vector<32x128xf32>
    %122 = math.tanh %121 : vector<32x128xf32>
    %123 = arith.mulf %118, %122 : vector<32x128xf32>
    %c32 = arith.constant 32 : index
    %c0_53 = arith.constant 0 : index
    %124 = vector.load %arg6[%c32, %c0_53] : memref<256x128xf32, #tpu.memory_space<vmem>>, vector<32x128xf32>
    tpu.vector_store %arg6[%c32, %c0_53], %123 {strides = array<i32>} : memref<256x128xf32, #tpu.memory_space<vmem>>, vector<32x128xf32>,
    %125 = arith.truncf %123 : vector<32x128xf32> to vector<32x128xbf16>
    %cst_54 = arith.constant dense<0.000000e+00> : vector<128x128xf32>
    %126 = tpu.matmul %3, %125, %cst_54 {dimension_numbers = #tpu.dot_dimension_numbers<[1], [0], [0], [1], [0, 0, 1, 1], [], []>} : vector<128x32xbf16>, vector<32x128xbf16>, vector<128x128xf32> -> vector<128x128xf32>
    %127 = arith.addf %22, %126 : vector<128x128xf32>
    %128 = vector.extract_strided_slice %127 {offsets = [0, 0], sizes = [32, 128], strides = [1, 1]} : vector<128x128xf32> to vector<32x128xf32>
    %cst_55 = arith.constant 0.000000e+00 : f32
    %129 = vector.broadcast %cst_55 : f32 to vector<32x128xf32>
    %130 = arith.subf %129, %128 : vector<32x128xf32>
    %131 = math.exp %130 : vector<32x128xf32>
    %cst_56 = arith.constant 1.000000e+00 : f32
    %132 = vector.broadcast %cst_56 : f32 to vector<32x128xf32>
    %133 = arith.addf %132, %131 : vector<32x128xf32>
    %cst_57 = arith.constant 1.000000e+00 : f32
    %134 = vector.broadcast %cst_57 : f32 to vector<32x128xf32>
    %135 = arith.divf %134, %133 : vector<32x128xf32>
    %136 = vector.extract_strided_slice %127 {offsets = [32, 0], sizes = [32, 128], strides = [1, 1]} : vector<128x128xf32> to vector<32x128xf32>
    %cst_58 = arith.constant 0.000000e+00 : f32
    %137 = vector.broadcast %cst_58 : f32 to vector<32x128xf32>
    %138 = arith.subf %137, %136 : vector<32x128xf32>
    %139 = math.exp %138 : vector<32x128xf32>
    %cst_59 = arith.constant 1.000000e+00 : f32
    %140 = vector.broadcast %cst_59 : f32 to vector<32x128xf32>
    %141 = arith.addf %140, %139 : vector<32x128xf32>
    %cst_60 = arith.constant 1.000000e+00 : f32
    %142 = vector.broadcast %cst_60 : f32 to vector<32x128xf32>
    %143 = arith.divf %142, %141 : vector<32x128xf32>
    %144 = vector.extract_strided_slice %127 {offsets = [64, 0], sizes = [32, 128], strides = [1, 1]} : vector<128x128xf32> to vector<32x128xf32>
    %145 = math.tanh %144 : vector<32x128xf32>
    %146 = vector.extract_strided_slice %127 {offsets = [96, 0], sizes = [32, 128], strides = [1, 1]} : vector<128x128xf32> to vector<32x128xf32>
    %cst_61 = arith.constant 0.000000e+00 : f32
    %147 = vector.broadcast %cst_61 : f32 to vector<32x128xf32>
    %148 = arith.subf %147, %146 : vector<32x128xf32>
    %149 = math.exp %148 : vector<32x128xf32>
    %cst_62 = arith.constant 1.000000e+00 : f32
    %150 = vector.broadcast %cst_62 : f32 to vector<32x128xf32>
    %151 = arith.addf %150, %149 : vector<32x128xf32>
    %cst_63 = arith.constant 1.000000e+00 : f32
    %152 = vector.broadcast %cst_63 : f32 to vector<32x128xf32>
    %153 = arith.divf %152, %151 : vector<32x128xf32>
    %154 = arith.mulf %143, %121 : vector<32x128xf32>
    %155 = arith.mulf %135, %145 : vector<32x128xf32>
    %156 = arith.addf %154, %155 : vector<32x128xf32>
    %157 = math.tanh %156 : vector<32x128xf32>
    %158 = arith.mulf %153, %157 : vector<32x128xf32>
    %c64 = arith.constant 64 : index
    %c0_64 = arith.constant 0 : index
    %159 = vector.load %arg6[%c64, %c0_64] : memref<256x128xf32, #tpu.memory_space<vmem>>, vector<32x128xf32>
    tpu.vector_store %arg6[%c64, %c0_64], %158 {strides = array<i32>} : memref<256x128xf32, #tpu.memory_space<vmem>>, vector<32x128xf32>,
    %160 = arith.truncf %158 : vector<32x128xf32> to vector<32x128xbf16>
    %cst_65 = arith.constant dense<0.000000e+00> : vector<128x128xf32>
    %161 = tpu.matmul %3, %160, %cst_65 {dimension_numbers = #tpu.dot_dimension_numbers<[1], [0], [0], [1], [0, 0, 1, 1], [], []>} : vector<128x32xbf16>, vector<32x128xbf16>, vector<128x128xf32> -> vector<128x128xf32>
    %162 = arith.addf %28, %161 : vector<128x128xf32>
    %163 = vector.extract_strided_slice %162 {offsets = [0, 0], sizes = [32, 128], strides = [1, 1]} : vector<128x128xf32> to vector<32x128xf32>
    %cst_66 = arith.constant 0.000000e+00 : f32
    %164 = vector.broadcast %cst_66 : f32 to vector<32x128xf32>
    %165 = arith.subf %164, %163 : vector<32x128xf32>
    %166 = math.exp %165 : vector<32x128xf32>
    %cst_67 = arith.constant 1.000000e+00 : f32
    %167 = vector.broadcast %cst_67 : f32 to vector<32x128xf32>
    %168 = arith.addf %167, %166 : vector<32x128xf32>
    %cst_68 = arith.constant 1.000000e+00 : f32
    %169 = vector.broadcast %cst_68 : f32 to vector<32x128xf32>
    %170 = arith.divf %169, %168 : vector<32x128xf32>
    %171 = vector.extract_strided_slice %162 {offsets = [32, 0], sizes = [32, 128], strides = [1, 1]} : vector<128x128xf32> to vector<32x128xf32>
    %cst_69 = arith.constant 0.000000e+00 : f32
    %172 = vector.broadcast %cst_69 : f32 to vector<32x128xf32>
    %173 = arith.subf %172, %171 : vector<32x128xf32>
    %174 = math.exp %173 : vector<32x128xf32>
    %cst_70 = arith.constant 1.000000e+00 : f32
    %175 = vector.broadcast %cst_70 : f32 to vector<32x128xf32>
    %176 = arith.addf %175, %174 : vector<32x128xf32>
    %cst_71 = arith.constant 1.000000e+00 : f32
    %177 = vector.broadcast %cst_71 : f32 to vector<32x128xf32>
    %178 = arith.divf %177, %176 : vector<32x128xf32>
    %179 = vector.extract_strided_slice %162 {offsets = [64, 0], sizes = [32, 128], strides = [1, 1]} : vector<128x128xf32> to vector<32x128xf32>
    %180 = math.tanh %179 : vector<32x128xf32>
    %181 = vector.extract_strided_slice %162 {offsets = [96, 0], sizes = [32, 128], strides = [1, 1]} : vector<128x128xf32> to vector<32x128xf32>
    %cst_72 = arith.constant 0.000000e+00 : f32
    %182 = vector.broadcast %cst_72 : f32 to vector<32x128xf32>
    %183 = arith.subf %182, %181 : vector<32x128xf32>
    %184 = math.exp %183 : vector<32x128xf32>
    %cst_73 = arith.constant 1.000000e+00 : f32
    %185 = vector.broadcast %cst_73 : f32 to vector<32x128xf32>
    %186 = arith.addf %185, %184 : vector<32x128xf32>
    %cst_74 = arith.constant 1.000000e+00 : f32
    %187 = vector.broadcast %cst_74 : f32 to vector<32x128xf32>
    %188 = arith.divf %187, %186 : vector<32x128xf32>
    %189 = arith.mulf %178, %156 : vector<32x128xf32>
    %190 = arith.mulf %170, %180 : vector<32x128xf32>
    %191 = arith.addf %189, %190 : vector<32x128xf32>
    %192 = math.tanh %191 : vector<32x128xf32>
    %193 = arith.mulf %188, %192 : vector<32x128xf32>
    %c96 = arith.constant 96 : index
    %c0_75 = arith.constant 0 : index
    %194 = vector.load %arg6[%c96, %c0_75] : memref<256x128xf32, #tpu.memory_space<vmem>>, vector<32x128xf32>
    tpu.vector_store %arg6[%c96, %c0_75], %193 {strides = array<i32>} : memref<256x128xf32, #tpu.memory_space<vmem>>, vector<32x128xf32>,
    %195 = arith.truncf %193 : vector<32x128xf32> to vector<32x128xbf16>
    %cst_76 = arith.constant dense<0.000000e+00> : vector<128x128xf32>
    %196 = tpu.matmul %3, %195, %cst_76 {dimension_numbers = #tpu.dot_dimension_numbers<[1], [0], [0], [1], [0, 0, 1, 1], [], []>} : vector<128x32xbf16>, vector<32x128xbf16>, vector<128x128xf32> -> vector<128x128xf32>
    %197 = arith.addf %34, %196 : vector<128x128xf32>
    %198 = vector.extract_strided_slice %197 {offsets = [0, 0], sizes = [32, 128], strides = [1, 1]} : vector<128x128xf32> to vector<32x128xf32>
    %cst_77 = arith.constant 0.000000e+00 : f32
    %199 = vector.broadcast %cst_77 : f32 to vector<32x128xf32>
    %200 = arith.subf %199, %198 : vector<32x128xf32>
    %201 = math.exp %200 : vector<32x128xf32>
    %cst_78 = arith.constant 1.000000e+00 : f32
    %202 = vector.broadcast %cst_78 : f32 to vector<32x128xf32>
    %203 = arith.addf %202, %201 : vector<32x128xf32>
    %cst_79 = arith.constant 1.000000e+00 : f32
    %204 = vector.broadcast %cst_79 : f32 to vector<32x128xf32>
    %205 = arith.divf %204, %203 : vector<32x128xf32>
    %206 = vector.extract_strided_slice %197 {offsets = [32, 0], sizes = [32, 128], strides = [1, 1]} : vector<128x128xf32> to vector<32x128xf32>
    %cst_80 = arith.constant 0.000000e+00 : f32
    %207 = vector.broadcast %cst_80 : f32 to vector<32x128xf32>
    %208 = arith.subf %207, %206 : vector<32x128xf32>
    %209 = math.exp %208 : vector<32x128xf32>
    %cst_81 = arith.constant 1.000000e+00 : f32
    %210 = vector.broadcast %cst_81 : f32 to vector<32x128xf32>
    %211 = arith.addf %210, %209 : vector<32x128xf32>
    %cst_82 = arith.constant 1.000000e+00 : f32
    %212 = vector.broadcast %cst_82 : f32 to vector<32x128xf32>
    %213 = arith.divf %212, %211 : vector<32x128xf32>
    %214 = vector.extract_strided_slice %197 {offsets = [64, 0], sizes = [32, 128], strides = [1, 1]} : vector<128x128xf32> to vector<32x128xf32>
    %215 = math.tanh %214 : vector<32x128xf32>
    %216 = vector.extract_strided_slice %197 {offsets = [96, 0], sizes = [32, 128], strides = [1, 1]} : vector<128x128xf32> to vector<32x128xf32>
    %cst_83 = arith.constant 0.000000e+00 : f32
    %217 = vector.broadcast %cst_83 : f32 to vector<32x128xf32>
    %218 = arith.subf %217, %216 : vector<32x128xf32>
    %219 = math.exp %218 : vector<32x128xf32>
    %cst_84 = arith.constant 1.000000e+00 : f32
    %220 = vector.broadcast %cst_84 : f32 to vector<32x128xf32>
    %221 = arith.addf %220, %219 : vector<32x128xf32>
    %cst_85 = arith.constant 1.000000e+00 : f32
    %222 = vector.broadcast %cst_85 : f32 to vector<32x128xf32>
    %223 = arith.divf %222, %221 : vector<32x128xf32>
    %224 = arith.mulf %213, %191 : vector<32x128xf32>
    %225 = arith.mulf %205, %215 : vector<32x128xf32>
    %226 = arith.addf %224, %225 : vector<32x128xf32>
    %227 = math.tanh %226 : vector<32x128xf32>
    %228 = arith.mulf %223, %227 : vector<32x128xf32>
    %c128 = arith.constant 128 : index
    %c0_86 = arith.constant 0 : index
    %229 = vector.load %arg6[%c128, %c0_86] : memref<256x128xf32, #tpu.memory_space<vmem>>, vector<32x128xf32>
    tpu.vector_store %arg6[%c128, %c0_86], %228 {strides = array<i32>} : memref<256x128xf32, #tpu.memory_space<vmem>>, vector<32x128xf32>,
    %230 = arith.truncf %228 : vector<32x128xf32> to vector<32x128xbf16>
    %cst_87 = arith.constant dense<0.000000e+00> : vector<128x128xf32>
    %231 = tpu.matmul %3, %230, %cst_87 {dimension_numbers = #tpu.dot_dimension_numbers<[1], [0], [0], [1], [0, 0, 1, 1], [], []>} : vector<128x32xbf16>, vector<32x128xbf16>, vector<128x128xf32> -> vector<128x128xf32>
    %232 = arith.addf %40, %231 : vector<128x128xf32>
    %233 = vector.extract_strided_slice %232 {offsets = [0, 0], sizes = [32, 128], strides = [1, 1]} : vector<128x128xf32> to vector<32x128xf32>
    %cst_88 = arith.constant 0.000000e+00 : f32
    %234 = vector.broadcast %cst_88 : f32 to vector<32x128xf32>
    %235 = arith.subf %234, %233 : vector<32x128xf32>
    %236 = math.exp %235 : vector<32x128xf32>
    %cst_89 = arith.constant 1.000000e+00 : f32
    %237 = vector.broadcast %cst_89 : f32 to vector<32x128xf32>
    %238 = arith.addf %237, %236 : vector<32x128xf32>
    %cst_90 = arith.constant 1.000000e+00 : f32
    %239 = vector.broadcast %cst_90 : f32 to vector<32x128xf32>
    %240 = arith.divf %239, %238 : vector<32x128xf32>
    %241 = vector.extract_strided_slice %232 {offsets = [32, 0], sizes = [32, 128], strides = [1, 1]} : vector<128x128xf32> to vector<32x128xf32>
    %cst_91 = arith.constant 0.000000e+00 : f32
    %242 = vector.broadcast %cst_91 : f32 to vector<32x128xf32>
    %243 = arith.subf %242, %241 : vector<32x128xf32>
    %244 = math.exp %243 : vector<32x128xf32>
    %cst_92 = arith.constant 1.000000e+00 : f32
    %245 = vector.broadcast %cst_92 : f32 to vector<32x128xf32>
    %246 = arith.addf %245, %244 : vector<32x128xf32>
    %cst_93 = arith.constant 1.000000e+00 : f32
    %247 = vector.broadcast %cst_93 : f32 to vector<32x128xf32>
    %248 = arith.divf %247, %246 : vector<32x128xf32>
    %249 = vector.extract_strided_slice %232 {offsets = [64, 0], sizes = [32, 128], strides = [1, 1]} : vector<128x128xf32> to vector<32x128xf32>
    %250 = math.tanh %249 : vector<32x128xf32>
    %251 = vector.extract_strided_slice %232 {offsets = [96, 0], sizes = [32, 128], strides = [1, 1]} : vector<128x128xf32> to vector<32x128xf32>
    %cst_94 = arith.constant 0.000000e+00 : f32
    %252 = vector.broadcast %cst_94 : f32 to vector<32x128xf32>
    %253 = arith.subf %252, %251 : vector<32x128xf32>
    %254 = math.exp %253 : vector<32x128xf32>
    %cst_95 = arith.constant 1.000000e+00 : f32
    %255 = vector.broadcast %cst_95 : f32 to vector<32x128xf32>
    %256 = arith.addf %255, %254 : vector<32x128xf32>
    %cst_96 = arith.constant 1.000000e+00 : f32
    %257 = vector.broadcast %cst_96 : f32 to vector<32x128xf32>
    %258 = arith.divf %257, %256 : vector<32x128xf32>
    %259 = arith.mulf %248, %226 : vector<32x128xf32>
    %260 = arith.mulf %240, %250 : vector<32x128xf32>
    %261 = arith.addf %259, %260 : vector<32x128xf32>
    %262 = math.tanh %261 : vector<32x128xf32>
    %263 = arith.mulf %258, %262 : vector<32x128xf32>
    %c160 = arith.constant 160 : index
    %c0_97 = arith.constant 0 : index
    %264 = vector.load %arg6[%c160, %c0_97] : memref<256x128xf32, #tpu.memory_space<vmem>>, vector<32x128xf32>
    tpu.vector_store %arg6[%c160, %c0_97], %263 {strides = array<i32>} : memref<256x128xf32, #tpu.memory_space<vmem>>, vector<32x128xf32>,
    %265 = arith.truncf %263 : vector<32x128xf32> to vector<32x128xbf16>
    %cst_98 = arith.constant dense<0.000000e+00> : vector<128x128xf32>
    %266 = tpu.matmul %3, %265, %cst_98 {dimension_numbers = #tpu.dot_dimension_numbers<[1], [0], [0], [1], [0, 0, 1, 1], [], []>} : vector<128x32xbf16>, vector<32x128xbf16>, vector<128x128xf32> -> vector<128x128xf32>
    %267 = arith.addf %46, %266 : vector<128x128xf32>
    %268 = vector.extract_strided_slice %267 {offsets = [0, 0], sizes = [32, 128], strides = [1, 1]} : vector<128x128xf32> to vector<32x128xf32>
    %cst_99 = arith.constant 0.000000e+00 : f32
    %269 = vector.broadcast %cst_99 : f32 to vector<32x128xf32>
    %270 = arith.subf %269, %268 : vector<32x128xf32>
    %271 = math.exp %270 : vector<32x128xf32>
    %cst_100 = arith.constant 1.000000e+00 : f32
    %272 = vector.broadcast %cst_100 : f32 to vector<32x128xf32>
    %273 = arith.addf %272, %271 : vector<32x128xf32>
    %cst_101 = arith.constant 1.000000e+00 : f32
    %274 = vector.broadcast %cst_101 : f32 to vector<32x128xf32>
    %275 = arith.divf %274, %273 : vector<32x128xf32>
    %276 = vector.extract_strided_slice %267 {offsets = [32, 0], sizes = [32, 128], strides = [1, 1]} : vector<128x128xf32> to vector<32x128xf32>
    %cst_102 = arith.constant 0.000000e+00 : f32
    %277 = vector.broadcast %cst_102 : f32 to vector<32x128xf32>
    %278 = arith.subf %277, %276 : vector<32x128xf32>
    %279 = math.exp %278 : vector<32x128xf32>
    %cst_103 = arith.constant 1.000000e+00 : f32
    %280 = vector.broadcast %cst_103 : f32 to vector<32x128xf32>
    %281 = arith.addf %280, %279 : vector<32x128xf32>
    %cst_104 = arith.constant 1.000000e+00 : f32
    %282 = vector.broadcast %cst_104 : f32 to vector<32x128xf32>
    %283 = arith.divf %282, %281 : vector<32x128xf32>
    %284 = vector.extract_strided_slice %267 {offsets = [64, 0], sizes = [32, 128], strides = [1, 1]} : vector<128x128xf32> to vector<32x128xf32>
    %285 = math.tanh %284 : vector<32x128xf32>
    %286 = vector.extract_strided_slice %267 {offsets = [96, 0], sizes = [32, 128], strides = [1, 1]} : vector<128x128xf32> to vector<32x128xf32>
    %cst_105 = arith.constant 0.000000e+00 : f32
    %287 = vector.broadcast %cst_105 : f32 to vector<32x128xf32>
    %288 = arith.subf %287, %286 : vector<32x128xf32>
    %289 = math.exp %288 : vector<32x128xf32>
    %cst_106 = arith.constant 1.000000e+00 : f32
    %290 = vector.broadcast %cst_106 : f32 to vector<32x128xf32>
    %291 = arith.addf %290, %289 : vector<32x128xf32>
    %cst_107 = arith.constant 1.000000e+00 : f32
    %292 = vector.broadcast %cst_107 : f32 to vector<32x128xf32>
    %293 = arith.divf %292, %291 : vector<32x128xf32>
    %294 = arith.mulf %283, %261 : vector<32x128xf32>
    %295 = arith.mulf %275, %285 : vector<32x128xf32>
    %296 = arith.addf %294, %295 : vector<32x128xf32>
    %297 = math.tanh %296 : vector<32x128xf32>
    %298 = arith.mulf %293, %297 : vector<32x128xf32>
    %c192 = arith.constant 192 : index
    %c0_108 = arith.constant 0 : index
    %299 = vector.load %arg6[%c192, %c0_108] : memref<256x128xf32, #tpu.memory_space<vmem>>, vector<32x128xf32>
    tpu.vector_store %arg6[%c192, %c0_108], %298 {strides = array<i32>} : memref<256x128xf32, #tpu.memory_space<vmem>>, vector<32x128xf32>,
    %300 = arith.truncf %298 : vector<32x128xf32> to vector<32x128xbf16>
    %cst_109 = arith.constant dense<0.000000e+00> : vector<128x128xf32>
    %301 = tpu.matmul %3, %300, %cst_109 {dimension_numbers = #tpu.dot_dimension_numbers<[1], [0], [0], [1], [0, 0, 1, 1], [], []>} : vector<128x32xbf16>, vector<32x128xbf16>, vector<128x128xf32> -> vector<128x128xf32>
    %302 = arith.addf %52, %301 : vector<128x128xf32>
    %303 = vector.extract_strided_slice %302 {offsets = [0, 0], sizes = [32, 128], strides = [1, 1]} : vector<128x128xf32> to vector<32x128xf32>
    %cst_110 = arith.constant 0.000000e+00 : f32
    %304 = vector.broadcast %cst_110 : f32 to vector<32x128xf32>
    %305 = arith.subf %304, %303 : vector<32x128xf32>
    %306 = math.exp %305 : vector<32x128xf32>
    %cst_111 = arith.constant 1.000000e+00 : f32
    %307 = vector.broadcast %cst_111 : f32 to vector<32x128xf32>
    %308 = arith.addf %307, %306 : vector<32x128xf32>
    %cst_112 = arith.constant 1.000000e+00 : f32
    %309 = vector.broadcast %cst_112 : f32 to vector<32x128xf32>
    %310 = arith.divf %309, %308 : vector<32x128xf32>
    %311 = vector.extract_strided_slice %302 {offsets = [32, 0], sizes = [32, 128], strides = [1, 1]} : vector<128x128xf32> to vector<32x128xf32>
    %cst_113 = arith.constant 0.000000e+00 : f32
    %312 = vector.broadcast %cst_113 : f32 to vector<32x128xf32>
    %313 = arith.subf %312, %311 : vector<32x128xf32>
    %314 = math.exp %313 : vector<32x128xf32>
    %cst_114 = arith.constant 1.000000e+00 : f32
    %315 = vector.broadcast %cst_114 : f32 to vector<32x128xf32>
    %316 = arith.addf %315, %314 : vector<32x128xf32>
    %cst_115 = arith.constant 1.000000e+00 : f32
    %317 = vector.broadcast %cst_115 : f32 to vector<32x128xf32>
    %318 = arith.divf %317, %316 : vector<32x128xf32>
    %319 = vector.extract_strided_slice %302 {offsets = [64, 0], sizes = [32, 128], strides = [1, 1]} : vector<128x128xf32> to vector<32x128xf32>
    %320 = math.tanh %319 : vector<32x128xf32>
    %321 = vector.extract_strided_slice %302 {offsets = [96, 0], sizes = [32, 128], strides = [1, 1]} : vector<128x128xf32> to vector<32x128xf32>
    %cst_116 = arith.constant 0.000000e+00 : f32
    %322 = vector.broadcast %cst_116 : f32 to vector<32x128xf32>
    %323 = arith.subf %322, %321 : vector<32x128xf32>
    %324 = math.exp %323 : vector<32x128xf32>
    %cst_117 = arith.constant 1.000000e+00 : f32
    %325 = vector.broadcast %cst_117 : f32 to vector<32x128xf32>
    %326 = arith.addf %325, %324 : vector<32x128xf32>
    %cst_118 = arith.constant 1.000000e+00 : f32
    %327 = vector.broadcast %cst_118 : f32 to vector<32x128xf32>
    %328 = arith.divf %327, %326 : vector<32x128xf32>
    %329 = arith.mulf %318, %296 : vector<32x128xf32>
    %330 = arith.mulf %310, %320 : vector<32x128xf32>
    %331 = arith.addf %329, %330 : vector<32x128xf32>
    %332 = math.tanh %331 : vector<32x128xf32>
    %333 = arith.mulf %328, %332 : vector<32x128xf32>
    %c224 = arith.constant 224 : index
    %c0_119 = arith.constant 0 : index
    %334 = vector.load %arg6[%c224, %c0_119] : memref<256x128xf32, #tpu.memory_space<vmem>>, vector<32x128xf32>
    tpu.vector_store %arg6[%c224, %c0_119], %333 {strides = array<i32>} : memref<256x128xf32, #tpu.memory_space<vmem>>, vector<32x128xf32>,
    %c0_120 = arith.constant 0 : index
    %c0_121 = arith.constant 0 : index
    %335 = vector.load %arg6[%c0_120, %c0_121] : memref<256x128xf32, #tpu.memory_space<vmem>>, vector<256x128xf32>
    %336 = tpu.transpose %335, [1, 0] : vector<256x128xf32> -> vector<128x256xf32>
    %c0_122 = arith.constant 0 : index
    %c0_123 = arith.constant 0 : index
    %337 = vector.load %arg5[%c0_122, %c0_123] : memref<128x256xf32, #tpu.memory_space<vmem>>, vector<128x256xf32>
    tpu.vector_store %arg5[%c0_122, %c0_123], %336 {strides = array<i32>} : memref<128x256xf32, #tpu.memory_space<vmem>>, vector<128x256xf32>,
    return
  }
  func.func @transform_0(%arg0: i32) -> (i32, i32, i32) {
    %c0_i32 = arith.constant 0 : i32
    %c0_i32_0 = arith.constant 0 : i32
    %c0_i32_1 = arith.constant 0 : i32
    return %c0_i32, %c0_i32_0, %arg0 : i32, i32, i32
  }
  func.func @transform_1(%arg0: i32) -> (i32, i32) {
    %c0_i32 = arith.constant 0 : i32
    %c0_i32_0 = arith.constant 0 : i32
    %c0_i32_1 = arith.constant 0 : i32
    return %c0_i32, %c0_i32_0 : i32, i32
  }
  func.func @transform_2(%arg0: i32) -> (i32, i32) {
    %c0_i32 = arith.constant 0 : i32
    %c0_i32_0 = arith.constant 0 : i32
    %c0_i32_1 = arith.constant 0 : i32
    return %c0_i32, %c0_i32_0 : i32, i32
  }
  func.func @transform_3(%arg0: i32) -> (i32, i32) {
    %c0_i32 = arith.constant 0 : i32
    %c0_i32_0 = arith.constant 0 : i32
    %c0_i32_1 = arith.constant 0 : i32
    return %c0_i32, %c0_i32_0 : i32, i32
  }
  func.func @transform_4(%arg0: i32) -> (i32, i32) {
    %c0_i32 = arith.constant 0 : i32
    %c0_i32_0 = arith.constant 0 : i32
    return %arg0, %c0_i32 : i32, i32
  }
}

module attributes {stable_mosaic.version = 11 : i64} {
  func.func @fused_conv_kernel(%arg0: i32, %arg1: memref<2x8x8x32xf32, #tpu.memory_space<vmem>>, %arg2: memref<288x32xf32, #tpu.memory_space<vmem>>, %arg3: memref<1x32xf32, #tpu.memory_space<vmem>>, %arg4: memref<288x16xf32, #tpu.memory_space<vmem>>, %arg5: memref<1x16xf32, #tpu.memory_space<vmem>>, %arg6: memref<2x8x8x16xf32, #tpu.memory_space<vmem>>, %arg7: memref<2x10x10x32xbf16, #tpu.memory_space<vmem>>, %arg8: memref<2x8x8x288xbf16, #tpu.memory_space<vmem>>, %arg9: memref<2x10x10x32xbf16, #tpu.memory_space<vmem>>, %arg10: memref<2x8x8x288xbf16, #tpu.memory_space<vmem>>) attributes {dimension_semantics = [#tpu.dimension_semantics<parallel>], iteration_bounds = array<i64: 1>, scalar_prefetch = 0 : i64, scratch_operands = 4 : i64, tpu.core_type = #tpu.core_type<tc>, window_params = [{transform_indices = @transform_0, window_bounds = array<i64: 2, 8, 8, 32>}, {pipeline_mode = #tpu.pipeline_mode<synchronous>, transform_indices = @transform_1, window_bounds = array<i64: 288, 32>}, {pipeline_mode = #tpu.pipeline_mode<synchronous>, transform_indices = @transform_2, window_bounds = array<i64: 1, 32>}, {pipeline_mode = #tpu.pipeline_mode<synchronous>, transform_indices = @transform_3, window_bounds = array<i64: 288, 16>}, {pipeline_mode = #tpu.pipeline_mode<synchronous>, transform_indices = @transform_4, window_bounds = array<i64: 1, 16>}, {transform_indices = @transform_5, window_bounds = array<i64: 2, 8, 8, 16>}]} {
    %cst = arith.constant 0.000000e+00 : bf16
    %0 = vector.broadcast %cst : bf16 to vector<2x10x10x32xbf16>
    %c0 = arith.constant 0 : index
    %c0_0 = arith.constant 0 : index
    %c0_1 = arith.constant 0 : index
    %c0_2 = arith.constant 0 : index
    %1 = vector.load %arg7[%c0, %c0_0, %c0_1, %c0_2] : memref<2x10x10x32xbf16, #tpu.memory_space<vmem>>, vector<2x10x10x32xbf16>
    tpu.vector_store %arg7[%c0, %c0_0, %c0_1, %c0_2], %0 {strides = array<i32>} : memref<2x10x10x32xbf16, #tpu.memory_space<vmem>>, vector<2x10x10x32xbf16>,
    %cst_3 = arith.constant 0.000000e+00 : bf16
    %2 = vector.broadcast %cst_3 : bf16 to vector<2x10x10x32xbf16>
    %c0_4 = arith.constant 0 : index
    %c0_5 = arith.constant 0 : index
    %c0_6 = arith.constant 0 : index
    %c0_7 = arith.constant 0 : index
    %3 = vector.load %arg9[%c0_4, %c0_5, %c0_6, %c0_7] : memref<2x10x10x32xbf16, #tpu.memory_space<vmem>>, vector<2x10x10x32xbf16>
    tpu.vector_store %arg9[%c0_4, %c0_5, %c0_6, %c0_7], %2 {strides = array<i32>} : memref<2x10x10x32xbf16, #tpu.memory_space<vmem>>, vector<2x10x10x32xbf16>,
    %c0_8 = arith.constant 0 : index
    %c0_9 = arith.constant 0 : index
    %c0_10 = arith.constant 0 : index
    %c0_11 = arith.constant 0 : index
    %4 = vector.load %arg1[%c0_8, %c0_9, %c0_10, %c0_11] : memref<2x8x8x32xf32, #tpu.memory_space<vmem>>, vector<2x8x8x32xf32>
    %5 = arith.truncf %4 : vector<2x8x8x32xf32> to vector<2x8x8x32xbf16>
    %c0_12 = arith.constant 0 : index
    %c1 = arith.constant 1 : index
    %c1_13 = arith.constant 1 : index
    %c0_14 = arith.constant 0 : index
    %6 = vector.load %arg7[%c0_12, %c1, %c1_13, %c0_14] : memref<2x10x10x32xbf16, #tpu.memory_space<vmem>>, vector<2x8x8x32xbf16>
    tpu.vector_store %arg7[%c0_12, %c1, %c1_13, %c0_14], %5 {strides = array<i32>} : memref<2x10x10x32xbf16, #tpu.memory_space<vmem>>, vector<2x8x8x32xbf16>,
    %c0_15 = arith.constant 0 : index
    %c0_16 = arith.constant 0 : index
    %c0_17 = arith.constant 0 : index
    %c0_18 = arith.constant 0 : index
    %7 = vector.load %arg7[%c0_15, %c0_16, %c0_17, %c0_18] : memref<2x10x10x32xbf16, #tpu.memory_space<vmem>>, vector<2x8x8x32xbf16>
    %c0_19 = arith.constant 0 : index
    %c0_20 = arith.constant 0 : index
    %c0_21 = arith.constant 0 : index
    %c0_22 = arith.constant 0 : index
    %8 = vector.load %arg8[%c0_19, %c0_20, %c0_21, %c0_22] : memref<2x8x8x288xbf16, #tpu.memory_space<vmem>>, vector<2x8x8x32xbf16>
    tpu.vector_store %arg8[%c0_19, %c0_20, %c0_21, %c0_22], %7 {strides = array<i32>} : memref<2x8x8x288xbf16, #tpu.memory_space<vmem>>, vector<2x8x8x32xbf16>,
    %c0_23 = arith.constant 0 : index
    %c0_24 = arith.constant 0 : index
    %c1_25 = arith.constant 1 : index
    %c0_26 = arith.constant 0 : index
    %9 = vector.load %arg7[%c0_23, %c0_24, %c1_25, %c0_26] : memref<2x10x10x32xbf16, #tpu.memory_space<vmem>>, vector<2x8x8x32xbf16>
    %c0_27 = arith.constant 0 : index
    %c0_28 = arith.constant 0 : index
    %c0_29 = arith.constant 0 : index
    %c32 = arith.constant 32 : index
    %10 = vector.load %arg8[%c0_27, %c0_28, %c0_29, %c32] : memref<2x8x8x288xbf16, #tpu.memory_space<vmem>>, vector<2x8x8x32xbf16>
    tpu.vector_store %arg8[%c0_27, %c0_28, %c0_29, %c32], %9 {strides = array<i32>} : memref<2x8x8x288xbf16, #tpu.memory_space<vmem>>, vector<2x8x8x32xbf16>,
    %c0_30 = arith.constant 0 : index
    %c0_31 = arith.constant 0 : index
    %c2 = arith.constant 2 : index
    %c0_32 = arith.constant 0 : index
    %11 = vector.load %arg7[%c0_30, %c0_31, %c2, %c0_32] : memref<2x10x10x32xbf16, #tpu.memory_space<vmem>>, vector<2x8x8x32xbf16>
    %c0_33 = arith.constant 0 : index
    %c0_34 = arith.constant 0 : index
    %c0_35 = arith.constant 0 : index
    %c64 = arith.constant 64 : index
    %12 = vector.load %arg8[%c0_33, %c0_34, %c0_35, %c64] : memref<2x8x8x288xbf16, #tpu.memory_space<vmem>>, vector<2x8x8x32xbf16>
    tpu.vector_store %arg8[%c0_33, %c0_34, %c0_35, %c64], %11 {strides = array<i32>} : memref<2x8x8x288xbf16, #tpu.memory_space<vmem>>, vector<2x8x8x32xbf16>,
    %c0_36 = arith.constant 0 : index
    %c1_37 = arith.constant 1 : index
    %c0_38 = arith.constant 0 : index
    %c0_39 = arith.constant 0 : index
    %13 = vector.load %arg7[%c0_36, %c1_37, %c0_38, %c0_39] : memref<2x10x10x32xbf16, #tpu.memory_space<vmem>>, vector<2x8x8x32xbf16>
    %c0_40 = arith.constant 0 : index
    %c0_41 = arith.constant 0 : index
    %c0_42 = arith.constant 0 : index
    %c96 = arith.constant 96 : index
    %14 = vector.load %arg8[%c0_40, %c0_41, %c0_42, %c96] : memref<2x8x8x288xbf16, #tpu.memory_space<vmem>>, vector<2x8x8x32xbf16>
    tpu.vector_store %arg8[%c0_40, %c0_41, %c0_42, %c96], %13 {strides = array<i32>} : memref<2x8x8x288xbf16, #tpu.memory_space<vmem>>, vector<2x8x8x32xbf16>,
    %c0_43 = arith.constant 0 : index
    %c1_44 = arith.constant 1 : index
    %c1_45 = arith.constant 1 : index
    %c0_46 = arith.constant 0 : index
    %15 = vector.load %arg7[%c0_43, %c1_44, %c1_45, %c0_46] : memref<2x10x10x32xbf16, #tpu.memory_space<vmem>>, vector<2x8x8x32xbf16>
    %c0_47 = arith.constant 0 : index
    %c0_48 = arith.constant 0 : index
    %c0_49 = arith.constant 0 : index
    %c128 = arith.constant 128 : index
    %16 = vector.load %arg8[%c0_47, %c0_48, %c0_49, %c128] : memref<2x8x8x288xbf16, #tpu.memory_space<vmem>>, vector<2x8x8x32xbf16>
    tpu.vector_store %arg8[%c0_47, %c0_48, %c0_49, %c128], %15 {strides = array<i32>} : memref<2x8x8x288xbf16, #tpu.memory_space<vmem>>, vector<2x8x8x32xbf16>,
    %c0_50 = arith.constant 0 : index
    %c1_51 = arith.constant 1 : index
    %c2_52 = arith.constant 2 : index
    %c0_53 = arith.constant 0 : index
    %17 = vector.load %arg7[%c0_50, %c1_51, %c2_52, %c0_53] : memref<2x10x10x32xbf16, #tpu.memory_space<vmem>>, vector<2x8x8x32xbf16>
    %c0_54 = arith.constant 0 : index
    %c0_55 = arith.constant 0 : index
    %c0_56 = arith.constant 0 : index
    %c160 = arith.constant 160 : index
    %18 = vector.load %arg8[%c0_54, %c0_55, %c0_56, %c160] : memref<2x8x8x288xbf16, #tpu.memory_space<vmem>>, vector<2x8x8x32xbf16>
    tpu.vector_store %arg8[%c0_54, %c0_55, %c0_56, %c160], %17 {strides = array<i32>} : memref<2x8x8x288xbf16, #tpu.memory_space<vmem>>, vector<2x8x8x32xbf16>,
    %c0_57 = arith.constant 0 : index
    %c2_58 = arith.constant 2 : index
    %c0_59 = arith.constant 0 : index
    %c0_60 = arith.constant 0 : index
    %19 = vector.load %arg7[%c0_57, %c2_58, %c0_59, %c0_60] : memref<2x10x10x32xbf16, #tpu.memory_space<vmem>>, vector<2x8x8x32xbf16>
    %c0_61 = arith.constant 0 : index
    %c0_62 = arith.constant 0 : index
    %c0_63 = arith.constant 0 : index
    %c192 = arith.constant 192 : index
    %20 = vector.load %arg8[%c0_61, %c0_62, %c0_63, %c192] : memref<2x8x8x288xbf16, #tpu.memory_space<vmem>>, vector<2x8x8x32xbf16>
    tpu.vector_store %arg8[%c0_61, %c0_62, %c0_63, %c192], %19 {strides = array<i32>} : memref<2x8x8x288xbf16, #tpu.memory_space<vmem>>, vector<2x8x8x32xbf16>,
    %c0_64 = arith.constant 0 : index
    %c2_65 = arith.constant 2 : index
    %c1_66 = arith.constant 1 : index
    %c0_67 = arith.constant 0 : index
    %21 = vector.load %arg7[%c0_64, %c2_65, %c1_66, %c0_67] : memref<2x10x10x32xbf16, #tpu.memory_space<vmem>>, vector<2x8x8x32xbf16>
    %c0_68 = arith.constant 0 : index
    %c0_69 = arith.constant 0 : index
    %c0_70 = arith.constant 0 : index
    %c224 = arith.constant 224 : index
    %22 = vector.load %arg8[%c0_68, %c0_69, %c0_70, %c224] : memref<2x8x8x288xbf16, #tpu.memory_space<vmem>>, vector<2x8x8x32xbf16>
    tpu.vector_store %arg8[%c0_68, %c0_69, %c0_70, %c224], %21 {strides = array<i32>} : memref<2x8x8x288xbf16, #tpu.memory_space<vmem>>, vector<2x8x8x32xbf16>,
    %c0_71 = arith.constant 0 : index
    %c2_72 = arith.constant 2 : index
    %c2_73 = arith.constant 2 : index
    %c0_74 = arith.constant 0 : index
    %23 = vector.load %arg7[%c0_71, %c2_72, %c2_73, %c0_74] : memref<2x10x10x32xbf16, #tpu.memory_space<vmem>>, vector<2x8x8x32xbf16>
    %c0_75 = arith.constant 0 : index
    %c0_76 = arith.constant 0 : index
    %c0_77 = arith.constant 0 : index
    %c256 = arith.constant 256 : index
    %24 = vector.load %arg8[%c0_75, %c0_76, %c0_77, %c256] : memref<2x8x8x288xbf16, #tpu.memory_space<vmem>>, vector<2x8x8x32xbf16>
    tpu.vector_store %arg8[%c0_75, %c0_76, %c0_77, %c256], %23 {strides = array<i32>} : memref<2x8x8x288xbf16, #tpu.memory_space<vmem>>, vector<2x8x8x32xbf16>,
    %c0_78 = arith.constant 0 : index
    %c0_79 = arith.constant 0 : index
    %25 = vector.load %arg2[%c0_78, %c0_79] : memref<288x32xf32, #tpu.memory_space<vmem>>, vector<288x32xf32>
    %26 = arith.truncf %25 : vector<288x32xf32> to vector<288x32xbf16>
    %c0_80 = arith.constant 0 : index
    %c0_81 = arith.constant 0 : index
    %c0_82 = arith.constant 0 : index
    %c0_83 = arith.constant 0 : index
    %27 = vector.load %arg8[%c0_80, %c0_81, %c0_82, %c0_83] : memref<2x8x8x288xbf16, #tpu.memory_space<vmem>>, vector<2x8x8x288xbf16>
    "tpu.trace_start"() <{level = 10 : i32, message = "bhwc,cd->bhwd"}> : () -> ()
    %cst_84 = arith.constant dense<0.000000e+00> : vector<2x8x8x32xf32>
    %28 = tpu.matmul %27, %26, %cst_84 {dimension_numbers = #tpu.dot_dimension_numbers<[3], [0], [0, 1, 2], [1], [0, 0, 0, 1, 0, 2, 1, 1], [], []>} : vector<2x8x8x288xbf16>, vector<288x32xbf16>, vector<2x8x8x32xf32> -> vector<2x8x8x32xf32>
    "tpu.trace_stop"() : () -> ()
    %c0_85 = arith.constant 0 : index
    %c0_86 = arith.constant 0 : index
    %29 = vector.load %arg3[%c0_85, %c0_86] : memref<1x32xf32, #tpu.memory_space<vmem>>, vector<1x32xf32>
    %30 = vector.shape_cast %29 : vector<1x32xf32> to vector<1x1x1x32xf32>
    %31 = vector.broadcast %30 : vector<1x1x1x32xf32> to vector<2x8x8x32xf32>
    %32 = arith.addf %28, %31 : vector<2x8x8x32xf32>
    %cst_87 = arith.constant 0.000000e+00 : f32
    %33 = vector.broadcast %cst_87 : f32 to vector<2x8x8x32xf32>
    %34 = arith.maximumf %32, %33 : vector<2x8x8x32xf32>
    %35 = arith.truncf %34 : vector<2x8x8x32xf32> to vector<2x8x8x32xbf16>
    %c0_88 = arith.constant 0 : index
    %c1_89 = arith.constant 1 : index
    %c1_90 = arith.constant 1 : index
    %c0_91 = arith.constant 0 : index
    %36 = vector.load %arg9[%c0_88, %c1_89, %c1_90, %c0_91] : memref<2x10x10x32xbf16, #tpu.memory_space<vmem>>, vector<2x8x8x32xbf16>
    tpu.vector_store %arg9[%c0_88, %c1_89, %c1_90, %c0_91], %35 {strides = array<i32>} : memref<2x10x10x32xbf16, #tpu.memory_space<vmem>>, vector<2x8x8x32xbf16>,
    %c0_92 = arith.constant 0 : index
    %c0_93 = arith.constant 0 : index
    %c0_94 = arith.constant 0 : index
    %c0_95 = arith.constant 0 : index
    %37 = vector.load %arg9[%c0_92, %c0_93, %c0_94, %c0_95] : memref<2x10x10x32xbf16, #tpu.memory_space<vmem>>, vector<2x8x8x32xbf16>
    %c0_96 = arith.constant 0 : index
    %c0_97 = arith.constant 0 : index
    %c0_98 = arith.constant 0 : index
    %c0_99 = arith.constant 0 : index
    %38 = vector.load %arg10[%c0_96, %c0_97, %c0_98, %c0_99] : memref<2x8x8x288xbf16, #tpu.memory_space<vmem>>, vector<2x8x8x32xbf16>
    tpu.vector_store %arg10[%c0_96, %c0_97, %c0_98, %c0_99], %37 {strides = array<i32>} : memref<2x8x8x288xbf16, #tpu.memory_space<vmem>>, vector<2x8x8x32xbf16>,
    %c0_100 = arith.constant 0 : index
    %c0_101 = arith.constant 0 : index
    %c1_102 = arith.constant 1 : index
    %c0_103 = arith.constant 0 : index
    %39 = vector.load %arg9[%c0_100, %c0_101, %c1_102, %c0_103] : memref<2x10x10x32xbf16, #tpu.memory_space<vmem>>, vector<2x8x8x32xbf16>
    %c0_104 = arith.constant 0 : index
    %c0_105 = arith.constant 0 : index
    %c0_106 = arith.constant 0 : index
    %c32_107 = arith.constant 32 : index
    %40 = vector.load %arg10[%c0_104, %c0_105, %c0_106, %c32_107] : memref<2x8x8x288xbf16, #tpu.memory_space<vmem>>, vector<2x8x8x32xbf16>
    tpu.vector_store %arg10[%c0_104, %c0_105, %c0_106, %c32_107], %39 {strides = array<i32>} : memref<2x8x8x288xbf16, #tpu.memory_space<vmem>>, vector<2x8x8x32xbf16>,
    %c0_108 = arith.constant 0 : index
    %c0_109 = arith.constant 0 : index
    %c2_110 = arith.constant 2 : index
    %c0_111 = arith.constant 0 : index
    %41 = vector.load %arg9[%c0_108, %c0_109, %c2_110, %c0_111] : memref<2x10x10x32xbf16, #tpu.memory_space<vmem>>, vector<2x8x8x32xbf16>
    %c0_112 = arith.constant 0 : index
    %c0_113 = arith.constant 0 : index
    %c0_114 = arith.constant 0 : index
    %c64_115 = arith.constant 64 : index
    %42 = vector.load %arg10[%c0_112, %c0_113, %c0_114, %c64_115] : memref<2x8x8x288xbf16, #tpu.memory_space<vmem>>, vector<2x8x8x32xbf16>
    tpu.vector_store %arg10[%c0_112, %c0_113, %c0_114, %c64_115], %41 {strides = array<i32>} : memref<2x8x8x288xbf16, #tpu.memory_space<vmem>>, vector<2x8x8x32xbf16>,
    %c0_116 = arith.constant 0 : index
    %c1_117 = arith.constant 1 : index
    %c0_118 = arith.constant 0 : index
    %c0_119 = arith.constant 0 : index
    %43 = vector.load %arg9[%c0_116, %c1_117, %c0_118, %c0_119] : memref<2x10x10x32xbf16, #tpu.memory_space<vmem>>, vector<2x8x8x32xbf16>
    %c0_120 = arith.constant 0 : index
    %c0_121 = arith.constant 0 : index
    %c0_122 = arith.constant 0 : index
    %c96_123 = arith.constant 96 : index
    %44 = vector.load %arg10[%c0_120, %c0_121, %c0_122, %c96_123] : memref<2x8x8x288xbf16, #tpu.memory_space<vmem>>, vector<2x8x8x32xbf16>
    tpu.vector_store %arg10[%c0_120, %c0_121, %c0_122, %c96_123], %43 {strides = array<i32>} : memref<2x8x8x288xbf16, #tpu.memory_space<vmem>>, vector<2x8x8x32xbf16>,
    %c0_124 = arith.constant 0 : index
    %c1_125 = arith.constant 1 : index
    %c1_126 = arith.constant 1 : index
    %c0_127 = arith.constant 0 : index
    %45 = vector.load %arg9[%c0_124, %c1_125, %c1_126, %c0_127] : memref<2x10x10x32xbf16, #tpu.memory_space<vmem>>, vector<2x8x8x32xbf16>
    %c0_128 = arith.constant 0 : index
    %c0_129 = arith.constant 0 : index
    %c0_130 = arith.constant 0 : index
    %c128_131 = arith.constant 128 : index
    %46 = vector.load %arg10[%c0_128, %c0_129, %c0_130, %c128_131] : memref<2x8x8x288xbf16, #tpu.memory_space<vmem>>, vector<2x8x8x32xbf16>
    tpu.vector_store %arg10[%c0_128, %c0_129, %c0_130, %c128_131], %45 {strides = array<i32>} : memref<2x8x8x288xbf16, #tpu.memory_space<vmem>>, vector<2x8x8x32xbf16>,
    %c0_132 = arith.constant 0 : index
    %c1_133 = arith.constant 1 : index
    %c2_134 = arith.constant 2 : index
    %c0_135 = arith.constant 0 : index
    %47 = vector.load %arg9[%c0_132, %c1_133, %c2_134, %c0_135] : memref<2x10x10x32xbf16, #tpu.memory_space<vmem>>, vector<2x8x8x32xbf16>
    %c0_136 = arith.constant 0 : index
    %c0_137 = arith.constant 0 : index
    %c0_138 = arith.constant 0 : index
    %c160_139 = arith.constant 160 : index
    %48 = vector.load %arg10[%c0_136, %c0_137, %c0_138, %c160_139] : memref<2x8x8x288xbf16, #tpu.memory_space<vmem>>, vector<2x8x8x32xbf16>
    tpu.vector_store %arg10[%c0_136, %c0_137, %c0_138, %c160_139], %47 {strides = array<i32>} : memref<2x8x8x288xbf16, #tpu.memory_space<vmem>>, vector<2x8x8x32xbf16>,
    %c0_140 = arith.constant 0 : index
    %c2_141 = arith.constant 2 : index
    %c0_142 = arith.constant 0 : index
    %c0_143 = arith.constant 0 : index
    %49 = vector.load %arg9[%c0_140, %c2_141, %c0_142, %c0_143] : memref<2x10x10x32xbf16, #tpu.memory_space<vmem>>, vector<2x8x8x32xbf16>
    %c0_144 = arith.constant 0 : index
    %c0_145 = arith.constant 0 : index
    %c0_146 = arith.constant 0 : index
    %c192_147 = arith.constant 192 : index
    %50 = vector.load %arg10[%c0_144, %c0_145, %c0_146, %c192_147] : memref<2x8x8x288xbf16, #tpu.memory_space<vmem>>, vector<2x8x8x32xbf16>
    tpu.vector_store %arg10[%c0_144, %c0_145, %c0_146, %c192_147], %49 {strides = array<i32>} : memref<2x8x8x288xbf16, #tpu.memory_space<vmem>>, vector<2x8x8x32xbf16>,
    %c0_148 = arith.constant 0 : index
    %c2_149 = arith.constant 2 : index
    %c1_150 = arith.constant 1 : index
    %c0_151 = arith.constant 0 : index
    %51 = vector.load %arg9[%c0_148, %c2_149, %c1_150, %c0_151] : memref<2x10x10x32xbf16, #tpu.memory_space<vmem>>, vector<2x8x8x32xbf16>
    %c0_152 = arith.constant 0 : index
    %c0_153 = arith.constant 0 : index
    %c0_154 = arith.constant 0 : index
    %c224_155 = arith.constant 224 : index
    %52 = vector.load %arg10[%c0_152, %c0_153, %c0_154, %c224_155] : memref<2x8x8x288xbf16, #tpu.memory_space<vmem>>, vector<2x8x8x32xbf16>
    tpu.vector_store %arg10[%c0_152, %c0_153, %c0_154, %c224_155], %51 {strides = array<i32>} : memref<2x8x8x288xbf16, #tpu.memory_space<vmem>>, vector<2x8x8x32xbf16>,
    %c0_156 = arith.constant 0 : index
    %c2_157 = arith.constant 2 : index
    %c2_158 = arith.constant 2 : index
    %c0_159 = arith.constant 0 : index
    %53 = vector.load %arg9[%c0_156, %c2_157, %c2_158, %c0_159] : memref<2x10x10x32xbf16, #tpu.memory_space<vmem>>, vector<2x8x8x32xbf16>
    %c0_160 = arith.constant 0 : index
    %c0_161 = arith.constant 0 : index
    %c0_162 = arith.constant 0 : index
    %c256_163 = arith.constant 256 : index
    %54 = vector.load %arg10[%c0_160, %c0_161, %c0_162, %c256_163] : memref<2x8x8x288xbf16, #tpu.memory_space<vmem>>, vector<2x8x8x32xbf16>
    tpu.vector_store %arg10[%c0_160, %c0_161, %c0_162, %c256_163], %53 {strides = array<i32>} : memref<2x8x8x288xbf16, #tpu.memory_space<vmem>>, vector<2x8x8x32xbf16>,
    %c0_164 = arith.constant 0 : index
    %c0_165 = arith.constant 0 : index
    %55 = vector.load %arg4[%c0_164, %c0_165] : memref<288x16xf32, #tpu.memory_space<vmem>>, vector<288x16xf32>
    %56 = arith.truncf %55 : vector<288x16xf32> to vector<288x16xbf16>
    %c0_166 = arith.constant 0 : index
    %c0_167 = arith.constant 0 : index
    %c0_168 = arith.constant 0 : index
    %c0_169 = arith.constant 0 : index
    %57 = vector.load %arg10[%c0_166, %c0_167, %c0_168, %c0_169] : memref<2x8x8x288xbf16, #tpu.memory_space<vmem>>, vector<2x8x8x288xbf16>
    "tpu.trace_start"() <{level = 10 : i32, message = "bhwc,cd->bhwd"}> : () -> ()
    %cst_170 = arith.constant dense<0.000000e+00> : vector<2x8x8x16xf32>
    %58 = tpu.matmul %57, %56, %cst_170 {dimension_numbers = #tpu.dot_dimension_numbers<[3], [0], [0, 1, 2], [1], [0, 0, 0, 1, 0, 2, 1, 1], [], []>} : vector<2x8x8x288xbf16>, vector<288x16xbf16>, vector<2x8x8x16xf32> -> vector<2x8x8x16xf32>
    "tpu.trace_stop"() : () -> ()
    %c0_171 = arith.constant 0 : index
    %c0_172 = arith.constant 0 : index
    %59 = vector.load %arg5[%c0_171, %c0_172] : memref<1x16xf32, #tpu.memory_space<vmem>>, vector<1x16xf32>
    %60 = vector.shape_cast %59 : vector<1x16xf32> to vector<1x1x1x16xf32>
    %61 = vector.broadcast %60 : vector<1x1x1x16xf32> to vector<2x8x8x16xf32>
    %62 = arith.addf %58, %61 : vector<2x8x8x16xf32>
    %c0_173 = arith.constant 0 : index
    %c0_174 = arith.constant 0 : index
    %c0_175 = arith.constant 0 : index
    %c0_176 = arith.constant 0 : index
    %63 = vector.load %arg6[%c0_173, %c0_174, %c0_175, %c0_176] : memref<2x8x8x16xf32, #tpu.memory_space<vmem>>, vector<2x8x8x16xf32>
    tpu.vector_store %arg6[%c0_173, %c0_174, %c0_175, %c0_176], %62 {strides = array<i32>} : memref<2x8x8x16xf32, #tpu.memory_space<vmem>>, vector<2x8x8x16xf32>,
    return
  }
  func.func @transform_0(%arg0: i32) -> (i32, i32, i32, i32) {
    %c0_i32 = arith.constant 0 : i32
    %c0_i32_0 = arith.constant 0 : i32
    %c0_i32_1 = arith.constant 0 : i32
    %c0_i32_2 = arith.constant 0 : i32
    return %arg0, %c0_i32, %c0_i32_0, %c0_i32_1 : i32, i32, i32, i32
  }
  func.func @transform_1(%arg0: i32) -> (i32, i32) {
    %c0_i32 = arith.constant 0 : i32
    %c0_i32_0 = arith.constant 0 : i32
    %c0_i32_1 = arith.constant 0 : i32
    return %c0_i32, %c0_i32_0 : i32, i32
  }
  func.func @transform_2(%arg0: i32) -> (i32, i32) {
    %c0_i32 = arith.constant 0 : i32
    %c0_i32_0 = arith.constant 0 : i32
    %c0_i32_1 = arith.constant 0 : i32
    return %c0_i32, %c0_i32_0 : i32, i32
  }
  func.func @transform_3(%arg0: i32) -> (i32, i32) {
    %c0_i32 = arith.constant 0 : i32
    %c0_i32_0 = arith.constant 0 : i32
    %c0_i32_1 = arith.constant 0 : i32
    return %c0_i32, %c0_i32_0 : i32, i32
  }
  func.func @transform_4(%arg0: i32) -> (i32, i32) {
    %c0_i32 = arith.constant 0 : i32
    %c0_i32_0 = arith.constant 0 : i32
    %c0_i32_1 = arith.constant 0 : i32
    return %c0_i32, %c0_i32_0 : i32, i32
  }
  func.func @transform_5(%arg0: i32) -> (i32, i32, i32, i32) {
    %c0_i32 = arith.constant 0 : i32
    %c0_i32_0 = arith.constant 0 : i32
    %c0_i32_1 = arith.constant 0 : i32
    %c0_i32_2 = arith.constant 0 : i32
    return %arg0, %c0_i32, %c0_i32_0, %c0_i32_1 : i32, i32, i32, i32
  }
}

</mosaic_0001>

<llo_original>
// kernel: position_aware_forward.2
$region0: #{position_aware_forward.2}
  #allocation0 [shape = 'u32[]', space=smem, size = 0x4, offset = 0x4, fixed_abs, tag = 'smem constant byte address 0x4 - core index']
  #allocation1 [shape = 'u32[144,128]{1,0:T(1,128)}', space=vmem, size = 0x12000, scoped, tag = 'internal scratch']
  #allocation2 [shape = 'f32[256,128]{1,0:T(8,128)}', space=vmem, size = 0x20000, scoped, tag = 'scratch operand']
  %s0 = inlined_call_operand.vmem [shape: f32[8,8,128], index: 0, kind: input, shape index: {}]
  %s1 = inlined_call_operand.vmem [shape: f32[128,8], index: 1, kind: input, shape index: {}]
  %s2 = inlined_call_operand.vmem [shape: f32[128,32], index: 2, kind: input, shape index: {}]
  %s3 = inlined_call_operand.vmem [shape: f32[128,1], index: 3, kind: input, shape index: {}]
  %s4 = inlined_call_operand.vmem [shape: f32[128,256], index: 4, kind: output, shape index: {}]
  %s5 = sld [smem:[#allocation0]]
  $region26: #{position_aware_forward.2} parent=0
    _
  %s7 = ssub.s32 1, %s5
  %s8 = scalar_select 0, %s7, %s5
  // Predicated region
  $region2: #{position_aware_forward.2} parent=0 // pred_check
    _
  $region3: #{position_aware_forward.2} parent=0 // pred_check_branch
    %10 = sbr.rel (0) target = $region5
  $region4: #{position_aware_forward.2} parent=0 // pred_region
    _
  $region5: #{position_aware_forward.2} parent=0 // pred_fallthru
    _
  // Predicated region
  $region6: #{position_aware_forward.2} parent=0 // pred_check
    _
  $region7: #{position_aware_forward.2} parent=0 // pred_check_branch
    %12 = sbr.rel (0) target = $region9
  $region8: #{position_aware_forward.2} parent=0 // pred_region
    _
  $region9: #{position_aware_forward.2} parent=0 // pred_fallthru
    _
  // Predicated region
  $region10: #{position_aware_forward.2} parent=0 // pred_check
    _
  $region11: #{position_aware_forward.2} parent=0 // pred_check_branch
    %14 = sbr.rel (0) target = $region13
  $region12: #{position_aware_forward.2} parent=0 // pred_region
    _
  $region13: #{position_aware_forward.2} parent=0 // pred_fallthru
    _
  // Predicated region
  $region14: #{position_aware_forward.2} parent=0 // pred_check
    _
  $region15: #{position_aware_forward.2} parent=0 // pred_check_branch
    %16 = sbr.rel (0) target = $region17
  $region16: #{position_aware_forward.2} parent=0 // pred_region
    _
  $region17: #{position_aware_forward.2} parent=0 // pred_fallthru
    _
  %v18 = vld [vmem:[%s1] sm:$0xff]
  %v19 = vld [vmem:[%s1 + $0x8] sm:$0xff]
  %v20 = vld [vmem:[%s1 + $0x10] sm:$0xff]
  %v21 = vld [vmem:[%s1 + $0x18] sm:$0xff]
  %v22 = vld [vmem:[%s1 + $0x20] sm:$0xff]
  %v23 = vld [vmem:[%s1 + $0x28] sm:$0xff]
  %v24 = vld [vmem:[%s1 + $0x30] sm:$0xff]
  %v25 = vld [vmem:[%s1 + $0x38] sm:$0xff]
  %v26 = vld [vmem:[%s1 + $0x40] sm:$0xff]
  %v27 = vld [vmem:[%s1 + $0x48] sm:$0xff]
  %v28 = vld [vmem:[%s1 + $0x50] sm:$0xff]
  %v29 = vld [vmem:[%s1 + $0x58] sm:$0xff]
  %v30 = vld [vmem:[%s1 + $0x60] sm:$0xff]
  %v31 = vld [vmem:[%s1 + $0x68] sm:$0xff]
  %v32 = vld [vmem:[%s1 + $0x70] sm:$0xff]
  %v33 = vld [vmem:[%s1 + $0x78] sm:$0xff]
  %v34 = vpack.c.bf16 %v19, %v18
  %v35 = vpack.c.bf16 %v21, %v20
  %v36 = vpack.c.bf16 %v23, %v22
  %v37 = vpack.c.bf16 %v25, %v24
  %v38 = vpack.c.bf16 %v27, %v26
  %v39 = vpack.c.bf16 %v29, %v28
  %v40 = vpack.c.bf16 %v31, %v30
  %v41 = vpack.c.bf16 %v33, %v32
  %v42 = vld [vmem:[%s2] sm:$0xff]
  %v43 = vld [vmem:[%s2 + $0x8] sm:$0xff]
  %v44 = vld [vmem:[%s2 + $0x10] sm:$0xff]
  %v45 = vld [vmem:[%s2 + $0x18] sm:$0xff]
  %v46 = vld [vmem:[%s2 + $0x20] sm:$0xff]
  %v47 = vld [vmem:[%s2 + $0x28] sm:$0xff]
  %v48 = vld [vmem:[%s2 + $0x30] sm:$0xff]
  %v49 = vld [vmem:[%s2 + $0x38] sm:$0xff]
  %v50 = vld [vmem:[%s2 + $0x40] sm:$0xff]
  %v51 = vld [vmem:[%s2 + $0x48] sm:$0xff]
  %v52 = vld [vmem:[%s2 + $0x50] sm:$0xff]
  %v53 = vld [vmem:[%s2 + $0x58] sm:$0xff]
  %v54 = vld [vmem:[%s2 + $0x60] sm:$0xff]
  %v55 = vld [vmem:[%s2 + $0x68] sm:$0xff]
  %v56 = vld [vmem:[%s2 + $0x70] sm:$0xff]
  %v57 = vld [vmem:[%s2 + $0x78] sm:$0xff]
  %v58 = vpack.c.bf16 %v43, %v42
  %v59 = vpack.c.bf16 %v45, %v44
  %v60 = vpack.c.bf16 %v47, %v46
  %v61 = vpack.c.bf16 %v49, %v48
  %v62 = vpack.c.bf16 %v51, %v50
  %v63 = vpack.c.bf16 %v53, %v52
  %v64 = vpack.c.bf16 %v55, %v54
  %v65 = vpack.c.bf16 %v57, %v56
  %v66 = vld [vmem:[%s3] sm:$0xff]
  %v67 = vld [vmem:[%s3 + $0x8] sm:$0xff]
  %v68 = vld [vmem:[%s3 + $0x10] sm:$0xff]
  %v69 = vld [vmem:[%s3 + $0x18] sm:$0xff]
  %v70 = vld [vmem:[%s3 + $0x20] sm:$0xff]
  %v71 = vld [vmem:[%s3 + $0x28] sm:$0xff]
  %v72 = vld [vmem:[%s3 + $0x30] sm:$0xff]
  %v73 = vld [vmem:[%s3 + $0x38] sm:$0xff]
  %v74 = vld [vmem:[%s3 + $0x40] sm:$0xff]
  %v75 = vld [vmem:[%s3 + $0x48] sm:$0xff]
  %v76 = vld [vmem:[%s3 + $0x50] sm:$0xff]
  %v77 = vld [vmem:[%s3 + $0x58] sm:$0xff]
  %v78 = vld [vmem:[%s3 + $0x60] sm:$0xff]
  %v79 = vld [vmem:[%s3 + $0x68] sm:$0xff]
  %v80 = vld [vmem:[%s3 + $0x70] sm:$0xff]
  %v81 = vld [vmem:[%s3 + $0x78] sm:$0xff]
  %v82 = vld [vmem:[%s0] sm:$0xff]
  %v83 = vpack.c.bf16 %v82, %v82
  %85 = vset.pattern.permute.xlu0 0
  %86 = vperm.xlu0 %85, %v66
  %v87 = vpop.permute.xlu0 %86
  %90 = vset.pattern.permute.xlu0 0
  %91 = vperm.xlu0 %90, %v67
  %v92 = vpop.permute.xlu0 %91
  %95 = vset.pattern.permute.xlu0 0
  %96 = vperm.xlu0 %95, %v68
  %v97 = vpop.permute.xlu0 %96
  %100 = vset.pattern.permute.xlu0 0
  %101 = vperm.xlu0 %100, %v69
  %v102 = vpop.permute.xlu0 %101
  %105 = vset.pattern.permute.xlu0 0
  %106 = vperm.xlu0 %105, %v70
  %v107 = vpop.permute.xlu0 %106
  %110 = vset.pattern.permute.xlu0 0
  %111 = vperm.xlu0 %110, %v71
  %v112 = vpop.permute.xlu0 %111
  %115 = vset.pattern.permute.xlu0 0
  %116 = vperm.xlu0 %115, %v72
  %v117 = vpop.permute.xlu0 %116
  %120 = vset.pattern.permute.xlu0 0
  %121 = vperm.xlu0 %120, %v73
  %v122 = vpop.permute.xlu0 %121
  %125 = vset.pattern.permute.xlu0 0
  %126 = vperm.xlu0 %125, %v74
  %v127 = vpop.permute.xlu0 %126
  %130 = vset.pattern.permute.xlu0 0
  %131 = vperm.xlu0 %130, %v75
  %v132 = vpop.permute.xlu0 %131
  %135 = vset.pattern.permute.xlu0 0
  %136 = vperm.xlu0 %135, %v76
  %v137 = vpop.permute.xlu0 %136
  %140 = vset.pattern.permute.xlu0 0
  %141 = vperm.xlu0 %140, %v77
  %v142 = vpop.permute.xlu0 %141
  %145 = vset.pattern.permute.xlu0 0
  %146 = vperm.xlu0 %145, %v78
  %v147 = vpop.permute.xlu0 %146
  %150 = vset.pattern.permute.xlu0 0
  %151 = vperm.xlu0 %150, %v79
  %v152 = vpop.permute.xlu0 %151
  %155 = vset.pattern.permute.xlu0 0
  %156 = vperm.xlu0 %155, %v80
  %v157 = vpop.permute.xlu0 %156
  %160 = vset.pattern.permute.xlu0 0
  %161 = vperm.xlu0 %160, %v81
  %v162 = vpop.permute.xlu0 %161
  %vm164 = vcmask 64512
  %v166 = vsel %vm164, %v34, 0
  %v169 = vsel %vm164, %v35, 0
  %v172 = vsel %vm164, %v36, 0
  %v175 = vsel %vm164, %v37, 0
  %v178 = vsel %vm164, %v38, 0
  %v181 = vsel %vm164, %v39, 0
  %v184 = vsel %vm164, %v40, 0
  %v187 = vsel %vm164, %v41, 0
  %vm189 = vcmask 1043456
  %v191 = vsel %vm189, %v83, 0
  %193 = vmatprep.subr.bf16.mxu0 0
  %194 = vmatpush1.bf16.msra.mxu0 %v191
  %195 = vmatprep.subr.bf16.mxu0 0
  %196 = vmatpush1.bf16.msra.mxu0 0
  %197 = vmatprep.subr.bf16.mxu0 0
  %198 = vmatpush1.bf16.msra.mxu0 0
  %199 = vmatprep.subr.bf16.mxu0 0
  %200 = vmatpush1.bf16.msra.mxu0 0
  %201 = vmatprep.subr.bf16.mxu0 0
  %202 = vmatpush1.bf16.msra.mxu0 0
  %203 = vmatprep.subr.bf16.mxu0 0
  %204 = vmatpush1.bf16.msra.mxu0 0
  %205 = vmatprep.subr.bf16.mxu0 0
  %206 = vmatpush1.bf16.msra.mxu0 0
  %207 = vmatprep.subr.bf16.mxu0 0
  %208 = vmatpush1.bf16.msra.mxu0 0
  %209 = vmatprep.subr.bf16.mxu0 0
  %210 = vmatpush1.bf16.msra.mxu0 0
  %211 = vmatprep.subr.bf16.mxu0 0
  %212 = vmatpush1.bf16.msra.mxu0 0
  %213 = vmatprep.subr.bf16.mxu0 0
  %214 = vmatpush1.bf16.msra.mxu0 0
  %215 = vmatprep.subr.bf16.mxu0 0
  %216 = vmatpush1.bf16.msra.mxu0 0
  %217 = vmatprep.subr.bf16.mxu0 0
  %218 = vmatpush1.bf16.msra.mxu0 0
  %219 = vmatprep.subr.bf16.mxu0 0
  %220 = vmatpush1.bf16.msra.mxu0 0
  %221 = vmatprep.subr.bf16.mxu0 0
  %222 = vmatpush1.bf16.msra.mxu0 0
  %223 = vmatprep.subr.bf16.mxu0 0
  %224 = vmatpush1.bf16.msra.mxu0 0
  %225 = vmatprep.mubr.bf16.mxu0 0
  %226 = vmatmul.mubr.bf16.gmra.mrb[0].mxu0 %v166
  %v227 = vpop.f32.mrb[0].mxu0
  %v228 = vadd.f32 %v87, %v227
  %v229 = vpop.f32.mrb[0].mxu0
  %v230 = vpop.f32.mrb[0].mxu0
  %v231 = vadd.f32 %v92, %v230
  %v232 = vpop.f32.mrb[0].mxu0
  %233 = vmatprep.mubr.bf16.mxu0 0
  %234 = vmatmul.mubr.bf16.gmra.mrb[0].mxu0 %v169
  %v235 = vpop.f32.mrb[0].mxu0
  %v236 = vadd.f32 %v97, %v235
  %v237 = vpop.f32.mrb[0].mxu0
  %v238 = vpop.f32.mrb[0].mxu0
  %v239 = vadd.f32 %v102, %v238
  %v240 = vpop.f32.mrb[0].mxu0
  %241 = vmatprep.mubr.bf16.mxu0 0
  %242 = vmatmul.mubr.bf16.gmra.mrb[0].mxu0 %v172
  %v243 = vpop.f32.mrb[0].mxu0
  %v244 = vadd.f32 %v107, %v243
  %v245 = vpop.f32.mrb[0].mxu0
  %v246 = vpop.f32.mrb[0].mxu0
  %v247 = vadd.f32 %v112, %v246
  %v248 = vpop.f32.mrb[0].mxu0
  %249 = vmatprep.mubr.bf16.mxu0 0
  %250 = vmatmul.mubr.bf16.gmra.mrb[0].mxu0 %v175
  %v251 = vpop.f32.mrb[0].mxu0
  %v252 = vadd.f32 %v117, %v251
  %v253 = vpop.f32.mrb[0].mxu0
  %v254 = vpop.f32.mrb[0].mxu0
  %v255 = vadd.f32 %v122, %v254
  %v256 = vpop.f32.mrb[0].mxu0
  %257 = vmatprep.mubr.bf16.mxu0 0
  %258 = vmatmul.mubr.bf16.gmra.mrb[0].mxu0 %v178
  %v259 = vpop.f32.mrb[0].mxu0
  %v260 = vadd.f32 %v127, %v259
  %v261 = vpop.f32.mrb[0].mxu0
  %v262 = vpop.f32.mrb[0].mxu0
  %v263 = vadd.f32 %v132, %v262
  %v264 = vpop.f32.mrb[0].mxu0
  %265 = vmatprep.mubr.bf16.mxu0 0
  %266 = vmatmul.mubr.bf16.gmra.mrb[0].mxu0 %v181
  %v267 = vpop.f32.mrb[0].mxu0
  %v268 = vadd.f32 %v137, %v267
  %v269 = vpop.f32.mrb[0].mxu0
  %v270 = vpop.f32.mrb[0].mxu0
  %v271 = vadd.f32 %v142, %v270
  %v272 = vpop.f32.mrb[0].mxu0
  %273 = vmatprep.mubr.bf16.mxu0 0
  %274 = vmatmul.mubr.bf16.gmra.mrb[0].mxu0 %v184
  %v275 = vpop.f32.mrb[0].mxu0
  %v276 = vadd.f32 %v147, %v275
  %v277 = vpop.f32.mrb[0].mxu0
  %v278 = vpop.f32.mrb[0].mxu0
  %v279 = vadd.f32 %v152, %v278
  %v280 = vpop.f32.mrb[0].mxu0
  %281 = vmatprep.mubr.bf16.mxu0 0
  %282 = vmatmul.mubr.bf16.gmra.mrb[0].mxu0 %v187
  %v283 = vpop.f32.mrb[0].mxu0
  %v284 = vadd.f32 %v157, %v283
  %v285 = vpop.f32.mrb[0].mxu0
  %v286 = vpop.f32.mrb[0].mxu0
  %v287 = vadd.f32 %v162, %v286
  %v288 = vpop.f32.mrb[0].mxu0
  %289 = vdwg.mxu0
  %s290 = scalar_lea.vmem %s0, 8
  %v291 = vld [vmem:[%s290] sm:$0xff]
  %v292 = vpack.c.bf16 %v291, %v291
  %v294 = vsel %vm189, %v292, 0
  %296 = vmatprep.subr.bf16.mxu0 0
  %297 = vmatpush1.bf16.msra.mxu0 %v294
  %298 = vmatprep.subr.bf16.mxu0 0
  %299 = vmatpush1.bf16.msra.mxu0 0
  %300 = vmatprep.subr.bf16.mxu0 0
  %301 = vmatpush1.bf16.msra.mxu0 0
  %302 = vmatprep.subr.bf16.mxu0 0
  %303 = vmatpush1.bf16.msra.mxu0 0
  %304 = vmatprep.subr.bf16.mxu0 0
  %305 = vmatpush1.bf16.msra.mxu0 0
  %306 = vmatprep.subr.bf16.mxu0 0
  %307 = vmatpush1.bf16.msra.mxu0 0
  %308 = vmatprep.subr.bf16.mxu0 0
  %309 = vmatpush1.bf16.msra.mxu0 0
  %310 = vmatprep.subr.bf16.mxu0 0
  %311 = vmatpush1.bf16.msra.mxu0 0
  %312 = vmatprep.subr.bf16.mxu0 0
  %313 = vmatpush1.bf16.msra.mxu0 0
  %314 = vmatprep.subr.bf16.mxu0 0
  %315 = vmatpush1.bf16.msra.mxu0 0
  %316 = vmatprep.subr.bf16.mxu0 0
  %317 = vmatpush1.bf16.msra.mxu0 0
  %318 = vmatprep.subr.bf16.mxu0 0
  %319 = vmatpush1.bf16.msra.mxu0 0
  %320 = vmatprep.subr.bf16.mxu0 0
  %321 = vmatpush1.bf16.msra.mxu0 0
  %322 = vmatprep.subr.bf16.mxu0 0
  %323 = vmatpush1.bf16.msra.mxu0 0
  %324 = vmatprep.subr.bf16.mxu0 0
  %325 = vmatpush1.bf16.msra.mxu0 0
  %326 = vmatprep.subr.bf16.mxu0 0
  %327 = vmatpush1.bf16.msra.mxu0 0
  %328 = vmatprep.mubr.bf16.mxu0 0
  %329 = vmatmul.mubr.bf16.gmra.mrb[0].mxu0 %v166
  %v330 = vpop.f32.mrb[0].mxu0
  %v331 = vadd.f32 %v87, %v330
  %v332 = vpop.f32.mrb[0].mxu0
  %v333 = vpop.f32.mrb[0].mxu0
  %v334 = vadd.f32 %v92, %v333
  %v335 = vpop.f32.mrb[0].mxu0
  %336 = vmatprep.mubr.bf16.mxu0 0
  %337 = vmatmul.mubr.bf16.gmra.mrb[0].mxu0 %v169
  %v338 = vpop.f32.mrb[0].mxu0
  %v339 = vadd.f32 %v97, %v338
  %v340 = vpop.f32.mrb[0].mxu0
  %v341 = vpop.f32.mrb[0].mxu0
  %v342 = vadd.f32 %v102, %v341
  %v343 = vpop.f32.mrb[0].mxu0
  %344 = vmatprep.mubr.bf16.mxu0 0
  %345 = vmatmul.mubr.bf16.gmra.mrb[0].mxu0 %v172
  %v346 = vpop.f32.mrb[0].mxu0
  %v347 = vadd.f32 %v107, %v346
  %v348 = vpop.f32.mrb[0].mxu0
  %v349 = vpop.f32.mrb[0].mxu0
  %v350 = vadd.f32 %v112, %v349
  %v351 = vpop.f32.mrb[0].mxu0
  %352 = vmatprep.mubr.bf16.mxu0 0
  %353 = vmatmul.mubr.bf16.gmra.mrb[0].mxu0 %v175
  %v354 = vpop.f32.mrb[0].mxu0
  %v355 = vadd.f32 %v117, %v354
  %v356 = vpop.f32.mrb[0].mxu0
  %v357 = vpop.f32.mrb[0].mxu0
  %v358 = vadd.f32 %v122, %v357
  %v359 = vpop.f32.mrb[0].mxu0
  %360 = vmatprep.mubr.bf16.mxu0 0
  %361 = vmatmul.mubr.bf16.gmra.mrb[0].mxu0 %v178
  %v362 = vpop.f32.mrb[0].mxu0
  %v363 = vadd.f32 %v127, %v362
  %v364 = vpop.f32.mrb[0].mxu0
  %v365 = vpop.f32.mrb[0].mxu0
  %v366 = vadd.f32 %v132, %v365
  %v367 = vpop.f32.mrb[0].mxu0
  %368 = vmatprep.mubr.bf16.mxu0 0
  %369 = vmatmul.mubr.bf16.gmra.mrb[0].mxu0 %v181
  %v370 = vpop.f32.mrb[0].mxu0
  %v371 = vadd.f32 %v137, %v370
  %v372 = vpop.f32.mrb[0].mxu0
  %v373 = vpop.f32.mrb[0].mxu0
  %v374 = vadd.f32 %v142, %v373
  %v375 = vpop.f32.mrb[0].mxu0
  %376 = vmatprep.mubr.bf16.mxu0 0
  %377 = vmatmul.mubr.bf16.gmra.mrb[0].mxu0 %v184
  %v378 = vpop.f32.mrb[0].mxu0
  %v379 = vadd.f32 %v147, %v378
  %v380 = vpop.f32.mrb[0].mxu0
  %v381 = vpop.f32.mrb[0].mxu0
  %v382 = vadd.f32 %v152, %v381
  %v383 = vpop.f32.mrb[0].mxu0
  %384 = vmatprep.mubr.bf16.mxu0 0
  %385 = vmatmul.mubr.bf16.gmra.mrb[0].mxu0 %v187
  %v386 = vpop.f32.mrb[0].mxu0
  %v387 = vadd.f32 %v157, %v386
  %v388 = vpop.f32.mrb[0].mxu0
  %v389 = vpop.f32.mrb[0].mxu0
  %v390 = vadd.f32 %v162, %v389
  %v391 = vpop.f32.mrb[0].mxu0
  %392 = vdwg.mxu0
  %s393 = scalar_lea.vmem %s0, 16
  %v394 = vld [vmem:[%s393] sm:$0xff]
  %v395 = vpack.c.bf16 %v394, %v394
  %v397 = vsel %vm189, %v395, 0
  %399 = vmatprep.subr.bf16.mxu0 0
  %400 = vmatpush1.bf16.msra.mxu0 %v397
  %401 = vmatprep.subr.bf16.mxu0 0
  %402 = vmatpush1.bf16.msra.mxu0 0
  %403 = vmatprep.subr.bf16.mxu0 0
  %404 = vmatpush1.bf16.msra.mxu0 0
  %405 = vmatprep.subr.bf16.mxu0 0
  %406 = vmatpush1.bf16.msra.mxu0 0
  %407 = vmatprep.subr.bf16.mxu0 0
  %408 = vmatpush1.bf16.msra.mxu0 0
  %409 = vmatprep.subr.bf16.mxu0 0
  %410 = vmatpush1.bf16.msra.mxu0 0
  %411 = vmatprep.subr.bf16.mxu0 0
  %412 = vmatpush1.bf16.msra.mxu0 0
  %413 = vmatprep.subr.bf16.mxu0 0
  %414 = vmatpush1.bf16.msra.mxu0 0
  %415 = vmatprep.subr.bf16.mxu0 0
  %416 = vmatpush1.bf16.msra.mxu0 0
  %417 = vmatprep.subr.bf16.mxu0 0
  %418 = vmatpush1.bf16.msra.mxu0 0
  %419 = vmatprep.subr.bf16.mxu0 0
  %420 = vmatpush1.bf16.msra.mxu0 0
  %421 = vmatprep.subr.bf16.mxu0 0
  %422 = vmatpush1.bf16.msra.mxu0 0
  %423 = vmatprep.subr.bf16.mxu0 0
  %424 = vmatpush1.bf16.msra.mxu0 0
  %425 = vmatprep.subr.bf16.mxu0 0
  %426 = vmatpush1.bf16.msra.mxu0 0
  %427 = vmatprep.subr.bf16.mxu0 0
  %428 = vmatpush1.bf16.msra.mxu0 0
  %429 = vmatprep.subr.bf16.mxu0 0
  %430 = vmatpush1.bf16.msra.mxu0 0
  %431 = vmatprep.mubr.bf16.mxu0 0
  %432 = vmatmul.mubr.bf16.gmra.mrb[0].mxu0 %v166
  %v433 = vpop.f32.mrb[0].mxu0
  %v434 = vadd.f32 %v87, %v433
  %v435 = vpop.f32.mrb[0].mxu0
  %v436 = vpop.f32.mrb[0].mxu0
  %v437 = vadd.f32 %v92, %v436
  %v438 = vpop.f32.mrb[0].mxu0
  %439 = vmatprep.mubr.bf16.mxu0 0
  %440 = vmatmul.mubr.bf16.gmra.mrb[0].mxu0 %v169
  %v441 = vpop.f32.mrb[0].mxu0
  %v442 = vadd.f32 %v97, %v441
  %v443 = vpop.f32.mrb[0].mxu0
  %v444 = vpop.f32.mrb[0].mxu0
  %v445 = vadd.f32 %v102, %v444
  %v446 = vpop.f32.mrb[0].mxu0
  %447 = vmatprep.mubr.bf16.mxu0 0
  %448 = vmatmul.mubr.bf16.gmra.mrb[0].mxu0 %v172
  %v449 = vpop.f32.mrb[0].mxu0
  %v450 = vadd.f32 %v107, %v449
  %v451 = vpop.f32.mrb[0].mxu0
  %v452 = vpop.f32.mrb[0].mxu0
  %v453 = vadd.f32 %v112, %v452
  %v454 = vpop.f32.mrb[0].mxu0
  %455 = vmatprep.mubr.bf16.mxu0 0
  %456 = vmatmul.mubr.bf16.gmra.mrb[0].mxu0 %v175
  %v457 = vpop.f32.mrb[0].mxu0
  %v458 = vadd.f32 %v117, %v457
  %v459 = vpop.f32.mrb[0].mxu0
  %v460 = vpop.f32.mrb[0].mxu0
  %v461 = vadd.f32 %v122, %v460
  %v462 = vpop.f32.mrb[0].mxu0
  %463 = vmatprep.mubr.bf16.mxu0 0
  %464 = vmatmul.mubr.bf16.gmra.mrb[0].mxu0 %v178
  %v465 = vpop.f32.mrb[0].mxu0
  %v466 = vadd.f32 %v127, %v465
  %v467 = vpop.f32.mrb[0].mxu0
  %v468 = vpop.f32.mrb[0].mxu0
  %v469 = vadd.f32 %v132, %v468
  %v470 = vpop.f32.mrb[0].mxu0
  %471 = vmatprep.mubr.bf16.mxu0 0
  %472 = vmatmul.mubr.bf16.gmra.mrb[0].mxu0 %v181
  %v473 = vpop.f32.mrb[0].mxu0
  %v474 = vadd.f32 %v137, %v473
  %v475 = vpop.f32.mrb[0].mxu0
  %v476 = vpop.f32.mrb[0].mxu0
  %v477 = vadd.f32 %v142, %v476
  %v478 = vpop.f32.mrb[0].mxu0
  %479 = vmatprep.mubr.bf16.mxu0 0
  %480 = vmatmul.mubr.bf16.gmra.mrb[0].mxu0 %v184
  %v481 = vpop.f32.mrb[0].mxu0
  %v482 = vadd.f32 %v147, %v481
  %v483 = vpop.f32.mrb[0].mxu0
  %v484 = vpop.f32.mrb[0].mxu0
  %v485 = vadd.f32 %v152, %v484
  %v486 = vpop.f32.mrb[0].mxu0
  %487 = vmatprep.mubr.bf16.mxu0 0
  %488 = vmatmul.mubr.bf16.gmra.mrb[0].mxu0 %v187
  %v489 = vpop.f32.mrb[0].mxu0
  %v490 = vadd.f32 %v157, %v489
  %v491 = vpop.f32.mrb[0].mxu0
  %v492 = vpop.f32.mrb[0].mxu0
  %v493 = vadd.f32 %v162, %v492
  %v494 = vpop.f32.mrb[0].mxu0
  %495 = vdwg.mxu0
  %s496 = scalar_lea.vmem %s0, 24
  %v497 = vld [vmem:[%s496] sm:$0xff]
  %v498 = vpack.c.bf16 %v497, %v497
  %v500 = vsel %vm189, %v498, 0
  %502 = vmatprep.subr.bf16.mxu0 0
  %503 = vmatpush1.bf16.msra.mxu0 %v500
  %504 = vmatprep.subr.bf16.mxu0 0
  %505 = vmatpush1.bf16.msra.mxu0 0
  %506 = vmatprep.subr.bf16.mxu0 0
  %507 = vmatpush1.bf16.msra.mxu0 0
  %508 = vmatprep.subr.bf16.mxu0 0
  %509 = vmatpush1.bf16.msra.mxu0 0
  %510 = vmatprep.subr.bf16.mxu0 0
  %511 = vmatpush1.bf16.msra.mxu0 0
  %512 = vmatprep.subr.bf16.mxu0 0
  %513 = vmatpush1.bf16.msra.mxu0 0
  %514 = vmatprep.subr.bf16.mxu0 0
  %515 = vmatpush1.bf16.msra.mxu0 0
  %516 = vmatprep.subr.bf16.mxu0 0
  %517 = vmatpush1.bf16.msra.mxu0 0
  %518 = vmatprep.subr.bf16.mxu0 0
  %519 = vmatpush1.bf16.msra.mxu0 0
  %520 = vmatprep.subr.bf16.mxu0 0
  %521 = vmatpush1.bf16.msra.mxu0 0
  %522 = vmatprep.subr.bf16.mxu0 0
  %523 = vmatpush1.bf16.msra.mxu0 0
  %524 = vmatprep.subr.bf16.mxu0 0
  %525 = vmatpush1.bf16.msra.mxu0 0
  %526 = vmatprep.subr.bf16.mxu0 0
  %527 = vmatpush1.bf16.msra.mxu0 0
  %528 = vmatprep.subr.bf16.mxu0 0
  %529 = vmatpush1.bf16.msra.mxu0 0
  %530 = vmatprep.subr.bf16.mxu0 0
  %531 = vmatpush1.bf16.msra.mxu0 0
  %532 = vmatprep.subr.bf16.mxu0 0
  %533 = vmatpush1.bf16.msra.mxu0 0
  %534 = vmatprep.mubr.bf16.mxu0 0
  %535 = vmatmul.mubr.bf16.gmra.mrb[0].mxu0 %v166
  %v536 = vpop.f32.mrb[0].mxu0
  %v537 = vadd.f32 %v87, %v536
  %v538 = vpop.f32.mrb[0].mxu0
  %v539 = vpop.f32.mrb[0].mxu0
  %v540 = vadd.f32 %v92, %v539
  %v541 = vpop.f32.mrb[0].mxu0
  %542 = vmatprep.mubr.bf16.mxu0 0
  %543 = vmatmul.mubr.bf16.gmra.mrb[0].mxu0 %v169
  %v544 = vpop.f32.mrb[0].mxu0
  %v545 = vadd.f32 %v97, %v544
  %v546 = vpop.f32.mrb[0].mxu0
  %v547 = vpop.f32.mrb[0].mxu0
  %v548 = vadd.f32 %v102, %v547
  %v549 = vpop.f32.mrb[0].mxu0
  %550 = vmatprep.mubr.bf16.mxu0 0
  %551 = vmatmul.mubr.bf16.gmra.mrb[0].mxu0 %v172
  %v552 = vpop.f32.mrb[0].mxu0
  %v553 = vadd.f32 %v107, %v552
  %v554 = vpop.f32.mrb[0].mxu0
  %v555 = vpop.f32.mrb[0].mxu0
  %v556 = vadd.f32 %v112, %v555
  %v557 = vpop.f32.mrb[0].mxu0
  %558 = vmatprep.mubr.bf16.mxu0 0
  %559 = vmatmul.mubr.bf16.gmra.mrb[0].mxu0 %v175
  %v560 = vpop.f32.mrb[0].mxu0
  %v561 = vadd.f32 %v117, %v560
  %v562 = vpop.f32.mrb[0].mxu0
  %v563 = vpop.f32.mrb[0].mxu0
  %v564 = vadd.f32 %v122, %v563
  %v565 = vpop.f32.mrb[0].mxu0
  %566 = vmatprep.mubr.bf16.mxu0 0
  %567 = vmatmul.mubr.bf16.gmra.mrb[0].mxu0 %v178
  %v568 = vpop.f32.mrb[0].mxu0
  %v569 = vadd.f32 %v127, %v568
  %v570 = vpop.f32.mrb[0].mxu0
  %v571 = vpop.f32.mrb[0].mxu0
  %v572 = vadd.f32 %v132, %v571
  %v573 = vpop.f32.mrb[0].mxu0
  %574 = vmatprep.mubr.bf16.mxu0 0
  %575 = vmatmul.mubr.bf16.gmra.mrb[0].mxu0 %v181
  %v576 = vpop.f32.mrb[0].mxu0
  %v577 = vadd.f32 %v137, %v576
  %v578 = vpop.f32.mrb[0].mxu0
  %v579 = vpop.f32.mrb[0].mxu0
  %v580 = vadd.f32 %v142, %v579
  %v581 = vpop.f32.mrb[0].mxu0
  %582 = vmatprep.mubr.bf16.mxu0 0
  %583 = vmatmul.mubr.bf16.gmra.mrb[0].mxu0 %v184
  %v584 = vpop.f32.mrb[0].mxu0
  %v585 = vadd.f32 %v147, %v584
  %v586 = vpop.f32.mrb[0].mxu0
  %v587 = vpop.f32.mrb[0].mxu0
  %v588 = vadd.f32 %v152, %v587
  %v589 = vpop.f32.mrb[0].mxu0
  %590 = vmatprep.mubr.bf16.mxu0 0
  %591 = vmatmul.mubr.bf16.gmra.mrb[0].mxu0 %v187
  %v592 = vpop.f32.mrb[0].mxu0
  %v593 = vadd.f32 %v157, %v592
  %v594 = vpop.f32.mrb[0].mxu0
  %v595 = vpop.f32.mrb[0].mxu0
  %v596 = vadd.f32 %v162, %v595
  %v597 = vpop.f32.mrb[0].mxu0
  %598 = vdwg.mxu0
  %s599 = scalar_lea.vmem %s0, 32
  %v600 = vld [vmem:[%s599] sm:$0xff]
  %v601 = vpack.c.bf16 %v600, %v600
  %v603 = vsel %vm189, %v601, 0
  %605 = vmatprep.subr.bf16.mxu0 0
  %606 = vmatpush1.bf16.msra.mxu0 %v603
  %607 = vmatprep.subr.bf16.mxu0 0
  %608 = vmatpush1.bf16.msra.mxu0 0
  %609 = vmatprep.subr.bf16.mxu0 0
  %610 = vmatpush1.bf16.msra.mxu0 0
  %611 = vmatprep.subr.bf16.mxu0 0
  %612 = vmatpush1.bf16.msra.mxu0 0
  %613 = vmatprep.subr.bf16.mxu0 0
  %614 = vmatpush1.bf16.msra.mxu0 0
  %615 = vmatprep.subr.bf16.mxu0 0
  %616 = vmatpush1.bf16.msra.mxu0 0
  %617 = vmatprep.subr.bf16.mxu0 0
  %618 = vmatpush1.bf16.msra.mxu0 0
  %619 = vmatprep.subr.bf16.mxu0 0
  %620 = vmatpush1.bf16.msra.mxu0 0
  %621 = vmatprep.subr.bf16.mxu0 0
  %622 = vmatpush1.bf16.msra.mxu0 0
  %623 = vmatprep.subr.bf16.mxu0 0
  %624 = vmatpush1.bf16.msra.mxu0 0
  %625 = vmatprep.subr.bf16.mxu0 0
  %626 = vmatpush1.bf16.msra.mxu0 0
  %627 = vmatprep.subr.bf16.mxu0 0
  %628 = vmatpush1.bf16.msra.mxu0 0
  %629 = vmatprep.subr.bf16.mxu0 0
  %630 = vmatpush1.bf16.msra.mxu0 0
  %631 = vmatprep.subr.bf16.mxu0 0
  %632 = vmatpush1.bf16.msra.mxu0 0
  %633 = vmatprep.subr.bf16.mxu0 0
  %634 = vmatpush1.bf16.msra.mxu0 0
  %635 = vmatprep.subr.bf16.mxu0 0
  %636 = vmatpush1.bf16.msra.mxu0 0
  %637 = vmatprep.mubr.bf16.mxu0 0
  %638 = vmatmul.mubr.bf16.gmra.mrb[0].mxu0 %v166
  %v639 = vpop.f32.mrb[0].mxu0
  %v640 = vadd.f32 %v87, %v639
  %v641 = vpop.f32.mrb[0].mxu0
  %v642 = vpop.f32.mrb[0].mxu0
  %v643 = vadd.f32 %v92, %v642
  %v644 = vpop.f32.mrb[0].mxu0
  %645 = vmatprep.mubr.bf16.mxu0 0
  %646 = vmatmul.mubr.bf16.gmra.mrb[0].mxu0 %v169
  %v647 = vpop.f32.mrb[0].mxu0
  %v648 = vadd.f32 %v97, %v647
  %v649 = vpop.f32.mrb[0].mxu0
  %v650 = vpop.f32.mrb[0].mxu0
  %v651 = vadd.f32 %v102, %v650
  %v652 = vpop.f32.mrb[0].mxu0
  %653 = vmatprep.mubr.bf16.mxu0 0
  %654 = vmatmul.mubr.bf16.gmra.mrb[0].mxu0 %v172
  %v655 = vpop.f32.mrb[0].mxu0
  %v656 = vadd.f32 %v107, %v655
  %v657 = vpop.f32.mrb[0].mxu0
  %v658 = vpop.f32.mrb[0].mxu0
  %v659 = vadd.f32 %v112, %v658
  %v660 = vpop.f32.mrb[0].mxu0
  %661 = vmatprep.mubr.bf16.mxu0 0
  %662 = vmatmul.mubr.bf16.gmra.mrb[0].mxu0 %v175
  %v663 = vpop.f32.mrb[0].mxu0
  %v664 = vadd.f32 %v117, %v663
  %v665 = vpop.f32.mrb[0].mxu0
  %v666 = vpop.f32.mrb[0].mxu0
  %v667 = vadd.f32 %v122, %v666
  %v668 = vpop.f32.mrb[0].mxu0
  %669 = vmatprep.mubr.bf16.mxu0 0
  %670 = vmatmul.mubr.bf16.gmra.mrb[0].mxu0 %v178
  %v671 = vpop.f32.mrb[0].mxu0
  %v672 = vadd.f32 %v127, %v671
  %v673 = vpop.f32.mrb[0].mxu0
  %v674 = vpop.f32.mrb[0].mxu0
  %v675 = vadd.f32 %v132, %v674
  %v676 = vpop.f32.mrb[0].mxu0
  %677 = vmatprep.mubr.bf16.mxu0 0
  %678 = vmatmul.mubr.bf16.gmra.mrb[0].mxu0 %v181
  %v679 = vpop.f32.mrb[0].mxu0
  %v680 = vadd.f32 %v137, %v679
  %v681 = vpop.f32.mrb[0].mxu0
  %v682 = vpop.f32.mrb[0].mxu0
  %v683 = vadd.f32 %v142, %v682
  %v684 = vpop.f32.mrb[0].mxu0
  %685 = vmatprep.mubr.bf16.mxu0 0
  %686 = vmatmul.mubr.bf16.gmra.mrb[0].mxu0 %v184
  %v687 = vpop.f32.mrb[0].mxu0
  %v688 = vadd.f32 %v147, %v687
  %v689 = vpop.f32.mrb[0].mxu0
  %v690 = vpop.f32.mrb[0].mxu0
  %v691 = vadd.f32 %v152, %v690
  %v692 = vpop.f32.mrb[0].mxu0
  %693 = vmatprep.mubr.bf16.mxu0 0
  %694 = vmatmul.mubr.bf16.gmra.mrb[0].mxu0 %v187
  %v695 = vpop.f32.mrb[0].mxu0
  %v696 = vadd.f32 %v157, %v695
  %v697 = vpop.f32.mrb[0].mxu0
  %v698 = vpop.f32.mrb[0].mxu0
  %v699 = vadd.f32 %v162, %v698
  %v700 = vpop.f32.mrb[0].mxu0
  %701 = vdwg.mxu0
  %s702 = scalar_lea.vmem %s0, 40
  %v703 = vld [vmem:[%s702] sm:$0xff]
  %v704 = vpack.c.bf16 %v703, %v703
  %v706 = vsel %vm189, %v704, 0
  %708 = vmatprep.subr.bf16.mxu0 0
  %709 = vmatpush1.bf16.msra.mxu0 %v706
  %710 = vmatprep.subr.bf16.mxu0 0
  %711 = vmatpush1.bf16.msra.mxu0 0
  %712 = vmatprep.subr.bf16.mxu0 0
  %713 = vmatpush1.bf16.msra.mxu0 0
  %714 = vmatprep.subr.bf16.mxu0 0
  %715 = vmatpush1.bf16.msra.mxu0 0
  %716 = vmatprep.subr.bf16.mxu0 0
  %717 = vmatpush1.bf16.msra.mxu0 0
  %718 = vmatprep.subr.bf16.mxu0 0
  %719 = vmatpush1.bf16.msra.mxu0 0
  %720 = vmatprep.subr.bf16.mxu0 0
  %721 = vmatpush1.bf16.msra.mxu0 0
  %722 = vmatprep.subr.bf16.mxu0 0
  %723 = vmatpush1.bf16.msra.mxu0 0
  %724 = vmatprep.subr.bf16.mxu0 0
  %725 = vmatpush1.bf16.msra.mxu0 0
  %726 = vmatprep.subr.bf16.mxu0 0
  %727 = vmatpush1.bf16.msra.mxu0 0
  %728 = vmatprep.subr.bf16.mxu0 0
  %729 = vmatpush1.bf16.msra.mxu0 0
  %730 = vmatprep.subr.bf16.mxu0 0
  %731 = vmatpush1.bf16.msra.mxu0 0
  %732 = vmatprep.subr.bf16.mxu0 0
  %733 = vmatpush1.bf16.msra.mxu0 0
  %734 = vmatprep.subr.bf16.mxu0 0
  %735 = vmatpush1.bf16.msra.mxu0 0
  %736 = vmatprep.subr.bf16.mxu0 0
  %737 = vmatpush1.bf16.msra.mxu0 0
  %738 = vmatprep.subr.bf16.mxu0 0
  %739 = vmatpush1.bf16.msra.mxu0 0
  %740 = vmatprep.mubr.bf16.mxu0 0
  %741 = vmatmul.mubr.bf16.gmra.mrb[0].mxu0 %v166
  %v742 = vpop.f32.mrb[0].mxu0
  %v743 = vadd.f32 %v87, %v742
  %v744 = vpop.f32.mrb[0].mxu0
  %v745 = vpop.f32.mrb[0].mxu0
  %v746 = vadd.f32 %v92, %v745
  %v747 = vpop.f32.mrb[0].mxu0
  %748 = vmatprep.mubr.bf16.mxu0 0
  %749 = vmatmul.mubr.bf16.gmra.mrb[0].mxu0 %v169
  %v750 = vpop.f32.mrb[0].mxu0
  %v751 = vadd.f32 %v97, %v750
  %v752 = vpop.f32.mrb[0].mxu0
  %v753 = vpop.f32.mrb[0].mxu0
  %v754 = vadd.f32 %v102, %v753
  %v755 = vpop.f32.mrb[0].mxu0
  %756 = vmatprep.mubr.bf16.mxu0 0
  %757 = vmatmul.mubr.bf16.gmra.mrb[0].mxu0 %v172
  %v758 = vpop.f32.mrb[0].mxu0
  %v759 = vadd.f32 %v107, %v758
  %v760 = vpop.f32.mrb[0].mxu0
  %v761 = vpop.f32.mrb[0].mxu0
  %v762 = vadd.f32 %v112, %v761
  %v763 = vpop.f32.mrb[0].mxu0
  %764 = vmatprep.mubr.bf16.mxu0 0
  %765 = vmatmul.mubr.bf16.gmra.mrb[0].mxu0 %v175
  %v766 = vpop.f32.mrb[0].mxu0
  %v767 = vadd.f32 %v117, %v766
  %v768 = vpop.f32.mrb[0].mxu0
  %v769 = vpop.f32.mrb[0].mxu0
  %v770 = vadd.f32 %v122, %v769
  %v771 = vpop.f32.mrb[0].mxu0
  %772 = vmatprep.mubr.bf16.mxu0 0
  %773 = vmatmul.mubr.bf16.gmra.mrb[0].mxu0 %v178
  %v774 = vpop.f32.mrb[0].mxu0
  %v775 = vadd.f32 %v127, %v774
  %v776 = vpop.f32.mrb[0].mxu0
  %v777 = vpop.f32.mrb[0].mxu0
  %v778 = vadd.f32 %v132, %v777
  %v779 = vpop.f32.mrb[0].mxu0
  %780 = vmatprep.mubr.bf16.mxu0 0
  %781 = vmatmul.mubr.bf16.gmra.mrb[0].mxu0 %v181
  %v782 = vpop.f32.mrb[0].mxu0
  %v783 = vadd.f32 %v137, %v782
  %v784 = vpop.f32.mrb[0].mxu0
  %v785 = vpop.f32.mrb[0].mxu0
  %v786 = vadd.f32 %v142, %v785
  %v787 = vpop.f32.mrb[0].mxu0
  %788 = vmatprep.mubr.bf16.mxu0 0
  %789 = vmatmul.mubr.bf16.gmra.mrb[0].mxu0 %v184
  %v790 = vpop.f32.mrb[0].mxu0
  %v791 = vadd.f32 %v147, %v790
  %v792 = vpop.f32.mrb[0].mxu0
  %v793 = vpop.f32.mrb[0].mxu0
  %v794 = vadd.f32 %v152, %v793
  %v795 = vpop.f32.mrb[0].mxu0
  %796 = vmatprep.mubr.bf16.mxu0 0
  %797 = vmatmul.mubr.bf16.gmra.mrb[0].mxu0 %v187
  %v798 = vpop.f32.mrb[0].mxu0
  %v799 = vadd.f32 %v157, %v798
  %v800 = vpop.f32.mrb[0].mxu0
  %v801 = vpop.f32.mrb[0].mxu0
  %v802 = vadd.f32 %v162, %v801
  %v803 = vpop.f32.mrb[0].mxu0
  %804 = vdwg.mxu0
  %s805 = scalar_lea.vmem %s0, 48
  %v806 = vld [vmem:[%s805] sm:$0xff]
  %v807 = vpack.c.bf16 %v806, %v806
  %v809 = vsel %vm189, %v807, 0
  %811 = vmatprep.subr.bf16.mxu0 0
  %812 = vmatpush1.bf16.msra.mxu0 %v809
  %813 = vmatprep.subr.bf16.mxu0 0
  %814 = vmatpush1.bf16.msra.mxu0 0
  %815 = vmatprep.subr.bf16.mxu0 0
  %816 = vmatpush1.bf16.msra.mxu0 0
  %817 = vmatprep.subr.bf16.mxu0 0
  %818 = vmatpush1.bf16.msra.mxu0 0
  %819 = vmatprep.subr.bf16.mxu0 0
  %820 = vmatpush1.bf16.msra.mxu0 0
  %821 = vmatprep.subr.bf16.mxu0 0
  %822 = vmatpush1.bf16.msra.mxu0 0
  %823 = vmatprep.subr.bf16.mxu0 0
  %824 = vmatpush1.bf16.msra.mxu0 0
  %825 = vmatprep.subr.bf16.mxu0 0
  %826 = vmatpush1.bf16.msra.mxu0 0
  %827 = vmatprep.subr.bf16.mxu0 0
  %828 = vmatpush1.bf16.msra.mxu0 0
  %829 = vmatprep.subr.bf16.mxu0 0
  %830 = vmatpush1.bf16.msra.mxu0 0
  %831 = vmatprep.subr.bf16.mxu0 0
  %832 = vmatpush1.bf16.msra.mxu0 0
  %833 = vmatprep.subr.bf16.mxu0 0
  %834 = vmatpush1.bf16.msra.mxu0 0
  %835 = vmatprep.subr.bf16.mxu0 0
  %836 = vmatpush1.bf16.msra.mxu0 0
  %837 = vmatprep.subr.bf16.mxu0 0
  %838 = vmatpush1.bf16.msra.mxu0 0
  %839 = vmatprep.subr.bf16.mxu0 0
  %840 = vmatpush1.bf16.msra.mxu0 0
  %841 = vmatprep.subr.bf16.mxu0 0
  %842 = vmatpush1.bf16.msra.mxu0 0
  %843 = vmatprep.mubr.bf16.mxu0 0
  %844 = vmatmul.mubr.bf16.gmra.mrb[0].mxu0 %v166
  %v845 = vpop.f32.mrb[0].mxu0
  %v846 = vadd.f32 %v87, %v845
  %v847 = vpop.f32.mrb[0].mxu0
  %v848 = vpop.f32.mrb[0].mxu0
  %v849 = vadd.f32 %v92, %v848
  %v850 = vpop.f32.mrb[0].mxu0
  %851 = vmatprep.mubr.bf16.mxu0 0
  %852 = vmatmul.mubr.bf16.gmra.mrb[0].mxu0 %v169
  %v853 = vpop.f32.mrb[0].mxu0
  %v854 = vadd.f32 %v97, %v853
  %v855 = vpop.f32.mrb[0].mxu0
  %v856 = vpop.f32.mrb[0].mxu0
  %v857 = vadd.f32 %v102, %v856
  %v858 = vpop.f32.mrb[0].mxu0
  %859 = vmatprep.mubr.bf16.mxu0 0
  %860 = vmatmul.mubr.bf16.gmra.mrb[0].mxu0 %v172
  %v861 = vpop.f32.mrb[0].mxu0
  %v862 = vadd.f32 %v107, %v861
  %v863 = vpop.f32.mrb[0].mxu0
  %v864 = vpop.f32.mrb[0].mxu0
  %v865 = vadd.f32 %v112, %v864
  %v866 = vpop.f32.mrb[0].mxu0
  %867 = vmatprep.mubr.bf16.mxu0 0
  %868 = vmatmul.mubr.bf16.gmra.mrb[0].mxu0 %v175
  %v869 = vpop.f32.mrb[0].mxu0
  %v870 = vadd.f32 %v117, %v869
  %v871 = vpop.f32.mrb[0].mxu0
  %v872 = vpop.f32.mrb[0].mxu0
  %v873 = vadd.f32 %v122, %v872
  %v874 = vpop.f32.mrb[0].mxu0
  %875 = vmatprep.mubr.bf16.mxu0 0
  %876 = vmatmul.mubr.bf16.gmra.mrb[0].mxu0 %v178
  %v877 = vpop.f32.mrb[0].mxu0
  %v878 = vadd.f32 %v127, %v877
  %v879 = vpop.f32.mrb[0].mxu0
  %v880 = vpop.f32.mrb[0].mxu0
  %v881 = vadd.f32 %v132, %v880
  %v882 = vpop.f32.mrb[0].mxu0
  %883 = vmatprep.mubr.bf16.mxu0 0
  %884 = vmatmul.mubr.bf16.gmra.mrb[0].mxu0 %v181
  %v885 = vpop.f32.mrb[0].mxu0
  %v886 = vadd.f32 %v137, %v885
  %v887 = vpop.f32.mrb[0].mxu0
  %v888 = vpop.f32.mrb[0].mxu0
  %v889 = vadd.f32 %v142, %v888
  %v890 = vpop.f32.mrb[0].mxu0
  %891 = vmatprep.mubr.bf16.mxu0 0
  %892 = vmatmul.mubr.bf16.gmra.mrb[0].mxu0 %v184
  %v893 = vpop.f32.mrb[0].mxu0
  %v894 = vadd.f32 %v147, %v893
  %v895 = vpop.f32.mrb[0].mxu0
  %v896 = vpop.f32.mrb[0].mxu0
  %v897 = vadd.f32 %v152, %v896
  %v898 = vpop.f32.mrb[0].mxu0
  %899 = vmatprep.mubr.bf16.mxu0 0
  %900 = vmatmul.mubr.bf16.gmra.mrb[0].mxu0 %v187
  %v901 = vpop.f32.mrb[0].mxu0
  %v902 = vadd.f32 %v157, %v901
  %v903 = vpop.f32.mrb[0].mxu0
  %v904 = vpop.f32.mrb[0].mxu0
  %v905 = vadd.f32 %v162, %v904
  %v906 = vpop.f32.mrb[0].mxu0
  %907 = vdwg.mxu0
  %s908 = scalar_lea.vmem %s0, 56
  %v909 = vld [vmem:[%s908] sm:$0xff]
  %v910 = vpack.c.bf16 %v909, %v909
  %v912 = vsel %vm189, %v910, 0
  %914 = vmatprep.subr.bf16.mxu0 0
  %915 = vmatpush1.bf16.msra.mxu0 %v912
  %916 = vmatprep.subr.bf16.mxu0 0
  %917 = vmatpush1.bf16.msra.mxu0 0
  %918 = vmatprep.subr.bf16.mxu0 0
  %919 = vmatpush1.bf16.msra.mxu0 0
  %920 = vmatprep.subr.bf16.mxu0 0
  %921 = vmatpush1.bf16.msra.mxu0 0
  %922 = vmatprep.subr.bf16.mxu0 0
  %923 = vmatpush1.bf16.msra.mxu0 0
  %924 = vmatprep.subr.bf16.mxu0 0
  %925 = vmatpush1.bf16.msra.mxu0 0
  %926 = vmatprep.subr.bf16.mxu0 0
  %927 = vmatpush1.bf16.msra.mxu0 0
  %928 = vmatprep.subr.bf16.mxu0 0
  %929 = vmatpush1.bf16.msra.mxu0 0
  %930 = vmatprep.subr.bf16.mxu0 0
  %931 = vmatpush1.bf16.msra.mxu0 0
  %932 = vmatprep.subr.bf16.mxu0 0
  %933 = vmatpush1.bf16.msra.mxu0 0
  %934 = vmatprep.subr.bf16.mxu0 0
  %935 = vmatpush1.bf16.msra.mxu0 0
  %936 = vmatprep.subr.bf16.mxu0 0
  %937 = vmatpush1.bf16.msra.mxu0 0
  %938 = vmatprep.subr.bf16.mxu0 0
  %939 = vmatpush1.bf16.msra.mxu0 0
  %940 = vmatprep.subr.bf16.mxu0 0
  %941 = vmatpush1.bf16.msra.mxu0 0
  %942 = vmatprep.subr.bf16.mxu0 0
  %943 = vmatpush1.bf16.msra.mxu0 0
  %944 = vmatprep.subr.bf16.mxu0 0
  %945 = vmatpush1.bf16.msra.mxu0 0
  %946 = vmatprep.mubr.bf16.mxu0 0
  %947 = vmatmul.mubr.bf16.gmra.mrb[0].mxu0 %v166
  %v948 = vpop.f32.mrb[0].mxu0
  %v949 = vadd.f32 %v87, %v948
  %v950 = vpop.f32.mrb[0].mxu0
  %v951 = vpop.f32.mrb[0].mxu0
  %v952 = vadd.f32 %v92, %v951
  %v953 = vpop.f32.mrb[0].mxu0
  %954 = vmatprep.mubr.bf16.mxu0 0
  %955 = vmatmul.mubr.bf16.gmra.mrb[0].mxu0 %v169
  %v956 = vpop.f32.mrb[0].mxu0
  %v957 = vadd.f32 %v97, %v956
  %v958 = vpop.f32.mrb[0].mxu0
  %v959 = vpop.f32.mrb[0].mxu0
  %v960 = vadd.f32 %v102, %v959
  %v961 = vpop.f32.mrb[0].mxu0
  %962 = vmatprep.mubr.bf16.mxu0 0
  %963 = vmatmul.mubr.bf16.gmra.mrb[0].mxu0 %v172
  %v964 = vpop.f32.mrb[0].mxu0
  %v965 = vadd.f32 %v107, %v964
  %v966 = vpop.f32.mrb[0].mxu0
  %v967 = vpop.f32.mrb[0].mxu0
  %v968 = vadd.f32 %v112, %v967
  %v969 = vpop.f32.mrb[0].mxu0
  %970 = vmatprep.mubr.bf16.mxu0 0
  %971 = vmatmul.mubr.bf16.gmra.mrb[0].mxu0 %v175
  %v972 = vpop.f32.mrb[0].mxu0
  %v973 = vadd.f32 %v117, %v972
  %v974 = vpop.f32.mrb[0].mxu0
  %v975 = vpop.f32.mrb[0].mxu0
  %v976 = vadd.f32 %v122, %v975
  %v977 = vpop.f32.mrb[0].mxu0
  %978 = vmatprep.mubr.bf16.mxu0 0
  %979 = vmatmul.mubr.bf16.gmra.mrb[0].mxu0 %v178
  %v980 = vpop.f32.mrb[0].mxu0
  %v981 = vadd.f32 %v127, %v980
  %v982 = vpop.f32.mrb[0].mxu0
  %v983 = vpop.f32.mrb[0].mxu0
  %v984 = vadd.f32 %v132, %v983
  %v985 = vpop.f32.mrb[0].mxu0
  %986 = vmatprep.mubr.bf16.mxu0 0
  %987 = vmatmul.mubr.bf16.gmra.mrb[0].mxu0 %v181
  %v988 = vpop.f32.mrb[0].mxu0
  %v989 = vadd.f32 %v137, %v988
  %v990 = vpop.f32.mrb[0].mxu0
  %v991 = vpop.f32.mrb[0].mxu0
  %v992 = vadd.f32 %v142, %v991
  %v993 = vpop.f32.mrb[0].mxu0
  %994 = vmatprep.mubr.bf16.mxu0 0
  %995 = vmatmul.mubr.bf16.gmra.mrb[0].mxu0 %v184
  %v996 = vpop.f32.mrb[0].mxu0
  %v997 = vadd.f32 %v147, %v996
  %v998 = vpop.f32.mrb[0].mxu0
  %v999 = vpop.f32.mrb[0].mxu0
  %v1000 = vadd.f32 %v152, %v999
  %v1001 = vpop.f32.mrb[0].mxu0
  %1002 = vmatprep.mubr.bf16.mxu0 0
  %1003 = vmatmul.mubr.bf16.gmra.mrb[0].mxu0 %v187
  %v1004 = vpop.f32.mrb[0].mxu0
  %v1005 = vadd.f32 %v157, %v1004
  %v1006 = vpop.f32.mrb[0].mxu0
  %v1007 = vpop.f32.mrb[0].mxu0
  %v1008 = vadd.f32 %v162, %v1007
  %v1009 = vpop.f32.mrb[0].mxu0
  %1010 = vdwg.mxu0
  %vm1011 = vcmask 261120
  %v1013 = vsel %vm1011, %v58, 0
  %v1016 = vsel %vm1011, %v59, 0
  %v1019 = vsel %vm1011, %v60, 0
  %v1022 = vsel %vm1011, %v61, 0
  %v1025 = vsel %vm1011, %v62, 0
  %v1028 = vsel %vm1011, %v63, 0
  %v1031 = vsel %vm1011, %v64, 0
  %v1034 = vsel %vm1011, %v65, 0
  %1036 = vmatprep.subr.bf16.mxu0 0
  %1037 = vmatpush1.bf16.msra.mxu0 0
  %1038 = vmatprep.subr.bf16.mxu0 0
  %1039 = vmatpush1.bf16.msra.mxu0 0
  %1040 = vmatprep.subr.bf16.mxu0 0
  %1041 = vmatpush1.bf16.msra.mxu0 0
  %1042 = vmatprep.subr.bf16.mxu0 0
  %1043 = vmatpush1.bf16.msra.mxu0 0
  %1044 = vmatprep.subr.bf16.mxu0 0
  %1045 = vmatpush1.bf16.msra.mxu0 0
  %1046 = vmatprep.subr.bf16.mxu0 0
  %1047 = vmatpush1.bf16.msra.mxu0 0
  %1048 = vmatprep.subr.bf16.mxu0 0
  %1049 = vmatpush1.bf16.msra.mxu0 0
  %1050 = vmatprep.subr.bf16.mxu0 0
  %1051 = vmatpush1.bf16.msra.mxu0 0
  %1052 = vmatprep.subr.bf16.mxu0 0
  %1053 = vmatpush1.bf16.msra.mxu0 0
  %1054 = vmatprep.subr.bf16.mxu0 0
  %1055 = vmatpush1.bf16.msra.mxu0 0
  %1056 = vmatprep.subr.bf16.mxu0 0
  %1057 = vmatpush1.bf16.msra.mxu0 0
  %1058 = vmatprep.subr.bf16.mxu0 0
  %1059 = vmatpush1.bf16.msra.mxu0 0
  %1060 = vmatprep.subr.bf16.mxu0 0
  %1061 = vmatpush1.bf16.msra.mxu0 0
  %1062 = vmatprep.subr.bf16.mxu0 0
  %1063 = vmatpush1.bf16.msra.mxu0 0
  %1064 = vmatprep.subr.bf16.mxu0 0
  %1065 = vmatpush1.bf16.msra.mxu0 0
  %1066 = vmatprep.subr.bf16.mxu0 0
  %1067 = vmatpush1.bf16.msra.mxu0 0
  %1068 = vmatprep.mubr.bf16.mxu0 0
  %1069 = vmatmul.mubr.bf16.gmra.mrb[0].mxu0 %v1013
  %v1070 = vpop.f32.mrb[0].mxu0
  %v1071 = vadd.f32 0.0, %v1070
  %v1072 = vpop.f32.mrb[0].mxu0
  %v1073 = vpop.f32.mrb[0].mxu0
  %v1074 = vadd.f32 0.0, %v1073
  %v1075 = vpop.f32.mrb[0].mxu0
  %1076 = vmatprep.mubr.bf16.mxu0 0
  %1077 = vmatmul.mubr.bf16.gmra.mrb[0].mxu0 %v1016
  %v1078 = vpop.f32.mrb[0].mxu0
  %v1079 = vadd.f32 0.0, %v1078
  %v1080 = vpop.f32.mrb[0].mxu0
  %v1081 = vpop.f32.mrb[0].mxu0
  %v1082 = vadd.f32 0.0, %v1081
  %v1083 = vpop.f32.mrb[0].mxu0
  %1084 = vmatprep.mubr.bf16.mxu0 0
  %1085 = vmatmul.mubr.bf16.gmra.mrb[0].mxu0 %v1019
  %v1086 = vpop.f32.mrb[0].mxu0
  %v1087 = vadd.f32 0.0, %v1086
  %v1088 = vpop.f32.mrb[0].mxu0
  %v1089 = vpop.f32.mrb[0].mxu0
  %v1090 = vadd.f32 0.0, %v1089
  %v1091 = vpop.f32.mrb[0].mxu0
  %1092 = vmatprep.mubr.bf16.mxu0 0
  %1093 = vmatmul.mubr.bf16.gmra.mrb[0].mxu0 %v1022
  %v1094 = vpop.f32.mrb[0].mxu0
  %v1095 = vadd.f32 0.0, %v1094
  %v1096 = vpop.f32.mrb[0].mxu0
  %v1097 = vpop.f32.mrb[0].mxu0
  %v1098 = vadd.f32 0.0, %v1097
  %v1099 = vpop.f32.mrb[0].mxu0
  %1100 = vmatprep.mubr.bf16.mxu0 0
  %1101 = vmatmul.mubr.bf16.gmra.mrb[0].mxu0 %v1025
  %v1102 = vpop.f32.mrb[0].mxu0
  %v1103 = vadd.f32 0.0, %v1102
  %v1104 = vpop.f32.mrb[0].mxu0
  %v1105 = vpop.f32.mrb[0].mxu0
  %v1106 = vadd.f32 0.0, %v1105
  %v1107 = vpop.f32.mrb[0].mxu0
  %1108 = vmatprep.mubr.bf16.mxu0 0
  %1109 = vmatmul.mubr.bf16.gmra.mrb[0].mxu0 %v1028
  %v1110 = vpop.f32.mrb[0].mxu0
  %v1111 = vadd.f32 0.0, %v1110
  %v1112 = vpop.f32.mrb[0].mxu0
  %v1113 = vpop.f32.mrb[0].mxu0
  %v1114 = vadd.f32 0.0, %v1113
  %v1115 = vpop.f32.mrb[0].mxu0
  %1116 = vmatprep.mubr.bf16.mxu0 0
  %1117 = vmatmul.mubr.bf16.gmra.mrb[0].mxu0 %v1031
  %v1118 = vpop.f32.mrb[0].mxu0
  %v1119 = vadd.f32 0.0, %v1118
  %v1120 = vpop.f32.mrb[0].mxu0
  %v1121 = vpop.f32.mrb[0].mxu0
  %v1122 = vadd.f32 0.0, %v1121
  %v1123 = vpop.f32.mrb[0].mxu0
  %1124 = vmatprep.mubr.bf16.mxu0 0
  %1125 = vmatmul.mubr.bf16.gmra.mrb[0].mxu0 %v1034
  %v1126 = vpop.f32.mrb[0].mxu0
  %v1127 = vadd.f32 0.0, %v1126
  %v1128 = vpop.f32.mrb[0].mxu0
  %v1129 = vpop.f32.mrb[0].mxu0
  %v1130 = vadd.f32 0.0, %v1129
  %v1131 = vpop.f32.mrb[0].mxu0
  %1132 = vdwg.mxu0
  %v1133 = vadd.f32 %v228, %v1071
  %v1134 = vadd.f32 %v231, %v1074
  %v1135 = vadd.f32 %v236, %v1079
  %v1136 = vadd.f32 %v239, %v1082
  %v1137 = vadd.f32 %v244, %v1087
  %v1138 = vadd.f32 %v247, %v1090
  %v1139 = vadd.f32 %v252, %v1095
  %v1140 = vadd.f32 %v255, %v1098
  %v1141 = vadd.f32 %v260, %v1103
  %v1142 = vadd.f32 %v263, %v1106
  %v1143 = vadd.f32 %v268, %v1111
  %v1144 = vadd.f32 %v271, %v1114
  %v1145 = vadd.f32 %v276, %v1119
  %v1146 = vadd.f32 %v279, %v1122
  %v1147 = vadd.f32 %v284, %v1127
  %v1148 = vadd.f32 %v287, %v1130
  %v1149 = vsub.f32 0.0, %v1133
  %v1150 = vsub.f32 0.0, %v1134
  %v1151 = vsub.f32 0.0, %v1135
  %v1152 = vsub.f32 0.0, %v1136
  %v1153 = vmul.f32 %v1149, 1.442695
  %v1154 = vpow.pop %v1153
  %v1155 = vmul.f32 %v1150, 1.442695
  %v1156 = vpow.pop %v1155
  %v1157 = vmul.f32 %v1151, 1.442695
  %v1158 = vpow.pop %v1157
  %v1159 = vmul.f32 %v1152, 1.442695
  %v1160 = vpow.pop %v1159
  %v1161 = vadd.f32 %v1154, 1.0
  %v1162 = vadd.f32 %v1156, 1.0
  %v1163 = vadd.f32 %v1158, 1.0
  %v1164 = vadd.f32 %v1160, 1.0
  %v1165 = vrcp.pop %v1161
  %v1166 = vmul.f32 1.0, %v1165
  %v1167 = vrcp.pop %v1162
  %v1168 = vmul.f32 1.0, %v1167
  %v1169 = vrcp.pop %v1163
  %v1170 = vmul.f32 1.0, %v1169
  %v1171 = vrcp.pop %v1164
  %v1172 = vmul.f32 1.0, %v1171
  %v1173 = vsub.f32 0.0, %v1137
  %v1174 = vsub.f32 0.0, %v1138
  %v1175 = vsub.f32 0.0, %v1139
  %v1176 = vsub.f32 0.0, %v1140
  %v1177 = vmul.f32 %v1173, 1.442695
  %v1178 = vpow.pop %v1177
  %v1179 = vmul.f32 %v1174, 1.442695
  %v1180 = vpow.pop %v1179
  %v1181 = vmul.f32 %v1175, 1.442695
  %v1182 = vpow.pop %v1181
  %v1183 = vmul.f32 %v1176, 1.442695
  %v1184 = vpow.pop %v1183
  %v1185 = vadd.f32 %v1178, 1.0
  %v1186 = vadd.f32 %v1180, 1.0
  %v1187 = vadd.f32 %v1182, 1.0
  %v1188 = vadd.f32 %v1184, 1.0
  %v1189 = vrcp.pop %v1185
  %v1190 = vmul.f32 1.0, %v1189
  %v1191 = vrcp.pop %v1186
  %v1192 = vmul.f32 1.0, %v1191
  %v1193 = vrcp.pop %v1187
  %v1194 = vmul.f32 1.0, %v1193
  %v1195 = vrcp.pop %v1188
  %v1196 = vmul.f32 1.0, %v1195
  %v1197 = vtanh.pop %v1141
  %v1198 = vtanh.pop %v1142
  %v1199 = vtanh.pop %v1143
  %v1200 = vtanh.pop %v1144
  %v1201 = vsub.f32 0.0, %v1145
  %v1202 = vsub.f32 0.0, %v1146
  %v1203 = vsub.f32 0.0, %v1147
  %v1204 = vsub.f32 0.0, %v1148
  %v1205 = vmul.f32 %v1201, 1.442695
  %v1206 = vpow.pop %v1205
  %v1207 = vmul.f32 %v1202, 1.442695
  %v1208 = vpow.pop %v1207
  %v1209 = vmul.f32 %v1203, 1.442695
  %v1210 = vpow.pop %v1209
  %v1211 = vmul.f32 %v1204, 1.442695
  %v1212 = vpow.pop %v1211
  %v1213 = vadd.f32 %v1206, 1.0
  %v1214 = vadd.f32 %v1208, 1.0
  %v1215 = vadd.f32 %v1210, 1.0
  %v1216 = vadd.f32 %v1212, 1.0
  %v1217 = vrcp.pop %v1213
  %v1218 = vmul.f32 1.0, %v1217
  %v1219 = vrcp.pop %v1214
  %v1220 = vmul.f32 1.0, %v1219
  %v1221 = vrcp.pop %v1215
  %v1222 = vmul.f32 1.0, %v1221
  %v1223 = vrcp.pop %v1216
  %v1224 = vmul.f32 1.0, %v1223
  %v1225 = vmul.f32 %v1190, 0.0
  %v1226 = vmul.f32 %v1192, 0.0
  %v1227 = vmul.f32 %v1194, 0.0
  %v1228 = vmul.f32 %v1196, 0.0
  %v1229 = vmul.f32 %v1166, %v1197
  %v1230 = vmul.f32 %v1168, %v1198
  %v1231 = vmul.f32 %v1170, %v1199
  %v1232 = vmul.f32 %v1172, %v1200
  %v1233 = vadd.f32 %v1225, %v1229
  %v1234 = vadd.f32 %v1226, %v1230
  %v1235 = vadd.f32 %v1227, %v1231
  %v1236 = vadd.f32 %v1228, %v1232
  %v1237 = vtanh.pop %v1233
  %v1238 = vtanh.pop %v1234
  %v1239 = vtanh.pop %v1235
  %v1240 = vtanh.pop %v1236
  %v1241 = vmul.f32 %v1218, %v1237
  %v1242 = vmul.f32 %v1220, %v1238
  %v1243 = vmul.f32 %v1222, %v1239
  %v1244 = vmul.f32 %v1224, %v1240
  %1245 = vst [vmem:[#allocation2] sm:$0xff] %v1241
  %1246 = vst [vmem:[#allocation2 + $0x8] sm:$0xff] %v1242
  %1247 = vst [vmem:[#allocation2 + $0x10] sm:$0xff] %v1243
  %1248 = vst [vmem:[#allocation2 + $0x18] sm:$0xff] %v1244
  %v1249 = vpack.c.bf16 %v1242, %v1241
  %v1250 = vpack.c.bf16 %v1244, %v1243
  %1251 = vmatprep.subr.bf16.mxu0 0
  %1252 = vmatpush1.bf16.msra.mxu0 %v1249
  %1253 = vmatprep.subr.bf16.mxu0 0
  %1254 = vmatpush1.bf16.msra.mxu0 %v1250
  %1255 = vmatprep.subr.bf16.mxu0 0
  %1256 = vmatpush1.bf16.msra.mxu0 0
  %1257 = vmatprep.subr.bf16.mxu0 0
  %1258 = vmatpush1.bf16.msra.mxu0 0
  %1259 = vmatprep.subr.bf16.mxu0 0
  %1260 = vmatpush1.bf16.msra.mxu0 0
  %1261 = vmatprep.subr.bf16.mxu0 0
  %1262 = vmatpush1.bf16.msra.mxu0 0
  %1263 = vmatprep.subr.bf16.mxu0 0
  %1264 = vmatpush1.bf16.msra.mxu0 0
  %1265 = vmatprep.subr.bf16.mxu0 0
  %1266 = vmatpush1.bf16.msra.mxu0 0
  %1267 = vmatprep.subr.bf16.mxu0 0
  %1268 = vmatpush1.bf16.msra.mxu0 0
  %1269 = vmatprep.subr.bf16.mxu0 0
  %1270 = vmatpush1.bf16.msra.mxu0 0
  %1271 = vmatprep.subr.bf16.mxu0 0
  %1272 = vmatpush1.bf16.msra.mxu0 0
  %1273 = vmatprep.subr.bf16.mxu0 0
  %1274 = vmatpush1.bf16.msra.mxu0 0
  %1275 = vmatprep.subr.bf16.mxu0 0
  %1276 = vmatpush1.bf16.msra.mxu0 0
  %1277 = vmatprep.subr.bf16.mxu0 0
  %1278 = vmatpush1.bf16.msra.mxu0 0
  %1279 = vmatprep.subr.bf16.mxu0 0
  %1280 = vmatpush1.bf16.msra.mxu0 0
  %1281 = vmatprep.subr.bf16.mxu0 0
  %1282 = vmatpush1.bf16.msra.mxu0 0
  %1283 = vmatprep.mubr.bf16.mxu0 0
  %1284 = vmatmul.mubr.bf16.gmra.mrb[0].mxu0 %v1013
  %v1285 = vpop.f32.mrb[0].mxu0
  %v1286 = vadd.f32 0.0, %v1285
  %v1287 = vpop.f32.mrb[0].mxu0
  %v1288 = vpop.f32.mrb[0].mxu0
  %v1289 = vadd.f32 0.0, %v1288
  %v1290 = vpop.f32.mrb[0].mxu0
  %1291 = vmatprep.mubr.bf16.mxu0 0
  %1292 = vmatmul.mubr.bf16.gmra.mrb[0].mxu0 %v1016
  %v1293 = vpop.f32.mrb[0].mxu0
  %v1294 = vadd.f32 0.0, %v1293
  %v1295 = vpop.f32.mrb[0].mxu0
  %v1296 = vpop.f32.mrb[0].mxu0
  %v1297 = vadd.f32 0.0, %v1296
  %v1298 = vpop.f32.mrb[0].mxu0
  %1299 = vmatprep.mubr.bf16.mxu0 0
  %1300 = vmatmul.mubr.bf16.gmra.mrb[0].mxu0 %v1019
  %v1301 = vpop.f32.mrb[0].mxu0
  %v1302 = vadd.f32 0.0, %v1301
  %v1303 = vpop.f32.mrb[0].mxu0
  %v1304 = vpop.f32.mrb[0].mxu0
  %v1305 = vadd.f32 0.0, %v1304
  %v1306 = vpop.f32.mrb[0].mxu0
  %1307 = vmatprep.mubr.bf16.mxu0 0
  %1308 = vmatmul.mubr.bf16.gmra.mrb[0].mxu0 %v1022
  %v1309 = vpop.f32.mrb[0].mxu0
  %v1310 = vadd.f32 0.0, %v1309
  %v1311 = vpop.f32.mrb[0].mxu0
  %v1312 = vpop.f32.mrb[0].mxu0
  %v1313 = vadd.f32 0.0, %v1312
  %v1314 = vpop.f32.mrb[0].mxu0
  %1315 = vmatprep.mubr.bf16.mxu0 0
  %1316 = vmatmul.mubr.bf16.gmra.mrb[0].mxu0 %v1025
  %v1317 = vpop.f32.mrb[0].mxu0
  %v1318 = vadd.f32 0.0, %v1317
  %v1319 = vpop.f32.mrb[0].mxu0
  %v1320 = vpop.f32.mrb[0].mxu0
  %v1321 = vadd.f32 0.0, %v1320
  %v1322 = vpop.f32.mrb[0].mxu0
  %1323 = vmatprep.mubr.bf16.mxu0 0
  %1324 = vmatmul.mubr.bf16.gmra.mrb[0].mxu0 %v1028
  %v1325 = vpop.f32.mrb[0].mxu0
  %v1326 = vadd.f32 0.0, %v1325
  %v1327 = vpop.f32.mrb[0].mxu0
  %v1328 = vpop.f32.mrb[0].mxu0
  %v1329 = vadd.f32 0.0, %v1328
  %v1330 = vpop.f32.mrb[0].mxu0
  %1331 = vmatprep.mubr.bf16.mxu0 0
  %1332 = vmatmul.mubr.bf16.gmra.mrb[0].mxu0 %v1031
  %v1333 = vpop.f32.mrb[0].mxu0
  %v1334 = vadd.f32 0.0, %v1333
  %v1335 = vpop.f32.mrb[0].mxu0
  %v1336 = vpop.f32.mrb[0].mxu0
  %v1337 = vadd.f32 0.0, %v1336
  %v1338 = vpop.f32.mrb[0].mxu0
  %1339 = vmatprep.mubr.bf16.mxu0 0
  %1340 = vmatmul.mubr.bf16.gmra.mrb[0].mxu0 %v1034
  %v1341 = vpop.f32.mrb[0].mxu0
  %v1342 = vadd.f32 0.0, %v1341
  %v1343 = vpop.f32.mrb[0].mxu0
  %v1344 = vpop.f32.mrb[0].mxu0
  %v1345 = vadd.f32 0.0, %v1344
  %v1346 = vpop.f32.mrb[0].mxu0
  %1347 = vdwg.mxu0
  %v1348 = vadd.f32 %v331, %v1286
  %v1349 = vadd.f32 %v334, %v1289
  %v1350 = vadd.f32 %v339, %v1294
  %v1351 = vadd.f32 %v342, %v1297
  %v1352 = vadd.f32 %v347, %v1302
  %v1353 = vadd.f32 %v350, %v1305
  %v1354 = vadd.f32 %v355, %v1310
  %v1355 = vadd.f32 %v358, %v1313
  %v1356 = vadd.f32 %v363, %v1318
  %v1357 = vadd.f32 %v366, %v1321
  %v1358 = vadd.f32 %v371, %v1326
  %v1359 = vadd.f32 %v374, %v1329
  %v1360 = vadd.f32 %v379, %v1334
  %v1361 = vadd.f32 %v382, %v1337
  %v1362 = vadd.f32 %v387, %v1342
  %v1363 = vadd.f32 %v390, %v1345
  %v1364 = vsub.f32 0.0, %v1348
  %v1365 = vsub.f32 0.0, %v1349
  %v1366 = vsub.f32 0.0, %v1350
  %v1367 = vsub.f32 0.0, %v1351
  %v1368 = vmul.f32 %v1364, 1.442695
  %v1369 = vpow.pop %v1368
  %v1370 = vmul.f32 %v1365, 1.442695
  %v1371 = vpow.pop %v1370
  %v1372 = vmul.f32 %v1366, 1.442695
  %v1373 = vpow.pop %v1372
  %v1374 = vmul.f32 %v1367, 1.442695
  %v1375 = vpow.pop %v1374
  %v1376 = vadd.f32 %v1369, 1.0
  %v1377 = vadd.f32 %v1371, 1.0
  %v1378 = vadd.f32 %v1373, 1.0
  %v1379 = vadd.f32 %v1375, 1.0
  %v1380 = vrcp.pop %v1376
  %v1381 = vmul.f32 1.0, %v1380
  %v1382 = vrcp.pop %v1377
  %v1383 = vmul.f32 1.0, %v1382
  %v1384 = vrcp.pop %v1378
  %v1385 = vmul.f32 1.0, %v1384
  %v1386 = vrcp.pop %v1379
  %v1387 = vmul.f32 1.0, %v1386
  %v1388 = vsub.f32 0.0, %v1352
  %v1389 = vsub.f32 0.0, %v1353
  %v1390 = vsub.f32 0.0, %v1354
  %v1391 = vsub.f32 0.0, %v1355
  %v1392 = vmul.f32 %v1388, 1.442695
  %v1393 = vpow.pop %v1392
  %v1394 = vmul.f32 %v1389, 1.442695
  %v1395 = vpow.pop %v1394
  %v1396 = vmul.f32 %v1390, 1.442695
  %v1397 = vpow.pop %v1396
  %v1398 = vmul.f32 %v1391, 1.442695
  %v1399 = vpow.pop %v1398
  %v1400 = vadd.f32 %v1393, 1.0
  %v1401 = vadd.f32 %v1395, 1.0
  %v1402 = vadd.f32 %v1397, 1.0
  %v1403 = vadd.f32 %v1399, 1.0
  %v1404 = vrcp.pop %v1400
  %v1405 = vmul.f32 1.0, %v1404
  %v1406 = vrcp.pop %v1401
  %v1407 = vmul.f32 1.0, %v1406
  %v1408 = vrcp.pop %v1402
  %v1409 = vmul.f32 1.0, %v1408
  %v1410 = vrcp.pop %v1403
  %v1411 = vmul.f32 1.0, %v1410
  %v1412 = vtanh.pop %v1356
  %v1413 = vtanh.pop %v1357
  %v1414 = vtanh.pop %v1358
  %v1415 = vtanh.pop %v1359
  %v1416 = vsub.f32 0.0, %v1360
  %v1417 = vsub.f32 0.0, %v1361
  %v1418 = vsub.f32 0.0, %v1362
  %v1419 = vsub.f32 0.0, %v1363
  %v1420 = vmul.f32 %v1416, 1.442695
  %v1421 = vpow.pop %v1420
  %v1422 = vmul.f32 %v1417, 1.442695
  %v1423 = vpow.pop %v1422
  %v1424 = vmul.f32 %v1418, 1.442695
  %v1425 = vpow.pop %v1424
  %v1426 = vmul.f32 %v1419, 1.442695
  %v1427 = vpow.pop %v1426
  %v1428 = vadd.f32 %v1421, 1.0
  %v1429 = vadd.f32 %v1423, 1.0
  %v1430 = vadd.f32 %v1425, 1.0
  %v1431 = vadd.f32 %v1427, 1.0
  %v1432 = vrcp.pop %v1428
  %v1433 = vmul.f32 1.0, %v1432
  %v1434 = vrcp.pop %v1429
  %v1435 = vmul.f32 1.0, %v1434
  %v1436 = vrcp.pop %v1430
  %v1437 = vmul.f32 1.0, %v1436
  %v1438 = vrcp.pop %v1431
  %v1439 = vmul.f32 1.0, %v1438
  %v1440 = vmul.f32 %v1405, %v1233
  %v1441 = vmul.f32 %v1407, %v1234
  %v1442 = vmul.f32 %v1409, %v1235
  %v1443 = vmul.f32 %v1411, %v1236
  %v1444 = vmul.f32 %v1381, %v1412
  %v1445 = vmul.f32 %v1383, %v1413
  %v1446 = vmul.f32 %v1385, %v1414
  %v1447 = vmul.f32 %v1387, %v1415
  %v1448 = vadd.f32 %v1440, %v1444
  %v1449 = vadd.f32 %v1441, %v1445
  %v1450 = vadd.f32 %v1442, %v1446
  %v1451 = vadd.f32 %v1443, %v1447
  %v1452 = vtanh.pop %v1448
  %v1453 = vtanh.pop %v1449
  %v1454 = vtanh.pop %v1450
  %v1455 = vtanh.pop %v1451
  %v1456 = vmul.f32 %v1433, %v1452
  %v1457 = vmul.f32 %v1435, %v1453
  %v1458 = vmul.f32 %v1437, %v1454
  %v1459 = vmul.f32 %v1439, %v1455
  %1460 = vst [vmem:[#allocation2 + $0x20] sm:$0xff] %v1456
  %1461 = vst [vmem:[#allocation2 + $0x28] sm:$0xff] %v1457
  %1462 = vst [vmem:[#allocation2 + $0x30] sm:$0xff] %v1458
  %1463 = vst [vmem:[#allocation2 + $0x38] sm:$0xff] %v1459
  %v1464 = vpack.c.bf16 %v1457, %v1456
  %v1465 = vpack.c.bf16 %v1459, %v1458
  %1466 = vmatprep.subr.bf16.mxu0 0
  %1467 = vmatpush1.bf16.msra.mxu0 %v1464
  %1468 = vmatprep.subr.bf16.mxu0 0
  %1469 = vmatpush1.bf16.msra.mxu0 %v1465
  %1470 = vmatprep.subr.bf16.mxu0 0
  %1471 = vmatpush1.bf16.msra.mxu0 0
  %1472 = vmatprep.subr.bf16.mxu0 0
  %1473 = vmatpush1.bf16.msra.mxu0 0
  %1474 = vmatprep.subr.bf16.mxu0 0
  %1475 = vmatpush1.bf16.msra.mxu0 0
  %1476 = vmatprep.subr.bf16.mxu0 0
  %1477 = vmatpush1.bf16.msra.mxu0 0
  %1478 = vmatprep.subr.bf16.mxu0 0
  %1479 = vmatpush1.bf16.msra.mxu0 0
  %1480 = vmatprep.subr.bf16.mxu0 0
  %1481 = vmatpush1.bf16.msra.mxu0 0
  %1482 = vmatprep.subr.bf16.mxu0 0
  %1483 = vmatpush1.bf16.msra.mxu0 0
  %1484 = vmatprep.subr.bf16.mxu0 0
  %1485 = vmatpush1.bf16.msra.mxu0 0
  %1486 = vmatprep.subr.bf16.mxu0 0
  %1487 = vmatpush1.bf16.msra.mxu0 0
  %1488 = vmatprep.subr.bf16.mxu0 0
  %1489 = vmatpush1.bf16.msra.mxu0 0
  %1490 = vmatprep.subr.bf16.mxu0 0
  %1491 = vmatpush1.bf16.msra.mxu0 0
  %1492 = vmatprep.subr.bf16.mxu0 0
  %1493 = vmatpush1.bf16.msra.mxu0 0
  %1494 = vmatprep.subr.bf16.mxu0 0
  %1495 = vmatpush1.bf16.msra.mxu0 0
  %1496 = vmatprep.subr.bf16.mxu0 0
  %1497 = vmatpush1.bf16.msra.mxu0 0
  %1498 = vmatprep.mubr.bf16.mxu0 0
  %1499 = vmatmul.mubr.bf16.gmra.mrb[0].mxu0 %v1013
  %v1500 = vpop.f32.mrb[0].mxu0
  %v1501 = vadd.f32 0.0, %v1500
  %v1502 = vpop.f32.mrb[0].mxu0
  %v1503 = vpop.f32.mrb[0].mxu0
  %v1504 = vadd.f32 0.0, %v1503
  %v1505 = vpop.f32.mrb[0].mxu0
  %1506 = vmatprep.mubr.bf16.mxu0 0
  %1507 = vmatmul.mubr.bf16.gmra.mrb[0].mxu0 %v1016
  %v1508 = vpop.f32.mrb[0].mxu0
  %v1509 = vadd.f32 0.0, %v1508
  %v1510 = vpop.f32.mrb[0].mxu0
  %v1511 = vpop.f32.mrb[0].mxu0
  %v1512 = vadd.f32 0.0, %v1511
  %v1513 = vpop.f32.mrb[0].mxu0
  %1514 = vmatprep.mubr.bf16.mxu0 0
  %1515 = vmatmul.mubr.bf16.gmra.mrb[0].mxu0 %v1019
  %v1516 = vpop.f32.mrb[0].mxu0
  %v1517 = vadd.f32 0.0, %v1516
  %v1518 = vpop.f32.mrb[0].mxu0
  %v1519 = vpop.f32.mrb[0].mxu0
  %v1520 = vadd.f32 0.0, %v1519
  %v1521 = vpop.f32.mrb[0].mxu0
  %1522 = vmatprep.mubr.bf16.mxu0 0
  %1523 = vmatmul.mubr.bf16.gmra.mrb[0].mxu0 %v1022
  %v1524 = vpop.f32.mrb[0].mxu0
  %v1525 = vadd.f32 0.0, %v1524
  %v1526 = vpop.f32.mrb[0].mxu0
  %v1527 = vpop.f32.mrb[0].mxu0
  %v1528 = vadd.f32 0.0, %v1527
  %v1529 = vpop.f32.mrb[0].mxu0
  %1530 = vmatprep.mubr.bf16.mxu0 0
  %1531 = vmatmul.mubr.bf16.gmra.mrb[0].mxu0 %v1025
  %v1532 = vpop.f32.mrb[0].mxu0
  %v1533 = vadd.f32 0.0, %v1532
  %v1534 = vpop.f32.mrb[0].mxu0
  %v1535 = vpop.f32.mrb[0].mxu0
  %v1536 = vadd.f32 0.0, %v1535
  %v1537 = vpop.f32.mrb[0].mxu0
  %1538 = vmatprep.mubr.bf16.mxu0 0
  %1539 = vmatmul.mubr.bf16.gmra.mrb[0].mxu0 %v1028
  %v1540 = vpop.f32.mrb[0].mxu0
  %v1541 = vadd.f32 0.0, %v1540
  %v1542 = vpop.f32.mrb[0].mxu0
  %v1543 = vpop.f32.mrb[0].mxu0
  %v1544 = vadd.f32 0.0, %v1543
  %v1545 = vpop.f32.mrb[0].mxu0
  %1546 = vmatprep.mubr.bf16.mxu0 0
  %1547 = vmatmul.mubr.bf16.gmra.mrb[0].mxu0 %v1031
  %v1548 = vpop.f32.mrb[0].mxu0
  %v1549 = vadd.f32 0.0, %v1548
  %v1550 = vpop.f32.mrb[0].mxu0
  %v1551 = vpop.f32.mrb[0].mxu0
  %v1552 = vadd.f32 0.0, %v1551
  %v1553 = vpop.f32.mrb[0].mxu0
  %1554 = vmatprep.mubr.bf16.mxu0 0
  %1555 = vmatmul.mubr.bf16.gmra.mrb[0].mxu0 %v1034
  %v1556 = vpop.f32.mrb[0].mxu0
  %v1557 = vadd.f32 0.0, %v1556
  %v1558 = vpop.f32.mrb[0].mxu0
  %v1559 = vpop.f32.mrb[0].mxu0
  %v1560 = vadd.f32 0.0, %v1559
  %v1561 = vpop.f32.mrb[0].mxu0
  %1562 = vdwg.mxu0
  %v1563 = vadd.f32 %v434, %v1501
  %v1564 = vadd.f32 %v437, %v1504
  %v1565 = vadd.f32 %v442, %v1509
  %v1566 = vadd.f32 %v445, %v1512
  %v1567 = vadd.f32 %v450, %v1517
  %v1568 = vadd.f32 %v453, %v1520
  %v1569 = vadd.f32 %v458, %v1525
  %v1570 = vadd.f32 %v461, %v1528
  %v1571 = vadd.f32 %v466, %v1533
  %v1572 = vadd.f32 %v469, %v1536
  %v1573 = vadd.f32 %v474, %v1541
  %v1574 = vadd.f32 %v477, %v1544
  %v1575 = vadd.f32 %v482, %v1549
  %v1576 = vadd.f32 %v485, %v1552
  %v1577 = vadd.f32 %v490, %v1557
  %v1578 = vadd.f32 %v493, %v1560
  %v1579 = vsub.f32 0.0, %v1563
  %v1580 = vsub.f32 0.0, %v1564
  %v1581 = vsub.f32 0.0, %v1565
  %v1582 = vsub.f32 0.0, %v1566
  %v1583 = vmul.f32 %v1579, 1.442695
  %v1584 = vpow.pop %v1583
  %v1585 = vmul.f32 %v1580, 1.442695
  %v1586 = vpow.pop %v1585
  %v1587 = vmul.f32 %v1581, 1.442695
  %v1588 = vpow.pop %v1587
  %v1589 = vmul.f32 %v1582, 1.442695
  %v1590 = vpow.pop %v1589
  %v1591 = vadd.f32 %v1584, 1.0
  %v1592 = vadd.f32 %v1586, 1.0
  %v1593 = vadd.f32 %v1588, 1.0
  %v1594 = vadd.f32 %v1590, 1.0
  %v1595 = vrcp.pop %v1591
  %v1596 = vmul.f32 1.0, %v1595
  %v1597 = vrcp.pop %v1592
  %v1598 = vmul.f32 1.0, %v1597
  %v1599 = vrcp.pop %v1593
  %v1600 = vmul.f32 1.0, %v1599
  %v1601 = vrcp.pop %v1594
  %v1602 = vmul.f32 1.0, %v1601
  %v1603 = vsub.f32 0.0, %v1567
  %v1604 = vsub.f32 0.0, %v1568
  %v1605 = vsub.f32 0.0, %v1569
  %v1606 = vsub.f32 0.0, %v1570
  %v1607 = vmul.f32 %v1603, 1.442695
  %v1608 = vpow.pop %v1607
  %v1609 = vmul.f32 %v1604, 1.442695
  %v1610 = vpow.pop %v1609
  %v1611 = vmul.f32 %v1605, 1.442695
  %v1612 = vpow.pop %v1611
  %v1613 = vmul.f32 %v1606, 1.442695
  %v1614 = vpow.pop %v1613
  %v1615 = vadd.f32 %v1608, 1.0
  %v1616 = vadd.f32 %v1610, 1.0
  %v1617 = vadd.f32 %v1612, 1.0
  %v1618 = vadd.f32 %v1614, 1.0
  %v1619 = vrcp.pop %v1615
  %v1620 = vmul.f32 1.0, %v1619
  %v1621 = vrcp.pop %v1616
  %v1622 = vmul.f32 1.0, %v1621
  %v1623 = vrcp.pop %v1617
  %v1624 = vmul.f32 1.0, %v1623
  %v1625 = vrcp.pop %v1618
  %v1626 = vmul.f32 1.0, %v1625
  %v1627 = vtanh.pop %v1571
  %v1628 = vtanh.pop %v1572
  %v1629 = vtanh.pop %v1573
  %v1630 = vtanh.pop %v1574
  %v1631 = vsub.f32 0.0, %v1575
  %v1632 = vsub.f32 0.0, %v1576
  %v1633 = vsub.f32 0.0, %v1577
  %v1634 = vsub.f32 0.0, %v1578
  %v1635 = vmul.f32 %v1631, 1.442695
  %v1636 = vpow.pop %v1635
  %v1637 = vmul.f32 %v1632, 1.442695
  %v1638 = vpow.pop %v1637
  %v1639 = vmul.f32 %v1633, 1.442695
  %v1640 = vpow.pop %v1639
  %v1641 = vmul.f32 %v1634, 1.442695
  %v1642 = vpow.pop %v1641
  %v1643 = vadd.f32 %v1636, 1.0
  %v1644 = vadd.f32 %v1638, 1.0
  %v1645 = vadd.f32 %v1640, 1.0
  %v1646 = vadd.f32 %v1642, 1.0
  %v1647 = vrcp.pop %v1643
  %v1648 = vmul.f32 1.0, %v1647
  %v1649 = vrcp.pop %v1644
  %v1650 = vmul.f32 1.0, %v1649
  %v1651 = vrcp.pop %v1645
  %v1652 = vmul.f32 1.0, %v1651
  %v1653 = vrcp.pop %v1646
  %v1654 = vmul.f32 1.0, %v1653
  %v1655 = vmul.f32 %v1620, %v1448
  %v1656 = vmul.f32 %v1622, %v1449
  %v1657 = vmul.f32 %v1624, %v1450
  %v1658 = vmul.f32 %v1626, %v1451
  %v1659 = vmul.f32 %v1596, %v1627
  %v1660 = vmul.f32 %v1598, %v1628
  %v1661 = vmul.f32 %v1600, %v1629
  %v1662 = vmul.f32 %v1602, %v1630
  %v1663 = vadd.f32 %v1655, %v1659
  %v1664 = vadd.f32 %v1656, %v1660
  %v1665 = vadd.f32 %v1657, %v1661
  %v1666 = vadd.f32 %v1658, %v1662
  %v1667 = vtanh.pop %v1663
  %v1668 = vtanh.pop %v1664
  %v1669 = vtanh.pop %v1665
  %v1670 = vtanh.pop %v1666
  %v1671 = vmul.f32 %v1648, %v1667
  %v1672 = vmul.f32 %v1650, %v1668
  %v1673 = vmul.f32 %v1652, %v1669
  %v1674 = vmul.f32 %v1654, %v1670
  %1675 = vst [vmem:[#allocation2 + $0x40] sm:$0xff] %v1671
  %1676 = vst [vmem:[#allocation2 + $0x48] sm:$0xff] %v1672
  %1677 = vst [vmem:[#allocation2 + $0x50] sm:$0xff] %v1673
  %1678 = vst [vmem:[#allocation2 + $0x58] sm:$0xff] %v1674
  %v1679 = vpack.c.bf16 %v1672, %v1671
  %v1680 = vpack.c.bf16 %v1674, %v1673
  %1681 = vmatprep.subr.bf16.mxu0 0
  %1682 = vmatpush1.bf16.msra.mxu0 %v1679
  %1683 = vmatprep.subr.bf16.mxu0 0
  %1684 = vmatpush1.bf16.msra.mxu0 %v1680
  %1685 = vmatprep.subr.bf16.mxu0 0
  %1686 = vmatpush1.bf16.msra.mxu0 0
  %1687 = vmatprep.subr.bf16.mxu0 0
  %1688 = vmatpush1.bf16.msra.mxu0 0
  %1689 = vmatprep.subr.bf16.mxu0 0
  %1690 = vmatpush1.bf16.msra.mxu0 0
  %1691 = vmatprep.subr.bf16.mxu0 0
  %1692 = vmatpush1.bf16.msra.mxu0 0
  %1693 = vmatprep.subr.bf16.mxu0 0
  %1694 = vmatpush1.bf16.msra.mxu0 0
  %1695 = vmatprep.subr.bf16.mxu0 0
  %1696 = vmatpush1.bf16.msra.mxu0 0
  %1697 = vmatprep.subr.bf16.mxu0 0
  %1698 = vmatpush1.bf16.msra.mxu0 0
  %1699 = vmatprep.subr.bf16.mxu0 0
  %1700 = vmatpush1.bf16.msra.mxu0 0
  %1701 = vmatprep.subr.bf16.mxu0 0
  %1702 = vmatpush1.bf16.msra.mxu0 0
  %1703 = vmatprep.subr.bf16.mxu0 0
  %1704 = vmatpush1.bf16.msra.mxu0 0
  %1705 = vmatprep.subr.bf16.mxu0 0
  %1706 = vmatpush1.bf16.msra.mxu0 0
  %1707 = vmatprep.subr.bf16.mxu0 0
  %1708 = vmatpush1.bf16.msra.mxu0 0
  %1709 = vmatprep.subr.bf16.mxu0 0
  %1710 = vmatpush1.bf16.msra.mxu0 0
  %1711 = vmatprep.subr.bf16.mxu0 0
  %1712 = vmatpush1.bf16.msra.mxu0 0
  %1713 = vmatprep.mubr.bf16.mxu0 0
  %1714 = vmatmul.mubr.bf16.gmra.mrb[0].mxu0 %v1013
  %v1715 = vpop.f32.mrb[0].mxu0
  %v1716 = vadd.f32 0.0, %v1715
  %v1717 = vpop.f32.mrb[0].mxu0
  %v1718 = vpop.f32.mrb[0].mxu0
  %v1719 = vadd.f32 0.0, %v1718
  %v1720 = vpop.f32.mrb[0].mxu0
  %1721 = vmatprep.mubr.bf16.mxu0 0
  %1722 = vmatmul.mubr.bf16.gmra.mrb[0].mxu0 %v1016
  %v1723 = vpop.f32.mrb[0].mxu0
  %v1724 = vadd.f32 0.0, %v1723
  %v1725 = vpop.f32.mrb[0].mxu0
  %v1726 = vpop.f32.mrb[0].mxu0
  %v1727 = vadd.f32 0.0, %v1726
  %v1728 = vpop.f32.mrb[0].mxu0
  %1729 = vmatprep.mubr.bf16.mxu0 0
  %1730 = vmatmul.mubr.bf16.gmra.mrb[0].mxu0 %v1019
  %v1731 = vpop.f32.mrb[0].mxu0
  %v1732 = vadd.f32 0.0, %v1731
  %v1733 = vpop.f32.mrb[0].mxu0
  %v1734 = vpop.f32.mrb[0].mxu0
  %v1735 = vadd.f32 0.0, %v1734
  %v1736 = vpop.f32.mrb[0].mxu0
  %1737 = vmatprep.mubr.bf16.mxu0 0
  %1738 = vmatmul.mubr.bf16.gmra.mrb[0].mxu0 %v1022
  %v1739 = vpop.f32.mrb[0].mxu0
  %v1740 = vadd.f32 0.0, %v1739
  %v1741 = vpop.f32.mrb[0].mxu0
  %v1742 = vpop.f32.mrb[0].mxu0
  %v1743 = vadd.f32 0.0, %v1742
  %v1744 = vpop.f32.mrb[0].mxu0
  %1745 = vmatprep.mubr.bf16.mxu0 0
  %1746 = vmatmul.mubr.bf16.gmra.mrb[0].mxu0 %v1025
  %v1747 = vpop.f32.mrb[0].mxu0
  %v1748 = vadd.f32 0.0, %v1747
  %v1749 = vpop.f32.mrb[0].mxu0
  %v1750 = vpop.f32.mrb[0].mxu0
  %v1751 = vadd.f32 0.0, %v1750
  %v1752 = vpop.f32.mrb[0].mxu0
  %1753 = vmatprep.mubr.bf16.mxu0 0
  %1754 = vmatmul.mubr.bf16.gmra.mrb[0].mxu0 %v1028
  %v1755 = vpop.f32.mrb[0].mxu0
  %v1756 = vadd.f32 0.0, %v1755
  %v1757 = vpop.f32.mrb[0].mxu0
  %v1758 = vpop.f32.mrb[0].mxu0
  %v1759 = vadd.f32 0.0, %v1758
  %v1760 = vpop.f32.mrb[0].mxu0
  %1761 = vmatprep.mubr.bf16.mxu0 0
  %1762 = vmatmul.mubr.bf16.gmra.mrb[0].mxu0 %v1031
  %v1763 = vpop.f32.mrb[0].mxu0
  %v1764 = vadd.f32 0.0, %v1763
  %v1765 = vpop.f32.mrb[0].mxu0
  %v1766 = vpop.f32.mrb[0].mxu0
  %v1767 = vadd.f32 0.0, %v1766
  %v1768 = vpop.f32.mrb[0].mxu0
  %1769 = vmatprep.mubr.bf16.mxu0 0
  %1770 = vmatmul.mubr.bf16.gmra.mrb[0].mxu0 %v1034
  %v1771 = vpop.f32.mrb[0].mxu0
  %v1772 = vadd.f32 0.0, %v1771
  %v1773 = vpop.f32.mrb[0].mxu0
  %v1774 = vpop.f32.mrb[0].mxu0
  %v1775 = vadd.f32 0.0, %v1774
  %v1776 = vpop.f32.mrb[0].mxu0
  %1777 = vdwg.mxu0
  %v1778 = vadd.f32 %v537, %v1716
  %v1779 = vadd.f32 %v540, %v1719
  %v1780 = vadd.f32 %v545, %v1724
  %v1781 = vadd.f32 %v548, %v1727
  %v1782 = vadd.f32 %v553, %v1732
  %v1783 = vadd.f32 %v556, %v1735
  %v1784 = vadd.f32 %v561, %v1740
  %v1785 = vadd.f32 %v564, %v1743
  %v1786 = vadd.f32 %v569, %v1748
  %v1787 = vadd.f32 %v572, %v1751
  %v1788 = vadd.f32 %v577, %v1756
  %v1789 = vadd.f32 %v580, %v1759
  %v1790 = vadd.f32 %v585, %v1764
  %v1791 = vadd.f32 %v588, %v1767
  %v1792 = vadd.f32 %v593, %v1772
  %v1793 = vadd.f32 %v596, %v1775
  %v1794 = vsub.f32 0.0, %v1778
  %v1795 = vsub.f32 0.0, %v1779
  %v1796 = vsub.f32 0.0, %v1780
  %v1797 = vsub.f32 0.0, %v1781
  %v1798 = vmul.f32 %v1794, 1.442695
  %v1799 = vpow.pop %v1798
  %v1800 = vmul.f32 %v1795, 1.442695
  %v1801 = vpow.pop %v1800
  %v1802 = vmul.f32 %v1796, 1.442695
  %v1803 = vpow.pop %v1802
  %v1804 = vmul.f32 %v1797, 1.442695
  %v1805 = vpow.pop %v1804
  %v1806 = vadd.f32 %v1799, 1.0
  %v1807 = vadd.f32 %v1801, 1.0
  %v1808 = vadd.f32 %v1803, 1.0
  %v1809 = vadd.f32 %v1805, 1.0
  %v1810 = vrcp.pop %v1806
  %v1811 = vmul.f32 1.0, %v1810
  %v1812 = vrcp.pop %v1807
  %v1813 = vmul.f32 1.0, %v1812
  %v1814 = vrcp.pop %v1808
  %v1815 = vmul.f32 1.0, %v1814
  %v1816 = vrcp.pop %v1809
  %v1817 = vmul.f32 1.0, %v1816
  %v1818 = vsub.f32 0.0, %v1782
  %v1819 = vsub.f32 0.0, %v1783
  %v1820 = vsub.f32 0.0, %v1784
  %v1821 = vsub.f32 0.0, %v1785
  %v1822 = vmul.f32 %v1818, 1.442695
  %v1823 = vpow.pop %v1822
  %v1824 = vmul.f32 %v1819, 1.442695
  %v1825 = vpow.pop %v1824
  %v1826 = vmul.f32 %v1820, 1.442695
  %v1827 = vpow.pop %v1826
  %v1828 = vmul.f32 %v1821, 1.442695
  %v1829 = vpow.pop %v1828
  %v1830 = vadd.f32 %v1823, 1.0
  %v1831 = vadd.f32 %v1825, 1.0
  %v1832 = vadd.f32 %v1827, 1.0
  %v1833 = vadd.f32 %v1829, 1.0
  %v1834 = vrcp.pop %v1830
  %v1835 = vmul.f32 1.0, %v1834
  %v1836 = vrcp.pop %v1831
  %v1837 = vmul.f32 1.0, %v1836
  %v1838 = vrcp.pop %v1832
  %v1839 = vmul.f32 1.0, %v1838
  %v1840 = vrcp.pop %v1833
  %v1841 = vmul.f32 1.0, %v1840
  %v1842 = vtanh.pop %v1786
  %v1843 = vtanh.pop %v1787
  %v1844 = vtanh.pop %v1788
  %v1845 = vtanh.pop %v1789
  %v1846 = vsub.f32 0.0, %v1790
  %v1847 = vsub.f32 0.0, %v1791
  %v1848 = vsub.f32 0.0, %v1792
  %v1849 = vsub.f32 0.0, %v1793
  %v1850 = vmul.f32 %v1846, 1.442695
  %v1851 = vpow.pop %v1850
  %v1852 = vmul.f32 %v1847, 1.442695
  %v1853 = vpow.pop %v1852
  %v1854 = vmul.f32 %v1848, 1.442695
  %v1855 = vpow.pop %v1854
  %v1856 = vmul.f32 %v1849, 1.442695
  %v1857 = vpow.pop %v1856
  %v1858 = vadd.f32 %v1851, 1.0
  %v1859 = vadd.f32 %v1853, 1.0
  %v1860 = vadd.f32 %v1855, 1.0
  %v1861 = vadd.f32 %v1857, 1.0
  %v1862 = vrcp.pop %v1858
  %v1863 = vmul.f32 1.0, %v1862
  %v1864 = vrcp.pop %v1859
  %v1865 = vmul.f32 1.0, %v1864
  %v1866 = vrcp.pop %v1860
  %v1867 = vmul.f32 1.0, %v1866
  %v1868 = vrcp.pop %v1861
  %v1869 = vmul.f32 1.0, %v1868
  %v1870 = vmul.f32 %v1835, %v1663
  %v1871 = vmul.f32 %v1837, %v1664
  %v1872 = vmul.f32 %v1839, %v1665
  %v1873 = vmul.f32 %v1841, %v1666
  %v1874 = vmul.f32 %v1811, %v1842
  %v1875 = vmul.f32 %v1813, %v1843
  %v1876 = vmul.f32 %v1815, %v1844
  %v1877 = vmul.f32 %v1817, %v1845
  %v1878 = vadd.f32 %v1870, %v1874
  %v1879 = vadd.f32 %v1871, %v1875
  %v1880 = vadd.f32 %v1872, %v1876
  %v1881 = vadd.f32 %v1873, %v1877
  %v1882 = vtanh.pop %v1878
  %v1883 = vtanh.pop %v1879
  %v1884 = vtanh.pop %v1880
  %v1885 = vtanh.pop %v1881
  %v1886 = vmul.f32 %v1863, %v1882
  %v1887 = vmul.f32 %v1865, %v1883
  %v1888 = vmul.f32 %v1867, %v1884
  %v1889 = vmul.f32 %v1869, %v1885
  %1890 = vst [vmem:[#allocation2 + $0x60] sm:$0xff] %v1886
  %1891 = vst [vmem:[#allocation2 + $0x68] sm:$0xff] %v1887
  %1892 = vst [vmem:[#allocation2 + $0x70] sm:$0xff] %v1888
  %1893 = vst [vmem:[#allocation2 + $0x78] sm:$0xff] %v1889
  %v1894 = vpack.c.bf16 %v1887, %v1886
  %v1895 = vpack.c.bf16 %v1889, %v1888
  %1896 = vmatprep.subr.bf16.mxu0 0
  %1897 = vmatpush1.bf16.msra.mxu0 %v1894
  %1898 = vmatprep.subr.bf16.mxu0 0
  %1899 = vmatpush1.bf16.msra.mxu0 %v1895
  %1900 = vmatprep.subr.bf16.mxu0 0
  %1901 = vmatpush1.bf16.msra.mxu0 0
  %1902 = vmatprep.subr.bf16.mxu0 0
  %1903 = vmatpush1.bf16.msra.mxu0 0
  %1904 = vmatprep.subr.bf16.mxu0 0
  %1905 = vmatpush1.bf16.msra.mxu0 0
  %1906 = vmatprep.subr.bf16.mxu0 0
  %1907 = vmatpush1.bf16.msra.mxu0 0
  %1908 = vmatprep.subr.bf16.mxu0 0
  %1909 = vmatpush1.bf16.msra.mxu0 0
  %1910 = vmatprep.subr.bf16.mxu0 0
  %1911 = vmatpush1.bf16.msra.mxu0 0
  %1912 = vmatprep.subr.bf16.mxu0 0
  %1913 = vmatpush1.bf16.msra.mxu0 0
  %1914 = vmatprep.subr.bf16.mxu0 0
  %1915 = vmatpush1.bf16.msra.mxu0 0
  %1916 = vmatprep.subr.bf16.mxu0 0
  %1917 = vmatpush1.bf16.msra.mxu0 0
  %1918 = vmatprep.subr.bf16.mxu0 0
  %1919 = vmatpush1.bf16.msra.mxu0 0
  %1920 = vmatprep.subr.bf16.mxu0 0
  %1921 = vmatpush1.bf16.msra.mxu0 0
  %1922 = vmatprep.subr.bf16.mxu0 0
  %1923 = vmatpush1.bf16.msra.mxu0 0
  %1924 = vmatprep.subr.bf16.mxu0 0
  %1925 = vmatpush1.bf16.msra.mxu0 0
  %1926 = vmatprep.subr.bf16.mxu0 0
  %1927 = vmatpush1.bf16.msra.mxu0 0
  %1928 = vmatprep.mubr.bf16.mxu0 0
  %1929 = vmatmul.mubr.bf16.gmra.mrb[0].mxu0 %v1013
  %v1930 = vpop.f32.mrb[0].mxu0
  %v1931 = vadd.f32 0.0, %v1930
  %v1932 = vpop.f32.mrb[0].mxu0
  %v1933 = vpop.f32.mrb[0].mxu0
  %v1934 = vadd.f32 0.0, %v1933
  %v1935 = vpop.f32.mrb[0].mxu0
  %1936 = vmatprep.mubr.bf16.mxu0 0
  %1937 = vmatmul.mubr.bf16.gmra.mrb[0].mxu0 %v1016
  %v1938 = vpop.f32.mrb[0].mxu0
  %v1939 = vadd.f32 0.0, %v1938
  %v1940 = vpop.f32.mrb[0].mxu0
  %v1941 = vpop.f32.mrb[0].mxu0
  %v1942 = vadd.f32 0.0, %v1941
  %v1943 = vpop.f32.mrb[0].mxu0
  %1944 = vmatprep.mubr.bf16.mxu0 0
  %1945 = vmatmul.mubr.bf16.gmra.mrb[0].mxu0 %v1019
  %v1946 = vpop.f32.mrb[0].mxu0
  %v1947 = vadd.f32 0.0, %v1946
  %v1948 = vpop.f32.mrb[0].mxu0
  %v1949 = vpop.f32.mrb[0].mxu0
  %v1950 = vadd.f32 0.0, %v1949
  %v1951 = vpop.f32.mrb[0].mxu0
  %1952 = vmatprep.mubr.bf16.mxu0 0
  %1953 = vmatmul.mubr.bf16.gmra.mrb[0].mxu0 %v1022
  %v1954 = vpop.f32.mrb[0].mxu0
  %v1955 = vadd.f32 0.0, %v1954
  %v1956 = vpop.f32.mrb[0].mxu0
  %v1957 = vpop.f32.mrb[0].mxu0
  %v1958 = vadd.f32 0.0, %v1957
  %v1959 = vpop.f32.mrb[0].mxu0
  %1960 = vmatprep.mubr.bf16.mxu0 0
  %1961 = vmatmul.mubr.bf16.gmra.mrb[0].mxu0 %v1025
  %v1962 = vpop.f32.mrb[0].mxu0
  %v1963 = vadd.f32 0.0, %v1962
  %v1964 = vpop.f32.mrb[0].mxu0
  %v1965 = vpop.f32.mrb[0].mxu0
  %v1966 = vadd.f32 0.0, %v1965
  %v1967 = vpop.f32.mrb[0].mxu0
  %1968 = vmatprep.mubr.bf16.mxu0 0
  %1969 = vmatmul.mubr.bf16.gmra.mrb[0].mxu0 %v1028
  %v1970 = vpop.f32.mrb[0].mxu0
  %v1971 = vadd.f32 0.0, %v1970
  %v1972 = vpop.f32.mrb[0].mxu0
  %v1973 = vpop.f32.mrb[0].mxu0
  %v1974 = vadd.f32 0.0, %v1973
  %v1975 = vpop.f32.mrb[0].mxu0
  %1976 = vmatprep.mubr.bf16.mxu0 0
  %1977 = vmatmul.mubr.bf16.gmra.mrb[0].mxu0 %v1031
  %v1978 = vpop.f32.mrb[0].mxu0
  %v1979 = vadd.f32 0.0, %v1978
  %v1980 = vpop.f32.mrb[0].mxu0
  %v1981 = vpop.f32.mrb[0].mxu0
  %v1982 = vadd.f32 0.0, %v1981
  %v1983 = vpop.f32.mrb[0].mxu0
  %1984 = vmatprep.mubr.bf16.mxu0 0
  %1985 = vmatmul.mubr.bf16.gmra.mrb[0].mxu0 %v1034
  %v1986 = vpop.f32.mrb[0].mxu0
  %v1987 = vadd.f32 0.0, %v1986
  %v1988 = vpop.f32.mrb[0].mxu0
  %v1989 = vpop.f32.mrb[0].mxu0
  %v1990 = vadd.f32 0.0, %v1989
  %v1991 = vpop.f32.mrb[0].mxu0
  %1992 = vdwg.mxu0
  %v1993 = vadd.f32 %v640, %v1931
  %v1994 = vadd.f32 %v643, %v1934
  %v1995 = vadd.f32 %v648, %v1939
  %v1996 = vadd.f32 %v651, %v1942
  %v1997 = vadd.f32 %v656, %v1947
  %v1998 = vadd.f32 %v659, %v1950
  %v1999 = vadd.f32 %v664, %v1955
  %v2000 = vadd.f32 %v667, %v1958
  %v2001 = vadd.f32 %v672, %v1963
  %v2002 = vadd.f32 %v675, %v1966
  %v2003 = vadd.f32 %v680, %v1971
  %v2004 = vadd.f32 %v683, %v1974
  %v2005 = vadd.f32 %v688, %v1979
  %v2006 = vadd.f32 %v691, %v1982
  %v2007 = vadd.f32 %v696, %v1987
  %v2008 = vadd.f32 %v699, %v1990
  %v2009 = vsub.f32 0.0, %v1993
  %v2010 = vsub.f32 0.0, %v1994
  %v2011 = vsub.f32 0.0, %v1995
  %v2012 = vsub.f32 0.0, %v1996
  %v2013 = vmul.f32 %v2009, 1.442695
  %v2014 = vpow.pop %v2013
  %v2015 = vmul.f32 %v2010, 1.442695
  %v2016 = vpow.pop %v2015
  %v2017 = vmul.f32 %v2011, 1.442695
  %v2018 = vpow.pop %v2017
  %v2019 = vmul.f32 %v2012, 1.442695
  %v2020 = vpow.pop %v2019
  %v2021 = vadd.f32 %v2014, 1.0
  %v2022 = vadd.f32 %v2016, 1.0
  %v2023 = vadd.f32 %v2018, 1.0
  %v2024 = vadd.f32 %v2020, 1.0
  %v2025 = vrcp.pop %v2021
  %v2026 = vmul.f32 1.0, %v2025
  %v2027 = vrcp.pop %v2022
  %v2028 = vmul.f32 1.0, %v2027
  %v2029 = vrcp.pop %v2023
  %v2030 = vmul.f32 1.0, %v2029
  %v2031 = vrcp.pop %v2024
  %v2032 = vmul.f32 1.0, %v2031
  %v2033 = vsub.f32 0.0, %v1997
  %v2034 = vsub.f32 0.0, %v1998
  %v2035 = vsub.f32 0.0, %v1999
  %v2036 = vsub.f32 0.0, %v2000
  %v2037 = vmul.f32 %v2033, 1.442695
  %v2038 = vpow.pop %v2037
  %v2039 = vmul.f32 %v2034, 1.442695
  %v2040 = vpow.pop %v2039
  %v2041 = vmul.f32 %v2035, 1.442695
  %v2042 = vpow.pop %v2041
  %v2043 = vmul.f32 %v2036, 1.442695
  %v2044 = vpow.pop %v2043
  %v2045 = vadd.f32 %v2038, 1.0
  %v2046 = vadd.f32 %v2040, 1.0
  %v2047 = vadd.f32 %v2042, 1.0
  %v2048 = vadd.f32 %v2044, 1.0
  %v2049 = vrcp.pop %v2045
  %v2050 = vmul.f32 1.0, %v2049
  %v2051 = vrcp.pop %v2046
  %v2052 = vmul.f32 1.0, %v2051
  %v2053 = vrcp.pop %v2047
  %v2054 = vmul.f32 1.0, %v2053
  %v2055 = vrcp.pop %v2048
  %v2056 = vmul.f32 1.0, %v2055
  %v2057 = vtanh.pop %v2001
  %v2058 = vtanh.pop %v2002
  %v2059 = vtanh.pop %v2003
  %v2060 = vtanh.pop %v2004
  %v2061 = vsub.f32 0.0, %v2005
  %v2062 = vsub.f32 0.0, %v2006
  %v2063 = vsub.f32 0.0, %v2007
  %v2064 = vsub.f32 0.0, %v2008
  %v2065 = vmul.f32 %v2061, 1.442695
  %v2066 = vpow.pop %v2065
  %v2067 = vmul.f32 %v2062, 1.442695
  %v2068 = vpow.pop %v2067
  %v2069 = vmul.f32 %v2063, 1.442695
  %v2070 = vpow.pop %v2069
  %v2071 = vmul.f32 %v2064, 1.442695
  %v2072 = vpow.pop %v2071
  %v2073 = vadd.f32 %v2066, 1.0
  %v2074 = vadd.f32 %v2068, 1.0
  %v2075 = vadd.f32 %v2070, 1.0
  %v2076 = vadd.f32 %v2072, 1.0
  %v2077 = vrcp.pop %v2073
  %v2078 = vmul.f32 1.0, %v2077
  %v2079 = vrcp.pop %v2074
  %v2080 = vmul.f32 1.0, %v2079
  %v2081 = vrcp.pop %v2075
  %v2082 = vmul.f32 1.0, %v2081
  %v2083 = vrcp.pop %v2076
  %v2084 = vmul.f32 1.0, %v2083
  %v2085 = vmul.f32 %v2050, %v1878
  %v2086 = vmul.f32 %v2052, %v1879
  %v2087 = vmul.f32 %v2054, %v1880
  %v2088 = vmul.f32 %v2056, %v1881
  %v2089 = vmul.f32 %v2026, %v2057
  %v2090 = vmul.f32 %v2028, %v2058
  %v2091 = vmul.f32 %v2030, %v2059
  %v2092 = vmul.f32 %v2032, %v2060
  %v2093 = vadd.f32 %v2085, %v2089
  %v2094 = vadd.f32 %v2086, %v2090
  %v2095 = vadd.f32 %v2087, %v2091
  %v2096 = vadd.f32 %v2088, %v2092
  %v2097 = vtanh.pop %v2093
  %v2098 = vtanh.pop %v2094
  %v2099 = vtanh.pop %v2095
  %v2100 = vtanh.pop %v2096
  %v2101 = vmul.f32 %v2078, %v2097
  %v2102 = vmul.f32 %v2080, %v2098
  %v2103 = vmul.f32 %v2082, %v2099
  %v2104 = vmul.f32 %v2084, %v2100
  %2105 = vst [vmem:[#allocation2 + $0x80] sm:$0xff] %v2101
  %2106 = vst [vmem:[#allocation2 + $0x88] sm:$0xff] %v2102
  %2107 = vst [vmem:[#allocation2 + $0x90] sm:$0xff] %v2103
  %2108 = vst [vmem:[#allocation2 + $0x98] sm:$0xff] %v2104
  %v2109 = vpack.c.bf16 %v2102, %v2101
  %v2110 = vpack.c.bf16 %v2104, %v2103
  %2111 = vmatprep.subr.bf16.mxu0 0
  %2112 = vmatpush1.bf16.msra.mxu0 %v2109
  %2113 = vmatprep.subr.bf16.mxu0 0
  %2114 = vmatpush1.bf16.msra.mxu0 %v2110
  %2115 = vmatprep.subr.bf16.mxu0 0
  %2116 = vmatpush1.bf16.msra.mxu0 0
  %2117 = vmatprep.subr.bf16.mxu0 0
  %2118 = vmatpush1.bf16.msra.mxu0 0
  %2119 = vmatprep.subr.bf16.mxu0 0
  %2120 = vmatpush1.bf16.msra.mxu0 0
  %2121 = vmatprep.subr.bf16.mxu0 0
  %2122 = vmatpush1.bf16.msra.mxu0 0
  %2123 = vmatprep.subr.bf16.mxu0 0
  %2124 = vmatpush1.bf16.msra.mxu0 0
  %2125 = vmatprep.subr.bf16.mxu0 0
  %2126 = vmatpush1.bf16.msra.mxu0 0
  %2127 = vmatprep.subr.bf16.mxu0 0
  %2128 = vmatpush1.bf16.msra.mxu0 0
  %2129 = vmatprep.subr.bf16.mxu0 0
  %2130 = vmatpush1.bf16.msra.mxu0 0
  %2131 = vmatprep.subr.bf16.mxu0 0
  %2132 = vmatpush1.bf16.msra.mxu0 0
  %2133 = vmatprep.subr.bf16.mxu0 0
  %2134 = vmatpush1.bf16.msra.mxu0 0
  %2135 = vmatprep.subr.bf16.mxu0 0
  %2136 = vmatpush1.bf16.msra.mxu0 0
  %2137 = vmatprep.subr.bf16.mxu0 0
  %2138 = vmatpush1.bf16.msra.mxu0 0
  %2139 = vmatprep.subr.bf16.mxu0 0
  %2140 = vmatpush1.bf16.msra.mxu0 0
  %2141 = vmatprep.subr.bf16.mxu0 0
  %2142 = vmatpush1.bf16.msra.mxu0 0
  %2143 = vmatprep.mubr.bf16.mxu0 0
  %2144 = vmatmul.mubr.bf16.gmra.mrb[0].mxu0 %v1013
  %v2145 = vpop.f32.mrb[0].mxu0
  %v2146 = vadd.f32 0.0, %v2145
  %v2147 = vpop.f32.mrb[0].mxu0
  %v2148 = vpop.f32.mrb[0].mxu0
  %v2149 = vadd.f32 0.0, %v2148
  %v2150 = vpop.f32.mrb[0].mxu0
  %2151 = vmatprep.mubr.bf16.mxu0 0
  %2152 = vmatmul.mubr.bf16.gmra.mrb[0].mxu0 %v1016
  %v2153 = vpop.f32.mrb[0].mxu0
  %v2154 = vadd.f32 0.0, %v2153
  %v2155 = vpop.f32.mrb[0].mxu0
  %v2156 = vpop.f32.mrb[0].mxu0
  %v2157 = vadd.f32 0.0, %v2156
  %v2158 = vpop.f32.mrb[0].mxu0
  %2159 = vmatprep.mubr.bf16.mxu0 0
  %2160 = vmatmul.mubr.bf16.gmra.mrb[0].mxu0 %v1019
  %v2161 = vpop.f32.mrb[0].mxu0
  %v2162 = vadd.f32 0.0, %v2161
  %v2163 = vpop.f32.mrb[0].mxu0
  %v2164 = vpop.f32.mrb[0].mxu0
  %v2165 = vadd.f32 0.0, %v2164
  %v2166 = vpop.f32.mrb[0].mxu0
  %2167 = vmatprep.mubr.bf16.mxu0 0
  %2168 = vmatmul.mubr.bf16.gmra.mrb[0].mxu0 %v1022
  %v2169 = vpop.f32.mrb[0].mxu0
  %v2170 = vadd.f32 0.0, %v2169
  %v2171 = vpop.f32.mrb[0].mxu0
  %v2172 = vpop.f32.mrb[0].mxu0
  %v2173 = vadd.f32 0.0, %v2172
  %v2174 = vpop.f32.mrb[0].mxu0
  %2175 = vmatprep.mubr.bf16.mxu0 0
  %2176 = vmatmul.mubr.bf16.gmra.mrb[0].mxu0 %v1025
  %v2177 = vpop.f32.mrb[0].mxu0
  %v2178 = vadd.f32 0.0, %v2177
  %v2179 = vpop.f32.mrb[0].mxu0
  %v2180 = vpop.f32.mrb[0].mxu0
  %v2181 = vadd.f32 0.0, %v2180
  %v2182 = vpop.f32.mrb[0].mxu0
  %2183 = vmatprep.mubr.bf16.mxu0 0
  %2184 = vmatmul.mubr.bf16.gmra.mrb[0].mxu0 %v1028
  %v2185 = vpop.f32.mrb[0].mxu0
  %v2186 = vadd.f32 0.0, %v2185
  %v2187 = vpop.f32.mrb[0].mxu0
  %v2188 = vpop.f32.mrb[0].mxu0
  %v2189 = vadd.f32 0.0, %v2188
  %v2190 = vpop.f32.mrb[0].mxu0
  %2191 = vmatprep.mubr.bf16.mxu0 0
  %2192 = vmatmul.mubr.bf16.gmra.mrb[0].mxu0 %v1031
  %v2193 = vpop.f32.mrb[0].mxu0
  %v2194 = vadd.f32 0.0, %v2193
  %v2195 = vpop.f32.mrb[0].mxu0
  %v2196 = vpop.f32.mrb[0].mxu0
  %v2197 = vadd.f32 0.0, %v2196
  %v2198 = vpop.f32.mrb[0].mxu0
  %2199 = vmatprep.mubr.bf16.mxu0 0
  %2200 = vmatmul.mubr.bf16.gmra.mrb[0].mxu0 %v1034
  %v2201 = vpop.f32.mrb[0].mxu0
  %v2202 = vadd.f32 0.0, %v2201
  %v2203 = vpop.f32.mrb[0].mxu0
  %v2204 = vpop.f32.mrb[0].mxu0
  %v2205 = vadd.f32 0.0, %v2204
  %v2206 = vpop.f32.mrb[0].mxu0
  %2207 = vdwg.mxu0
  %v2208 = vadd.f32 %v743, %v2146
  %v2209 = vadd.f32 %v746, %v2149
  %v2210 = vadd.f32 %v751, %v2154
  %v2211 = vadd.f32 %v754, %v2157
  %v2212 = vadd.f32 %v759, %v2162
  %v2213 = vadd.f32 %v762, %v2165
  %v2214 = vadd.f32 %v767, %v2170
  %v2215 = vadd.f32 %v770, %v2173
  %v2216 = vadd.f32 %v775, %v2178
  %v2217 = vadd.f32 %v778, %v2181
  %v2218 = vadd.f32 %v783, %v2186
  %v2219 = vadd.f32 %v786, %v2189
  %v2220 = vadd.f32 %v791, %v2194
  %v2221 = vadd.f32 %v794, %v2197
  %v2222 = vadd.f32 %v799, %v2202
  %v2223 = vadd.f32 %v802, %v2205
  %v2224 = vsub.f32 0.0, %v2208
  %v2225 = vsub.f32 0.0, %v2209
  %v2226 = vsub.f32 0.0, %v2210
  %v2227 = vsub.f32 0.0, %v2211
  %v2228 = vmul.f32 %v2224, 1.442695
  %v2229 = vpow.pop %v2228
  %v2230 = vmul.f32 %v2225, 1.442695
  %v2231 = vpow.pop %v2230
  %v2232 = vmul.f32 %v2226, 1.442695
  %v2233 = vpow.pop %v2232
  %v2234 = vmul.f32 %v2227, 1.442695
  %v2235 = vpow.pop %v2234
  %v2236 = vadd.f32 %v2229, 1.0
  %v2237 = vadd.f32 %v2231, 1.0
  %v2238 = vadd.f32 %v2233, 1.0
  %v2239 = vadd.f32 %v2235, 1.0
  %v2240 = vrcp.pop %v2236
  %v2241 = vmul.f32 1.0, %v2240
  %v2242 = vrcp.pop %v2237
  %v2243 = vmul.f32 1.0, %v2242
  %v2244 = vrcp.pop %v2238
  %v2245 = vmul.f32 1.0, %v2244
  %v2246 = vrcp.pop %v2239
  %v2247 = vmul.f32 1.0, %v2246
  %v2248 = vsub.f32 0.0, %v2212
  %v2249 = vsub.f32 0.0, %v2213
  %v2250 = vsub.f32 0.0, %v2214
  %v2251 = vsub.f32 0.0, %v2215
  %v2252 = vmul.f32 %v2248, 1.442695
  %v2253 = vpow.pop %v2252
  %v2254 = vmul.f32 %v2249, 1.442695
  %v2255 = vpow.pop %v2254
  %v2256 = vmul.f32 %v2250, 1.442695
  %v2257 = vpow.pop %v2256
  %v2258 = vmul.f32 %v2251, 1.442695
  %v2259 = vpow.pop %v2258
  %v2260 = vadd.f32 %v2253, 1.0
  %v2261 = vadd.f32 %v2255, 1.0
  %v2262 = vadd.f32 %v2257, 1.0
  %v2263 = vadd.f32 %v2259, 1.0
  %v2264 = vrcp.pop %v2260
  %v2265 = vmul.f32 1.0, %v2264
  %v2266 = vrcp.pop %v2261
  %v2267 = vmul.f32 1.0, %v2266
  %v2268 = vrcp.pop %v2262
  %v2269 = vmul.f32 1.0, %v2268
  %v2270 = vrcp.pop %v2263
  %v2271 = vmul.f32 1.0, %v2270
  %v2272 = vtanh.pop %v2216
  %v2273 = vtanh.pop %v2217
  %v2274 = vtanh.pop %v2218
  %v2275 = vtanh.pop %v2219
  %v2276 = vsub.f32 0.0, %v2220
  %v2277 = vsub.f32 0.0, %v2221
  %v2278 = vsub.f32 0.0, %v2222
  %v2279 = vsub.f32 0.0, %v2223
  %v2280 = vmul.f32 %v2276, 1.442695
  %v2281 = vpow.pop %v2280
  %v2282 = vmul.f32 %v2277, 1.442695
  %v2283 = vpow.pop %v2282
  %v2284 = vmul.f32 %v2278, 1.442695
  %v2285 = vpow.pop %v2284
  %v2286 = vmul.f32 %v2279, 1.442695
  %v2287 = vpow.pop %v2286
  %v2288 = vadd.f32 %v2281, 1.0
  %v2289 = vadd.f32 %v2283, 1.0
  %v2290 = vadd.f32 %v2285, 1.0
  %v2291 = vadd.f32 %v2287, 1.0
  %v2292 = vrcp.pop %v2288
  %v2293 = vmul.f32 1.0, %v2292
  %v2294 = vrcp.pop %v2289
  %v2295 = vmul.f32 1.0, %v2294
  %v2296 = vrcp.pop %v2290
  %v2297 = vmul.f32 1.0, %v2296
  %v2298 = vrcp.pop %v2291
  %v2299 = vmul.f32 1.0, %v2298
  %v2300 = vmul.f32 %v2265, %v2093
  %v2301 = vmul.f32 %v2267, %v2094
  %v2302 = vmul.f32 %v2269, %v2095
  %v2303 = vmul.f32 %v2271, %v2096
  %v2304 = vmul.f32 %v2241, %v2272
  %v2305 = vmul.f32 %v2243, %v2273
  %v2306 = vmul.f32 %v2245, %v2274
  %v2307 = vmul.f32 %v2247, %v2275
  %v2308 = vadd.f32 %v2300, %v2304
  %v2309 = vadd.f32 %v2301, %v2305
  %v2310 = vadd.f32 %v2302, %v2306
  %v2311 = vadd.f32 %v2303, %v2307
  %v2312 = vtanh.pop %v2308
  %v2313 = vtanh.pop %v2309
  %v2314 = vtanh.pop %v2310
  %v2315 = vtanh.pop %v2311
  %v2316 = vmul.f32 %v2293, %v2312
  %v2317 = vmul.f32 %v2295, %v2313
  %v2318 = vmul.f32 %v2297, %v2314
  %v2319 = vmul.f32 %v2299, %v2315
  %2320 = vst [vmem:[#allocation2 + $0xa0] sm:$0xff] %v2316
  %2321 = vst [vmem:[#allocation2 + $0xa8] sm:$0xff] %v2317
  %2322 = vst [vmem:[#allocation2 + $0xb0] sm:$0xff] %v2318
  %2323 = vst [vmem:[#allocation2 + $0xb8] sm:$0xff] %v2319
  %v2324 = vpack.c.bf16 %v2317, %v2316
  %v2325 = vpack.c.bf16 %v2319, %v2318
  %2326 = vmatprep.subr.bf16.mxu0 0
  %2327 = vmatpush1.bf16.msra.mxu0 %v2324
  %2328 = vmatprep.subr.bf16.mxu0 0
  %2329 = vmatpush1.bf16.msra.mxu0 %v2325
  %2330 = vmatprep.subr.bf16.mxu0 0
  %2331 = vmatpush1.bf16.msra.mxu0 0
  %2332 = vmatprep.subr.bf16.mxu0 0
  %2333 = vmatpush1.bf16.msra.mxu0 0
  %2334 = vmatprep.subr.bf16.mxu0 0
  %2335 = vmatpush1.bf16.msra.mxu0 0
  %2336 = vmatprep.subr.bf16.mxu0 0
  %2337 = vmatpush1.bf16.msra.mxu0 0
  %2338 = vmatprep.subr.bf16.mxu0 0
  %2339 = vmatpush1.bf16.msra.mxu0 0
  %2340 = vmatprep.subr.bf16.mxu0 0
  %2341 = vmatpush1.bf16.msra.mxu0 0
  %2342 = vmatprep.subr.bf16.mxu0 0
  %2343 = vmatpush1.bf16.msra.mxu0 0
  %2344 = vmatprep.subr.bf16.mxu0 0
  %2345 = vmatpush1.bf16.msra.mxu0 0
  %2346 = vmatprep.subr.bf16.mxu0 0
  %2347 = vmatpush1.bf16.msra.mxu0 0
  %2348 = vmatprep.subr.bf16.mxu0 0
  %2349 = vmatpush1.bf16.msra.mxu0 0
  %2350 = vmatprep.subr.bf16.mxu0 0
  %2351 = vmatpush1.bf16.msra.mxu0 0
  %2352 = vmatprep.subr.bf16.mxu0 0
  %2353 = vmatpush1.bf16.msra.mxu0 0
  %2354 = vmatprep.subr.bf16.mxu0 0
  %2355 = vmatpush1.bf16.msra.mxu0 0
  %2356 = vmatprep.subr.bf16.mxu0 0
  %2357 = vmatpush1.bf16.msra.mxu0 0
  %2358 = vmatprep.mubr.bf16.mxu0 0
  %2359 = vmatmul.mubr.bf16.gmra.mrb[0].mxu0 %v1013
  %v2360 = vpop.f32.mrb[0].mxu0
  %v2361 = vadd.f32 0.0, %v2360
  %v2362 = vpop.f32.mrb[0].mxu0
  %v2363 = vpop.f32.mrb[0].mxu0
  %v2364 = vadd.f32 0.0, %v2363
  %v2365 = vpop.f32.mrb[0].mxu0
  %2366 = vmatprep.mubr.bf16.mxu0 0
  %2367 = vmatmul.mubr.bf16.gmra.mrb[0].mxu0 %v1016
  %v2368 = vpop.f32.mrb[0].mxu0
  %v2369 = vadd.f32 0.0, %v2368
  %v2370 = vpop.f32.mrb[0].mxu0
  %v2371 = vpop.f32.mrb[0].mxu0
  %v2372 = vadd.f32 0.0, %v2371
  %v2373 = vpop.f32.mrb[0].mxu0
  %2374 = vmatprep.mubr.bf16.mxu0 0
  %2375 = vmatmul.mubr.bf16.gmra.mrb[0].mxu0 %v1019
  %v2376 = vpop.f32.mrb[0].mxu0
  %v2377 = vadd.f32 0.0, %v2376
  %v2378 = vpop.f32.mrb[0].mxu0
  %v2379 = vpop.f32.mrb[0].mxu0
  %v2380 = vadd.f32 0.0, %v2379
  %v2381 = vpop.f32.mrb[0].mxu0
  %2382 = vmatprep.mubr.bf16.mxu0 0
  %2383 = vmatmul.mubr.bf16.gmra.mrb[0].mxu0 %v1022
  %v2384 = vpop.f32.mrb[0].mxu0
  %v2385 = vadd.f32 0.0, %v2384
  %v2386 = vpop.f32.mrb[0].mxu0
  %v2387 = vpop.f32.mrb[0].mxu0
  %v2388 = vadd.f32 0.0, %v2387
  %v2389 = vpop.f32.mrb[0].mxu0
  %2390 = vmatprep.mubr.bf16.mxu0 0
  %2391 = vmatmul.mubr.bf16.gmra.mrb[0].mxu0 %v1025
  %v2392 = vpop.f32.mrb[0].mxu0
  %v2393 = vadd.f32 0.0, %v2392
  %v2394 = vpop.f32.mrb[0].mxu0
  %v2395 = vpop.f32.mrb[0].mxu0
  %v2396 = vadd.f32 0.0, %v2395
  %v2397 = vpop.f32.mrb[0].mxu0
  %2398 = vmatprep.mubr.bf16.mxu0 0
  %2399 = vmatmul.mubr.bf16.gmra.mrb[0].mxu0 %v1028
  %v2400 = vpop.f32.mrb[0].mxu0
  %v2401 = vadd.f32 0.0, %v2400
  %v2402 = vpop.f32.mrb[0].mxu0
  %v2403 = vpop.f32.mrb[0].mxu0
  %v2404 = vadd.f32 0.0, %v2403
  %v2405 = vpop.f32.mrb[0].mxu0
  %2406 = vmatprep.mubr.bf16.mxu0 0
  %2407 = vmatmul.mubr.bf16.gmra.mrb[0].mxu0 %v1031
  %v2408 = vpop.f32.mrb[0].mxu0
  %v2409 = vadd.f32 0.0, %v2408
  %v2410 = vpop.f32.mrb[0].mxu0
  %v2411 = vpop.f32.mrb[0].mxu0
  %v2412 = vadd.f32 0.0, %v2411
  %v2413 = vpop.f32.mrb[0].mxu0
  %2414 = vmatprep.mubr.bf16.mxu0 0
  %2415 = vmatmul.mubr.bf16.gmra.mrb[0].mxu0 %v1034
  %v2416 = vpop.f32.mrb[0].mxu0
  %v2417 = vadd.f32 0.0, %v2416
  %v2418 = vpop.f32.mrb[0].mxu0
  %v2419 = vpop.f32.mrb[0].mxu0
  %v2420 = vadd.f32 0.0, %v2419
  %v2421 = vpop.f32.mrb[0].mxu0
  %2422 = vdwg.mxu0
  %v2423 = vadd.f32 %v846, %v2361
  %v2424 = vadd.f32 %v849, %v2364
  %v2425 = vadd.f32 %v854, %v2369
  %v2426 = vadd.f32 %v857, %v2372
  %v2427 = vadd.f32 %v862, %v2377
  %v2428 = vadd.f32 %v865, %v2380
  %v2429 = vadd.f32 %v870, %v2385
  %v2430 = vadd.f32 %v873, %v2388
  %v2431 = vadd.f32 %v878, %v2393
  %v2432 = vadd.f32 %v881, %v2396
  %v2433 = vadd.f32 %v886, %v2401
  %v2434 = vadd.f32 %v889, %v2404
  %v2435 = vadd.f32 %v894, %v2409
  %v2436 = vadd.f32 %v897, %v2412
  %v2437 = vadd.f32 %v902, %v2417
  %v2438 = vadd.f32 %v905, %v2420
  %v2439 = vsub.f32 0.0, %v2423
  %v2440 = vsub.f32 0.0, %v2424
  %v2441 = vsub.f32 0.0, %v2425
  %v2442 = vsub.f32 0.0, %v2426
  %v2443 = vmul.f32 %v2439, 1.442695
  %v2444 = vpow.pop %v2443
  %v2445 = vmul.f32 %v2440, 1.442695
  %v2446 = vpow.pop %v2445
  %v2447 = vmul.f32 %v2441, 1.442695
  %v2448 = vpow.pop %v2447
  %v2449 = vmul.f32 %v2442, 1.442695
  %v2450 = vpow.pop %v2449
  %v2451 = vadd.f32 %v2444, 1.0
  %v2452 = vadd.f32 %v2446, 1.0
  %v2453 = vadd.f32 %v2448, 1.0
  %v2454 = vadd.f32 %v2450, 1.0
  %v2455 = vrcp.pop %v2451
  %v2456 = vmul.f32 1.0, %v2455
  %v2457 = vrcp.pop %v2452
  %v2458 = vmul.f32 1.0, %v2457
  %v2459 = vrcp.pop %v2453
  %v2460 = vmul.f32 1.0, %v2459
  %v2461 = vrcp.pop %v2454
  %v2462 = vmul.f32 1.0, %v2461
  %v2463 = vsub.f32 0.0, %v2427
  %v2464 = vsub.f32 0.0, %v2428
  %v2465 = vsub.f32 0.0, %v2429
  %v2466 = vsub.f32 0.0, %v2430
  %v2467 = vmul.f32 %v2463, 1.442695
  %v2468 = vpow.pop %v2467
  %v2469 = vmul.f32 %v2464, 1.442695
  %v2470 = vpow.pop %v2469
  %v2471 = vmul.f32 %v2465, 1.442695
  %v2472 = vpow.pop %v2471
  %v2473 = vmul.f32 %v2466, 1.442695
  %v2474 = vpow.pop %v2473
  %v2475 = vadd.f32 %v2468, 1.0
  %v2476 = vadd.f32 %v2470, 1.0
  %v2477 = vadd.f32 %v2472, 1.0
  %v2478 = vadd.f32 %v2474, 1.0
  %v2479 = vrcp.pop %v2475
  %v2480 = vmul.f32 1.0, %v2479
  %v2481 = vrcp.pop %v2476
  %v2482 = vmul.f32 1.0, %v2481
  %v2483 = vrcp.pop %v2477
  %v2484 = vmul.f32 1.0, %v2483
  %v2485 = vrcp.pop %v2478
  %v2486 = vmul.f32 1.0, %v2485
  %v2487 = vtanh.pop %v2431
  %v2488 = vtanh.pop %v2432
  %v2489 = vtanh.pop %v2433
  %v2490 = vtanh.pop %v2434
  %v2491 = vsub.f32 0.0, %v2435
  %v2492 = vsub.f32 0.0, %v2436
  %v2493 = vsub.f32 0.0, %v2437
  %v2494 = vsub.f32 0.0, %v2438
  %v2495 = vmul.f32 %v2491, 1.442695
  %v2496 = vpow.pop %v2495
  %v2497 = vmul.f32 %v2492, 1.442695
  %v2498 = vpow.pop %v2497
  %v2499 = vmul.f32 %v2493, 1.442695
  %v2500 = vpow.pop %v2499
  %v2501 = vmul.f32 %v2494, 1.442695
  %v2502 = vpow.pop %v2501
  %v2503 = vadd.f32 %v2496, 1.0
  %v2504 = vadd.f32 %v2498, 1.0
  %v2505 = vadd.f32 %v2500, 1.0
  %v2506 = vadd.f32 %v2502, 1.0
  %v2507 = vrcp.pop %v2503
  %v2508 = vmul.f32 1.0, %v2507
  %v2509 = vrcp.pop %v2504
  %v2510 = vmul.f32 1.0, %v2509
  %v2511 = vrcp.pop %v2505
  %v2512 = vmul.f32 1.0, %v2511
  %v2513 = vrcp.pop %v2506
  %v2514 = vmul.f32 1.0, %v2513
  %v2515 = vmul.f32 %v2480, %v2308
  %v2516 = vmul.f32 %v2482, %v2309
  %v2517 = vmul.f32 %v2484, %v2310
  %v2518 = vmul.f32 %v2486, %v2311
  %v2519 = vmul.f32 %v2456, %v2487
  %v2520 = vmul.f32 %v2458, %v2488
  %v2521 = vmul.f32 %v2460, %v2489
  %v2522 = vmul.f32 %v2462, %v2490
  %v2523 = vadd.f32 %v2515, %v2519
  %v2524 = vadd.f32 %v2516, %v2520
  %v2525 = vadd.f32 %v2517, %v2521
  %v2526 = vadd.f32 %v2518, %v2522
  %v2527 = vtanh.pop %v2523
  %v2528 = vtanh.pop %v2524
  %v2529 = vtanh.pop %v2525
  %v2530 = vtanh.pop %v2526
  %v2531 = vmul.f32 %v2508, %v2527
  %v2532 = vmul.f32 %v2510, %v2528
  %v2533 = vmul.f32 %v2512, %v2529
  %v2534 = vmul.f32 %v2514, %v2530
  %2535 = vst [vmem:[#allocation2 + $0xc0] sm:$0xff] %v2531
  %2536 = vst [vmem:[#allocation2 + $0xc8] sm:$0xff] %v2532
  %2537 = vst [vmem:[#allocation2 + $0xd0] sm:$0xff] %v2533
  %2538 = vst [vmem:[#allocation2 + $0xd8] sm:$0xff] %v2534
  %v2539 = vpack.c.bf16 %v2532, %v2531
  %v2540 = vpack.c.bf16 %v2534, %v2533
  %2541 = vmatprep.subr.bf16.mxu0 0
  %2542 = vmatpush1.bf16.msra.mxu0 %v2539
  %2543 = vmatprep.subr.bf16.mxu0 0
  %2544 = vmatpush1.bf16.msra.mxu0 %v2540
  %2545 = vmatprep.subr.bf16.mxu0 0
  %2546 = vmatpush1.bf16.msra.mxu0 0
  %2547 = vmatprep.subr.bf16.mxu0 0
  %2548 = vmatpush1.bf16.msra.mxu0 0
  %2549 = vmatprep.subr.bf16.mxu0 0
  %2550 = vmatpush1.bf16.msra.mxu0 0
  %2551 = vmatprep.subr.bf16.mxu0 0
  %2552 = vmatpush1.bf16.msra.mxu0 0
  %2553 = vmatprep.subr.bf16.mxu0 0
  %2554 = vmatpush1.bf16.msra.mxu0 0
  %2555 = vmatprep.subr.bf16.mxu0 0
  %2556 = vmatpush1.bf16.msra.mxu0 0
  %2557 = vmatprep.subr.bf16.mxu0 0
  %2558 = vmatpush1.bf16.msra.mxu0 0
  %2559 = vmatprep.subr.bf16.mxu0 0
  %2560 = vmatpush1.bf16.msra.mxu0 0
  %2561 = vmatprep.subr.bf16.mxu0 0
  %2562 = vmatpush1.bf16.msra.mxu0 0
  %2563 = vmatprep.subr.bf16.mxu0 0
  %2564 = vmatpush1.bf16.msra.mxu0 0
  %2565 = vmatprep.subr.bf16.mxu0 0
  %2566 = vmatpush1.bf16.msra.mxu0 0
  %2567 = vmatprep.subr.bf16.mxu0 0
  %2568 = vmatpush1.bf16.msra.mxu0 0
  %2569 = vmatprep.subr.bf16.mxu0 0
  %2570 = vmatpush1.bf16.msra.mxu0 0
  %2571 = vmatprep.subr.bf16.mxu0 0
  %2572 = vmatpush1.bf16.msra.mxu0 0
  %2573 = vmatprep.mubr.bf16.mxu0 0
  %2574 = vmatmul.mubr.bf16.gmra.mrb[0].mxu0 %v1013
  %v2575 = vpop.f32.mrb[0].mxu0
  %v2576 = vadd.f32 0.0, %v2575
  %v2577 = vpop.f32.mrb[0].mxu0
  %v2578 = vpop.f32.mrb[0].mxu0
  %v2579 = vadd.f32 0.0, %v2578
  %v2580 = vpop.f32.mrb[0].mxu0
  %2581 = vmatprep.mubr.bf16.mxu0 0
  %2582 = vmatmul.mubr.bf16.gmra.mrb[0].mxu0 %v1016
  %v2583 = vpop.f32.mrb[0].mxu0
  %v2584 = vadd.f32 0.0, %v2583
  %v2585 = vpop.f32.mrb[0].mxu0
  %v2586 = vpop.f32.mrb[0].mxu0
  %v2587 = vadd.f32 0.0, %v2586
  %v2588 = vpop.f32.mrb[0].mxu0
  %2589 = vmatprep.mubr.bf16.mxu0 0
  %2590 = vmatmul.mubr.bf16.gmra.mrb[0].mxu0 %v1019
  %v2591 = vpop.f32.mrb[0].mxu0
  %v2592 = vadd.f32 0.0, %v2591
  %v2593 = vpop.f32.mrb[0].mxu0
  %v2594 = vpop.f32.mrb[0].mxu0
  %v2595 = vadd.f32 0.0, %v2594
  %v2596 = vpop.f32.mrb[0].mxu0
  %2597 = vmatprep.mubr.bf16.mxu0 0
  %2598 = vmatmul.mubr.bf16.gmra.mrb[0].mxu0 %v1022
  %v2599 = vpop.f32.mrb[0].mxu0
  %v2600 = vadd.f32 0.0, %v2599
  %v2601 = vpop.f32.mrb[0].mxu0
  %v2602 = vpop.f32.mrb[0].mxu0
  %v2603 = vadd.f32 0.0, %v2602
  %v2604 = vpop.f32.mrb[0].mxu0
  %2605 = vmatprep.mubr.bf16.mxu0 0
  %2606 = vmatmul.mubr.bf16.gmra.mrb[0].mxu0 %v1025
  %v2607 = vpop.f32.mrb[0].mxu0
  %v2608 = vadd.f32 0.0, %v2607
  %v2609 = vpop.f32.mrb[0].mxu0
  %v2610 = vpop.f32.mrb[0].mxu0
  %v2611 = vadd.f32 0.0, %v2610
  %v2612 = vpop.f32.mrb[0].mxu0
  %2613 = vmatprep.mubr.bf16.mxu0 0
  %2614 = vmatmul.mubr.bf16.gmra.mrb[0].mxu0 %v1028
  %v2615 = vpop.f32.mrb[0].mxu0
  %v2616 = vadd.f32 0.0, %v2615
  %v2617 = vpop.f32.mrb[0].mxu0
  %v2618 = vpop.f32.mrb[0].mxu0
  %v2619 = vadd.f32 0.0, %v2618
  %v2620 = vpop.f32.mrb[0].mxu0
  %2621 = vmatprep.mubr.bf16.mxu0 0
  %2622 = vmatmul.mubr.bf16.gmra.mrb[0].mxu0 %v1031
  %v2623 = vpop.f32.mrb[0].mxu0
  %v2624 = vadd.f32 0.0, %v2623
  %v2625 = vpop.f32.mrb[0].mxu0
  %v2626 = vpop.f32.mrb[0].mxu0
  %v2627 = vadd.f32 0.0, %v2626
  %v2628 = vpop.f32.mrb[0].mxu0
  %2629 = vmatprep.mubr.bf16.mxu0 0
  %2630 = vmatmul.mubr.bf16.gmra.mrb[0].mxu0 %v1034
  %v2631 = vpop.f32.mrb[0].mxu0
  %v2632 = vadd.f32 0.0, %v2631
  %v2633 = vpop.f32.mrb[0].mxu0
  %v2634 = vpop.f32.mrb[0].mxu0
  %v2635 = vadd.f32 0.0, %v2634
  %v2636 = vpop.f32.mrb[0].mxu0
  %2637 = vdwg.mxu0
  %v2638 = vadd.f32 %v949, %v2576
  %v2639 = vadd.f32 %v952, %v2579
  %v2640 = vadd.f32 %v957, %v2584
  %v2641 = vadd.f32 %v960, %v2587
  %v2642 = vadd.f32 %v965, %v2592
  %v2643 = vadd.f32 %v968, %v2595
  %v2644 = vadd.f32 %v973, %v2600
  %v2645 = vadd.f32 %v976, %v2603
  %v2646 = vadd.f32 %v981, %v2608
  %v2647 = vadd.f32 %v984, %v2611
  %v2648 = vadd.f32 %v989, %v2616
  %v2649 = vadd.f32 %v992, %v2619
  %v2650 = vadd.f32 %v997, %v2624
  %v2651 = vadd.f32 %v1000, %v2627
  %v2652 = vadd.f32 %v1005, %v2632
  %v2653 = vadd.f32 %v1008, %v2635
  %v2654 = vsub.f32 0.0, %v2638
  %v2655 = vsub.f32 0.0, %v2639
  %v2656 = vsub.f32 0.0, %v2640
  %v2657 = vsub.f32 0.0, %v2641
  %v2658 = vmul.f32 %v2654, 1.442695
  %v2659 = vpow.pop %v2658
  %v2660 = vmul.f32 %v2655, 1.442695
  %v2661 = vpow.pop %v2660
  %v2662 = vmul.f32 %v2656, 1.442695
  %v2663 = vpow.pop %v2662
  %v2664 = vmul.f32 %v2657, 1.442695
  %v2665 = vpow.pop %v2664
  %v2666 = vadd.f32 %v2659, 1.0
  %v2667 = vadd.f32 %v2661, 1.0
  %v2668 = vadd.f32 %v2663, 1.0
  %v2669 = vadd.f32 %v2665, 1.0
  %v2670 = vrcp.pop %v2666
  %v2671 = vmul.f32 1.0, %v2670
  %v2672 = vrcp.pop %v2667
  %v2673 = vmul.f32 1.0, %v2672
  %v2674 = vrcp.pop %v2668
  %v2675 = vmul.f32 1.0, %v2674
  %v2676 = vrcp.pop %v2669
  %v2677 = vmul.f32 1.0, %v2676
  %v2678 = vsub.f32 0.0, %v2642
  %v2679 = vsub.f32 0.0, %v2643
  %v2680 = vsub.f32 0.0, %v2644
  %v2681 = vsub.f32 0.0, %v2645
  %v2682 = vmul.f32 %v2678, 1.442695
  %v2683 = vpow.pop %v2682
  %v2684 = vmul.f32 %v2679, 1.442695
  %v2685 = vpow.pop %v2684
  %v2686 = vmul.f32 %v2680, 1.442695
  %v2687 = vpow.pop %v2686
  %v2688 = vmul.f32 %v2681, 1.442695
  %v2689 = vpow.pop %v2688
  %v2690 = vadd.f32 %v2683, 1.0
  %v2691 = vadd.f32 %v2685, 1.0
  %v2692 = vadd.f32 %v2687, 1.0
  %v2693 = vadd.f32 %v2689, 1.0
  %v2694 = vrcp.pop %v2690
  %v2695 = vmul.f32 1.0, %v2694
  %v2696 = vrcp.pop %v2691
  %v2697 = vmul.f32 1.0, %v2696
  %v2698 = vrcp.pop %v2692
  %v2699 = vmul.f32 1.0, %v2698
  %v2700 = vrcp.pop %v2693
  %v2701 = vmul.f32 1.0, %v2700
  %v2702 = vtanh.pop %v2646
  %v2703 = vtanh.pop %v2647
  %v2704 = vtanh.pop %v2648
  %v2705 = vtanh.pop %v2649
  %v2706 = vsub.f32 0.0, %v2650
  %v2707 = vsub.f32 0.0, %v2651
  %v2708 = vsub.f32 0.0, %v2652
  %v2709 = vsub.f32 0.0, %v2653
  %v2710 = vmul.f32 %v2706, 1.442695
  %v2711 = vpow.pop %v2710
  %v2712 = vmul.f32 %v2707, 1.442695
  %v2713 = vpow.pop %v2712
  %v2714 = vmul.f32 %v2708, 1.442695
  %v2715 = vpow.pop %v2714
  %v2716 = vmul.f32 %v2709, 1.442695
  %v2717 = vpow.pop %v2716
  %v2718 = vadd.f32 %v2711, 1.0
  %v2719 = vadd.f32 %v2713, 1.0
  %v2720 = vadd.f32 %v2715, 1.0
  %v2721 = vadd.f32 %v2717, 1.0
  %v2722 = vrcp.pop %v2718
  %v2723 = vmul.f32 1.0, %v2722
  %v2724 = vrcp.pop %v2719
  %v2725 = vmul.f32 1.0, %v2724
  %v2726 = vrcp.pop %v2720
  %v2727 = vmul.f32 1.0, %v2726
  %v2728 = vrcp.pop %v2721
  %v2729 = vmul.f32 1.0, %v2728
  %v2730 = vmul.f32 %v2695, %v2523
  %v2731 = vmul.f32 %v2697, %v2524
  %v2732 = vmul.f32 %v2699, %v2525
  %v2733 = vmul.f32 %v2701, %v2526
  %v2734 = vmul.f32 %v2671, %v2702
  %v2735 = vmul.f32 %v2673, %v2703
  %v2736 = vmul.f32 %v2675, %v2704
  %v2737 = vmul.f32 %v2677, %v2705
  %v2738 = vadd.f32 %v2730, %v2734
  %v2739 = vadd.f32 %v2731, %v2735
  %v2740 = vadd.f32 %v2732, %v2736
  %v2741 = vadd.f32 %v2733, %v2737
  %v2742 = vtanh.pop %v2738
  %v2743 = vtanh.pop %v2739
  %v2744 = vtanh.pop %v2740
  %v2745 = vtanh.pop %v2741
  %v2746 = vmul.f32 %v2723, %v2742
  %v2747 = vmul.f32 %v2725, %v2743
  %v2748 = vmul.f32 %v2727, %v2744
  %v2749 = vmul.f32 %v2729, %v2745
  %2750 = vst [vmem:[#allocation2 + $0xe0] sm:$0xff] %v2746
  %2751 = vst [vmem:[#allocation2 + $0xe8] sm:$0xff] %v2747
  %2752 = vst [vmem:[#allocation2 + $0xf0] sm:$0xff] %v2748
  %2753 = vst [vmem:[#allocation2 + $0xf8] sm:$0xff] %v2749
  %v2754 = vld [vmem:[#allocation2] sm:$0xff]
  %v2755 = vld [vmem:[#allocation2 + $0x8] sm:$0xff]
  %v2756 = vld [vmem:[#allocation2 + $0x10] sm:$0xff]
  %v2757 = vld [vmem:[#allocation2 + $0x18] sm:$0xff]
  %v2758 = vld [vmem:[#allocation2 + $0x20] sm:$0xff]
  %v2759 = vld [vmem:[#allocation2 + $0x28] sm:$0xff]
  %v2760 = vld [vmem:[#allocation2 + $0x30] sm:$0xff]
  %v2761 = vld [vmem:[#allocation2 + $0x38] sm:$0xff]
  %v2762 = vld [vmem:[#allocation2 + $0x40] sm:$0xff]
  %v2763 = vld [vmem:[#allocation2 + $0x48] sm:$0xff]
  %v2764 = vld [vmem:[#allocation2 + $0x50] sm:$0xff]
  %v2765 = vld [vmem:[#allocation2 + $0x58] sm:$0xff]
  %v2766 = vld [vmem:[#allocation2 + $0x60] sm:$0xff]
  %v2767 = vld [vmem:[#allocation2 + $0x68] sm:$0xff]
  %v2768 = vld [vmem:[#allocation2 + $0x70] sm:$0xff]
  %v2769 = vld [vmem:[#allocation2 + $0x78] sm:$0xff]
  %v2770 = vld [vmem:[#allocation2 + $0x80] sm:$0xff]
  %v2771 = vld [vmem:[#allocation2 + $0x88] sm:$0xff]
  %v2772 = vld [vmem:[#allocation2 + $0x90] sm:$0xff]
  %v2773 = vld [vmem:[#allocation2 + $0x98] sm:$0xff]
  %v2774 = vld [vmem:[#allocation2 + $0xa0] sm:$0xff]
  %v2775 = vld [vmem:[#allocation2 + $0xa8] sm:$0xff]
  %v2776 = vld [vmem:[#allocation2 + $0xb0] sm:$0xff]
  %v2777 = vld [vmem:[#allocation2 + $0xb8] sm:$0xff]
  %v2778 = vld [vmem:[#allocation2 + $0xc0] sm:$0xff]
  %v2779 = vld [vmem:[#allocation2 + $0xc8] sm:$0xff]
  %v2780 = vld [vmem:[#allocation2 + $0xd0] sm:$0xff]
  %v2781 = vld [vmem:[#allocation2 + $0xd8] sm:$0xff]
  %v2782 = vld [vmem:[#allocation2 + $0xe0] sm:$0xff]
  %v2783 = vld [vmem:[#allocation2 + $0xe8] sm:$0xff]
  %v2784 = vld [vmem:[#allocation2 + $0xf0] sm:$0xff]
  %v2785 = vld [vmem:[#allocation2 + $0xf8] sm:$0xff]
  %2786 = vxpose.xlu0.b32.start [1/16] %v2754, 128
  %2787 = vxpose.xlu0.b32.cont [2/16] %v2755, 128
  %2788 = vxpose.xlu0.b32.cont [3/16] %v2756, 128
  %2789 = vxpose.xlu0.b32.cont [4/16] %v2757, 128
  %2790 = vxpose.xlu0.b32.cont [5/16] %v2758, 128
  %2791 = vxpose.xlu0.b32.cont [6/16] %v2759, 128
  %2792 = vxpose.xlu0.b32.cont [7/16] %v2760, 128
  %2793 = vxpose.xlu0.b32.cont [8/16] %v2761, 128
  %2794 = vxpose.xlu0.b32.cont [9/16] %v2762, 128
  %2795 = vxpose.xlu0.b32.cont [10/16] %v2763, 128
  %2796 = vxpose.xlu0.b32.cont [11/16] %v2764, 128
  %2797 = vxpose.xlu0.b32.cont [12/16] %v2765, 128
  %2798 = vxpose.xlu0.b32.cont [13/16] %v2766, 128
  %2799 = vxpose.xlu0.b32.cont [14/16] %v2767, 128
  %2800 = vxpose.xlu0.b32.cont [15/16] %v2768, 128
  %2801 = vxpose.xlu0.b32.end [16/16] %v2769, 128
  %v2802 = vpop.trf.xlu0
  %v2803 = vpop.trf.xlu0
  %v2804 = vpop.trf.xlu0
  %v2805 = vpop.trf.xlu0
  %v2806 = vpop.trf.xlu0
  %v2807 = vpop.trf.xlu0
  %v2808 = vpop.trf.xlu0
  %v2809 = vpop.trf.xlu0
  %v2810 = vpop.trf.xlu0
  %v2811 = vpop.trf.xlu0
  %v2812 = vpop.trf.xlu0
  %v2813 = vpop.trf.xlu0
  %v2814 = vpop.trf.xlu0
  %v2815 = vpop.trf.xlu0
  %v2816 = vpop.trf.xlu0
  %v2817 = vpop.trf.xlu0
  %2818 = vxpose.xlu0.b32.start [1/16] %v2770, 128
  %2819 = vxpose.xlu0.b32.cont [2/16] %v2771, 128
  %2820 = vxpose.xlu0.b32.cont [3/16] %v2772, 128
  %2821 = vxpose.xlu0.b32.cont [4/16] %v2773, 128
  %2822 = vxpose.xlu0.b32.cont [5/16] %v2774, 128
  %2823 = vxpose.xlu0.b32.cont [6/16] %v2775, 128
  %2824 = vxpose.xlu0.b32.cont [7/16] %v2776, 128
  %2825 = vxpose.xlu0.b32.cont [8/16] %v2777, 128
  %2826 = vxpose.xlu0.b32.cont [9/16] %v2778, 128
  %2827 = vxpose.xlu0.b32.cont [10/16] %v2779, 128
  %2828 = vxpose.xlu0.b32.cont [11/16] %v2780, 128
  %2829 = vxpose.xlu0.b32.cont [12/16] %v2781, 128
  %2830 = vxpose.xlu0.b32.cont [13/16] %v2782, 128
  %2831 = vxpose.xlu0.b32.cont [14/16] %v2783, 128
  %2832 = vxpose.xlu0.b32.cont [15/16] %v2784, 128
  %2833 = vxpose.xlu0.b32.end [16/16] %v2785, 128
  %v2834 = vpop.trf.xlu0
  %v2835 = vpop.trf.xlu0
  %v2836 = vpop.trf.xlu0
  %v2837 = vpop.trf.xlu0
  %v2838 = vpop.trf.xlu0
  %v2839 = vpop.trf.xlu0
  %v2840 = vpop.trf.xlu0
  %v2841 = vpop.trf.xlu0
  %v2842 = vpop.trf.xlu0
  %v2843 = vpop.trf.xlu0
  %v2844 = vpop.trf.xlu0
  %v2845 = vpop.trf.xlu0
  %v2846 = vpop.trf.xlu0
  %v2847 = vpop.trf.xlu0
  %v2848 = vpop.trf.xlu0
  %v2849 = vpop.trf.xlu0
  %2850 = vst [vmem:[%s4] sm:$0xff] %v2802
  %2851 = vst [vmem:[%s4 + $0x8] sm:$0xff] %v2834
  %2852 = vst [vmem:[%s4 + $0x10] sm:$0xff] %v2803
  %2853 = vst [vmem:[%s4 + $0x18] sm:$0xff] %v2835
  %2854 = vst [vmem:[%s4 + $0x20] sm:$0xff] %v2804
  %2855 = vst [vmem:[%s4 + $0x28] sm:$0xff] %v2836
  %2856 = vst [vmem:[%s4 + $0x30] sm:$0xff] %v2805
  %2857 = vst [vmem:[%s4 + $0x38] sm:$0xff] %v2837
  %2858 = vst [vmem:[%s4 + $0x40] sm:$0xff] %v2806
  %2859 = vst [vmem:[%s4 + $0x48] sm:$0xff] %v2838
  %2860 = vst [vmem:[%s4 + $0x50] sm:$0xff] %v2807
  %2861 = vst [vmem:[%s4 + $0x58] sm:$0xff] %v2839
  %2862 = vst [vmem:[%s4 + $0x60] sm:$0xff] %v2808
  %2863 = vst [vmem:[%s4 + $0x68] sm:$0xff] %v2840
  %2864 = vst [vmem:[%s4 + $0x70] sm:$0xff] %v2809
  %2865 = vst [vmem:[%s4 + $0x78] sm:$0xff] %v2841
  %2866 = vst [vmem:[%s4 + $0x80] sm:$0xff] %v2810
  %2867 = vst [vmem:[%s4 + $0x88] sm:$0xff] %v2842
  %2868 = vst [vmem:[%s4 + $0x90] sm:$0xff] %v2811
  %2869 = vst [vmem:[%s4 + $0x98] sm:$0xff] %v2843
  %2870 = vst [vmem:[%s4 + $0xa0] sm:$0xff] %v2812
  %2871 = vst [vmem:[%s4 + $0xa8] sm:$0xff] %v2844
  %2872 = vst [vmem:[%s4 + $0xb0] sm:$0xff] %v2813
  %2873 = vst [vmem:[%s4 + $0xb8] sm:$0xff] %v2845
  %2874 = vst [vmem:[%s4 + $0xc0] sm:$0xff] %v2814
  %2875 = vst [vmem:[%s4 + $0xc8] sm:$0xff] %v2846
  %2876 = vst [vmem:[%s4 + $0xd0] sm:$0xff] %v2815
  %2877 = vst [vmem:[%s4 + $0xd8] sm:$0xff] %v2847
  %2878 = vst [vmem:[%s4 + $0xe0] sm:$0xff] %v2816
  %2879 = vst [vmem:[%s4 + $0xe8] sm:$0xff] %v2848
  %2880 = vst [vmem:[%s4 + $0xf0] sm:$0xff] %v2817
  %2881 = vst [vmem:[%s4 + $0xf8] sm:$0xff] %v2849
  // Predicated region
  $region18: #{position_aware_forward.2} parent=0 // pred_check
    _
  $region19: #{position_aware_forward.2} parent=0 // pred_check_branch
    %2883 = sbr.rel (0) target = $region21
  $region20: #{position_aware_forward.2} parent=0 // pred_region
    _
  $region21: #{position_aware_forward.2} parent=0 // pred_fallthru
    _
  // Predicated region
  $region22: #{position_aware_forward.2} parent=0 // pred_check
    _
  $region23: #{position_aware_forward.2} parent=0 // pred_check_branch
    %2885 = sbr.rel (0) target = $region25
  $region24: #{position_aware_forward.2} parent=0 // pred_region
    _
  $region25: #{position_aware_forward.2} parent=0 // pred_fallthru
    _

// kernel: position_aware_forward.3
$region0: #{position_aware_forward.3}
  #allocation0 [shape = 'u32[]', space=smem, size = 0x4, offset = 0x4, fixed_abs, tag = 'smem constant byte address 0x4 - core index']
  #allocation1 [shape = 'u32[144,128]{1,0:T(1,128)}', space=vmem, size = 0x12000, scoped, tag = 'internal scratch']
  #allocation2 [shape = 'bf16[2,10,10,32]{3,2,1,0:T(8,128)(2,1)}', space=vmem, size = 0x14000, scoped, tag = 'scratch operand']
  #allocation3 [shape = 'bf16[2,8,8,288]{3,2,1,0:T(8,128)(2,1)}', space=vmem, size = 0x18000, scoped, tag = 'scratch operand']
  #allocation4 [shape = 'bf16[2,10,10,32]{3,2,1,0:T(8,128)(2,1)}', space=vmem, size = 0x14000, scoped, tag = 'scratch operand']
  #allocation5 [shape = 'bf16[2,8,8,288]{3,2,1,0:T(8,128)(2,1)}', space=vmem, size = 0x18000, scoped, tag = 'scratch operand']
  %s0 = inlined_call_operand.vmem [shape: f32[2,8,8,32], index: 0, kind: input, shape index: {}]
  %s1 = inlined_call_operand.vmem [shape: f32[288,32], index: 1, kind: input, shape index: {}]
  %s2 = inlined_call_operand.vmem [shape: f32[1,32], index: 2, kind: input, shape index: {}]
  %s3 = inlined_call_operand.vmem [shape: f32[288,16], index: 3, kind: input, shape index: {}]
  %s4 = inlined_call_operand.vmem [shape: f32[1,16], index: 4, kind: input, shape index: {}]
  %s5 = inlined_call_operand.hbm [shape: f32[2,8,8,16], index: 5, kind: output, shape index: {}]
  %s6 = sld [smem:[#allocation0]]
  $region30: #{position_aware_forward.3} parent=0
    _
  %s8 = ssub.s32 1, %s6
  %s9 = scalar_select 0, %s8, %s6
  $region1: #{position_aware_forward.3} parent=0
    #allocation6 [shape = 'u8[65536]{0}', space=vmem, size = 0x10000, scoped, tag = 'output window, operand 0, single buffered']
    #allocation7 [shape = 's32[1]{0}', space=sflag, size = 0x4, scoped, tag = 'scoped memory for position_aware_forward.3']
    %10 = vsyncpa [#allocation7], 0
    // Predicated region
    $region2: #{position_aware_forward.3} parent=1 // pred_check
      _
    $region3: #{position_aware_forward.3} parent=1 // pred_check_branch
      %12 = sbr.rel (0) target = $region5
    $region4: #{position_aware_forward.3} parent=1 // pred_region
      _
    $region5: #{position_aware_forward.3} parent=1 // pred_fallthru
      _
    // Predicated region
    $region6: #{position_aware_forward.3} parent=1 // pred_check
      _
    $region7: #{position_aware_forward.3} parent=1 // pred_check_branch
      %14 = sbr.rel (0) target = $region9
    $region8: #{position_aware_forward.3} parent=1 // pred_region
      _
    $region9: #{position_aware_forward.3} parent=1 // pred_fallthru
      _
    // Predicated region
    $region10: #{position_aware_forward.3} parent=1 // pred_check
      _
    $region11: #{position_aware_forward.3} parent=1 // pred_check_branch
      %16 = sbr.rel (0) target = $region13
    $region12: #{position_aware_forward.3} parent=1 // pred_region
      _
    $region13: #{position_aware_forward.3} parent=1 // pred_fallthru
      _
    // Predicated region
    $region14: #{position_aware_forward.3} parent=1 // pred_check
      _
    $region15: #{position_aware_forward.3} parent=1 // pred_check_branch
      %18 = sbr.rel (0) target = $region17
    $region16: #{position_aware_forward.3} parent=1 // pred_region
      _
    $region17: #{position_aware_forward.3} parent=1 // pred_fallthru
      _
    // Predicated region
    $region18: #{position_aware_forward.3} parent=1 // pred_check
      _
    $region19: #{position_aware_forward.3} parent=1 // pred_check_branch
      %20 = sbr.rel (0) target = $region21
    $region20: #{position_aware_forward.3} parent=1 // pred_region
      _
    $region21: #{position_aware_forward.3} parent=1 // pred_fallthru
      _
    %vm22 = vcmask 257024
    %23 = vst.msk [vmem:[#allocation2] sm:$0xf] %vm22, 0
    %vm24 = vcmask 253952
    %25 = vst.msk [vmem:[#allocation2 + $0x4] sm:$0x1] %vm24, 0
    %26 = vst.msk [vmem:[#allocation2 + $0x8] sm:$0xf] %vm22, 0
    %27 = vst.msk [vmem:[#allocation2 + $0xc] sm:$0x1] %vm24, 0
    %28 = vst.msk [vmem:[#allocation2 + $0x10] sm:$0xf] %vm22, 0
    %29 = vst.msk [vmem:[#allocation2 + $0x14] sm:$0x1] %vm24, 0
    %30 = vst.msk [vmem:[#allocation2 + $0x18] sm:$0xf] %vm22, 0
    %31 = vst.msk [vmem:[#allocation2 + $0x1c] sm:$0x1] %vm24, 0
    %32 = vst.msk [vmem:[#allocation2 + $0x20] sm:$0xf] %vm22, 0
    %33 = vst.msk [vmem:[#allocation2 + $0x24] sm:$0x1] %vm24, 0
    %34 = vst.msk [vmem:[#allocation2 + $0x28] sm:$0xf] %vm22, 0
    %35 = vst.msk [vmem:[#allocation2 + $0x2c] sm:$0x1] %vm24, 0
    %36 = vst.msk [vmem:[#allocation2 + $0x30] sm:$0xf] %vm22, 0
    %37 = vst.msk [vmem:[#allocation2 + $0x34] sm:$0x1] %vm24, 0
    %38 = vst.msk [vmem:[#allocation2 + $0x38] sm:$0xf] %vm22, 0
    %39 = vst.msk [vmem:[#allocation2 + $0x3c] sm:$0x1] %vm24, 0
    %40 = vst.msk [vmem:[#allocation2 + $0x40] sm:$0xf] %vm22, 0
    %41 = vst.msk [vmem:[#allocation2 + $0x44] sm:$0x1] %vm24, 0
    %42 = vst.msk [vmem:[#allocation2 + $0x48] sm:$0xf] %vm22, 0
    %43 = vst.msk [vmem:[#allocation2 + $0x4c] sm:$0x1] %vm24, 0
    %44 = vst.msk [vmem:[#allocation2 + $0x50] sm:$0xf] %vm22, 0
    %45 = vst.msk [vmem:[#allocation2 + $0x54] sm:$0x1] %vm24, 0
    %46 = vst.msk [vmem:[#allocation2 + $0x58] sm:$0xf] %vm22, 0
    %47 = vst.msk [vmem:[#allocation2 + $0x5c] sm:$0x1] %vm24, 0
    %48 = vst.msk [vmem:[#allocation2 + $0x60] sm:$0xf] %vm22, 0
    %49 = vst.msk [vmem:[#allocation2 + $0x64] sm:$0x1] %vm24, 0
    %50 = vst.msk [vmem:[#allocation2 + $0x68] sm:$0xf] %vm22, 0
    %51 = vst.msk [vmem:[#allocation2 + $0x6c] sm:$0x1] %vm24, 0
    %52 = vst.msk [vmem:[#allocation2 + $0x70] sm:$0xf] %vm22, 0
    %53 = vst.msk [vmem:[#allocation2 + $0x74] sm:$0x1] %vm24, 0
    %54 = vst.msk [vmem:[#allocation2 + $0x78] sm:$0xf] %vm22, 0
    %55 = vst.msk [vmem:[#allocation2 + $0x7c] sm:$0x1] %vm24, 0
    %56 = vst.msk [vmem:[#allocation2 + $0x80] sm:$0xf] %vm22, 0
    %57 = vst.msk [vmem:[#allocation2 + $0x84] sm:$0x1] %vm24, 0
    %58 = vst.msk [vmem:[#allocation2 + $0x88] sm:$0xf] %vm22, 0
    %59 = vst.msk [vmem:[#allocation2 + $0x8c] sm:$0x1] %vm24, 0
    %60 = vst.msk [vmem:[#allocation2 + $0x90] sm:$0xf] %vm22, 0
    %61 = vst.msk [vmem:[#allocation2 + $0x94] sm:$0x1] %vm24, 0
    %62 = vst.msk [vmem:[#allocation2 + $0x98] sm:$0xf] %vm22, 0
    %63 = vst.msk [vmem:[#allocation2 + $0x9c] sm:$0x1] %vm24, 0
    %64 = vst.msk [vmem:[#allocation4] sm:$0xf] %vm22, 0
    %65 = vst.msk [vmem:[#allocation4 + $0x4] sm:$0x1] %vm24, 0
    %66 = vst.msk [vmem:[#allocation4 + $0x8] sm:$0xf] %vm22, 0
    %67 = vst.msk [vmem:[#allocation4 + $0xc] sm:$0x1] %vm24, 0
    %68 = vst.msk [vmem:[#allocation4 + $0x10] sm:$0xf] %vm22, 0
    %69 = vst.msk [vmem:[#allocation4 + $0x14] sm:$0x1] %vm24, 0
    %70 = vst.msk [vmem:[#allocation4 + $0x18] sm:$0xf] %vm22, 0
    %71 = vst.msk [vmem:[#allocation4 + $0x1c] sm:$0x1] %vm24, 0
    %72 = vst.msk [vmem:[#allocation4 + $0x20] sm:$0xf] %vm22, 0
    %73 = vst.msk [vmem:[#allocation4 + $0x24] sm:$0x1] %vm24, 0
    %74 = vst.msk [vmem:[#allocation4 + $0x28] sm:$0xf] %vm22, 0
    %75 = vst.msk [vmem:[#allocation4 + $0x2c] sm:$0x1] %vm24, 0
    %76 = vst.msk [vmem:[#allocation4 + $0x30] sm:$0xf] %vm22, 0
    %77 = vst.msk [vmem:[#allocation4 + $0x34] sm:$0x1] %vm24, 0
    %78 = vst.msk [vmem:[#allocation4 + $0x38] sm:$0xf] %vm22, 0
    %79 = vst.msk [vmem:[#allocation4 + $0x3c] sm:$0x1] %vm24, 0
    %80 = vst.msk [vmem:[#allocation4 + $0x40] sm:$0xf] %vm22, 0
    %81 = vst.msk [vmem:[#allocation4 + $0x44] sm:$0x1] %vm24, 0
    %82 = vst.msk [vmem:[#allocation4 + $0x48] sm:$0xf] %vm22, 0
    %83 = vst.msk [vmem:[#allocation4 + $0x4c] sm:$0x1] %vm24, 0
    %84 = vst.msk [vmem:[#allocation4 + $0x50] sm:$0xf] %vm22, 0
    %85 = vst.msk [vmem:[#allocation4 + $0x54] sm:$0x1] %vm24, 0
    %86 = vst.msk [vmem:[#allocation4 + $0x58] sm:$0xf] %vm22, 0
    %87 = vst.msk [vmem:[#allocation4 + $0x5c] sm:$0x1] %vm24, 0
    %88 = vst.msk [vmem:[#allocation4 + $0x60] sm:$0xf] %vm22, 0
    %89 = vst.msk [vmem:[#allocation4 + $0x64] sm:$0x1] %vm24, 0
    %90 = vst.msk [vmem:[#allocation4 + $0x68] sm:$0xf] %vm22, 0
    %91 = vst.msk [vmem:[#allocation4 + $0x6c] sm:$0x1] %vm24, 0
    %92 = vst.msk [vmem:[#allocation4 + $0x70] sm:$0xf] %vm22, 0
    %93 = vst.msk [vmem:[#allocation4 + $0x74] sm:$0x1] %vm24, 0
    %94 = vst.msk [vmem:[#allocation4 + $0x78] sm:$0xf] %vm22, 0
    %95 = vst.msk [vmem:[#allocation4 + $0x7c] sm:$0x1] %vm24, 0
    %96 = vst.msk [vmem:[#allocation4 + $0x80] sm:$0xf] %vm22, 0
    %97 = vst.msk [vmem:[#allocation4 + $0x84] sm:$0x1] %vm24, 0
    %98 = vst.msk [vmem:[#allocation4 + $0x88] sm:$0xf] %vm22, 0
    %99 = vst.msk [vmem:[#allocation4 + $0x8c] sm:$0x1] %vm24, 0
    %100 = vst.msk [vmem:[#allocation4 + $0x90] sm:$0xf] %vm22, 0
    %101 = vst.msk [vmem:[#allocation4 + $0x94] sm:$0x1] %vm24, 0
    %102 = vst.msk [vmem:[#allocation4 + $0x98] sm:$0xf] %vm22, 0
    %103 = vst.msk [vmem:[#allocation4 + $0x9c] sm:$0x1] %vm24, 0
    %v104 = vld [vmem:[%s0] sm:$0xff]
    %v105 = vld [vmem:[%s0 + $0x8] sm:$0xff]
    %v106 = vld [vmem:[%s0 + $0x10] sm:$0xff]
    %v107 = vld [vmem:[%s0 + $0x18] sm:$0xff]
    %v108 = vld [vmem:[%s0 + $0x20] sm:$0xff]
    %v109 = vld [vmem:[%s0 + $0x28] sm:$0xff]
    %v110 = vld [vmem:[%s0 + $0x30] sm:$0xff]
    %v111 = vld [vmem:[%s0 + $0x38] sm:$0xff]
    %v112 = vld [vmem:[%s0 + $0x40] sm:$0xff]
    %v113 = vld [vmem:[%s0 + $0x48] sm:$0xff]
    %v114 = vld [vmem:[%s0 + $0x50] sm:$0xff]
    %v115 = vld [vmem:[%s0 + $0x58] sm:$0xff]
    %v116 = vld [vmem:[%s0 + $0x60] sm:$0xff]
    %v117 = vld [vmem:[%s0 + $0x68] sm:$0xff]
    %v118 = vld [vmem:[%s0 + $0x70] sm:$0xff]
    %v119 = vld [vmem:[%s0 + $0x78] sm:$0xff]
    %v120 = vpack.c.bf16 %v104, %v104
    %v121 = vpack.c.bf16 %v105, %v105
    %v122 = vpack.c.bf16 %v106, %v106
    %v123 = vpack.c.bf16 %v107, %v107
    %v124 = vpack.c.bf16 %v108, %v108
    %v125 = vpack.c.bf16 %v109, %v109
    %v126 = vpack.c.bf16 %v110, %v110
    %v127 = vpack.c.bf16 %v111, %v111
    %v128 = vpack.c.bf16 %v112, %v112
    %v129 = vpack.c.bf16 %v113, %v113
    %v130 = vpack.c.bf16 %v114, %v114
    %v131 = vpack.c.bf16 %v115, %v115
    %v132 = vpack.c.bf16 %v116, %v116
    %v133 = vpack.c.bf16 %v117, %v117
    %v134 = vpack.c.bf16 %v118, %v118
    %v135 = vpack.c.bf16 %v119, %v119
    %v152 = vunpack.c.l.b16 %v120
    %v153 = vunpack.c.l.b16 %v121
    %v154 = vunpack.c.l.b16 %v122
    %v155 = vunpack.c.l.b16 %v123
    %v156 = vunpack.c.l.b16 %v124
    %v157 = vunpack.c.l.b16 %v125
    %v158 = vunpack.c.l.b16 %v126
    %v159 = vunpack.c.l.b16 %v127
    %v160 = vunpack.c.l.b16 %v128
    %v161 = vunpack.c.l.b16 %v129
    %v162 = vunpack.c.l.b16 %v130
    %v163 = vunpack.c.l.b16 %v131
    %v164 = vunpack.c.l.b16 %v132
    %v165 = vunpack.c.l.b16 %v133
    %v166 = vunpack.c.l.b16 %v134
    %v167 = vunpack.c.l.b16 %v135
    %v168 = vpack.c.b16 %v152, %v152
    %v169 = vpack.c.b16 %v153, %v153
    %v170 = vpack.c.b16 %v154, %v154
    %v171 = vpack.c.b16 %v155, %v155
    %v172 = vpack.c.b16 %v156, %v156
    %v173 = vpack.c.b16 %v157, %v157
    %v174 = vpack.c.b16 %v158, %v158
    %v175 = vpack.c.b16 %v159, %v159
    %v176 = vpack.c.b16 %v160, %v160
    %v177 = vpack.c.b16 %v161, %v161
    %v178 = vpack.c.b16 %v162, %v162
    %v179 = vpack.c.b16 %v163, %v163
    %v180 = vpack.c.b16 %v164, %v164
    %v181 = vpack.c.b16 %v165, %v165
    %v182 = vpack.c.b16 %v166, %v166
    %v183 = vpack.c.b16 %v167, %v167
    %v185 = vshrl.u32 %v168, 16
    %v187 = vrot.slane %v185, 7
    %v188 = vshll.u32 %v168, 16
    %v190 = vor.u32 %v187, %v188
    %v191 = vrot.slane %v187, 4
    %v193 = vshrl.u32 %v169, 16
    %v195 = vrot.slane %v193, 7
    %v196 = vshll.u32 %v169, 16
    %v198 = vor.u32 %v195, %v196
    %v199 = vrot.slane %v195, 4
    %v201 = vshrl.u32 %v170, 16
    %v203 = vrot.slane %v201, 7
    %v204 = vshll.u32 %v170, 16
    %v206 = vor.u32 %v203, %v204
    %v207 = vrot.slane %v203, 4
    %v209 = vshrl.u32 %v171, 16
    %v211 = vrot.slane %v209, 7
    %v212 = vshll.u32 %v171, 16
    %v214 = vor.u32 %v211, %v212
    %v215 = vrot.slane %v211, 4
    %v217 = vshrl.u32 %v172, 16
    %v219 = vrot.slane %v217, 7
    %v220 = vshll.u32 %v172, 16
    %v222 = vor.u32 %v219, %v220
    %v223 = vrot.slane %v219, 4
    %v225 = vshrl.u32 %v173, 16
    %v227 = vrot.slane %v225, 7
    %v228 = vshll.u32 %v173, 16
    %v230 = vor.u32 %v227, %v228
    %v231 = vrot.slane %v227, 4
    %v233 = vshrl.u32 %v174, 16
    %v235 = vrot.slane %v233, 7
    %v236 = vshll.u32 %v174, 16
    %v238 = vor.u32 %v235, %v236
    %v239 = vrot.slane %v235, 4
    %v241 = vshrl.u32 %v175, 16
    %v243 = vrot.slane %v241, 7
    %v244 = vshll.u32 %v175, 16
    %v246 = vor.u32 %v243, %v244
    %v247 = vrot.slane %v243, 4
    %v249 = vshrl.u32 %v176, 16
    %v251 = vrot.slane %v249, 7
    %v252 = vshll.u32 %v176, 16
    %v254 = vor.u32 %v251, %v252
    %v255 = vrot.slane %v251, 4
    %v257 = vshrl.u32 %v177, 16
    %v259 = vrot.slane %v257, 7
    %v260 = vshll.u32 %v177, 16
    %v262 = vor.u32 %v259, %v260
    %v263 = vrot.slane %v259, 4
    %v265 = vshrl.u32 %v178, 16
    %v267 = vrot.slane %v265, 7
    %v268 = vshll.u32 %v178, 16
    %v270 = vor.u32 %v267, %v268
    %v271 = vrot.slane %v267, 4
    %v273 = vshrl.u32 %v179, 16
    %v275 = vrot.slane %v273, 7
    %v276 = vshll.u32 %v179, 16
    %v278 = vor.u32 %v275, %v276
    %v279 = vrot.slane %v275, 4
    %v281 = vshrl.u32 %v180, 16
    %v283 = vrot.slane %v281, 7
    %v284 = vshll.u32 %v180, 16
    %v286 = vor.u32 %v283, %v284
    %v287 = vrot.slane %v283, 4
    %v289 = vshrl.u32 %v181, 16
    %v291 = vrot.slane %v289, 7
    %v292 = vshll.u32 %v181, 16
    %v294 = vor.u32 %v291, %v292
    %v295 = vrot.slane %v291, 4
    %v297 = vshrl.u32 %v182, 16
    %v299 = vrot.slane %v297, 7
    %v300 = vshll.u32 %v182, 16
    %v302 = vor.u32 %v299, %v300
    %v303 = vrot.slane %v299, 4
    %v305 = vshrl.u32 %v183, 16
    %v307 = vrot.slane %v305, 7
    %v308 = vshll.u32 %v183, 16
    %v310 = vor.u32 %v307, %v308
    %v311 = vrot.slane %v307, 4
    %s344 = scalar_lea.vmem [#allocation2], 8
    %vm345 = vcmask 257024
    %vm346 = vsmask.f32 7938
    %vm347 = vmand %vm345, %vm346
    %v348 = vld [vmem:[%s344] sm:$0xf]
    %v349 = vsel %vm347, %v190, %v348
    %350 = vst [vmem:[%s344] sm:$0xf] %v349
    %vm351 = vcmask 253952
    %vm352 = vsmask.f32 256
    %vm353 = vmand %vm351, %vm352
    %v354 = vld [vmem:[%s344 + $0x4] sm:$0x1]
    %v355 = vsel %vm353, %v191, %v354
    %356 = vst [vmem:[%s344 + $0x4] sm:$0x1] %v355
    %v357 = vld [vmem:[%s344 + $0x8] sm:$0xf]
    %v358 = vsel %vm347, %v198, %v357
    %359 = vst [vmem:[%s344 + $0x8] sm:$0xf] %v358
    %v360 = vld [vmem:[%s344 + $0xc] sm:$0x1]
    %v361 = vsel %vm353, %v199, %v360
    %362 = vst [vmem:[%s344 + $0xc] sm:$0x1] %v361
    %v363 = vld [vmem:[%s344 + $0x10] sm:$0xf]
    %v364 = vsel %vm347, %v206, %v363
    %365 = vst [vmem:[%s344 + $0x10] sm:$0xf] %v364
    %v366 = vld [vmem:[%s344 + $0x14] sm:$0x1]
    %v367 = vsel %vm353, %v207, %v366
    %368 = vst [vmem:[%s344 + $0x14] sm:$0x1] %v367
    %v369 = vld [vmem:[%s344 + $0x18] sm:$0xf]
    %v370 = vsel %vm347, %v214, %v369
    %371 = vst [vmem:[%s344 + $0x18] sm:$0xf] %v370
    %v372 = vld [vmem:[%s344 + $0x1c] sm:$0x1]
    %v373 = vsel %vm353, %v215, %v372
    %374 = vst [vmem:[%s344 + $0x1c] sm:$0x1] %v373
    %v375 = vld [vmem:[%s344 + $0x20] sm:$0xf]
    %v376 = vsel %vm347, %v222, %v375
    %377 = vst [vmem:[%s344 + $0x20] sm:$0xf] %v376
    %v378 = vld [vmem:[%s344 + $0x24] sm:$0x1]
    %v379 = vsel %vm353, %v223, %v378
    %380 = vst [vmem:[%s344 + $0x24] sm:$0x1] %v379
    %v381 = vld [vmem:[%s344 + $0x28] sm:$0xf]
    %v382 = vsel %vm347, %v230, %v381
    %383 = vst [vmem:[%s344 + $0x28] sm:$0xf] %v382
    %v384 = vld [vmem:[%s344 + $0x2c] sm:$0x1]
    %v385 = vsel %vm353, %v231, %v384
    %386 = vst [vmem:[%s344 + $0x2c] sm:$0x1] %v385
    %v387 = vld [vmem:[%s344 + $0x30] sm:$0xf]
    %v388 = vsel %vm347, %v238, %v387
    %389 = vst [vmem:[%s344 + $0x30] sm:$0xf] %v388
    %v390 = vld [vmem:[%s344 + $0x34] sm:$0x1]
    %v391 = vsel %vm353, %v239, %v390
    %392 = vst [vmem:[%s344 + $0x34] sm:$0x1] %v391
    %v393 = vld [vmem:[%s344 + $0x38] sm:$0xf]
    %v394 = vsel %vm347, %v246, %v393
    %395 = vst [vmem:[%s344 + $0x38] sm:$0xf] %v394
    %v396 = vld [vmem:[%s344 + $0x3c] sm:$0x1]
    %v397 = vsel %vm353, %v247, %v396
    %398 = vst [vmem:[%s344 + $0x3c] sm:$0x1] %v397
    %v399 = vld [vmem:[%s344 + $0x50] sm:$0xf]
    %v400 = vsel %vm347, %v254, %v399
    %401 = vst [vmem:[%s344 + $0x50] sm:$0xf] %v400
    %v402 = vld [vmem:[%s344 + $0x54] sm:$0x1]
    %v403 = vsel %vm353, %v255, %v402
    %404 = vst [vmem:[%s344 + $0x54] sm:$0x1] %v403
    %v405 = vld [vmem:[%s344 + $0x58] sm:$0xf]
    %v406 = vsel %vm347, %v262, %v405
    %407 = vst [vmem:[%s344 + $0x58] sm:$0xf] %v406
    %v408 = vld [vmem:[%s344 + $0x5c] sm:$0x1]
    %v409 = vsel %vm353, %v263, %v408
    %410 = vst [vmem:[%s344 + $0x5c] sm:$0x1] %v409
    %v411 = vld [vmem:[%s344 + $0x60] sm:$0xf]
    %v412 = vsel %vm347, %v270, %v411
    %413 = vst [vmem:[%s344 + $0x60] sm:$0xf] %v412
    %v414 = vld [vmem:[%s344 + $0x64] sm:$0x1]
    %v415 = vsel %vm353, %v271, %v414
    %416 = vst [vmem:[%s344 + $0x64] sm:$0x1] %v415
    %v417 = vld [vmem:[%s344 + $0x68] sm:$0xf]
    %v418 = vsel %vm347, %v278, %v417
    %419 = vst [vmem:[%s344 + $0x68] sm:$0xf] %v418
    %v420 = vld [vmem:[%s344 + $0x6c] sm:$0x1]
    %v421 = vsel %vm353, %v279, %v420
    %422 = vst [vmem:[%s344 + $0x6c] sm:$0x1] %v421
    %v423 = vld [vmem:[%s344 + $0x70] sm:$0xf]
    %v424 = vsel %vm347, %v286, %v423
    %425 = vst [vmem:[%s344 + $0x70] sm:$0xf] %v424
    %v426 = vld [vmem:[%s344 + $0x74] sm:$0x1]
    %v427 = vsel %vm353, %v287, %v426
    %428 = vst [vmem:[%s344 + $0x74] sm:$0x1] %v427
    %v429 = vld [vmem:[%s344 + $0x78] sm:$0xf]
    %v430 = vsel %vm347, %v294, %v429
    %431 = vst [vmem:[%s344 + $0x78] sm:$0xf] %v430
    %v432 = vld [vmem:[%s344 + $0x7c] sm:$0x1]
    %v433 = vsel %vm353, %v295, %v432
    %434 = vst [vmem:[%s344 + $0x7c] sm:$0x1] %v433
    %v435 = vld [vmem:[%s344 + $0x80] sm:$0xf]
    %v436 = vsel %vm347, %v302, %v435
    %437 = vst [vmem:[%s344 + $0x80] sm:$0xf] %v436
    %v438 = vld [vmem:[%s344 + $0x84] sm:$0x1]
    %v439 = vsel %vm353, %v303, %v438
    %440 = vst [vmem:[%s344 + $0x84] sm:$0x1] %v439
    %v441 = vld [vmem:[%s344 + $0x88] sm:$0xf]
    %v442 = vsel %vm347, %v310, %v441
    %443 = vst [vmem:[%s344 + $0x88] sm:$0xf] %v442
    %v444 = vld [vmem:[%s344 + $0x8c] sm:$0x1]
    %v445 = vsel %vm353, %v311, %v444
    %446 = vst [vmem:[%s344 + $0x8c] sm:$0x1] %v445
    %v447 = vld [vmem:[#allocation2] sm:$0xf]
    %v448 = vld [vmem:[#allocation2 + $0x8] sm:$0xf]
    %v449 = vld [vmem:[#allocation2 + $0x10] sm:$0xf]
    %v450 = vld [vmem:[#allocation2 + $0x18] sm:$0xf]
    %v451 = vld [vmem:[#allocation2 + $0x20] sm:$0xf]
    %v452 = vld [vmem:[#allocation2 + $0x28] sm:$0xf]
    %v453 = vld [vmem:[#allocation2 + $0x30] sm:$0xf]
    %v454 = vld [vmem:[#allocation2 + $0x38] sm:$0xf]
    %v455 = vld [vmem:[#allocation2 + $0x50] sm:$0xf]
    %v456 = vld [vmem:[#allocation2 + $0x58] sm:$0xf]
    %v457 = vld [vmem:[#allocation2 + $0x60] sm:$0xf]
    %v458 = vld [vmem:[#allocation2 + $0x68] sm:$0xf]
    %v459 = vld [vmem:[#allocation2 + $0x70] sm:$0xf]
    %v460 = vld [vmem:[#allocation2 + $0x78] sm:$0xf]
    %v461 = vld [vmem:[#allocation2 + $0x80] sm:$0xf]
    %v462 = vld [vmem:[#allocation2 + $0x88] sm:$0xf]
    %463 = vst.msk [vmem:[#allocation3] sm:$0xf] %vm22, %v447
    %464 = vst.msk [vmem:[#allocation3 + $0xc] sm:$0xf] %vm22, %v448
    %465 = vst.msk [vmem:[#allocation3 + $0x18] sm:$0xf] %vm22, %v449
    %466 = vst.msk [vmem:[#allocation3 + $0x24] sm:$0xf] %vm22, %v450
    %467 = vst.msk [vmem:[#allocation3 + $0x30] sm:$0xf] %vm22, %v451
    %468 = vst.msk [vmem:[#allocation3 + $0x3c] sm:$0xf] %vm22, %v452
    %469 = vst.msk [vmem:[#allocation3 + $0x48] sm:$0xf] %vm22, %v453
    %470 = vst.msk [vmem:[#allocation3 + $0x54] sm:$0xf] %vm22, %v454
    %471 = vst.msk [vmem:[#allocation3 + $0x60] sm:$0xf] %vm22, %v455
    %472 = vst.msk [vmem:[#allocation3 + $0x6c] sm:$0xf] %vm22, %v456
    %473 = vst.msk [vmem:[#allocation3 + $0x78] sm:$0xf] %vm22, %v457
    %474 = vst.msk [vmem:[#allocation3 + $0x84] sm:$0xf] %vm22, %v458
    %475 = vst.msk [vmem:[#allocation3 + $0x90] sm:$0xf] %vm22, %v459
    %476 = vst.msk [vmem:[#allocation3 + $0x9c] sm:$0xf] %vm22, %v460
    %477 = vst.msk [vmem:[#allocation3 + $0xa8] sm:$0xf] %vm22, %v461
    %478 = vst.msk [vmem:[#allocation3 + $0xb4] sm:$0xf] %vm22, %v462
    %v479 = vld [vmem:[#allocation2] sm:$0xf]
    %v480 = vld [vmem:[#allocation2 + $0x4] sm:$0x1]
    %v481 = vld [vmem:[#allocation2 + $0x8] sm:$0xf]
    %v482 = vld [vmem:[#allocation2 + $0xc] sm:$0x1]
    %v483 = vld [vmem:[#allocation2 + $0x10] sm:$0xf]
    %v484 = vld [vmem:[#allocation2 + $0x14] sm:$0x1]
    %v485 = vld [vmem:[#allocation2 + $0x18] sm:$0xf]
    %v486 = vld [vmem:[#allocation2 + $0x1c] sm:$0x1]
    %v487 = vld [vmem:[#allocation2 + $0x20] sm:$0xf]
    %v488 = vld [vmem:[#allocation2 + $0x24] sm:$0x1]
    %v489 = vld [vmem:[#allocation2 + $0x28] sm:$0xf]
    %v490 = vld [vmem:[#allocation2 + $0x2c] sm:$0x1]
    %v491 = vld [vmem:[#allocation2 + $0x30] sm:$0xf]
    %v492 = vld [vmem:[#allocation2 + $0x34] sm:$0x1]
    %v493 = vld [vmem:[#allocation2 + $0x38] sm:$0xf]
    %v494 = vld [vmem:[#allocation2 + $0x3c] sm:$0x1]
    %v495 = vld [vmem:[#allocation2 + $0x50] sm:$0xf]
    %v496 = vld [vmem:[#allocation2 + $0x54] sm:$0x1]
    %v497 = vld [vmem:[#allocation2 + $0x58] sm:$0xf]
    %v498 = vld [vmem:[#allocation2 + $0x5c] sm:$0x1]
    %v499 = vld [vmem:[#allocation2 + $0x60] sm:$0xf]
    %v500 = vld [vmem:[#allocation2 + $0x64] sm:$0x1]
    %v501 = vld [vmem:[#allocation2 + $0x68] sm:$0xf]
    %v502 = vld [vmem:[#allocation2 + $0x6c] sm:$0x1]
    %v503 = vld [vmem:[#allocation2 + $0x70] sm:$0xf]
    %v504 = vld [vmem:[#allocation2 + $0x74] sm:$0x1]
    %v505 = vld [vmem:[#allocation2 + $0x78] sm:$0xf]
    %v506 = vld [vmem:[#allocation2 + $0x7c] sm:$0x1]
    %v507 = vld [vmem:[#allocation2 + $0x80] sm:$0xf]
    %v508 = vld [vmem:[#allocation2 + $0x84] sm:$0x1]
    %v509 = vld [vmem:[#allocation2 + $0x88] sm:$0xf]
    %v510 = vld [vmem:[#allocation2 + $0x8c] sm:$0x1]
    %vm511 = vsmask.f32 3328
    %vm512 = vsmask.f32 7440
    %vm513 = vmor %vm511, %vm512
    %v515 = vshrl.u32 %v479, 16
    %v517 = vrot.slane %v515, 4
    %v518 = vshll.u32 %v479, 16
    %v520 = vrot.slane %v518, 5
    %v521 = vor.u32 %v517, %v520
    %v522 = vrot.slane %v521, 4
    %v524 = vshll.u32 %v480, 16
    %v526 = vrot.slane %v524, 5
    %v527 = vsel %vm513, %v522, %v526
    %v529 = vshrl.u32 %v481, 16
    %v531 = vrot.slane %v529, 4
    %v532 = vshll.u32 %v481, 16
    %v534 = vrot.slane %v532, 5
    %v535 = vor.u32 %v531, %v534
    %v536 = vrot.slane %v535, 4
    %v538 = vshll.u32 %v482, 16
    %v540 = vrot.slane %v538, 5
    %v541 = vsel %vm513, %v536, %v540
    %v543 = vshrl.u32 %v483, 16
    %v545 = vrot.slane %v543, 4
    %v546 = vshll.u32 %v483, 16
    %v548 = vrot.slane %v546, 5
    %v549 = vor.u32 %v545, %v548
    %v550 = vrot.slane %v549, 4
    %v552 = vshll.u32 %v484, 16
    %v554 = vrot.slane %v552, 5
    %v555 = vsel %vm513, %v550, %v554
    %v557 = vshrl.u32 %v485, 16
    %v559 = vrot.slane %v557, 4
    %v560 = vshll.u32 %v485, 16
    %v562 = vrot.slane %v560, 5
    %v563 = vor.u32 %v559, %v562
    %v564 = vrot.slane %v563, 4
    %v566 = vshll.u32 %v486, 16
    %v568 = vrot.slane %v566, 5
    %v569 = vsel %vm513, %v564, %v568
    %v571 = vshrl.u32 %v487, 16
    %v573 = vrot.slane %v571, 4
    %v574 = vshll.u32 %v487, 16
    %v576 = vrot.slane %v574, 5
    %v577 = vor.u32 %v573, %v576
    %v578 = vrot.slane %v577, 4
    %v580 = vshll.u32 %v488, 16
    %v582 = vrot.slane %v580, 5
    %v583 = vsel %vm513, %v578, %v582
    %v585 = vshrl.u32 %v489, 16
    %v587 = vrot.slane %v585, 4
    %v588 = vshll.u32 %v489, 16
    %v590 = vrot.slane %v588, 5
    %v591 = vor.u32 %v587, %v590
    %v592 = vrot.slane %v591, 4
    %v594 = vshll.u32 %v490, 16
    %v596 = vrot.slane %v594, 5
    %v597 = vsel %vm513, %v592, %v596
    %v599 = vshrl.u32 %v491, 16
    %v601 = vrot.slane %v599, 4
    %v602 = vshll.u32 %v491, 16
    %v604 = vrot.slane %v602, 5
    %v605 = vor.u32 %v601, %v604
    %v606 = vrot.slane %v605, 4
    %v608 = vshll.u32 %v492, 16
    %v610 = vrot.slane %v608, 5
    %v611 = vsel %vm513, %v606, %v610
    %v613 = vshrl.u32 %v493, 16
    %v615 = vrot.slane %v613, 4
    %v616 = vshll.u32 %v493, 16
    %v618 = vrot.slane %v616, 5
    %v619 = vor.u32 %v615, %v618
    %v620 = vrot.slane %v619, 4
    %v622 = vshll.u32 %v494, 16
    %v624 = vrot.slane %v622, 5
    %v625 = vsel %vm513, %v620, %v624
    %v627 = vshrl.u32 %v495, 16
    %v629 = vrot.slane %v627, 4
    %v630 = vshll.u32 %v495, 16
    %v632 = vrot.slane %v630, 5
    %v633 = vor.u32 %v629, %v632
    %v634 = vrot.slane %v633, 4
    %v636 = vshll.u32 %v496, 16
    %v638 = vrot.slane %v636, 5
    %v639 = vsel %vm513, %v634, %v638
    %v641 = vshrl.u32 %v497, 16
    %v643 = vrot.slane %v641, 4
    %v644 = vshll.u32 %v497, 16
    %v646 = vrot.slane %v644, 5
    %v647 = vor.u32 %v643, %v646
    %v648 = vrot.slane %v647, 4
    %v650 = vshll.u32 %v498, 16
    %v652 = vrot.slane %v650, 5
    %v653 = vsel %vm513, %v648, %v652
    %v655 = vshrl.u32 %v499, 16
    %v657 = vrot.slane %v655, 4
    %v658 = vshll.u32 %v499, 16
    %v660 = vrot.slane %v658, 5
    %v661 = vor.u32 %v657, %v660
    %v662 = vrot.slane %v661, 4
    %v664 = vshll.u32 %v500, 16
    %v666 = vrot.slane %v664, 5
    %v667 = vsel %vm513, %v662, %v666
    %v669 = vshrl.u32 %v501, 16
    %v671 = vrot.slane %v669, 4
    %v672 = vshll.u32 %v501, 16
    %v674 = vrot.slane %v672, 5
    %v675 = vor.u32 %v671, %v674
    %v676 = vrot.slane %v675, 4
    %v678 = vshll.u32 %v502, 16
    %v680 = vrot.slane %v678, 5
    %v681 = vsel %vm513, %v676, %v680
    %v683 = vshrl.u32 %v503, 16
    %v685 = vrot.slane %v683, 4
    %v686 = vshll.u32 %v503, 16
    %v688 = vrot.slane %v686, 5
    %v689 = vor.u32 %v685, %v688
    %v690 = vrot.slane %v689, 4
    %v692 = vshll.u32 %v504, 16
    %v694 = vrot.slane %v692, 5
    %v695 = vsel %vm513, %v690, %v694
    %v697 = vshrl.u32 %v505, 16
    %v699 = vrot.slane %v697, 4
    %v700 = vshll.u32 %v505, 16
    %v702 = vrot.slane %v700, 5
    %v703 = vor.u32 %v699, %v702
    %v704 = vrot.slane %v703, 4
    %v706 = vshll.u32 %v506, 16
    %v708 = vrot.slane %v706, 5
    %v709 = vsel %vm513, %v704, %v708
    %v711 = vshrl.u32 %v507, 16
    %v713 = vrot.slane %v711, 4
    %v714 = vshll.u32 %v507, 16
    %v716 = vrot.slane %v714, 5
    %v717 = vor.u32 %v713, %v716
    %v718 = vrot.slane %v717, 4
    %v720 = vshll.u32 %v508, 16
    %v722 = vrot.slane %v720, 5
    %v723 = vsel %vm513, %v718, %v722
    %v725 = vshrl.u32 %v509, 16
    %v727 = vrot.slane %v725, 4
    %v728 = vshll.u32 %v509, 16
    %v730 = vrot.slane %v728, 5
    %v731 = vor.u32 %v727, %v730
    %v732 = vrot.slane %v731, 4
    %v734 = vshll.u32 %v510, 16
    %v736 = vrot.slane %v734, 5
    %v737 = vsel %vm513, %v732, %v736
    %738 = vrot.lane.b32.xlu0 %v527, 32
    %v739 = vpop.permute.xlu0 %738
    %740 = vrot.lane.b32.xlu0 %v541, 32
    %v741 = vpop.permute.xlu0 %740
    %742 = vrot.lane.b32.xlu0 %v555, 32
    %v743 = vpop.permute.xlu0 %742
    %744 = vrot.lane.b32.xlu0 %v569, 32
    %v745 = vpop.permute.xlu0 %744
    %746 = vrot.lane.b32.xlu0 %v583, 32
    %v747 = vpop.permute.xlu0 %746
    %748 = vrot.lane.b32.xlu0 %v597, 32
    %v749 = vpop.permute.xlu0 %748
    %750 = vrot.lane.b32.xlu0 %v611, 32
    %v751 = vpop.permute.xlu0 %750
    %752 = vrot.lane.b32.xlu0 %v625, 32
    %v753 = vpop.permute.xlu0 %752
    %754 = vrot.lane.b32.xlu0 %v639, 32
    %v755 = vpop.permute.xlu0 %754
    %756 = vrot.lane.b32.xlu0 %v653, 32
    %v757 = vpop.permute.xlu0 %756
    %758 = vrot.lane.b32.xlu0 %v667, 32
    %v759 = vpop.permute.xlu0 %758
    %760 = vrot.lane.b32.xlu0 %v681, 32
    %v761 = vpop.permute.xlu0 %760
    %762 = vrot.lane.b32.xlu0 %v695, 32
    %v763 = vpop.permute.xlu0 %762
    %764 = vrot.lane.b32.xlu0 %v709, 32
    %v765 = vpop.permute.xlu0 %764
    %766 = vrot.lane.b32.xlu0 %v723, 32
    %v767 = vpop.permute.xlu0 %766
    %768 = vrot.lane.b32.xlu0 %v737, 32
    %v769 = vpop.permute.xlu0 %768
    %vm786 = vcmask 519424
    %787 = vst.msk [vmem:[#allocation3] sm:$0xf] %vm786, %v739
    %788 = vst.msk [vmem:[#allocation3 + $0xc] sm:$0xf] %vm786, %v741
    %789 = vst.msk [vmem:[#allocation3 + $0x18] sm:$0xf] %vm786, %v743
    %790 = vst.msk [vmem:[#allocation3 + $0x24] sm:$0xf] %vm786, %v745
    %791 = vst.msk [vmem:[#allocation3 + $0x30] sm:$0xf] %vm786, %v747
    %792 = vst.msk [vmem:[#allocation3 + $0x3c] sm:$0xf] %vm786, %v749
    %793 = vst.msk [vmem:[#allocation3 + $0x48] sm:$0xf] %vm786, %v751
    %794 = vst.msk [vmem:[#allocation3 + $0x54] sm:$0xf] %vm786, %v753
    %795 = vst.msk [vmem:[#allocation3 + $0x60] sm:$0xf] %vm786, %v755
    %796 = vst.msk [vmem:[#allocation3 + $0x6c] sm:$0xf] %vm786, %v757
    %797 = vst.msk [vmem:[#allocation3 + $0x78] sm:$0xf] %vm786, %v759
    %798 = vst.msk [vmem:[#allocation3 + $0x84] sm:$0xf] %vm786, %v761
    %799 = vst.msk [vmem:[#allocation3 + $0x90] sm:$0xf] %vm786, %v763
    %800 = vst.msk [vmem:[#allocation3 + $0x9c] sm:$0xf] %vm786, %v765
    %801 = vst.msk [vmem:[#allocation3 + $0xa8] sm:$0xf] %vm786, %v767
    %802 = vst.msk [vmem:[#allocation3 + $0xb4] sm:$0xf] %vm786, %v769
    %v803 = vld [vmem:[#allocation2] sm:$0xe]
    %v804 = vld [vmem:[#allocation2 + $0x4] sm:$0x1]
    %v805 = vld [vmem:[#allocation2 + $0x8] sm:$0xe]
    %v806 = vld [vmem:[#allocation2 + $0xc] sm:$0x1]
    %v807 = vld [vmem:[#allocation2 + $0x10] sm:$0xe]
    %v808 = vld [vmem:[#allocation2 + $0x14] sm:$0x1]
    %v809 = vld [vmem:[#allocation2 + $0x18] sm:$0xe]
    %v810 = vld [vmem:[#allocation2 + $0x1c] sm:$0x1]
    %v811 = vld [vmem:[#allocation2 + $0x20] sm:$0xe]
    %v812 = vld [vmem:[#allocation2 + $0x24] sm:$0x1]
    %v813 = vld [vmem:[#allocation2 + $0x28] sm:$0xe]
    %v814 = vld [vmem:[#allocation2 + $0x2c] sm:$0x1]
    %v815 = vld [vmem:[#allocation2 + $0x30] sm:$0xe]
    %v816 = vld [vmem:[#allocation2 + $0x34] sm:$0x1]
    %v817 = vld [vmem:[#allocation2 + $0x38] sm:$0xe]
    %v818 = vld [vmem:[#allocation2 + $0x3c] sm:$0x1]
    %v819 = vld [vmem:[#allocation2 + $0x50] sm:$0xe]
    %v820 = vld [vmem:[#allocation2 + $0x54] sm:$0x1]
    %v821 = vld [vmem:[#allocation2 + $0x58] sm:$0xe]
    %v822 = vld [vmem:[#allocation2 + $0x5c] sm:$0x1]
    %v823 = vld [vmem:[#allocation2 + $0x60] sm:$0xe]
    %v824 = vld [vmem:[#allocation2 + $0x64] sm:$0x1]
    %v825 = vld [vmem:[#allocation2 + $0x68] sm:$0xe]
    %v826 = vld [vmem:[#allocation2 + $0x6c] sm:$0x1]
    %v827 = vld [vmem:[#allocation2 + $0x70] sm:$0xe]
    %v828 = vld [vmem:[#allocation2 + $0x74] sm:$0x1]
    %v829 = vld [vmem:[#allocation2 + $0x78] sm:$0xe]
    %v830 = vld [vmem:[#allocation2 + $0x7c] sm:$0x1]
    %v831 = vld [vmem:[#allocation2 + $0x80] sm:$0xe]
    %v832 = vld [vmem:[#allocation2 + $0x84] sm:$0x1]
    %v833 = vld [vmem:[#allocation2 + $0x88] sm:$0xe]
    %v834 = vld [vmem:[#allocation2 + $0x8c] sm:$0x1]
    %vm867 = vcmask 1042432
    %vm868 = vcmask 1046532
    %vm869 = vmor %vm867, %vm868
    %v870 = vrot.slane %v803, 5
    %v871 = vrot.slane %v870, 4
    %v872 = vrot.slane %v804, 5
    %v873 = vsel %vm869, %v871, %v872
    %v874 = vrot.slane %v805, 5
    %v875 = vrot.slane %v874, 4
    %v876 = vrot.slane %v806, 5
    %v877 = vsel %vm869, %v875, %v876
    %v878 = vrot.slane %v807, 5
    %v879 = vrot.slane %v878, 4
    %v880 = vrot.slane %v808, 5
    %v881 = vsel %vm869, %v879, %v880
    %v882 = vrot.slane %v809, 5
    %v883 = vrot.slane %v882, 4
    %v884 = vrot.slane %v810, 5
    %v885 = vsel %vm869, %v883, %v884
    %v886 = vrot.slane %v811, 5
    %v887 = vrot.slane %v886, 4
    %v888 = vrot.slane %v812, 5
    %v889 = vsel %vm869, %v887, %v888
    %v890 = vrot.slane %v813, 5
    %v891 = vrot.slane %v890, 4
    %v892 = vrot.slane %v814, 5
    %v893 = vsel %vm869, %v891, %v892
    %v894 = vrot.slane %v815, 5
    %v895 = vrot.slane %v894, 4
    %v896 = vrot.slane %v816, 5
    %v897 = vsel %vm869, %v895, %v896
    %v898 = vrot.slane %v817, 5
    %v899 = vrot.slane %v898, 4
    %v900 = vrot.slane %v818, 5
    %v901 = vsel %vm869, %v899, %v900
    %v902 = vrot.slane %v819, 5
    %v903 = vrot.slane %v902, 4
    %v904 = vrot.slane %v820, 5
    %v905 = vsel %vm869, %v903, %v904
    %v906 = vrot.slane %v821, 5
    %v907 = vrot.slane %v906, 4
    %v908 = vrot.slane %v822, 5
    %v909 = vsel %vm869, %v907, %v908
    %v910 = vrot.slane %v823, 5
    %v911 = vrot.slane %v910, 4
    %v912 = vrot.slane %v824, 5
    %v913 = vsel %vm869, %v911, %v912
    %v914 = vrot.slane %v825, 5
    %v915 = vrot.slane %v914, 4
    %v916 = vrot.slane %v826, 5
    %v917 = vsel %vm869, %v915, %v916
    %v918 = vrot.slane %v827, 5
    %v919 = vrot.slane %v918, 4
    %v920 = vrot.slane %v828, 5
    %v921 = vsel %vm869, %v919, %v920
    %v922 = vrot.slane %v829, 5
    %v923 = vrot.slane %v922, 4
    %v924 = vrot.slane %v830, 5
    %v925 = vsel %vm869, %v923, %v924
    %v926 = vrot.slane %v831, 5
    %v927 = vrot.slane %v926, 4
    %v928 = vrot.slane %v832, 5
    %v929 = vsel %vm869, %v927, %v928
    %v930 = vrot.slane %v833, 5
    %v931 = vrot.slane %v930, 4
    %v932 = vrot.slane %v834, 5
    %v933 = vsel %vm869, %v931, %v932
    %934 = vrot.lane.b32.xlu0 %v873, 64
    %v935 = vpop.permute.xlu0 %934
    %936 = vrot.lane.b32.xlu0 %v877, 64
    %v937 = vpop.permute.xlu0 %936
    %938 = vrot.lane.b32.xlu0 %v881, 64
    %v939 = vpop.permute.xlu0 %938
    %940 = vrot.lane.b32.xlu0 %v885, 64
    %v941 = vpop.permute.xlu0 %940
    %942 = vrot.lane.b32.xlu0 %v889, 64
    %v943 = vpop.permute.xlu0 %942
    %944 = vrot.lane.b32.xlu0 %v893, 64
    %v945 = vpop.permute.xlu0 %944
    %946 = vrot.lane.b32.xlu0 %v897, 64
    %v947 = vpop.permute.xlu0 %946
    %948 = vrot.lane.b32.xlu0 %v901, 64
    %v949 = vpop.permute.xlu0 %948
    %950 = vrot.lane.b32.xlu0 %v905, 64
    %v951 = vpop.permute.xlu0 %950
    %952 = vrot.lane.b32.xlu0 %v909, 64
    %v953 = vpop.permute.xlu0 %952
    %954 = vrot.lane.b32.xlu0 %v913, 64
    %v955 = vpop.permute.xlu0 %954
    %956 = vrot.lane.b32.xlu0 %v917, 64
    %v957 = vpop.permute.xlu0 %956
    %958 = vrot.lane.b32.xlu0 %v921, 64
    %v959 = vpop.permute.xlu0 %958
    %960 = vrot.lane.b32.xlu0 %v925, 64
    %v961 = vpop.permute.xlu0 %960
    %962 = vrot.lane.b32.xlu0 %v929, 64
    %v963 = vpop.permute.xlu0 %962
    %964 = vrot.lane.b32.xlu0 %v933, 64
    %v965 = vpop.permute.xlu0 %964
    %vm982 = vcmask 781824
    %983 = vst.msk [vmem:[#allocation3] sm:$0xf] %vm982, %v935
    %984 = vst.msk [vmem:[#allocation3 + $0xc] sm:$0xf] %vm982, %v937
    %985 = vst.msk [vmem:[#allocation3 + $0x18] sm:$0xf] %vm982, %v939
    %986 = vst.msk [vmem:[#allocation3 + $0x24] sm:$0xf] %vm982, %v941
    %987 = vst.msk [vmem:[#allocation3 + $0x30] sm:$0xf] %vm982, %v943
    %988 = vst.msk [vmem:[#allocation3 + $0x3c] sm:$0xf] %vm982, %v945
    %989 = vst.msk [vmem:[#allocation3 + $0x48] sm:$0xf] %vm982, %v947
    %990 = vst.msk [vmem:[#allocation3 + $0x54] sm:$0xf] %vm982, %v949
    %991 = vst.msk [vmem:[#allocation3 + $0x60] sm:$0xf] %vm982, %v951
    %992 = vst.msk [vmem:[#allocation3 + $0x6c] sm:$0xf] %vm982, %v953
    %993 = vst.msk [vmem:[#allocation3 + $0x78] sm:$0xf] %vm982, %v955
    %994 = vst.msk [vmem:[#allocation3 + $0x84] sm:$0xf] %vm982, %v957
    %995 = vst.msk [vmem:[#allocation3 + $0x90] sm:$0xf] %vm982, %v959
    %996 = vst.msk [vmem:[#allocation3 + $0x9c] sm:$0xf] %vm982, %v961
    %997 = vst.msk [vmem:[#allocation3 + $0xa8] sm:$0xf] %vm982, %v963
    %998 = vst.msk [vmem:[#allocation3 + $0xb4] sm:$0xf] %vm982, %v965
    %v999 = vld [vmem:[%s344] sm:$0xf]
    %v1000 = vld [vmem:[%s344 + $0x8] sm:$0xf]
    %v1001 = vld [vmem:[%s344 + $0x10] sm:$0xf]
    %v1002 = vld [vmem:[%s344 + $0x18] sm:$0xf]
    %v1003 = vld [vmem:[%s344 + $0x20] sm:$0xf]
    %v1004 = vld [vmem:[%s344 + $0x28] sm:$0xf]
    %v1005 = vld [vmem:[%s344 + $0x30] sm:$0xf]
    %v1006 = vld [vmem:[%s344 + $0x38] sm:$0xf]
    %v1007 = vld [vmem:[%s344 + $0x50] sm:$0xf]
    %v1008 = vld [vmem:[%s344 + $0x58] sm:$0xf]
    %v1009 = vld [vmem:[%s344 + $0x60] sm:$0xf]
    %v1010 = vld [vmem:[%s344 + $0x68] sm:$0xf]
    %v1011 = vld [vmem:[%s344 + $0x70] sm:$0xf]
    %v1012 = vld [vmem:[%s344 + $0x78] sm:$0xf]
    %v1013 = vld [vmem:[%s344 + $0x80] sm:$0xf]
    %v1014 = vld [vmem:[%s344 + $0x88] sm:$0xf]
    %1031 = vrot.lane.b32.xlu0 %v999, 96
    %v1032 = vpop.permute.xlu0 %1031
    %1033 = vrot.lane.b32.xlu0 %v1000, 96
    %v1034 = vpop.permute.xlu0 %1033
    %1035 = vrot.lane.b32.xlu0 %v1001, 96
    %v1036 = vpop.permute.xlu0 %1035
    %1037 = vrot.lane.b32.xlu0 %v1002, 96
    %v1038 = vpop.permute.xlu0 %1037
    %1039 = vrot.lane.b32.xlu0 %v1003, 96
    %v1040 = vpop.permute.xlu0 %1039
    %1041 = vrot.lane.b32.xlu0 %v1004, 96
    %v1042 = vpop.permute.xlu0 %1041
    %1043 = vrot.lane.b32.xlu0 %v1005, 96
    %v1044 = vpop.permute.xlu0 %1043
    %1045 = vrot.lane.b32.xlu0 %v1006, 96
    %v1046 = vpop.permute.xlu0 %1045
    %1047 = vrot.lane.b32.xlu0 %v1007, 96
    %v1048 = vpop.permute.xlu0 %1047
    %1049 = vrot.lane.b32.xlu0 %v1008, 96
    %v1050 = vpop.permute.xlu0 %1049
    %1051 = vrot.lane.b32.xlu0 %v1009, 96
    %v1052 = vpop.permute.xlu0 %1051
    %1053 = vrot.lane.b32.xlu0 %v1010, 96
    %v1054 = vpop.permute.xlu0 %1053
    %1055 = vrot.lane.b32.xlu0 %v1011, 96
    %v1056 = vpop.permute.xlu0 %1055
    %1057 = vrot.lane.b32.xlu0 %v1012, 96
    %v1058 = vpop.permute.xlu0 %1057
    %1059 = vrot.lane.b32.xlu0 %v1013, 96
    %v1060 = vpop.permute.xlu0 %1059
    %1061 = vrot.lane.b32.xlu0 %v1014, 96
    %v1062 = vpop.permute.xlu0 %1061
    %vm1079 = vcmask 1044224
    %1080 = vst.msk [vmem:[#allocation3] sm:$0xf] %vm1079, %v1032
    %1081 = vst.msk [vmem:[#allocation3 + $0xc] sm:$0xf] %vm1079, %v1034
    %1082 = vst.msk [vmem:[#allocation3 + $0x18] sm:$0xf] %vm1079, %v1036
    %1083 = vst.msk [vmem:[#allocation3 + $0x24] sm:$0xf] %vm1079, %v1038
    %1084 = vst.msk [vmem:[#allocation3 + $0x30] sm:$0xf] %vm1079, %v1040
    %1085 = vst.msk [vmem:[#allocation3 + $0x3c] sm:$0xf] %vm1079, %v1042
    %1086 = vst.msk [vmem:[#allocation3 + $0x48] sm:$0xf] %vm1079, %v1044
    %1087 = vst.msk [vmem:[#allocation3 + $0x54] sm:$0xf] %vm1079, %v1046
    %1088 = vst.msk [vmem:[#allocation3 + $0x60] sm:$0xf] %vm1079, %v1048
    %1089 = vst.msk [vmem:[#allocation3 + $0x6c] sm:$0xf] %vm1079, %v1050
    %1090 = vst.msk [vmem:[#allocation3 + $0x78] sm:$0xf] %vm1079, %v1052
    %1091 = vst.msk [vmem:[#allocation3 + $0x84] sm:$0xf] %vm1079, %v1054
    %1092 = vst.msk [vmem:[#allocation3 + $0x90] sm:$0xf] %vm1079, %v1056
    %1093 = vst.msk [vmem:[#allocation3 + $0x9c] sm:$0xf] %vm1079, %v1058
    %1094 = vst.msk [vmem:[#allocation3 + $0xa8] sm:$0xf] %vm1079, %v1060
    %1095 = vst.msk [vmem:[#allocation3 + $0xb4] sm:$0xf] %vm1079, %v1062
    %v1096 = vld [vmem:[%s344] sm:$0xf]
    %v1097 = vld [vmem:[%s344 + $0x4] sm:$0x1]
    %v1098 = vld [vmem:[%s344 + $0x8] sm:$0xf]
    %v1099 = vld [vmem:[%s344 + $0xc] sm:$0x1]
    %v1100 = vld [vmem:[%s344 + $0x10] sm:$0xf]
    %v1101 = vld [vmem:[%s344 + $0x14] sm:$0x1]
    %v1102 = vld [vmem:[%s344 + $0x18] sm:$0xf]
    %v1103 = vld [vmem:[%s344 + $0x1c] sm:$0x1]
    %v1104 = vld [vmem:[%s344 + $0x20] sm:$0xf]
    %v1105 = vld [vmem:[%s344 + $0x24] sm:$0x1]
    %v1106 = vld [vmem:[%s344 + $0x28] sm:$0xf]
    %v1107 = vld [vmem:[%s344 + $0x2c] sm:$0x1]
    %v1108 = vld [vmem:[%s344 + $0x30] sm:$0xf]
    %v1109 = vld [vmem:[%s344 + $0x34] sm:$0x1]
    %v1110 = vld [vmem:[%s344 + $0x38] sm:$0xf]
    %v1111 = vld [vmem:[%s344 + $0x3c] sm:$0x1]
    %v1112 = vld [vmem:[%s344 + $0x50] sm:$0xf]
    %v1113 = vld [vmem:[%s344 + $0x54] sm:$0x1]
    %v1114 = vld [vmem:[%s344 + $0x58] sm:$0xf]
    %v1115 = vld [vmem:[%s344 + $0x5c] sm:$0x1]
    %v1116 = vld [vmem:[%s344 + $0x60] sm:$0xf]
    %v1117 = vld [vmem:[%s344 + $0x64] sm:$0x1]
    %v1118 = vld [vmem:[%s344 + $0x68] sm:$0xf]
    %v1119 = vld [vmem:[%s344 + $0x6c] sm:$0x1]
    %v1120 = vld [vmem:[%s344 + $0x70] sm:$0xf]
    %v1121 = vld [vmem:[%s344 + $0x74] sm:$0x1]
    %v1122 = vld [vmem:[%s344 + $0x78] sm:$0xf]
    %v1123 = vld [vmem:[%s344 + $0x7c] sm:$0x1]
    %v1124 = vld [vmem:[%s344 + $0x80] sm:$0xf]
    %v1125 = vld [vmem:[%s344 + $0x84] sm:$0x1]
    %v1126 = vld [vmem:[%s344 + $0x88] sm:$0xf]
    %v1127 = vld [vmem:[%s344 + $0x8c] sm:$0x1]
    %v1129 = vshrl.u32 %v1096, 16
    %v1131 = vrot.slane %v1129, 4
    %v1132 = vshll.u32 %v1096, 16
    %v1134 = vrot.slane %v1132, 5
    %v1135 = vor.u32 %v1131, %v1134
    %v1136 = vrot.slane %v1135, 4
    %v1138 = vshll.u32 %v1097, 16
    %v1140 = vrot.slane %v1138, 5
    %v1141 = vsel %vm513, %v1136, %v1140
    %v1143 = vshrl.u32 %v1098, 16
    %v1145 = vrot.slane %v1143, 4
    %v1146 = vshll.u32 %v1098, 16
    %v1148 = vrot.slane %v1146, 5
    %v1149 = vor.u32 %v1145, %v1148
    %v1150 = vrot.slane %v1149, 4
    %v1152 = vshll.u32 %v1099, 16
    %v1154 = vrot.slane %v1152, 5
    %v1155 = vsel %vm513, %v1150, %v1154
    %v1157 = vshrl.u32 %v1100, 16
    %v1159 = vrot.slane %v1157, 4
    %v1160 = vshll.u32 %v1100, 16
    %v1162 = vrot.slane %v1160, 5
    %v1163 = vor.u32 %v1159, %v1162
    %v1164 = vrot.slane %v1163, 4
    %v1166 = vshll.u32 %v1101, 16
    %v1168 = vrot.slane %v1166, 5
    %v1169 = vsel %vm513, %v1164, %v1168
    %v1171 = vshrl.u32 %v1102, 16
    %v1173 = vrot.slane %v1171, 4
    %v1174 = vshll.u32 %v1102, 16
    %v1176 = vrot.slane %v1174, 5
    %v1177 = vor.u32 %v1173, %v1176
    %v1178 = vrot.slane %v1177, 4
    %v1180 = vshll.u32 %v1103, 16
    %v1182 = vrot.slane %v1180, 5
    %v1183 = vsel %vm513, %v1178, %v1182
    %v1185 = vshrl.u32 %v1104, 16
    %v1187 = vrot.slane %v1185, 4
    %v1188 = vshll.u32 %v1104, 16
    %v1190 = vrot.slane %v1188, 5
    %v1191 = vor.u32 %v1187, %v1190
    %v1192 = vrot.slane %v1191, 4
    %v1194 = vshll.u32 %v1105, 16
    %v1196 = vrot.slane %v1194, 5
    %v1197 = vsel %vm513, %v1192, %v1196
    %v1199 = vshrl.u32 %v1106, 16
    %v1201 = vrot.slane %v1199, 4
    %v1202 = vshll.u32 %v1106, 16
    %v1204 = vrot.slane %v1202, 5
    %v1205 = vor.u32 %v1201, %v1204
    %v1206 = vrot.slane %v1205, 4
    %v1208 = vshll.u32 %v1107, 16
    %v1210 = vrot.slane %v1208, 5
    %v1211 = vsel %vm513, %v1206, %v1210
    %v1213 = vshrl.u32 %v1108, 16
    %v1215 = vrot.slane %v1213, 4
    %v1216 = vshll.u32 %v1108, 16
    %v1218 = vrot.slane %v1216, 5
    %v1219 = vor.u32 %v1215, %v1218
    %v1220 = vrot.slane %v1219, 4
    %v1222 = vshll.u32 %v1109, 16
    %v1224 = vrot.slane %v1222, 5
    %v1225 = vsel %vm513, %v1220, %v1224
    %v1227 = vshrl.u32 %v1110, 16
    %v1229 = vrot.slane %v1227, 4
    %v1230 = vshll.u32 %v1110, 16
    %v1232 = vrot.slane %v1230, 5
    %v1233 = vor.u32 %v1229, %v1232
    %v1234 = vrot.slane %v1233, 4
    %v1236 = vshll.u32 %v1111, 16
    %v1238 = vrot.slane %v1236, 5
    %v1239 = vsel %vm513, %v1234, %v1238
    %v1241 = vshrl.u32 %v1112, 16
    %v1243 = vrot.slane %v1241, 4
    %v1244 = vshll.u32 %v1112, 16
    %v1246 = vrot.slane %v1244, 5
    %v1247 = vor.u32 %v1243, %v1246
    %v1248 = vrot.slane %v1247, 4
    %v1250 = vshll.u32 %v1113, 16
    %v1252 = vrot.slane %v1250, 5
    %v1253 = vsel %vm513, %v1248, %v1252
    %v1255 = vshrl.u32 %v1114, 16
    %v1257 = vrot.slane %v1255, 4
    %v1258 = vshll.u32 %v1114, 16
    %v1260 = vrot.slane %v1258, 5
    %v1261 = vor.u32 %v1257, %v1260
    %v1262 = vrot.slane %v1261, 4
    %v1264 = vshll.u32 %v1115, 16
    %v1266 = vrot.slane %v1264, 5
    %v1267 = vsel %vm513, %v1262, %v1266
    %v1269 = vshrl.u32 %v1116, 16
    %v1271 = vrot.slane %v1269, 4
    %v1272 = vshll.u32 %v1116, 16
    %v1274 = vrot.slane %v1272, 5
    %v1275 = vor.u32 %v1271, %v1274
    %v1276 = vrot.slane %v1275, 4
    %v1278 = vshll.u32 %v1117, 16
    %v1280 = vrot.slane %v1278, 5
    %v1281 = vsel %vm513, %v1276, %v1280
    %v1283 = vshrl.u32 %v1118, 16
    %v1285 = vrot.slane %v1283, 4
    %v1286 = vshll.u32 %v1118, 16
    %v1288 = vrot.slane %v1286, 5
    %v1289 = vor.u32 %v1285, %v1288
    %v1290 = vrot.slane %v1289, 4
    %v1292 = vshll.u32 %v1119, 16
    %v1294 = vrot.slane %v1292, 5
    %v1295 = vsel %vm513, %v1290, %v1294
    %v1297 = vshrl.u32 %v1120, 16
    %v1299 = vrot.slane %v1297, 4
    %v1300 = vshll.u32 %v1120, 16
    %v1302 = vrot.slane %v1300, 5
    %v1303 = vor.u32 %v1299, %v1302
    %v1304 = vrot.slane %v1303, 4
    %v1306 = vshll.u32 %v1121, 16
    %v1308 = vrot.slane %v1306, 5
    %v1309 = vsel %vm513, %v1304, %v1308
    %v1311 = vshrl.u32 %v1122, 16
    %v1313 = vrot.slane %v1311, 4
    %v1314 = vshll.u32 %v1122, 16
    %v1316 = vrot.slane %v1314, 5
    %v1317 = vor.u32 %v1313, %v1316
    %v1318 = vrot.slane %v1317, 4
    %v1320 = vshll.u32 %v1123, 16
    %v1322 = vrot.slane %v1320, 5
    %v1323 = vsel %vm513, %v1318, %v1322
    %v1325 = vshrl.u32 %v1124, 16
    %v1327 = vrot.slane %v1325, 4
    %v1328 = vshll.u32 %v1124, 16
    %v1330 = vrot.slane %v1328, 5
    %v1331 = vor.u32 %v1327, %v1330
    %v1332 = vrot.slane %v1331, 4
    %v1334 = vshll.u32 %v1125, 16
    %v1336 = vrot.slane %v1334, 5
    %v1337 = vsel %vm513, %v1332, %v1336
    %v1339 = vshrl.u32 %v1126, 16
    %v1341 = vrot.slane %v1339, 4
    %v1342 = vshll.u32 %v1126, 16
    %v1344 = vrot.slane %v1342, 5
    %v1345 = vor.u32 %v1341, %v1344
    %v1346 = vrot.slane %v1345, 4
    %v1348 = vshll.u32 %v1127, 16
    %v1350 = vrot.slane %v1348, 5
    %v1351 = vsel %vm513, %v1346, %v1350
    %1368 = vst.msk [vmem:[#allocation3 + $0x4] sm:$0xf] %vm22, %v1141
    %1369 = vst.msk [vmem:[#allocation3 + $0x10] sm:$0xf] %vm22, %v1155
    %1370 = vst.msk [vmem:[#allocation3 + $0x1c] sm:$0xf] %vm22, %v1169
    %1371 = vst.msk [vmem:[#allocation3 + $0x28] sm:$0xf] %vm22, %v1183
    %1372 = vst.msk [vmem:[#allocation3 + $0x34] sm:$0xf] %vm22, %v1197
    %1373 = vst.msk [vmem:[#allocation3 + $0x40] sm:$0xf] %vm22, %v1211
    %1374 = vst.msk [vmem:[#allocation3 + $0x4c] sm:$0xf] %vm22, %v1225
    %1375 = vst.msk [vmem:[#allocation3 + $0x58] sm:$0xf] %vm22, %v1239
    %1376 = vst.msk [vmem:[#allocation3 + $0x64] sm:$0xf] %vm22, %v1253
    %1377 = vst.msk [vmem:[#allocation3 + $0x70] sm:$0xf] %vm22, %v1267
    %1378 = vst.msk [vmem:[#allocation3 + $0x7c] sm:$0xf] %vm22, %v1281
    %1379 = vst.msk [vmem:[#allocation3 + $0x88] sm:$0xf] %vm22, %v1295
    %1380 = vst.msk [vmem:[#allocation3 + $0x94] sm:$0xf] %vm22, %v1309
    %1381 = vst.msk [vmem:[#allocation3 + $0xa0] sm:$0xf] %vm22, %v1323
    %1382 = vst.msk [vmem:[#allocation3 + $0xac] sm:$0xf] %vm22, %v1337
    %1383 = vst.msk [vmem:[#allocation3 + $0xb8] sm:$0xf] %vm22, %v1351
    %v1384 = vld [vmem:[%s344] sm:$0xe]
    %v1385 = vld [vmem:[%s344 + $0x4] sm:$0x1]
    %v1386 = vld [vmem:[%s344 + $0x8] sm:$0xe]
    %v1387 = vld [vmem:[%s344 + $0xc] sm:$0x1]
    %v1388 = vld [vmem:[%s344 + $0x10] sm:$0xe]
    %v1389 = vld [vmem:[%s344 + $0x14] sm:$0x1]
    %v1390 = vld [vmem:[%s344 + $0x18] sm:$0xe]
    %v1391 = vld [vmem:[%s344 + $0x1c] sm:$0x1]
    %v1392 = vld [vmem:[%s344 + $0x20] sm:$0xe]
    %v1393 = vld [vmem:[%s344 + $0x24] sm:$0x1]
    %v1394 = vld [vmem:[%s344 + $0x28] sm:$0xe]
    %v1395 = vld [vmem:[%s344 + $0x2c] sm:$0x1]
    %v1396 = vld [vmem:[%s344 + $0x30] sm:$0xe]
    %v1397 = vld [vmem:[%s344 + $0x34] sm:$0x1]
    %v1398 = vld [vmem:[%s344 + $0x38] sm:$0xe]
    %v1399 = vld [vmem:[%s344 + $0x3c] sm:$0x1]
    %v1400 = vld [vmem:[%s344 + $0x50] sm:$0xe]
    %v1401 = vld [vmem:[%s344 + $0x54] sm:$0x1]
    %v1402 = vld [vmem:[%s344 + $0x58] sm:$0xe]
    %v1403 = vld [vmem:[%s344 + $0x5c] sm:$0x1]
    %v1404 = vld [vmem:[%s344 + $0x60] sm:$0xe]
    %v1405 = vld [vmem:[%s344 + $0x64] sm:$0x1]
    %v1406 = vld [vmem:[%s344 + $0x68] sm:$0xe]
    %v1407 = vld [vmem:[%s344 + $0x6c] sm:$0x1]
    %v1408 = vld [vmem:[%s344 + $0x70] sm:$0xe]
    %v1409 = vld [vmem:[%s344 + $0x74] sm:$0x1]
    %v1410 = vld [vmem:[%s344 + $0x78] sm:$0xe]
    %v1411 = vld [vmem:[%s344 + $0x7c] sm:$0x1]
    %v1412 = vld [vmem:[%s344 + $0x80] sm:$0xe]
    %v1413 = vld [vmem:[%s344 + $0x84] sm:$0x1]
    %v1414 = vld [vmem:[%s344 + $0x88] sm:$0xe]
    %v1415 = vld [vmem:[%s344 + $0x8c] sm:$0x1]
    %v1448 = vrot.slane %v1384, 5
    %v1449 = vrot.slane %v1448, 4
    %v1450 = vrot.slane %v1385, 5
    %v1451 = vsel %vm869, %v1449, %v1450
    %v1452 = vrot.slane %v1386, 5
    %v1453 = vrot.slane %v1452, 4
    %v1454 = vrot.slane %v1387, 5
    %v1455 = vsel %vm869, %v1453, %v1454
    %v1456 = vrot.slane %v1388, 5
    %v1457 = vrot.slane %v1456, 4
    %v1458 = vrot.slane %v1389, 5
    %v1459 = vsel %vm869, %v1457, %v1458
    %v1460 = vrot.slane %v1390, 5
    %v1461 = vrot.slane %v1460, 4
    %v1462 = vrot.slane %v1391, 5
    %v1463 = vsel %vm869, %v1461, %v1462
    %v1464 = vrot.slane %v1392, 5
    %v1465 = vrot.slane %v1464, 4
    %v1466 = vrot.slane %v1393, 5
    %v1467 = vsel %vm869, %v1465, %v1466
    %v1468 = vrot.slane %v1394, 5
    %v1469 = vrot.slane %v1468, 4
    %v1470 = vrot.slane %v1395, 5
    %v1471 = vsel %vm869, %v1469, %v1470
    %v1472 = vrot.slane %v1396, 5
    %v1473 = vrot.slane %v1472, 4
    %v1474 = vrot.slane %v1397, 5
    %v1475 = vsel %vm869, %v1473, %v1474
    %v1476 = vrot.slane %v1398, 5
    %v1477 = vrot.slane %v1476, 4
    %v1478 = vrot.slane %v1399, 5
    %v1479 = vsel %vm869, %v1477, %v1478
    %v1480 = vrot.slane %v1400, 5
    %v1481 = vrot.slane %v1480, 4
    %v1482 = vrot.slane %v1401, 5
    %v1483 = vsel %vm869, %v1481, %v1482
    %v1484 = vrot.slane %v1402, 5
    %v1485 = vrot.slane %v1484, 4
    %v1486 = vrot.slane %v1403, 5
    %v1487 = vsel %vm869, %v1485, %v1486
    %v1488 = vrot.slane %v1404, 5
    %v1489 = vrot.slane %v1488, 4
    %v1490 = vrot.slane %v1405, 5
    %v1491 = vsel %vm869, %v1489, %v1490
    %v1492 = vrot.slane %v1406, 5
    %v1493 = vrot.slane %v1492, 4
    %v1494 = vrot.slane %v1407, 5
    %v1495 = vsel %vm869, %v1493, %v1494
    %v1496 = vrot.slane %v1408, 5
    %v1497 = vrot.slane %v1496, 4
    %v1498 = vrot.slane %v1409, 5
    %v1499 = vsel %vm869, %v1497, %v1498
    %v1500 = vrot.slane %v1410, 5
    %v1501 = vrot.slane %v1500, 4
    %v1502 = vrot.slane %v1411, 5
    %v1503 = vsel %vm869, %v1501, %v1502
    %v1504 = vrot.slane %v1412, 5
    %v1505 = vrot.slane %v1504, 4
    %v1506 = vrot.slane %v1413, 5
    %v1507 = vsel %vm869, %v1505, %v1506
    %v1508 = vrot.slane %v1414, 5
    %v1509 = vrot.slane %v1508, 4
    %v1510 = vrot.slane %v1415, 5
    %v1511 = vsel %vm869, %v1509, %v1510
    %1512 = vrot.lane.b32.xlu0 %v1451, 32
    %v1513 = vpop.permute.xlu0 %1512
    %1514 = vrot.lane.b32.xlu0 %v1455, 32
    %v1515 = vpop.permute.xlu0 %1514
    %1516 = vrot.lane.b32.xlu0 %v1459, 32
    %v1517 = vpop.permute.xlu0 %1516
    %1518 = vrot.lane.b32.xlu0 %v1463, 32
    %v1519 = vpop.permute.xlu0 %1518
    %1520 = vrot.lane.b32.xlu0 %v1467, 32
    %v1521 = vpop.permute.xlu0 %1520
    %1522 = vrot.lane.b32.xlu0 %v1471, 32
    %v1523 = vpop.permute.xlu0 %1522
    %1524 = vrot.lane.b32.xlu0 %v1475, 32
    %v1525 = vpop.permute.xlu0 %1524
    %1526 = vrot.lane.b32.xlu0 %v1479, 32
    %v1527 = vpop.permute.xlu0 %1526
    %1528 = vrot.lane.b32.xlu0 %v1483, 32
    %v1529 = vpop.permute.xlu0 %1528
    %1530 = vrot.lane.b32.xlu0 %v1487, 32
    %v1531 = vpop.permute.xlu0 %1530
    %1532 = vrot.lane.b32.xlu0 %v1491, 32
    %v1533 = vpop.permute.xlu0 %1532
    %1534 = vrot.lane.b32.xlu0 %v1495, 32
    %v1535 = vpop.permute.xlu0 %1534
    %1536 = vrot.lane.b32.xlu0 %v1499, 32
    %v1537 = vpop.permute.xlu0 %1536
    %1538 = vrot.lane.b32.xlu0 %v1503, 32
    %v1539 = vpop.permute.xlu0 %1538
    %1540 = vrot.lane.b32.xlu0 %v1507, 32
    %v1541 = vpop.permute.xlu0 %1540
    %1542 = vrot.lane.b32.xlu0 %v1511, 32
    %v1543 = vpop.permute.xlu0 %1542
    %1560 = vst.msk [vmem:[#allocation3 + $0x4] sm:$0xf] %vm786, %v1513
    %1561 = vst.msk [vmem:[#allocation3 + $0x10] sm:$0xf] %vm786, %v1515
    %1562 = vst.msk [vmem:[#allocation3 + $0x1c] sm:$0xf] %vm786, %v1517
    %1563 = vst.msk [vmem:[#allocation3 + $0x28] sm:$0xf] %vm786, %v1519
    %1564 = vst.msk [vmem:[#allocation3 + $0x34] sm:$0xf] %vm786, %v1521
    %1565 = vst.msk [vmem:[#allocation3 + $0x40] sm:$0xf] %vm786, %v1523
    %1566 = vst.msk [vmem:[#allocation3 + $0x4c] sm:$0xf] %vm786, %v1525
    %1567 = vst.msk [vmem:[#allocation3 + $0x58] sm:$0xf] %vm786, %v1527
    %1568 = vst.msk [vmem:[#allocation3 + $0x64] sm:$0xf] %vm786, %v1529
    %1569 = vst.msk [vmem:[#allocation3 + $0x70] sm:$0xf] %vm786, %v1531
    %1570 = vst.msk [vmem:[#allocation3 + $0x7c] sm:$0xf] %vm786, %v1533
    %1571 = vst.msk [vmem:[#allocation3 + $0x88] sm:$0xf] %vm786, %v1535
    %1572 = vst.msk [vmem:[#allocation3 + $0x94] sm:$0xf] %vm786, %v1537
    %1573 = vst.msk [vmem:[#allocation3 + $0xa0] sm:$0xf] %vm786, %v1539
    %1574 = vst.msk [vmem:[#allocation3 + $0xac] sm:$0xf] %vm786, %v1541
    %1575 = vst.msk [vmem:[#allocation3 + $0xb8] sm:$0xf] %vm786, %v1543
    %s1576 = scalar_lea.vmem [#allocation2], 16
    %v1577 = vld [vmem:[%s1576] sm:$0xf]
    %v1578 = vld [vmem:[%s1576 + $0x8] sm:$0xf]
    %v1579 = vld [vmem:[%s1576 + $0x10] sm:$0xf]
    %v1580 = vld [vmem:[%s1576 + $0x18] sm:$0xf]
    %v1581 = vld [vmem:[%s1576 + $0x20] sm:$0xf]
    %v1582 = vld [vmem:[%s1576 + $0x28] sm:$0xf]
    %v1583 = vld [vmem:[%s1576 + $0x30] sm:$0xf]
    %v1584 = vld [vmem:[%s1576 + $0x38] sm:$0xf]
    %v1585 = vld [vmem:[%s1576 + $0x50] sm:$0xf]
    %v1586 = vld [vmem:[%s1576 + $0x58] sm:$0xf]
    %v1587 = vld [vmem:[%s1576 + $0x60] sm:$0xf]
    %v1588 = vld [vmem:[%s1576 + $0x68] sm:$0xf]
    %v1589 = vld [vmem:[%s1576 + $0x70] sm:$0xf]
    %v1590 = vld [vmem:[%s1576 + $0x78] sm:$0xf]
    %v1591 = vld [vmem:[%s1576 + $0x80] sm:$0xf]
    %v1592 = vld [vmem:[%s1576 + $0x88] sm:$0xf]
    %1609 = vrot.lane.b32.xlu0 %v1577, 64
    %v1610 = vpop.permute.xlu0 %1609
    %1611 = vrot.lane.b32.xlu0 %v1578, 64
    %v1612 = vpop.permute.xlu0 %1611
    %1613 = vrot.lane.b32.xlu0 %v1579, 64
    %v1614 = vpop.permute.xlu0 %1613
    %1615 = vrot.lane.b32.xlu0 %v1580, 64
    %v1616 = vpop.permute.xlu0 %1615
    %1617 = vrot.lane.b32.xlu0 %v1581, 64
    %v1618 = vpop.permute.xlu0 %1617
    %1619 = vrot.lane.b32.xlu0 %v1582, 64
    %v1620 = vpop.permute.xlu0 %1619
    %1621 = vrot.lane.b32.xlu0 %v1583, 64
    %v1622 = vpop.permute.xlu0 %1621
    %1623 = vrot.lane.b32.xlu0 %v1584, 64
    %v1624 = vpop.permute.xlu0 %1623
    %1625 = vrot.lane.b32.xlu0 %v1585, 64
    %v1626 = vpop.permute.xlu0 %1625
    %1627 = vrot.lane.b32.xlu0 %v1586, 64
    %v1628 = vpop.permute.xlu0 %1627
    %1629 = vrot.lane.b32.xlu0 %v1587, 64
    %v1630 = vpop.permute.xlu0 %1629
    %1631 = vrot.lane.b32.xlu0 %v1588, 64
    %v1632 = vpop.permute.xlu0 %1631
    %1633 = vrot.lane.b32.xlu0 %v1589, 64
    %v1634 = vpop.permute.xlu0 %1633
    %1635 = vrot.lane.b32.xlu0 %v1590, 64
    %v1636 = vpop.permute.xlu0 %1635
    %1637 = vrot.lane.b32.xlu0 %v1591, 64
    %v1638 = vpop.permute.xlu0 %1637
    %1639 = vrot.lane.b32.xlu0 %v1592, 64
    %v1640 = vpop.permute.xlu0 %1639
    %1657 = vst.msk [vmem:[#allocation3 + $0x4] sm:$0xf] %vm982, %v1610
    %1658 = vst.msk [vmem:[#allocation3 + $0x10] sm:$0xf] %vm982, %v1612
    %1659 = vst.msk [vmem:[#allocation3 + $0x1c] sm:$0xf] %vm982, %v1614
    %1660 = vst.msk [vmem:[#allocation3 + $0x28] sm:$0xf] %vm982, %v1616
    %1661 = vst.msk [vmem:[#allocation3 + $0x34] sm:$0xf] %vm982, %v1618
    %1662 = vst.msk [vmem:[#allocation3 + $0x40] sm:$0xf] %vm982, %v1620
    %1663 = vst.msk [vmem:[#allocation3 + $0x4c] sm:$0xf] %vm982, %v1622
    %1664 = vst.msk [vmem:[#allocation3 + $0x58] sm:$0xf] %vm982, %v1624
    %1665 = vst.msk [vmem:[#allocation3 + $0x64] sm:$0xf] %vm982, %v1626
    %1666 = vst.msk [vmem:[#allocation3 + $0x70] sm:$0xf] %vm982, %v1628
    %1667 = vst.msk [vmem:[#allocation3 + $0x7c] sm:$0xf] %vm982, %v1630
    %1668 = vst.msk [vmem:[#allocation3 + $0x88] sm:$0xf] %vm982, %v1632
    %1669 = vst.msk [vmem:[#allocation3 + $0x94] sm:$0xf] %vm982, %v1634
    %1670 = vst.msk [vmem:[#allocation3 + $0xa0] sm:$0xf] %vm982, %v1636
    %1671 = vst.msk [vmem:[#allocation3 + $0xac] sm:$0xf] %vm982, %v1638
    %1672 = vst.msk [vmem:[#allocation3 + $0xb8] sm:$0xf] %vm982, %v1640
    %v1673 = vld [vmem:[%s1576] sm:$0xf]
    %v1674 = vld [vmem:[%s1576 + $0x4] sm:$0x1]
    %v1675 = vld [vmem:[%s1576 + $0x8] sm:$0xf]
    %v1676 = vld [vmem:[%s1576 + $0xc] sm:$0x1]
    %v1677 = vld [vmem:[%s1576 + $0x10] sm:$0xf]
    %v1678 = vld [vmem:[%s1576 + $0x14] sm:$0x1]
    %v1679 = vld [vmem:[%s1576 + $0x18] sm:$0xf]
    %v1680 = vld [vmem:[%s1576 + $0x1c] sm:$0x1]
    %v1681 = vld [vmem:[%s1576 + $0x20] sm:$0xf]
    %v1682 = vld [vmem:[%s1576 + $0x24] sm:$0x1]
    %v1683 = vld [vmem:[%s1576 + $0x28] sm:$0xf]
    %v1684 = vld [vmem:[%s1576 + $0x2c] sm:$0x1]
    %v1685 = vld [vmem:[%s1576 + $0x30] sm:$0xf]
    %v1686 = vld [vmem:[%s1576 + $0x34] sm:$0x1]
    %v1687 = vld [vmem:[%s1576 + $0x38] sm:$0xf]
    %v1688 = vld [vmem:[%s1576 + $0x3c] sm:$0x1]
    %v1689 = vld [vmem:[%s1576 + $0x50] sm:$0xf]
    %v1690 = vld [vmem:[%s1576 + $0x54] sm:$0x1]
    %v1691 = vld [vmem:[%s1576 + $0x58] sm:$0xf]
    %v1692 = vld [vmem:[%s1576 + $0x5c] sm:$0x1]
    %v1693 = vld [vmem:[%s1576 + $0x60] sm:$0xf]
    %v1694 = vld [vmem:[%s1576 + $0x64] sm:$0x1]
    %v1695 = vld [vmem:[%s1576 + $0x68] sm:$0xf]
    %v1696 = vld [vmem:[%s1576 + $0x6c] sm:$0x1]
    %v1697 = vld [vmem:[%s1576 + $0x70] sm:$0xf]
    %v1698 = vld [vmem:[%s1576 + $0x74] sm:$0x1]
    %v1699 = vld [vmem:[%s1576 + $0x78] sm:$0xf]
    %v1700 = vld [vmem:[%s1576 + $0x7c] sm:$0x1]
    %v1701 = vld [vmem:[%s1576 + $0x80] sm:$0xf]
    %v1702 = vld [vmem:[%s1576 + $0x84] sm:$0x1]
    %v1703 = vld [vmem:[%s1576 + $0x88] sm:$0xf]
    %v1704 = vld [vmem:[%s1576 + $0x8c] sm:$0x1]
    %v1706 = vshrl.u32 %v1673, 16
    %v1708 = vrot.slane %v1706, 4
    %v1709 = vshll.u32 %v1673, 16
    %v1711 = vrot.slane %v1709, 5
    %v1712 = vor.u32 %v1708, %v1711
    %v1713 = vrot.slane %v1712, 4
    %v1715 = vshll.u32 %v1674, 16
    %v1717 = vrot.slane %v1715, 5
    %v1718 = vsel %vm513, %v1713, %v1717
    %v1720 = vshrl.u32 %v1675, 16
    %v1722 = vrot.slane %v1720, 4
    %v1723 = vshll.u32 %v1675, 16
    %v1725 = vrot.slane %v1723, 5
    %v1726 = vor.u32 %v1722, %v1725
    %v1727 = vrot.slane %v1726, 4
    %v1729 = vshll.u32 %v1676, 16
    %v1731 = vrot.slane %v1729, 5
    %v1732 = vsel %vm513, %v1727, %v1731
    %v1734 = vshrl.u32 %v1677, 16
    %v1736 = vrot.slane %v1734, 4
    %v1737 = vshll.u32 %v1677, 16
    %v1739 = vrot.slane %v1737, 5
    %v1740 = vor.u32 %v1736, %v1739
    %v1741 = vrot.slane %v1740, 4
    %v1743 = vshll.u32 %v1678, 16
    %v1745 = vrot.slane %v1743, 5
    %v1746 = vsel %vm513, %v1741, %v1745
    %v1748 = vshrl.u32 %v1679, 16
    %v1750 = vrot.slane %v1748, 4
    %v1751 = vshll.u32 %v1679, 16
    %v1753 = vrot.slane %v1751, 5
    %v1754 = vor.u32 %v1750, %v1753
    %v1755 = vrot.slane %v1754, 4
    %v1757 = vshll.u32 %v1680, 16
    %v1759 = vrot.slane %v1757, 5
    %v1760 = vsel %vm513, %v1755, %v1759
    %v1762 = vshrl.u32 %v1681, 16
    %v1764 = vrot.slane %v1762, 4
    %v1765 = vshll.u32 %v1681, 16
    %v1767 = vrot.slane %v1765, 5
    %v1768 = vor.u32 %v1764, %v1767
    %v1769 = vrot.slane %v1768, 4
    %v1771 = vshll.u32 %v1682, 16
    %v1773 = vrot.slane %v1771, 5
    %v1774 = vsel %vm513, %v1769, %v1773
    %v1776 = vshrl.u32 %v1683, 16
    %v1778 = vrot.slane %v1776, 4
    %v1779 = vshll.u32 %v1683, 16
    %v1781 = vrot.slane %v1779, 5
    %v1782 = vor.u32 %v1778, %v1781
    %v1783 = vrot.slane %v1782, 4
    %v1785 = vshll.u32 %v1684, 16
    %v1787 = vrot.slane %v1785, 5
    %v1788 = vsel %vm513, %v1783, %v1787
    %v1790 = vshrl.u32 %v1685, 16
    %v1792 = vrot.slane %v1790, 4
    %v1793 = vshll.u32 %v1685, 16
    %v1795 = vrot.slane %v1793, 5
    %v1796 = vor.u32 %v1792, %v1795
    %v1797 = vrot.slane %v1796, 4
    %v1799 = vshll.u32 %v1686, 16
    %v1801 = vrot.slane %v1799, 5
    %v1802 = vsel %vm513, %v1797, %v1801
    %v1804 = vshrl.u32 %v1687, 16
    %v1806 = vrot.slane %v1804, 4
    %v1807 = vshll.u32 %v1687, 16
    %v1809 = vrot.slane %v1807, 5
    %v1810 = vor.u32 %v1806, %v1809
    %v1811 = vrot.slane %v1810, 4
    %v1813 = vshll.u32 %v1688, 16
    %v1815 = vrot.slane %v1813, 5
    %v1816 = vsel %vm513, %v1811, %v1815
    %v1818 = vshrl.u32 %v1689, 16
    %v1820 = vrot.slane %v1818, 4
    %v1821 = vshll.u32 %v1689, 16
    %v1823 = vrot.slane %v1821, 5
    %v1824 = vor.u32 %v1820, %v1823
    %v1825 = vrot.slane %v1824, 4
    %v1827 = vshll.u32 %v1690, 16
    %v1829 = vrot.slane %v1827, 5
    %v1830 = vsel %vm513, %v1825, %v1829
    %v1832 = vshrl.u32 %v1691, 16
    %v1834 = vrot.slane %v1832, 4
    %v1835 = vshll.u32 %v1691, 16
    %v1837 = vrot.slane %v1835, 5
    %v1838 = vor.u32 %v1834, %v1837
    %v1839 = vrot.slane %v1838, 4
    %v1841 = vshll.u32 %v1692, 16
    %v1843 = vrot.slane %v1841, 5
    %v1844 = vsel %vm513, %v1839, %v1843
    %v1846 = vshrl.u32 %v1693, 16
    %v1848 = vrot.slane %v1846, 4
    %v1849 = vshll.u32 %v1693, 16
    %v1851 = vrot.slane %v1849, 5
    %v1852 = vor.u32 %v1848, %v1851
    %v1853 = vrot.slane %v1852, 4
    %v1855 = vshll.u32 %v1694, 16
    %v1857 = vrot.slane %v1855, 5
    %v1858 = vsel %vm513, %v1853, %v1857
    %v1860 = vshrl.u32 %v1695, 16
    %v1862 = vrot.slane %v1860, 4
    %v1863 = vshll.u32 %v1695, 16
    %v1865 = vrot.slane %v1863, 5
    %v1866 = vor.u32 %v1862, %v1865
    %v1867 = vrot.slane %v1866, 4
    %v1869 = vshll.u32 %v1696, 16
    %v1871 = vrot.slane %v1869, 5
    %v1872 = vsel %vm513, %v1867, %v1871
    %v1874 = vshrl.u32 %v1697, 16
    %v1876 = vrot.slane %v1874, 4
    %v1877 = vshll.u32 %v1697, 16
    %v1879 = vrot.slane %v1877, 5
    %v1880 = vor.u32 %v1876, %v1879
    %v1881 = vrot.slane %v1880, 4
    %v1883 = vshll.u32 %v1698, 16
    %v1885 = vrot.slane %v1883, 5
    %v1886 = vsel %vm513, %v1881, %v1885
    %v1888 = vshrl.u32 %v1699, 16
    %v1890 = vrot.slane %v1888, 4
    %v1891 = vshll.u32 %v1699, 16
    %v1893 = vrot.slane %v1891, 5
    %v1894 = vor.u32 %v1890, %v1893
    %v1895 = vrot.slane %v1894, 4
    %v1897 = vshll.u32 %v1700, 16
    %v1899 = vrot.slane %v1897, 5
    %v1900 = vsel %vm513, %v1895, %v1899
    %v1902 = vshrl.u32 %v1701, 16
    %v1904 = vrot.slane %v1902, 4
    %v1905 = vshll.u32 %v1701, 16
    %v1907 = vrot.slane %v1905, 5
    %v1908 = vor.u32 %v1904, %v1907
    %v1909 = vrot.slane %v1908, 4
    %v1911 = vshll.u32 %v1702, 16
    %v1913 = vrot.slane %v1911, 5
    %v1914 = vsel %vm513, %v1909, %v1913
    %v1916 = vshrl.u32 %v1703, 16
    %v1918 = vrot.slane %v1916, 4
    %v1919 = vshll.u32 %v1703, 16
    %v1921 = vrot.slane %v1919, 5
    %v1922 = vor.u32 %v1918, %v1921
    %v1923 = vrot.slane %v1922, 4
    %v1925 = vshll.u32 %v1704, 16
    %v1927 = vrot.slane %v1925, 5
    %v1928 = vsel %vm513, %v1923, %v1927
    %1929 = vrot.lane.b32.xlu0 %v1718, 96
    %v1930 = vpop.permute.xlu0 %1929
    %1931 = vrot.lane.b32.xlu0 %v1732, 96
    %v1932 = vpop.permute.xlu0 %1931
    %1933 = vrot.lane.b32.xlu0 %v1746, 96
    %v1934 = vpop.permute.xlu0 %1933
    %1935 = vrot.lane.b32.xlu0 %v1760, 96
    %v1936 = vpop.permute.xlu0 %1935
    %1937 = vrot.lane.b32.xlu0 %v1774, 96
    %v1938 = vpop.permute.xlu0 %1937
    %1939 = vrot.lane.b32.xlu0 %v1788, 96
    %v1940 = vpop.permute.xlu0 %1939
    %1941 = vrot.lane.b32.xlu0 %v1802, 96
    %v1942 = vpop.permute.xlu0 %1941
    %1943 = vrot.lane.b32.xlu0 %v1816, 96
    %v1944 = vpop.permute.xlu0 %1943
    %1945 = vrot.lane.b32.xlu0 %v1830, 96
    %v1946 = vpop.permute.xlu0 %1945
    %1947 = vrot.lane.b32.xlu0 %v1844, 96
    %v1948 = vpop.permute.xlu0 %1947
    %1949 = vrot.lane.b32.xlu0 %v1858, 96
    %v1950 = vpop.permute.xlu0 %1949
    %1951 = vrot.lane.b32.xlu0 %v1872, 96
    %v1952 = vpop.permute.xlu0 %1951
    %1953 = vrot.lane.b32.xlu0 %v1886, 96
    %v1954 = vpop.permute.xlu0 %1953
    %1955 = vrot.lane.b32.xlu0 %v1900, 96
    %v1956 = vpop.permute.xlu0 %1955
    %1957 = vrot.lane.b32.xlu0 %v1914, 96
    %v1958 = vpop.permute.xlu0 %1957
    %1959 = vrot.lane.b32.xlu0 %v1928, 96
    %v1960 = vpop.permute.xlu0 %1959
    %1977 = vst.msk [vmem:[#allocation3 + $0x4] sm:$0xf] %vm1079, %v1930
    %1978 = vst.msk [vmem:[#allocation3 + $0x10] sm:$0xf] %vm1079, %v1932
    %1979 = vst.msk [vmem:[#allocation3 + $0x1c] sm:$0xf] %vm1079, %v1934
    %1980 = vst.msk [vmem:[#allocation3 + $0x28] sm:$0xf] %vm1079, %v1936
    %1981 = vst.msk [vmem:[#allocation3 + $0x34] sm:$0xf] %vm1079, %v1938
    %1982 = vst.msk [vmem:[#allocation3 + $0x40] sm:$0xf] %vm1079, %v1940
    %1983 = vst.msk [vmem:[#allocation3 + $0x4c] sm:$0xf] %vm1079, %v1942
    %1984 = vst.msk [vmem:[#allocation3 + $0x58] sm:$0xf] %vm1079, %v1944
    %1985 = vst.msk [vmem:[#allocation3 + $0x64] sm:$0xf] %vm1079, %v1946
    %1986 = vst.msk [vmem:[#allocation3 + $0x70] sm:$0xf] %vm1079, %v1948
    %1987 = vst.msk [vmem:[#allocation3 + $0x7c] sm:$0xf] %vm1079, %v1950
    %1988 = vst.msk [vmem:[#allocation3 + $0x88] sm:$0xf] %vm1079, %v1952
    %1989 = vst.msk [vmem:[#allocation3 + $0x94] sm:$0xf] %vm1079, %v1954
    %1990 = vst.msk [vmem:[#allocation3 + $0xa0] sm:$0xf] %vm1079, %v1956
    %1991 = vst.msk [vmem:[#allocation3 + $0xac] sm:$0xf] %vm1079, %v1958
    %1992 = vst.msk [vmem:[#allocation3 + $0xb8] sm:$0xf] %vm1079, %v1960
    %v1993 = vld [vmem:[%s1576] sm:$0xe]
    %v1994 = vld [vmem:[%s1576 + $0x4] sm:$0x1]
    %v1995 = vld [vmem:[%s1576 + $0x8] sm:$0xe]
    %v1996 = vld [vmem:[%s1576 + $0xc] sm:$0x1]
    %v1997 = vld [vmem:[%s1576 + $0x10] sm:$0xe]
    %v1998 = vld [vmem:[%s1576 + $0x14] sm:$0x1]
    %v1999 = vld [vmem:[%s1576 + $0x18] sm:$0xe]
    %v2000 = vld [vmem:[%s1576 + $0x1c] sm:$0x1]
    %v2001 = vld [vmem:[%s1576 + $0x20] sm:$0xe]
    %v2002 = vld [vmem:[%s1576 + $0x24] sm:$0x1]
    %v2003 = vld [vmem:[%s1576 + $0x28] sm:$0xe]
    %v2004 = vld [vmem:[%s1576 + $0x2c] sm:$0x1]
    %v2005 = vld [vmem:[%s1576 + $0x30] sm:$0xe]
    %v2006 = vld [vmem:[%s1576 + $0x34] sm:$0x1]
    %v2007 = vld [vmem:[%s1576 + $0x38] sm:$0xe]
    %v2008 = vld [vmem:[%s1576 + $0x3c] sm:$0x1]
    %v2009 = vld [vmem:[%s1576 + $0x50] sm:$0xe]
    %v2010 = vld [vmem:[%s1576 + $0x54] sm:$0x1]
    %v2011 = vld [vmem:[%s1576 + $0x58] sm:$0xe]
    %v2012 = vld [vmem:[%s1576 + $0x5c] sm:$0x1]
    %v2013 = vld [vmem:[%s1576 + $0x60] sm:$0xe]
    %v2014 = vld [vmem:[%s1576 + $0x64] sm:$0x1]
    %v2015 = vld [vmem:[%s1576 + $0x68] sm:$0xe]
    %v2016 = vld [vmem:[%s1576 + $0x6c] sm:$0x1]
    %v2017 = vld [vmem:[%s1576 + $0x70] sm:$0xe]
    %v2018 = vld [vmem:[%s1576 + $0x74] sm:$0x1]
    %v2019 = vld [vmem:[%s1576 + $0x78] sm:$0xe]
    %v2020 = vld [vmem:[%s1576 + $0x7c] sm:$0x1]
    %v2021 = vld [vmem:[%s1576 + $0x80] sm:$0xe]
    %v2022 = vld [vmem:[%s1576 + $0x84] sm:$0x1]
    %v2023 = vld [vmem:[%s1576 + $0x88] sm:$0xe]
    %v2024 = vld [vmem:[%s1576 + $0x8c] sm:$0x1]
    %v2057 = vrot.slane %v1993, 5
    %v2058 = vrot.slane %v2057, 4
    %v2059 = vrot.slane %v1994, 5
    %v2060 = vsel %vm869, %v2058, %v2059
    %v2061 = vrot.slane %v1995, 5
    %v2062 = vrot.slane %v2061, 4
    %v2063 = vrot.slane %v1996, 5
    %v2064 = vsel %vm869, %v2062, %v2063
    %v2065 = vrot.slane %v1997, 5
    %v2066 = vrot.slane %v2065, 4
    %v2067 = vrot.slane %v1998, 5
    %v2068 = vsel %vm869, %v2066, %v2067
    %v2069 = vrot.slane %v1999, 5
    %v2070 = vrot.slane %v2069, 4
    %v2071 = vrot.slane %v2000, 5
    %v2072 = vsel %vm869, %v2070, %v2071
    %v2073 = vrot.slane %v2001, 5
    %v2074 = vrot.slane %v2073, 4
    %v2075 = vrot.slane %v2002, 5
    %v2076 = vsel %vm869, %v2074, %v2075
    %v2077 = vrot.slane %v2003, 5
    %v2078 = vrot.slane %v2077, 4
    %v2079 = vrot.slane %v2004, 5
    %v2080 = vsel %vm869, %v2078, %v2079
    %v2081 = vrot.slane %v2005, 5
    %v2082 = vrot.slane %v2081, 4
    %v2083 = vrot.slane %v2006, 5
    %v2084 = vsel %vm869, %v2082, %v2083
    %v2085 = vrot.slane %v2007, 5
    %v2086 = vrot.slane %v2085, 4
    %v2087 = vrot.slane %v2008, 5
    %v2088 = vsel %vm869, %v2086, %v2087
    %v2089 = vrot.slane %v2009, 5
    %v2090 = vrot.slane %v2089, 4
    %v2091 = vrot.slane %v2010, 5
    %v2092 = vsel %vm869, %v2090, %v2091
    %v2093 = vrot.slane %v2011, 5
    %v2094 = vrot.slane %v2093, 4
    %v2095 = vrot.slane %v2012, 5
    %v2096 = vsel %vm869, %v2094, %v2095
    %v2097 = vrot.slane %v2013, 5
    %v2098 = vrot.slane %v2097, 4
    %v2099 = vrot.slane %v2014, 5
    %v2100 = vsel %vm869, %v2098, %v2099
    %v2101 = vrot.slane %v2015, 5
    %v2102 = vrot.slane %v2101, 4
    %v2103 = vrot.slane %v2016, 5
    %v2104 = vsel %vm869, %v2102, %v2103
    %v2105 = vrot.slane %v2017, 5
    %v2106 = vrot.slane %v2105, 4
    %v2107 = vrot.slane %v2018, 5
    %v2108 = vsel %vm869, %v2106, %v2107
    %v2109 = vrot.slane %v2019, 5
    %v2110 = vrot.slane %v2109, 4
    %v2111 = vrot.slane %v2020, 5
    %v2112 = vsel %vm869, %v2110, %v2111
    %v2113 = vrot.slane %v2021, 5
    %v2114 = vrot.slane %v2113, 4
    %v2115 = vrot.slane %v2022, 5
    %v2116 = vsel %vm869, %v2114, %v2115
    %v2117 = vrot.slane %v2023, 5
    %v2118 = vrot.slane %v2117, 4
    %v2119 = vrot.slane %v2024, 5
    %v2120 = vsel %vm869, %v2118, %v2119
    %2137 = vst.msk [vmem:[#allocation3 + $0x8] sm:$0xf] %vm22, %v2060
    %2138 = vst.msk [vmem:[#allocation3 + $0x14] sm:$0xf] %vm22, %v2064
    %2139 = vst.msk [vmem:[#allocation3 + $0x20] sm:$0xf] %vm22, %v2068
    %2140 = vst.msk [vmem:[#allocation3 + $0x2c] sm:$0xf] %vm22, %v2072
    %2141 = vst.msk [vmem:[#allocation3 + $0x38] sm:$0xf] %vm22, %v2076
    %2142 = vst.msk [vmem:[#allocation3 + $0x44] sm:$0xf] %vm22, %v2080
    %2143 = vst.msk [vmem:[#allocation3 + $0x50] sm:$0xf] %vm22, %v2084
    %2144 = vst.msk [vmem:[#allocation3 + $0x5c] sm:$0xf] %vm22, %v2088
    %2145 = vst.msk [vmem:[#allocation3 + $0x68] sm:$0xf] %vm22, %v2092
    %2146 = vst.msk [vmem:[#allocation3 + $0x74] sm:$0xf] %vm22, %v2096
    %2147 = vst.msk [vmem:[#allocation3 + $0x80] sm:$0xf] %vm22, %v2100
    %2148 = vst.msk [vmem:[#allocation3 + $0x8c] sm:$0xf] %vm22, %v2104
    %2149 = vst.msk [vmem:[#allocation3 + $0x98] sm:$0xf] %vm22, %v2108
    %2150 = vst.msk [vmem:[#allocation3 + $0xa4] sm:$0xf] %vm22, %v2112
    %2151 = vst.msk [vmem:[#allocation3 + $0xb0] sm:$0xf] %vm22, %v2116
    %2152 = vst.msk [vmem:[#allocation3 + $0xbc] sm:$0xf] %vm22, %v2120
    %v2153 = vld [vmem:[%s1] sm:$0xff]
    %v2154 = vld [vmem:[%s1 + $0x8] sm:$0xff]
    %v2155 = vld [vmem:[%s1 + $0x10] sm:$0xff]
    %v2156 = vld [vmem:[%s1 + $0x18] sm:$0xff]
    %v2157 = vld [vmem:[%s1 + $0x20] sm:$0xff]
    %v2158 = vld [vmem:[%s1 + $0x28] sm:$0xff]
    %v2159 = vld [vmem:[%s1 + $0x30] sm:$0xff]
    %v2160 = vld [vmem:[%s1 + $0x38] sm:$0xff]
    %v2161 = vld [vmem:[%s1 + $0x40] sm:$0xff]
    %v2162 = vld [vmem:[%s1 + $0x48] sm:$0xff]
    %v2163 = vld [vmem:[%s1 + $0x50] sm:$0xff]
    %v2164 = vld [vmem:[%s1 + $0x58] sm:$0xff]
    %v2165 = vld [vmem:[%s1 + $0x60] sm:$0xff]
    %v2166 = vld [vmem:[%s1 + $0x68] sm:$0xff]
    %v2167 = vld [vmem:[%s1 + $0x70] sm:$0xff]
    %v2168 = vld [vmem:[%s1 + $0x78] sm:$0xff]
    %v2169 = vld [vmem:[%s1 + $0x80] sm:$0xff]
    %v2170 = vld [vmem:[%s1 + $0x88] sm:$0xff]
    %v2171 = vld [vmem:[%s1 + $0x90] sm:$0xff]
    %v2172 = vld [vmem:[%s1 + $0x98] sm:$0xff]
    %v2173 = vld [vmem:[%s1 + $0xa0] sm:$0xff]
    %v2174 = vld [vmem:[%s1 + $0xa8] sm:$0xff]
    %v2175 = vld [vmem:[%s1 + $0xb0] sm:$0xff]
    %v2176 = vld [vmem:[%s1 + $0xb8] sm:$0xff]
    %v2177 = vld [vmem:[%s1 + $0xc0] sm:$0xff]
    %v2178 = vld [vmem:[%s1 + $0xc8] sm:$0xff]
    %v2179 = vld [vmem:[%s1 + $0xd0] sm:$0xff]
    %v2180 = vld [vmem:[%s1 + $0xd8] sm:$0xff]
    %v2181 = vld [vmem:[%s1 + $0xe0] sm:$0xff]
    %v2182 = vld [vmem:[%s1 + $0xe8] sm:$0xff]
    %v2183 = vld [vmem:[%s1 + $0xf0] sm:$0xff]
    %v2184 = vld [vmem:[%s1 + $0xf8] sm:$0xff]
    %v2185 = vld [vmem:[%s1 + $0x100] sm:$0xff]
    %v2186 = vld [vmem:[%s1 + $0x108] sm:$0xff]
    %v2187 = vld [vmem:[%s1 + $0x110] sm:$0xff]
    %v2188 = vld [vmem:[%s1 + $0x118] sm:$0xff]
    %v2189 = vpack.c.bf16 %v2154, %v2153
    %v2190 = vpack.c.bf16 %v2156, %v2155
    %v2191 = vpack.c.bf16 %v2158, %v2157
    %v2192 = vpack.c.bf16 %v2160, %v2159
    %v2193 = vpack.c.bf16 %v2162, %v2161
    %v2194 = vpack.c.bf16 %v2164, %v2163
    %v2195 = vpack.c.bf16 %v2166, %v2165
    %v2196 = vpack.c.bf16 %v2168, %v2167
    %v2197 = vpack.c.bf16 %v2170, %v2169
    %v2198 = vpack.c.bf16 %v2172, %v2171
    %v2199 = vpack.c.bf16 %v2174, %v2173
    %v2200 = vpack.c.bf16 %v2176, %v2175
    %v2201 = vpack.c.bf16 %v2178, %v2177
    %v2202 = vpack.c.bf16 %v2180, %v2179
    %v2203 = vpack.c.bf16 %v2182, %v2181
    %v2204 = vpack.c.bf16 %v2184, %v2183
    %v2205 = vpack.c.bf16 %v2186, %v2185
    %v2206 = vpack.c.bf16 %v2188, %v2187
    %v2207 = vld [vmem:[#allocation3] sm:$0xff]
    %v2208 = vld [vmem:[#allocation3 + $0x8] sm:$0xf]
    %v2209 = vld [vmem:[#allocation3 + $0xc] sm:$0xff]
    %v2210 = vld [vmem:[#allocation3 + $0x14] sm:$0xf]
    %v2211 = vld [vmem:[#allocation3 + $0x18] sm:$0xff]
    %v2212 = vld [vmem:[#allocation3 + $0x20] sm:$0xf]
    %v2213 = vld [vmem:[#allocation3 + $0x24] sm:$0xff]
    %v2214 = vld [vmem:[#allocation3 + $0x2c] sm:$0xf]
    %v2215 = vld [vmem:[#allocation3 + $0x30] sm:$0xff]
    %v2216 = vld [vmem:[#allocation3 + $0x38] sm:$0xf]
    %v2217 = vld [vmem:[#allocation3 + $0x3c] sm:$0xff]
    %v2218 = vld [vmem:[#allocation3 + $0x44] sm:$0xf]
    %v2219 = vld [vmem:[#allocation3 + $0x48] sm:$0xff]
    %v2220 = vld [vmem:[#allocation3 + $0x50] sm:$0xf]
    %v2221 = vld [vmem:[#allocation3 + $0x54] sm:$0xff]
    %v2222 = vld [vmem:[#allocation3 + $0x5c] sm:$0xf]
    %v2223 = vld [vmem:[#allocation3 + $0x60] sm:$0xff]
    %v2224 = vld [vmem:[#allocation3 + $0x68] sm:$0xf]
    %v2225 = vld [vmem:[#allocation3 + $0x6c] sm:$0xff]
    %v2226 = vld [vmem:[#allocation3 + $0x74] sm:$0xf]
    %v2227 = vld [vmem:[#allocation3 + $0x78] sm:$0xff]
    %v2228 = vld [vmem:[#allocation3 + $0x80] sm:$0xf]
    %v2229 = vld [vmem:[#allocation3 + $0x84] sm:$0xff]
    %v2230 = vld [vmem:[#allocation3 + $0x8c] sm:$0xf]
    %v2231 = vld [vmem:[#allocation3 + $0x90] sm:$0xff]
    %v2232 = vld [vmem:[#allocation3 + $0x98] sm:$0xf]
    %v2233 = vld [vmem:[#allocation3 + $0x9c] sm:$0xff]
    %v2234 = vld [vmem:[#allocation3 + $0xa4] sm:$0xf]
    %v2235 = vld [vmem:[#allocation3 + $0xa8] sm:$0xff]
    %v2236 = vld [vmem:[#allocation3 + $0xb0] sm:$0xf]
    %v2237 = vld [vmem:[#allocation3 + $0xb4] sm:$0xff]
    %v2238 = vld [vmem:[#allocation3 + $0xbc] sm:$0xf]
    %v2239 = vld [vmem:[%s2] sm:$0x1]
    %v2241 = vlaneseq
    %v2242 = vshrl.u32 %v2241, 7
    %v2243 = vsub.s32 0, %v2242
    %v2244 = vrot.slane %v2239, %v2243
    %v2278 = vunpack.c.l.b16 %v2207
    %v2279 = vunpack.c.h.b16 %v2207
    %v2280 = vunpack.c.l.b16 %v2208
    %v2281 = vunpack.c.l.b16 %v2209
    %v2282 = vunpack.c.h.b16 %v2209
    %v2283 = vunpack.c.l.b16 %v2210
    %v2284 = vunpack.c.l.b16 %v2211
    %v2285 = vunpack.c.h.b16 %v2211
    %v2286 = vunpack.c.l.b16 %v2212
    %v2287 = vunpack.c.l.b16 %v2213
    %v2288 = vunpack.c.h.b16 %v2213
    %v2289 = vunpack.c.l.b16 %v2214
    %v2290 = vunpack.c.l.b16 %v2215
    %v2291 = vunpack.c.h.b16 %v2215
    %v2292 = vunpack.c.l.b16 %v2216
    %v2293 = vunpack.c.l.b16 %v2217
    %v2294 = vunpack.c.h.b16 %v2217
    %v2295 = vunpack.c.l.b16 %v2218
    %v2296 = vunpack.c.l.b16 %v2219
    %v2297 = vunpack.c.h.b16 %v2219
    %v2298 = vunpack.c.l.b16 %v2220
    %v2299 = vunpack.c.l.b16 %v2221
    %v2300 = vunpack.c.h.b16 %v2221
    %v2301 = vunpack.c.l.b16 %v2222
    %v2302 = vunpack.c.l.b16 %v2223
    %v2303 = vunpack.c.h.b16 %v2223
    %v2304 = vunpack.c.l.b16 %v2224
    %v2305 = vunpack.c.l.b16 %v2225
    %v2306 = vunpack.c.h.b16 %v2225
    %v2307 = vunpack.c.l.b16 %v2226
    %v2308 = vunpack.c.l.b16 %v2227
    %v2309 = vunpack.c.h.b16 %v2227
    %v2310 = vunpack.c.l.b16 %v2228
    %v2311 = vunpack.c.l.b16 %v2229
    %v2312 = vunpack.c.h.b16 %v2229
    %v2313 = vunpack.c.l.b16 %v2230
    %v2314 = vunpack.c.l.b16 %v2231
    %v2315 = vunpack.c.h.b16 %v2231
    %v2316 = vunpack.c.l.b16 %v2232
    %v2317 = vunpack.c.l.b16 %v2233
    %v2318 = vunpack.c.h.b16 %v2233
    %v2319 = vunpack.c.l.b16 %v2234
    %v2320 = vunpack.c.l.b16 %v2235
    %v2321 = vunpack.c.h.b16 %v2235
    %v2322 = vunpack.c.l.b16 %v2236
    %v2323 = vunpack.c.l.b16 %v2237
    %v2324 = vunpack.c.h.b16 %v2237
    %v2325 = vunpack.c.l.b16 %v2238
    %v2326 = vpack.c.b16 %v2281, %v2278
    %v2327 = vpack.c.b16 %v2282, %v2279
    %v2328 = vpack.c.b16 %v2283, %v2280
    %v2329 = vpack.c.b16 %v2287, %v2284
    %v2330 = vpack.c.b16 %v2288, %v2285
    %v2331 = vpack.c.b16 %v2289, %v2286
    %v2332 = vpack.c.b16 %v2293, %v2290
    %v2333 = vpack.c.b16 %v2294, %v2291
    %v2334 = vpack.c.b16 %v2295, %v2292
    %v2335 = vpack.c.b16 %v2299, %v2296
    %v2336 = vpack.c.b16 %v2300, %v2297
    %v2337 = vpack.c.b16 %v2301, %v2298
    %v2338 = vpack.c.b16 %v2305, %v2302
    %v2339 = vpack.c.b16 %v2306, %v2303
    %v2340 = vpack.c.b16 %v2307, %v2304
    %v2341 = vpack.c.b16 %v2311, %v2308
    %v2342 = vpack.c.b16 %v2312, %v2309
    %v2343 = vpack.c.b16 %v2313, %v2310
    %v2344 = vpack.c.b16 %v2317, %v2314
    %v2345 = vpack.c.b16 %v2318, %v2315
    %v2346 = vpack.c.b16 %v2319, %v2316
    %v2347 = vpack.c.b16 %v2323, %v2320
    %v2348 = vpack.c.b16 %v2324, %v2321
    %v2349 = vpack.c.b16 %v2325, %v2322
    %vm2366 = vcmask 261120
    %v2368 = vsel %vm2366, %v2328, 0
    %v2371 = vsel %vm2366, %v2331, 0
    %v2374 = vsel %vm2366, %v2334, 0
    %v2377 = vsel %vm2366, %v2337, 0
    %v2380 = vsel %vm2366, %v2340, 0
    %v2383 = vsel %vm2366, %v2343, 0
    %v2386 = vsel %vm2366, %v2346, 0
    %v2389 = vsel %vm2366, %v2349, 0
    %2391 = vmatprep.subr.bf16.mxu0 0
    %2392 = vmatpush1.bf16.msra.mxu0 %v2189
    %2393 = vmatprep.subr.bf16.mxu0 0
    %2394 = vmatpush1.bf16.msra.mxu0 %v2190
    %2395 = vmatprep.subr.bf16.mxu0 0
    %2396 = vmatpush1.bf16.msra.mxu0 %v2191
    %2397 = vmatprep.subr.bf16.mxu0 0
    %2398 = vmatpush1.bf16.msra.mxu0 %v2192
    %2399 = vmatprep.subr.bf16.mxu0 0
    %2400 = vmatpush1.bf16.msra.mxu0 %v2193
    %2401 = vmatprep.subr.bf16.mxu0 0
    %2402 = vmatpush1.bf16.msra.mxu0 %v2194
    %2403 = vmatprep.subr.bf16.mxu0 0
    %2404 = vmatpush1.bf16.msra.mxu0 %v2195
    %2405 = vmatprep.subr.bf16.mxu0 0
    %2406 = vmatpush1.bf16.msra.mxu0 %v2196
    %2407 = vmatprep.subr.bf16.mxu0 0
    %2408 = vmatpush1.bf16.msra.mxu0 %v2197
    %2409 = vmatprep.subr.bf16.mxu0 0
    %2410 = vmatpush1.bf16.msra.mxu0 %v2198
    %2411 = vmatprep.subr.bf16.mxu0 0
    %2412 = vmatpush1.bf16.msra.mxu0 %v2199
    %2413 = vmatprep.subr.bf16.mxu0 0
    %2414 = vmatpush1.bf16.msra.mxu0 %v2200
    %2415 = vmatprep.subr.bf16.mxu0 0
    %2416 = vmatpush1.bf16.msra.mxu0 %v2201
    %2417 = vmatprep.subr.bf16.mxu0 0
    %2418 = vmatpush1.bf16.msra.mxu0 %v2202
    %2419 = vmatprep.subr.bf16.mxu0 0
    %2420 = vmatpush1.bf16.msra.mxu0 %v2203
    %2421 = vmatprep.subr.bf16.mxu0 0
    %2422 = vmatpush1.bf16.msra.mxu0 %v2204
    %2423 = vmatprep.mubr.bf16.mxu0 %v2327
    %2424 = vmatmul.mubr.bf16.gmra.mrb[0].mxu0 %v2326
    %v2425 = vpop.f32.mrb[0].mxu0
    %v2426 = vadd.f32 %v2244, %v2425
    %v2427 = vpop.f32.mrb[0].mxu0
    %v2428 = vpop.f32.mrb[0].mxu0
    %v2429 = vadd.f32 %v2244, %v2428
    %v2430 = vpop.f32.mrb[0].mxu0
    %2431 = vmatprep.mubr.bf16.mxu0 %v2330
    %2432 = vmatmul.mubr.bf16.gmra.mrb[0].mxu0 %v2329
    %v2433 = vpop.f32.mrb[0].mxu0
    %v2434 = vadd.f32 %v2244, %v2433
    %v2435 = vpop.f32.mrb[0].mxu0
    %v2436 = vpop.f32.mrb[0].mxu0
    %v2437 = vadd.f32 %v2244, %v2436
    %v2438 = vpop.f32.mrb[0].mxu0
    %2439 = vmatprep.mubr.bf16.mxu0 %v2333
    %2440 = vmatmul.mubr.bf16.gmra.mrb[0].mxu0 %v2332
    %v2441 = vpop.f32.mrb[0].mxu0
    %v2442 = vadd.f32 %v2244, %v2441
    %v2443 = vpop.f32.mrb[0].mxu0
    %v2444 = vpop.f32.mrb[0].mxu0
    %v2445 = vadd.f32 %v2244, %v2444
    %v2446 = vpop.f32.mrb[0].mxu0
    %2447 = vmatprep.mubr.bf16.mxu0 %v2336
    %2448 = vmatmul.mubr.bf16.gmra.mrb[0].mxu0 %v2335
    %v2449 = vpop.f32.mrb[0].mxu0
    %v2450 = vadd.f32 %v2244, %v2449
    %v2451 = vpop.f32.mrb[0].mxu0
    %v2452 = vpop.f32.mrb[0].mxu0
    %v2453 = vadd.f32 %v2244, %v2452
    %v2454 = vpop.f32.mrb[0].mxu0
    %2455 = vmatprep.mubr.bf16.mxu0 %v2339
    %2456 = vmatmul.mubr.bf16.gmra.mrb[0].mxu0 %v2338
    %v2457 = vpop.f32.mrb[0].mxu0
    %v2458 = vadd.f32 %v2244, %v2457
    %v2459 = vpop.f32.mrb[0].mxu0
    %v2460 = vpop.f32.mrb[0].mxu0
    %v2461 = vadd.f32 %v2244, %v2460
    %v2462 = vpop.f32.mrb[0].mxu0
    %2463 = vmatprep.mubr.bf16.mxu0 %v2342
    %2464 = vmatmul.mubr.bf16.gmra.mrb[0].mxu0 %v2341
    %v2465 = vpop.f32.mrb[0].mxu0
    %v2466 = vadd.f32 %v2244, %v2465
    %v2467 = vpop.f32.mrb[0].mxu0
    %v2468 = vpop.f32.mrb[0].mxu0
    %v2469 = vadd.f32 %v2244, %v2468
    %v2470 = vpop.f32.mrb[0].mxu0
    %2471 = vmatprep.mubr.bf16.mxu0 %v2345
    %2472 = vmatmul.mubr.bf16.gmra.mrb[0].mxu0 %v2344
    %v2473 = vpop.f32.mrb[0].mxu0
    %v2474 = vadd.f32 %v2244, %v2473
    %v2475 = vpop.f32.mrb[0].mxu0
    %v2476 = vpop.f32.mrb[0].mxu0
    %v2477 = vadd.f32 %v2244, %v2476
    %v2478 = vpop.f32.mrb[0].mxu0
    %2479 = vmatprep.mubr.bf16.mxu0 %v2348
    %2480 = vmatmul.mubr.bf16.gmra.mrb[0].mxu0 %v2347
    %v2481 = vpop.f32.mrb[0].mxu0
    %v2482 = vadd.f32 %v2244, %v2481
    %v2483 = vpop.f32.mrb[0].mxu0
    %v2484 = vpop.f32.mrb[0].mxu0
    %v2485 = vadd.f32 %v2244, %v2484
    %v2486 = vpop.f32.mrb[0].mxu0
    %2487 = vdwg.mxu0
    %2488 = vmatprep.subr.bf16.mxu0 0
    %2489 = vmatpush1.bf16.msra.mxu0 %v2205
    %2490 = vmatprep.subr.bf16.mxu0 0
    %2491 = vmatpush1.bf16.msra.mxu0 %v2206
    %2492 = vmatprep.subr.bf16.mxu0 0
    %2493 = vmatpush1.bf16.msra.mxu0 0
    %2494 = vmatprep.subr.bf16.mxu0 0
    %2495 = vmatpush1.bf16.msra.mxu0 0
    %2496 = vmatprep.subr.bf16.mxu0 0
    %2497 = vmatpush1.bf16.msra.mxu0 0
    %2498 = vmatprep.subr.bf16.mxu0 0
    %2499 = vmatpush1.bf16.msra.mxu0 0
    %2500 = vmatprep.subr.bf16.mxu0 0
    %2501 = vmatpush1.bf16.msra.mxu0 0
    %2502 = vmatprep.subr.bf16.mxu0 0
    %2503 = vmatpush1.bf16.msra.mxu0 0
    %2504 = vmatprep.subr.bf16.mxu0 0
    %2505 = vmatpush1.bf16.msra.mxu0 0
    %2506 = vmatprep.subr.bf16.mxu0 0
    %2507 = vmatpush1.bf16.msra.mxu0 0
    %2508 = vmatprep.subr.bf16.mxu0 0
    %2509 = vmatpush1.bf16.msra.mxu0 0
    %2510 = vmatprep.subr.bf16.mxu0 0
    %2511 = vmatpush1.bf16.msra.mxu0 0
    %2512 = vmatprep.subr.bf16.mxu0 0
    %2513 = vmatpush1.bf16.msra.mxu0 0
    %2514 = vmatprep.subr.bf16.mxu0 0
    %2515 = vmatpush1.bf16.msra.mxu0 0
    %2516 = vmatprep.subr.bf16.mxu0 0
    %2517 = vmatpush1.bf16.msra.mxu0 0
    %2518 = vmatprep.subr.bf16.mxu0 0
    %2519 = vmatpush1.bf16.msra.mxu0 0
    %2520 = vmatprep.mubr.bf16.mxu0 0
    %2521 = vmatmul.mubr.bf16.gmra.mrb[0].mxu0 %v2368
    %v2522 = vpop.f32.mrb[0].mxu0
    %v2523 = vadd.f32 %v2426, %v2522
    %v2524 = vpop.f32.mrb[0].mxu0
    %v2525 = vpop.f32.mrb[0].mxu0
    %v2526 = vadd.f32 %v2429, %v2525
    %v2527 = vpop.f32.mrb[0].mxu0
    %2528 = vmatprep.mubr.bf16.mxu0 0
    %2529 = vmatmul.mubr.bf16.gmra.mrb[0].mxu0 %v2371
    %v2530 = vpop.f32.mrb[0].mxu0
    %v2531 = vadd.f32 %v2434, %v2530
    %v2532 = vpop.f32.mrb[0].mxu0
    %v2533 = vpop.f32.mrb[0].mxu0
    %v2534 = vadd.f32 %v2437, %v2533
    %v2535 = vpop.f32.mrb[0].mxu0
    %2536 = vmatprep.mubr.bf16.mxu0 0
    %2537 = vmatmul.mubr.bf16.gmra.mrb[0].mxu0 %v2374
    %v2538 = vpop.f32.mrb[0].mxu0
    %v2539 = vadd.f32 %v2442, %v2538
    %v2540 = vpop.f32.mrb[0].mxu0
    %v2541 = vpop.f32.mrb[0].mxu0
    %v2542 = vadd.f32 %v2445, %v2541
    %v2543 = vpop.f32.mrb[0].mxu0
    %2544 = vmatprep.mubr.bf16.mxu0 0
    %2545 = vmatmul.mubr.bf16.gmra.mrb[0].mxu0 %v2377
    %v2546 = vpop.f32.mrb[0].mxu0
    %v2547 = vadd.f32 %v2450, %v2546
    %v2548 = vpop.f32.mrb[0].mxu0
    %v2549 = vpop.f32.mrb[0].mxu0
    %v2550 = vadd.f32 %v2453, %v2549
    %v2551 = vpop.f32.mrb[0].mxu0
    %2552 = vmatprep.mubr.bf16.mxu0 0
    %2553 = vmatmul.mubr.bf16.gmra.mrb[0].mxu0 %v2380
    %v2554 = vpop.f32.mrb[0].mxu0
    %v2555 = vadd.f32 %v2458, %v2554
    %v2556 = vpop.f32.mrb[0].mxu0
    %v2557 = vpop.f32.mrb[0].mxu0
    %v2558 = vadd.f32 %v2461, %v2557
    %v2559 = vpop.f32.mrb[0].mxu0
    %2560 = vmatprep.mubr.bf16.mxu0 0
    %2561 = vmatmul.mubr.bf16.gmra.mrb[0].mxu0 %v2383
    %v2562 = vpop.f32.mrb[0].mxu0
    %v2563 = vadd.f32 %v2466, %v2562
    %v2564 = vpop.f32.mrb[0].mxu0
    %v2565 = vpop.f32.mrb[0].mxu0
    %v2566 = vadd.f32 %v2469, %v2565
    %v2567 = vpop.f32.mrb[0].mxu0
    %2568 = vmatprep.mubr.bf16.mxu0 0
    %2569 = vmatmul.mubr.bf16.gmra.mrb[0].mxu0 %v2386
    %v2570 = vpop.f32.mrb[0].mxu0
    %v2571 = vadd.f32 %v2474, %v2570
    %v2572 = vpop.f32.mrb[0].mxu0
    %v2573 = vpop.f32.mrb[0].mxu0
    %v2574 = vadd.f32 %v2477, %v2573
    %v2575 = vpop.f32.mrb[0].mxu0
    %2576 = vmatprep.mubr.bf16.mxu0 0
    %2577 = vmatmul.mubr.bf16.gmra.mrb[0].mxu0 %v2389
    %v2578 = vpop.f32.mrb[0].mxu0
    %v2579 = vadd.f32 %v2482, %v2578
    %v2580 = vpop.f32.mrb[0].mxu0
    %v2581 = vpop.f32.mrb[0].mxu0
    %v2582 = vadd.f32 %v2485, %v2581
    %v2583 = vpop.f32.mrb[0].mxu0
    %2584 = vdwg.mxu0
    %v2585 = vmax.f32 %v2523, 0.0
    %v2586 = vmax.f32 %v2526, 0.0
    %v2587 = vmax.f32 %v2531, 0.0
    %v2588 = vmax.f32 %v2534, 0.0
    %v2589 = vmax.f32 %v2539, 0.0
    %v2590 = vmax.f32 %v2542, 0.0
    %v2591 = vmax.f32 %v2547, 0.0
    %v2592 = vmax.f32 %v2550, 0.0
    %v2593 = vmax.f32 %v2555, 0.0
    %v2594 = vmax.f32 %v2558, 0.0
    %v2595 = vmax.f32 %v2563, 0.0
    %v2596 = vmax.f32 %v2566, 0.0
    %v2597 = vmax.f32 %v2571, 0.0
    %v2598 = vmax.f32 %v2574, 0.0
    %v2599 = vmax.f32 %v2579, 0.0
    %v2600 = vmax.f32 %v2582, 0.0
    %v2601 = vpack.c.bf16 %v2585, %v2585
    %v2602 = vpack.c.bf16 %v2586, %v2586
    %v2603 = vpack.c.bf16 %v2587, %v2587
    %v2604 = vpack.c.bf16 %v2588, %v2588
    %v2605 = vpack.c.bf16 %v2589, %v2589
    %v2606 = vpack.c.bf16 %v2590, %v2590
    %v2607 = vpack.c.bf16 %v2591, %v2591
    %v2608 = vpack.c.bf16 %v2592, %v2592
    %v2609 = vpack.c.bf16 %v2593, %v2593
    %v2610 = vpack.c.bf16 %v2594, %v2594
    %v2611 = vpack.c.bf16 %v2595, %v2595
    %v2612 = vpack.c.bf16 %v2596, %v2596
    %v2613 = vpack.c.bf16 %v2597, %v2597
    %v2614 = vpack.c.bf16 %v2598, %v2598
    %v2615 = vpack.c.bf16 %v2599, %v2599
    %v2616 = vpack.c.bf16 %v2600, %v2600
    %v2633 = vunpack.c.l.b16 %v2601
    %v2634 = vunpack.c.l.b16 %v2602
    %v2635 = vunpack.c.l.b16 %v2603
    %v2636 = vunpack.c.l.b16 %v2604
    %v2637 = vunpack.c.l.b16 %v2605
    %v2638 = vunpack.c.l.b16 %v2606
    %v2639 = vunpack.c.l.b16 %v2607
    %v2640 = vunpack.c.l.b16 %v2608
    %v2641 = vunpack.c.l.b16 %v2609
    %v2642 = vunpack.c.l.b16 %v2610
    %v2643 = vunpack.c.l.b16 %v2611
    %v2644 = vunpack.c.l.b16 %v2612
    %v2645 = vunpack.c.l.b16 %v2613
    %v2646 = vunpack.c.l.b16 %v2614
    %v2647 = vunpack.c.l.b16 %v2615
    %v2648 = vunpack.c.l.b16 %v2616
    %v2649 = vpack.c.b16 %v2633, %v2633
    %v2650 = vpack.c.b16 %v2634, %v2634
    %v2651 = vpack.c.b16 %v2635, %v2635
    %v2652 = vpack.c.b16 %v2636, %v2636
    %v2653 = vpack.c.b16 %v2637, %v2637
    %v2654 = vpack.c.b16 %v2638, %v2638
    %v2655 = vpack.c.b16 %v2639, %v2639
    %v2656 = vpack.c.b16 %v2640, %v2640
    %v2657 = vpack.c.b16 %v2641, %v2641
    %v2658 = vpack.c.b16 %v2642, %v2642
    %v2659 = vpack.c.b16 %v2643, %v2643
    %v2660 = vpack.c.b16 %v2644, %v2644
    %v2661 = vpack.c.b16 %v2645, %v2645
    %v2662 = vpack.c.b16 %v2646, %v2646
    %v2663 = vpack.c.b16 %v2647, %v2647
    %v2664 = vpack.c.b16 %v2648, %v2648
    %v2666 = vshrl.u32 %v2649, 16
    %v2668 = vrot.slane %v2666, 7
    %v2669 = vshll.u32 %v2649, 16
    %v2671 = vor.u32 %v2668, %v2669
    %v2672 = vrot.slane %v2668, 4
    %v2674 = vshrl.u32 %v2650, 16
    %v2676 = vrot.slane %v2674, 7
    %v2677 = vshll.u32 %v2650, 16
    %v2679 = vor.u32 %v2676, %v2677
    %v2680 = vrot.slane %v2676, 4
    %v2682 = vshrl.u32 %v2651, 16
    %v2684 = vrot.slane %v2682, 7
    %v2685 = vshll.u32 %v2651, 16
    %v2687 = vor.u32 %v2684, %v2685
    %v2688 = vrot.slane %v2684, 4
    %v2690 = vshrl.u32 %v2652, 16
    %v2692 = vrot.slane %v2690, 7
    %v2693 = vshll.u32 %v2652, 16
    %v2695 = vor.u32 %v2692, %v2693
    %v2696 = vrot.slane %v2692, 4
    %v2698 = vshrl.u32 %v2653, 16
    %v2700 = vrot.slane %v2698, 7
    %v2701 = vshll.u32 %v2653, 16
    %v2703 = vor.u32 %v2700, %v2701
    %v2704 = vrot.slane %v2700, 4
    %v2706 = vshrl.u32 %v2654, 16
    %v2708 = vrot.slane %v2706, 7
    %v2709 = vshll.u32 %v2654, 16
    %v2711 = vor.u32 %v2708, %v2709
    %v2712 = vrot.slane %v2708, 4
    %v2714 = vshrl.u32 %v2655, 16
    %v2716 = vrot.slane %v2714, 7
    %v2717 = vshll.u32 %v2655, 16
    %v2719 = vor.u32 %v2716, %v2717
    %v2720 = vrot.slane %v2716, 4
    %v2722 = vshrl.u32 %v2656, 16
    %v2724 = vrot.slane %v2722, 7
    %v2725 = vshll.u32 %v2656, 16
    %v2727 = vor.u32 %v2724, %v2725
    %v2728 = vrot.slane %v2724, 4
    %v2730 = vshrl.u32 %v2657, 16
    %v2732 = vrot.slane %v2730, 7
    %v2733 = vshll.u32 %v2657, 16
    %v2735 = vor.u32 %v2732, %v2733
    %v2736 = vrot.slane %v2732, 4
    %v2738 = vshrl.u32 %v2658, 16
    %v2740 = vrot.slane %v2738, 7
    %v2741 = vshll.u32 %v2658, 16
    %v2743 = vor.u32 %v2740, %v2741
    %v2744 = vrot.slane %v2740, 4
    %v2746 = vshrl.u32 %v2659, 16
    %v2748 = vrot.slane %v2746, 7
    %v2749 = vshll.u32 %v2659, 16
    %v2751 = vor.u32 %v2748, %v2749
    %v2752 = vrot.slane %v2748, 4
    %v2754 = vshrl.u32 %v2660, 16
    %v2756 = vrot.slane %v2754, 7
    %v2757 = vshll.u32 %v2660, 16
    %v2759 = vor.u32 %v2756, %v2757
    %v2760 = vrot.slane %v2756, 4
    %v2762 = vshrl.u32 %v2661, 16
    %v2764 = vrot.slane %v2762, 7
    %v2765 = vshll.u32 %v2661, 16
    %v2767 = vor.u32 %v2764, %v2765
    %v2768 = vrot.slane %v2764, 4
    %v2770 = vshrl.u32 %v2662, 16
    %v2772 = vrot.slane %v2770, 7
    %v2773 = vshll.u32 %v2662, 16
    %v2775 = vor.u32 %v2772, %v2773
    %v2776 = vrot.slane %v2772, 4
    %v2778 = vshrl.u32 %v2663, 16
    %v2780 = vrot.slane %v2778, 7
    %v2781 = vshll.u32 %v2663, 16
    %v2783 = vor.u32 %v2780, %v2781
    %v2784 = vrot.slane %v2780, 4
    %v2786 = vshrl.u32 %v2664, 16
    %v2788 = vrot.slane %v2786, 7
    %v2789 = vshll.u32 %v2664, 16
    %v2791 = vor.u32 %v2788, %v2789
    %v2792 = vrot.slane %v2788, 4
    %s2825 = scalar_lea.vmem [#allocation4], 8
    %v2826 = vld [vmem:[%s2825] sm:$0xf]
    %v2827 = vsel %vm347, %v2671, %v2826
    %2828 = vst [vmem:[%s2825] sm:$0xf] %v2827
    %v2829 = vld [vmem:[%s2825 + $0x4] sm:$0x1]
    %v2830 = vsel %vm353, %v2672, %v2829
    %2831 = vst [vmem:[%s2825 + $0x4] sm:$0x1] %v2830
    %v2832 = vld [vmem:[%s2825 + $0x8] sm:$0xf]
    %v2833 = vsel %vm347, %v2679, %v2832
    %2834 = vst [vmem:[%s2825 + $0x8] sm:$0xf] %v2833
    %v2835 = vld [vmem:[%s2825 + $0xc] sm:$0x1]
    %v2836 = vsel %vm353, %v2680, %v2835
    %2837 = vst [vmem:[%s2825 + $0xc] sm:$0x1] %v2836
    %v2838 = vld [vmem:[%s2825 + $0x10] sm:$0xf]
    %v2839 = vsel %vm347, %v2687, %v2838
    %2840 = vst [vmem:[%s2825 + $0x10] sm:$0xf] %v2839
    %v2841 = vld [vmem:[%s2825 + $0x14] sm:$0x1]
    %v2842 = vsel %vm353, %v2688, %v2841
    %2843 = vst [vmem:[%s2825 + $0x14] sm:$0x1] %v2842
    %v2844 = vld [vmem:[%s2825 + $0x18] sm:$0xf]
    %v2845 = vsel %vm347, %v2695, %v2844
    %2846 = vst [vmem:[%s2825 + $0x18] sm:$0xf] %v2845
    %v2847 = vld [vmem:[%s2825 + $0x1c] sm:$0x1]
    %v2848 = vsel %vm353, %v2696, %v2847
    %2849 = vst [vmem:[%s2825 + $0x1c] sm:$0x1] %v2848
    %v2850 = vld [vmem:[%s2825 + $0x20] sm:$0xf]
    %v2851 = vsel %vm347, %v2703, %v2850
    %2852 = vst [vmem:[%s2825 + $0x20] sm:$0xf] %v2851
    %v2853 = vld [vmem:[%s2825 + $0x24] sm:$0x1]
    %v2854 = vsel %vm353, %v2704, %v2853
    %2855 = vst [vmem:[%s2825 + $0x24] sm:$0x1] %v2854
    %v2856 = vld [vmem:[%s2825 + $0x28] sm:$0xf]
    %v2857 = vsel %vm347, %v2711, %v2856
    %2858 = vst [vmem:[%s2825 + $0x28] sm:$0xf] %v2857
    %v2859 = vld [vmem:[%s2825 + $0x2c] sm:$0x1]
    %v2860 = vsel %vm353, %v2712, %v2859
    %2861 = vst [vmem:[%s2825 + $0x2c] sm:$0x1] %v2860
    %v2862 = vld [vmem:[%s2825 + $0x30] sm:$0xf]
    %v2863 = vsel %vm347, %v2719, %v2862
    %2864 = vst [vmem:[%s2825 + $0x30] sm:$0xf] %v2863
    %v2865 = vld [vmem:[%s2825 + $0x34] sm:$0x1]
    %v2866 = vsel %vm353, %v2720, %v2865
    %2867 = vst [vmem:[%s2825 + $0x34] sm:$0x1] %v2866
    %v2868 = vld [vmem:[%s2825 + $0x38] sm:$0xf]
    %v2869 = vsel %vm347, %v2727, %v2868
    %2870 = vst [vmem:[%s2825 + $0x38] sm:$0xf] %v2869
    %v2871 = vld [vmem:[%s2825 + $0x3c] sm:$0x1]
    %v2872 = vsel %vm353, %v2728, %v2871
    %2873 = vst [vmem:[%s2825 + $0x3c] sm:$0x1] %v2872
    %v2874 = vld [vmem:[%s2825 + $0x50] sm:$0xf]
    %v2875 = vsel %vm347, %v2735, %v2874
    %2876 = vst [vmem:[%s2825 + $0x50] sm:$0xf] %v2875
    %v2877 = vld [vmem:[%s2825 + $0x54] sm:$0x1]
    %v2878 = vsel %vm353, %v2736, %v2877
    %2879 = vst [vmem:[%s2825 + $0x54] sm:$0x1] %v2878
    %v2880 = vld [vmem:[%s2825 + $0x58] sm:$0xf]
    %v2881 = vsel %vm347, %v2743, %v2880
    %2882 = vst [vmem:[%s2825 + $0x58] sm:$0xf] %v2881
    %v2883 = vld [vmem:[%s2825 + $0x5c] sm:$0x1]
    %v2884 = vsel %vm353, %v2744, %v2883
    %2885 = vst [vmem:[%s2825 + $0x5c] sm:$0x1] %v2884
    %v2886 = vld [vmem:[%s2825 + $0x60] sm:$0xf]
    %v2887 = vsel %vm347, %v2751, %v2886
    %2888 = vst [vmem:[%s2825 + $0x60] sm:$0xf] %v2887
    %v2889 = vld [vmem:[%s2825 + $0x64] sm:$0x1]
    %v2890 = vsel %vm353, %v2752, %v2889
    %2891 = vst [vmem:[%s2825 + $0x64] sm:$0x1] %v2890
    %v2892 = vld [vmem:[%s2825 + $0x68] sm:$0xf]
    %v2893 = vsel %vm347, %v2759, %v2892
    %2894 = vst [vmem:[%s2825 + $0x68] sm:$0xf] %v2893
    %v2895 = vld [vmem:[%s2825 + $0x6c] sm:$0x1]
    %v2896 = vsel %vm353, %v2760, %v2895
    %2897 = vst [vmem:[%s2825 + $0x6c] sm:$0x1] %v2896
    %v2898 = vld [vmem:[%s2825 + $0x70] sm:$0xf]
    %v2899 = vsel %vm347, %v2767, %v2898
    %2900 = vst [vmem:[%s2825 + $0x70] sm:$0xf] %v2899
    %v2901 = vld [vmem:[%s2825 + $0x74] sm:$0x1]
    %v2902 = vsel %vm353, %v2768, %v2901
    %2903 = vst [vmem:[%s2825 + $0x74] sm:$0x1] %v2902
    %v2904 = vld [vmem:[%s2825 + $0x78] sm:$0xf]
    %v2905 = vsel %vm347, %v2775, %v2904
    %2906 = vst [vmem:[%s2825 + $0x78] sm:$0xf] %v2905
    %v2907 = vld [vmem:[%s2825 + $0x7c] sm:$0x1]
    %v2908 = vsel %vm353, %v2776, %v2907
    %2909 = vst [vmem:[%s2825 + $0x7c] sm:$0x1] %v2908
    %v2910 = vld [vmem:[%s2825 + $0x80] sm:$0xf]
    %v2911 = vsel %vm347, %v2783, %v2910
    %2912 = vst [vmem:[%s2825 + $0x80] sm:$0xf] %v2911
    %v2913 = vld [vmem:[%s2825 + $0x84] sm:$0x1]
    %v2914 = vsel %vm353, %v2784, %v2913
    %2915 = vst [vmem:[%s2825 + $0x84] sm:$0x1] %v2914
    %v2916 = vld [vmem:[%s2825 + $0x88] sm:$0xf]
    %v2917 = vsel %vm347, %v2791, %v2916
    %2918 = vst [vmem:[%s2825 + $0x88] sm:$0xf] %v2917
    %v2919 = vld [vmem:[%s2825 + $0x8c] sm:$0x1]
    %v2920 = vsel %vm353, %v2792, %v2919
    %2921 = vst [vmem:[%s2825 + $0x8c] sm:$0x1] %v2920
    %v2922 = vld [vmem:[#allocation4] sm:$0xf]
    %v2923 = vld [vmem:[#allocation4 + $0x8] sm:$0xf]
    %v2924 = vld [vmem:[#allocation4 + $0x10] sm:$0xf]
    %v2925 = vld [vmem:[#allocation4 + $0x18] sm:$0xf]
    %v2926 = vld [vmem:[#allocation4 + $0x20] sm:$0xf]
    %v2927 = vld [vmem:[#allocation4 + $0x28] sm:$0xf]
    %v2928 = vld [vmem:[#allocation4 + $0x30] sm:$0xf]
    %v2929 = vld [vmem:[#allocation4 + $0x38] sm:$0xf]
    %v2930 = vld [vmem:[#allocation4 + $0x50] sm:$0xf]
    %v2931 = vld [vmem:[#allocation4 + $0x58] sm:$0xf]
    %v2932 = vld [vmem:[#allocation4 + $0x60] sm:$0xf]
    %v2933 = vld [vmem:[#allocation4 + $0x68] sm:$0xf]
    %v2934 = vld [vmem:[#allocation4 + $0x70] sm:$0xf]
    %v2935 = vld [vmem:[#allocation4 + $0x78] sm:$0xf]
    %v2936 = vld [vmem:[#allocation4 + $0x80] sm:$0xf]
    %v2937 = vld [vmem:[#allocation4 + $0x88] sm:$0xf]
    %2938 = vst.msk [vmem:[#allocation5] sm:$0xf] %vm22, %v2922
    %2939 = vst.msk [vmem:[#allocation5 + $0xc] sm:$0xf] %vm22, %v2923
    %2940 = vst.msk [vmem:[#allocation5 + $0x18] sm:$0xf] %vm22, %v2924
    %2941 = vst.msk [vmem:[#allocation5 + $0x24] sm:$0xf] %vm22, %v2925
    %2942 = vst.msk [vmem:[#allocation5 + $0x30] sm:$0xf] %vm22, %v2926
    %2943 = vst.msk [vmem:[#allocation5 + $0x3c] sm:$0xf] %vm22, %v2927
    %2944 = vst.msk [vmem:[#allocation5 + $0x48] sm:$0xf] %vm22, %v2928
    %2945 = vst.msk [vmem:[#allocation5 + $0x54] sm:$0xf] %vm22, %v2929
    %2946 = vst.msk [vmem:[#allocation5 + $0x60] sm:$0xf] %vm22, %v2930
    %2947 = vst.msk [vmem:[#allocation5 + $0x6c] sm:$0xf] %vm22, %v2931
    %2948 = vst.msk [vmem:[#allocation5 + $0x78] sm:$0xf] %vm22, %v2932
    %2949 = vst.msk [vmem:[#allocation5 + $0x84] sm:$0xf] %vm22, %v2933
    %2950 = vst.msk [vmem:[#allocation5 + $0x90] sm:$0xf] %vm22, %v2934
    %2951 = vst.msk [vmem:[#allocation5 + $0x9c] sm:$0xf] %vm22, %v2935
    %2952 = vst.msk [vmem:[#allocation5 + $0xa8] sm:$0xf] %vm22, %v2936
    %2953 = vst.msk [vmem:[#allocation5 + $0xb4] sm:$0xf] %vm22, %v2937
    %v2954 = vld [vmem:[#allocation4] sm:$0xf]
    %v2955 = vld [vmem:[#allocation4 + $0x4] sm:$0x1]
    %v2956 = vld [vmem:[#allocation4 + $0x8] sm:$0xf]
    %v2957 = vld [vmem:[#allocation4 + $0xc] sm:$0x1]
    %v2958 = vld [vmem:[#allocation4 + $0x10] sm:$0xf]
    %v2959 = vld [vmem:[#allocation4 + $0x14] sm:$0x1]
    %v2960 = vld [vmem:[#allocation4 + $0x18] sm:$0xf]
    %v2961 = vld [vmem:[#allocation4 + $0x1c] sm:$0x1]
    %v2962 = vld [vmem:[#allocation4 + $0x20] sm:$0xf]
    %v2963 = vld [vmem:[#allocation4 + $0x24] sm:$0x1]
    %v2964 = vld [vmem:[#allocation4 + $0x28] sm:$0xf]
    %v2965 = vld [vmem:[#allocation4 + $0x2c] sm:$0x1]
    %v2966 = vld [vmem:[#allocation4 + $0x30] sm:$0xf]
    %v2967 = vld [vmem:[#allocation4 + $0x34] sm:$0x1]
    %v2968 = vld [vmem:[#allocation4 + $0x38] sm:$0xf]
    %v2969 = vld [vmem:[#allocation4 + $0x3c] sm:$0x1]
    %v2970 = vld [vmem:[#allocation4 + $0x50] sm:$0xf]
    %v2971 = vld [vmem:[#allocation4 + $0x54] sm:$0x1]
    %v2972 = vld [vmem:[#allocation4 + $0x58] sm:$0xf]
    %v2973 = vld [vmem:[#allocation4 + $0x5c] sm:$0x1]
    %v2974 = vld [vmem:[#allocation4 + $0x60] sm:$0xf]
    %v2975 = vld [vmem:[#allocation4 + $0x64] sm:$0x1]
    %v2976 = vld [vmem:[#allocation4 + $0x68] sm:$0xf]
    %v2977 = vld [vmem:[#allocation4 + $0x6c] sm:$0x1]
    %v2978 = vld [vmem:[#allocation4 + $0x70] sm:$0xf]
    %v2979 = vld [vmem:[#allocation4 + $0x74] sm:$0x1]
    %v2980 = vld [vmem:[#allocation4 + $0x78] sm:$0xf]
    %v2981 = vld [vmem:[#allocation4 + $0x7c] sm:$0x1]
    %v2982 = vld [vmem:[#allocation4 + $0x80] sm:$0xf]
    %v2983 = vld [vmem:[#allocation4 + $0x84] sm:$0x1]
    %v2984 = vld [vmem:[#allocation4 + $0x88] sm:$0xf]
    %v2985 = vld [vmem:[#allocation4 + $0x8c] sm:$0x1]
    %v2987 = vshrl.u32 %v2954, 16
    %v2989 = vrot.slane %v2987, 4
    %v2990 = vshll.u32 %v2954, 16
    %v2992 = vrot.slane %v2990, 5
    %v2993 = vor.u32 %v2989, %v2992
    %v2994 = vrot.slane %v2993, 4
    %v2996 = vshll.u32 %v2955, 16
    %v2998 = vrot.slane %v2996, 5
    %v2999 = vsel %vm513, %v2994, %v2998
    %v3001 = vshrl.u32 %v2956, 16
    %v3003 = vrot.slane %v3001, 4
    %v3004 = vshll.u32 %v2956, 16
    %v3006 = vrot.slane %v3004, 5
    %v3007 = vor.u32 %v3003, %v3006
    %v3008 = vrot.slane %v3007, 4
    %v3010 = vshll.u32 %v2957, 16
    %v3012 = vrot.slane %v3010, 5
    %v3013 = vsel %vm513, %v3008, %v3012
    %v3015 = vshrl.u32 %v2958, 16
    %v3017 = vrot.slane %v3015, 4
    %v3018 = vshll.u32 %v2958, 16
    %v3020 = vrot.slane %v3018, 5
    %v3021 = vor.u32 %v3017, %v3020
    %v3022 = vrot.slane %v3021, 4
    %v3024 = vshll.u32 %v2959, 16
    %v3026 = vrot.slane %v3024, 5
    %v3027 = vsel %vm513, %v3022, %v3026
    %v3029 = vshrl.u32 %v2960, 16
    %v3031 = vrot.slane %v3029, 4
    %v3032 = vshll.u32 %v2960, 16
    %v3034 = vrot.slane %v3032, 5
    %v3035 = vor.u32 %v3031, %v3034
    %v3036 = vrot.slane %v3035, 4
    %v3038 = vshll.u32 %v2961, 16
    %v3040 = vrot.slane %v3038, 5
    %v3041 = vsel %vm513, %v3036, %v3040
    %v3043 = vshrl.u32 %v2962, 16
    %v3045 = vrot.slane %v3043, 4
    %v3046 = vshll.u32 %v2962, 16
    %v3048 = vrot.slane %v3046, 5
    %v3049 = vor.u32 %v3045, %v3048
    %v3050 = vrot.slane %v3049, 4
    %v3052 = vshll.u32 %v2963, 16
    %v3054 = vrot.slane %v3052, 5
    %v3055 = vsel %vm513, %v3050, %v3054
    %v3057 = vshrl.u32 %v2964, 16
    %v3059 = vrot.slane %v3057, 4
    %v3060 = vshll.u32 %v2964, 16
    %v3062 = vrot.slane %v3060, 5
    %v3063 = vor.u32 %v3059, %v3062
    %v3064 = vrot.slane %v3063, 4
    %v3066 = vshll.u32 %v2965, 16
    %v3068 = vrot.slane %v3066, 5
    %v3069 = vsel %vm513, %v3064, %v3068
    %v3071 = vshrl.u32 %v2966, 16
    %v3073 = vrot.slane %v3071, 4
    %v3074 = vshll.u32 %v2966, 16
    %v3076 = vrot.slane %v3074, 5
    %v3077 = vor.u32 %v3073, %v3076
    %v3078 = vrot.slane %v3077, 4
    %v3080 = vshll.u32 %v2967, 16
    %v3082 = vrot.slane %v3080, 5
    %v3083 = vsel %vm513, %v3078, %v3082
    %v3085 = vshrl.u32 %v2968, 16
    %v3087 = vrot.slane %v3085, 4
    %v3088 = vshll.u32 %v2968, 16
    %v3090 = vrot.slane %v3088, 5
    %v3091 = vor.u32 %v3087, %v3090
    %v3092 = vrot.slane %v3091, 4
    %v3094 = vshll.u32 %v2969, 16
    %v3096 = vrot.slane %v3094, 5
    %v3097 = vsel %vm513, %v3092, %v3096
    %v3099 = vshrl.u32 %v2970, 16
    %v3101 = vrot.slane %v3099, 4
    %v3102 = vshll.u32 %v2970, 16
    %v3104 = vrot.slane %v3102, 5
    %v3105 = vor.u32 %v3101, %v3104
    %v3106 = vrot.slane %v3105, 4
    %v3108 = vshll.u32 %v2971, 16
    %v3110 = vrot.slane %v3108, 5
    %v3111 = vsel %vm513, %v3106, %v3110
    %v3113 = vshrl.u32 %v2972, 16
    %v3115 = vrot.slane %v3113, 4
    %v3116 = vshll.u32 %v2972, 16
    %v3118 = vrot.slane %v3116, 5
    %v3119 = vor.u32 %v3115, %v3118
    %v3120 = vrot.slane %v3119, 4
    %v3122 = vshll.u32 %v2973, 16
    %v3124 = vrot.slane %v3122, 5
    %v3125 = vsel %vm513, %v3120, %v3124
    %v3127 = vshrl.u32 %v2974, 16
    %v3129 = vrot.slane %v3127, 4
    %v3130 = vshll.u32 %v2974, 16
    %v3132 = vrot.slane %v3130, 5
    %v3133 = vor.u32 %v3129, %v3132
    %v3134 = vrot.slane %v3133, 4
    %v3136 = vshll.u32 %v2975, 16
    %v3138 = vrot.slane %v3136, 5
    %v3139 = vsel %vm513, %v3134, %v3138
    %v3141 = vshrl.u32 %v2976, 16
    %v3143 = vrot.slane %v3141, 4
    %v3144 = vshll.u32 %v2976, 16
    %v3146 = vrot.slane %v3144, 5
    %v3147 = vor.u32 %v3143, %v3146
    %v3148 = vrot.slane %v3147, 4
    %v3150 = vshll.u32 %v2977, 16
    %v3152 = vrot.slane %v3150, 5
    %v3153 = vsel %vm513, %v3148, %v3152
    %v3155 = vshrl.u32 %v2978, 16
    %v3157 = vrot.slane %v3155, 4
    %v3158 = vshll.u32 %v2978, 16
    %v3160 = vrot.slane %v3158, 5
    %v3161 = vor.u32 %v3157, %v3160
    %v3162 = vrot.slane %v3161, 4
    %v3164 = vshll.u32 %v2979, 16
    %v3166 = vrot.slane %v3164, 5
    %v3167 = vsel %vm513, %v3162, %v3166
    %v3169 = vshrl.u32 %v2980, 16
    %v3171 = vrot.slane %v3169, 4
    %v3172 = vshll.u32 %v2980, 16
    %v3174 = vrot.slane %v3172, 5
    %v3175 = vor.u32 %v3171, %v3174
    %v3176 = vrot.slane %v3175, 4
    %v3178 = vshll.u32 %v2981, 16
    %v3180 = vrot.slane %v3178, 5
    %v3181 = vsel %vm513, %v3176, %v3180
    %v3183 = vshrl.u32 %v2982, 16
    %v3185 = vrot.slane %v3183, 4
    %v3186 = vshll.u32 %v2982, 16
    %v3188 = vrot.slane %v3186, 5
    %v3189 = vor.u32 %v3185, %v3188
    %v3190 = vrot.slane %v3189, 4
    %v3192 = vshll.u32 %v2983, 16
    %v3194 = vrot.slane %v3192, 5
    %v3195 = vsel %vm513, %v3190, %v3194
    %v3197 = vshrl.u32 %v2984, 16
    %v3199 = vrot.slane %v3197, 4
    %v3200 = vshll.u32 %v2984, 16
    %v3202 = vrot.slane %v3200, 5
    %v3203 = vor.u32 %v3199, %v3202
    %v3204 = vrot.slane %v3203, 4
    %v3206 = vshll.u32 %v2985, 16
    %v3208 = vrot.slane %v3206, 5
    %v3209 = vsel %vm513, %v3204, %v3208
    %3210 = vrot.lane.b32.xlu0 %v2999, 32
    %v3211 = vpop.permute.xlu0 %3210
    %3212 = vrot.lane.b32.xlu0 %v3013, 32
    %v3213 = vpop.permute.xlu0 %3212
    %3214 = vrot.lane.b32.xlu0 %v3027, 32
    %v3215 = vpop.permute.xlu0 %3214
    %3216 = vrot.lane.b32.xlu0 %v3041, 32
    %v3217 = vpop.permute.xlu0 %3216
    %3218 = vrot.lane.b32.xlu0 %v3055, 32
    %v3219 = vpop.permute.xlu0 %3218
    %3220 = vrot.lane.b32.xlu0 %v3069, 32
    %v3221 = vpop.permute.xlu0 %3220
    %3222 = vrot.lane.b32.xlu0 %v3083, 32
    %v3223 = vpop.permute.xlu0 %3222
    %3224 = vrot.lane.b32.xlu0 %v3097, 32
    %v3225 = vpop.permute.xlu0 %3224
    %3226 = vrot.lane.b32.xlu0 %v3111, 32
    %v3227 = vpop.permute.xlu0 %3226
    %3228 = vrot.lane.b32.xlu0 %v3125, 32
    %v3229 = vpop.permute.xlu0 %3228
    %3230 = vrot.lane.b32.xlu0 %v3139, 32
    %v3231 = vpop.permute.xlu0 %3230
    %3232 = vrot.lane.b32.xlu0 %v3153, 32
    %v3233 = vpop.permute.xlu0 %3232
    %3234 = vrot.lane.b32.xlu0 %v3167, 32
    %v3235 = vpop.permute.xlu0 %3234
    %3236 = vrot.lane.b32.xlu0 %v3181, 32
    %v3237 = vpop.permute.xlu0 %3236
    %3238 = vrot.lane.b32.xlu0 %v3195, 32
    %v3239 = vpop.permute.xlu0 %3238
    %3240 = vrot.lane.b32.xlu0 %v3209, 32
    %v3241 = vpop.permute.xlu0 %3240
    %3258 = vst.msk [vmem:[#allocation5] sm:$0xf] %vm786, %v3211
    %3259 = vst.msk [vmem:[#allocation5 + $0xc] sm:$0xf] %vm786, %v3213
    %3260 = vst.msk [vmem:[#allocation5 + $0x18] sm:$0xf] %vm786, %v3215
    %3261 = vst.msk [vmem:[#allocation5 + $0x24] sm:$0xf] %vm786, %v3217
    %3262 = vst.msk [vmem:[#allocation5 + $0x30] sm:$0xf] %vm786, %v3219
    %3263 = vst.msk [vmem:[#allocation5 + $0x3c] sm:$0xf] %vm786, %v3221
    %3264 = vst.msk [vmem:[#allocation5 + $0x48] sm:$0xf] %vm786, %v3223
    %3265 = vst.msk [vmem:[#allocation5 + $0x54] sm:$0xf] %vm786, %v3225
    %3266 = vst.msk [vmem:[#allocation5 + $0x60] sm:$0xf] %vm786, %v3227
    %3267 = vst.msk [vmem:[#allocation5 + $0x6c] sm:$0xf] %vm786, %v3229
    %3268 = vst.msk [vmem:[#allocation5 + $0x78] sm:$0xf] %vm786, %v3231
    %3269 = vst.msk [vmem:[#allocation5 + $0x84] sm:$0xf] %vm786, %v3233
    %3270 = vst.msk [vmem:[#allocation5 + $0x90] sm:$0xf] %vm786, %v3235
    %3271 = vst.msk [vmem:[#allocation5 + $0x9c] sm:$0xf] %vm786, %v3237
    %3272 = vst.msk [vmem:[#allocation5 + $0xa8] sm:$0xf] %vm786, %v3239
    %3273 = vst.msk [vmem:[#allocation5 + $0xb4] sm:$0xf] %vm786, %v3241
    %v3274 = vld [vmem:[#allocation4] sm:$0xe]
    %v3275 = vld [vmem:[#allocation4 + $0x4] sm:$0x1]
    %v3276 = vld [vmem:[#allocation4 + $0x8] sm:$0xe]
    %v3277 = vld [vmem:[#allocation4 + $0xc] sm:$0x1]
    %v3278 = vld [vmem:[#allocation4 + $0x10] sm:$0xe]
    %v3279 = vld [vmem:[#allocation4 + $0x14] sm:$0x1]
    %v3280 = vld [vmem:[#allocation4 + $0x18] sm:$0xe]
    %v3281 = vld [vmem:[#allocation4 + $0x1c] sm:$0x1]
    %v3282 = vld [vmem:[#allocation4 + $0x20] sm:$0xe]
    %v3283 = vld [vmem:[#allocation4 + $0x24] sm:$0x1]
    %v3284 = vld [vmem:[#allocation4 + $0x28] sm:$0xe]
    %v3285 = vld [vmem:[#allocation4 + $0x2c] sm:$0x1]
    %v3286 = vld [vmem:[#allocation4 + $0x30] sm:$0xe]
    %v3287 = vld [vmem:[#allocation4 + $0x34] sm:$0x1]
    %v3288 = vld [vmem:[#allocation4 + $0x38] sm:$0xe]
    %v3289 = vld [vmem:[#allocation4 + $0x3c] sm:$0x1]
    %v3290 = vld [vmem:[#allocation4 + $0x50] sm:$0xe]
    %v3291 = vld [vmem:[#allocation4 + $0x54] sm:$0x1]
    %v3292 = vld [vmem:[#allocation4 + $0x58] sm:$0xe]
    %v3293 = vld [vmem:[#allocation4 + $0x5c] sm:$0x1]
    %v3294 = vld [vmem:[#allocation4 + $0x60] sm:$0xe]
    %v3295 = vld [vmem:[#allocation4 + $0x64] sm:$0x1]
    %v3296 = vld [vmem:[#allocation4 + $0x68] sm:$0xe]
    %v3297 = vld [vmem:[#allocation4 + $0x6c] sm:$0x1]
    %v3298 = vld [vmem:[#allocation4 + $0x70] sm:$0xe]
    %v3299 = vld [vmem:[#allocation4 + $0x74] sm:$0x1]
    %v3300 = vld [vmem:[#allocation4 + $0x78] sm:$0xe]
    %v3301 = vld [vmem:[#allocation4 + $0x7c] sm:$0x1]
    %v3302 = vld [vmem:[#allocation4 + $0x80] sm:$0xe]
    %v3303 = vld [vmem:[#allocation4 + $0x84] sm:$0x1]
    %v3304 = vld [vmem:[#allocation4 + $0x88] sm:$0xe]
    %v3305 = vld [vmem:[#allocation4 + $0x8c] sm:$0x1]
    %v3338 = vrot.slane %v3274, 5
    %v3339 = vrot.slane %v3338, 4
    %v3340 = vrot.slane %v3275, 5
    %v3341 = vsel %vm869, %v3339, %v3340
    %v3342 = vrot.slane %v3276, 5
    %v3343 = vrot.slane %v3342, 4
    %v3344 = vrot.slane %v3277, 5
    %v3345 = vsel %vm869, %v3343, %v3344
    %v3346 = vrot.slane %v3278, 5
    %v3347 = vrot.slane %v3346, 4
    %v3348 = vrot.slane %v3279, 5
    %v3349 = vsel %vm869, %v3347, %v3348
    %v3350 = vrot.slane %v3280, 5
    %v3351 = vrot.slane %v3350, 4
    %v3352 = vrot.slane %v3281, 5
    %v3353 = vsel %vm869, %v3351, %v3352
    %v3354 = vrot.slane %v3282, 5
    %v3355 = vrot.slane %v3354, 4
    %v3356 = vrot.slane %v3283, 5
    %v3357 = vsel %vm869, %v3355, %v3356
    %v3358 = vrot.slane %v3284, 5
    %v3359 = vrot.slane %v3358, 4
    %v3360 = vrot.slane %v3285, 5
    %v3361 = vsel %vm869, %v3359, %v3360
    %v3362 = vrot.slane %v3286, 5
    %v3363 = vrot.slane %v3362, 4
    %v3364 = vrot.slane %v3287, 5
    %v3365 = vsel %vm869, %v3363, %v3364
    %v3366 = vrot.slane %v3288, 5
    %v3367 = vrot.slane %v3366, 4
    %v3368 = vrot.slane %v3289, 5
    %v3369 = vsel %vm869, %v3367, %v3368
    %v3370 = vrot.slane %v3290, 5
    %v3371 = vrot.slane %v3370, 4
    %v3372 = vrot.slane %v3291, 5
    %v3373 = vsel %vm869, %v3371, %v3372
    %v3374 = vrot.slane %v3292, 5
    %v3375 = vrot.slane %v3374, 4
    %v3376 = vrot.slane %v3293, 5
    %v3377 = vsel %vm869, %v3375, %v3376
    %v3378 = vrot.slane %v3294, 5
    %v3379 = vrot.slane %v3378, 4
    %v3380 = vrot.slane %v3295, 5
    %v3381 = vsel %vm869, %v3379, %v3380
    %v3382 = vrot.slane %v3296, 5
    %v3383 = vrot.slane %v3382, 4
    %v3384 = vrot.slane %v3297, 5
    %v3385 = vsel %vm869, %v3383, %v3384
    %v3386 = vrot.slane %v3298, 5
    %v3387 = vrot.slane %v3386, 4
    %v3388 = vrot.slane %v3299, 5
    %v3389 = vsel %vm869, %v3387, %v3388
    %v3390 = vrot.slane %v3300, 5
    %v3391 = vrot.slane %v3390, 4
    %v3392 = vrot.slane %v3301, 5
    %v3393 = vsel %vm869, %v3391, %v3392
    %v3394 = vrot.slane %v3302, 5
    %v3395 = vrot.slane %v3394, 4
    %v3396 = vrot.slane %v3303, 5
    %v3397 = vsel %vm869, %v3395, %v3396
    %v3398 = vrot.slane %v3304, 5
    %v3399 = vrot.slane %v3398, 4
    %v3400 = vrot.slane %v3305, 5
    %v3401 = vsel %vm869, %v3399, %v3400
    %3402 = vrot.lane.b32.xlu0 %v3341, 64
    %v3403 = vpop.permute.xlu0 %3402
    %3404 = vrot.lane.b32.xlu0 %v3345, 64
    %v3405 = vpop.permute.xlu0 %3404
    %3406 = vrot.lane.b32.xlu0 %v3349, 64
    %v3407 = vpop.permute.xlu0 %3406
    %3408 = vrot.lane.b32.xlu0 %v3353, 64
    %v3409 = vpop.permute.xlu0 %3408
    %3410 = vrot.lane.b32.xlu0 %v3357, 64
    %v3411 = vpop.permute.xlu0 %3410
    %3412 = vrot.lane.b32.xlu0 %v3361, 64
    %v3413 = vpop.permute.xlu0 %3412
    %3414 = vrot.lane.b32.xlu0 %v3365, 64
    %v3415 = vpop.permute.xlu0 %3414
    %3416 = vrot.lane.b32.xlu0 %v3369, 64
    %v3417 = vpop.permute.xlu0 %3416
    %3418 = vrot.lane.b32.xlu0 %v3373, 64
    %v3419 = vpop.permute.xlu0 %3418
    %3420 = vrot.lane.b32.xlu0 %v3377, 64
    %v3421 = vpop.permute.xlu0 %3420
    %3422 = vrot.lane.b32.xlu0 %v3381, 64
    %v3423 = vpop.permute.xlu0 %3422
    %3424 = vrot.lane.b32.xlu0 %v3385, 64
    %v3425 = vpop.permute.xlu0 %3424
    %3426 = vrot.lane.b32.xlu0 %v3389, 64
    %v3427 = vpop.permute.xlu0 %3426
    %3428 = vrot.lane.b32.xlu0 %v3393, 64
    %v3429 = vpop.permute.xlu0 %3428
    %3430 = vrot.lane.b32.xlu0 %v3397, 64
    %v3431 = vpop.permute.xlu0 %3430
    %3432 = vrot.lane.b32.xlu0 %v3401, 64
    %v3433 = vpop.permute.xlu0 %3432
    %3450 = vst.msk [vmem:[#allocation5] sm:$0xf] %vm982, %v3403
    %3451 = vst.msk [vmem:[#allocation5 + $0xc] sm:$0xf] %vm982, %v3405
    %3452 = vst.msk [vmem:[#allocation5 + $0x18] sm:$0xf] %vm982, %v3407
    %3453 = vst.msk [vmem:[#allocation5 + $0x24] sm:$0xf] %vm982, %v3409
    %3454 = vst.msk [vmem:[#allocation5 + $0x30] sm:$0xf] %vm982, %v3411
    %3455 = vst.msk [vmem:[#allocation5 + $0x3c] sm:$0xf] %vm982, %v3413
    %3456 = vst.msk [vmem:[#allocation5 + $0x48] sm:$0xf] %vm982, %v3415
    %3457 = vst.msk [vmem:[#allocation5 + $0x54] sm:$0xf] %vm982, %v3417
    %3458 = vst.msk [vmem:[#allocation5 + $0x60] sm:$0xf] %vm982, %v3419
    %3459 = vst.msk [vmem:[#allocation5 + $0x6c] sm:$0xf] %vm982, %v3421
    %3460 = vst.msk [vmem:[#allocation5 + $0x78] sm:$0xf] %vm982, %v3423
    %3461 = vst.msk [vmem:[#allocation5 + $0x84] sm:$0xf] %vm982, %v3425
    %3462 = vst.msk [vmem:[#allocation5 + $0x90] sm:$0xf] %vm982, %v3427
    %3463 = vst.msk [vmem:[#allocation5 + $0x9c] sm:$0xf] %vm982, %v3429
    %3464 = vst.msk [vmem:[#allocation5 + $0xa8] sm:$0xf] %vm982, %v3431
    %3465 = vst.msk [vmem:[#allocation5 + $0xb4] sm:$0xf] %vm982, %v3433
    %v3466 = vld [vmem:[%s2825] sm:$0xf]
    %v3467 = vld [vmem:[%s2825 + $0x8] sm:$0xf]
    %v3468 = vld [vmem:[%s2825 + $0x10] sm:$0xf]
    %v3469 = vld [vmem:[%s2825 + $0x18] sm:$0xf]
    %v3470 = vld [vmem:[%s2825 + $0x20] sm:$0xf]
    %v3471 = vld [vmem:[%s2825 + $0x28] sm:$0xf]
    %v3472 = vld [vmem:[%s2825 + $0x30] sm:$0xf]
    %v3473 = vld [vmem:[%s2825 + $0x38] sm:$0xf]
    %v3474 = vld [vmem:[%s2825 + $0x50] sm:$0xf]
    %v3475 = vld [vmem:[%s2825 + $0x58] sm:$0xf]
    %v3476 = vld [vmem:[%s2825 + $0x60] sm:$0xf]
    %v3477 = vld [vmem:[%s2825 + $0x68] sm:$0xf]
    %v3478 = vld [vmem:[%s2825 + $0x70] sm:$0xf]
    %v3479 = vld [vmem:[%s2825 + $0x78] sm:$0xf]
    %v3480 = vld [vmem:[%s2825 + $0x80] sm:$0xf]
    %v3481 = vld [vmem:[%s2825 + $0x88] sm:$0xf]
    %3498 = vrot.lane.b32.xlu0 %v3466, 96
    %v3499 = vpop.permute.xlu0 %3498
    %3500 = vrot.lane.b32.xlu0 %v3467, 96
    %v3501 = vpop.permute.xlu0 %3500
    %3502 = vrot.lane.b32.xlu0 %v3468, 96
    %v3503 = vpop.permute.xlu0 %3502
    %3504 = vrot.lane.b32.xlu0 %v3469, 96
    %v3505 = vpop.permute.xlu0 %3504
    %3506 = vrot.lane.b32.xlu0 %v3470, 96
    %v3507 = vpop.permute.xlu0 %3506
    %3508 = vrot.lane.b32.xlu0 %v3471, 96
    %v3509 = vpop.permute.xlu0 %3508
    %3510 = vrot.lane.b32.xlu0 %v3472, 96
    %v3511 = vpop.permute.xlu0 %3510
    %3512 = vrot.lane.b32.xlu0 %v3473, 96
    %v3513 = vpop.permute.xlu0 %3512
    %3514 = vrot.lane.b32.xlu0 %v3474, 96
    %v3515 = vpop.permute.xlu0 %3514
    %3516 = vrot.lane.b32.xlu0 %v3475, 96
    %v3517 = vpop.permute.xlu0 %3516
    %3518 = vrot.lane.b32.xlu0 %v3476, 96
    %v3519 = vpop.permute.xlu0 %3518
    %3520 = vrot.lane.b32.xlu0 %v3477, 96
    %v3521 = vpop.permute.xlu0 %3520
    %3522 = vrot.lane.b32.xlu0 %v3478, 96
    %v3523 = vpop.permute.xlu0 %3522
    %3524 = vrot.lane.b32.xlu0 %v3479, 96
    %v3525 = vpop.permute.xlu0 %3524
    %3526 = vrot.lane.b32.xlu0 %v3480, 96
    %v3527 = vpop.permute.xlu0 %3526
    %3528 = vrot.lane.b32.xlu0 %v3481, 96
    %v3529 = vpop.permute.xlu0 %3528
    %3546 = vst.msk [vmem:[#allocation5] sm:$0xf] %vm1079, %v3499
    %3547 = vst.msk [vmem:[#allocation5 + $0xc] sm:$0xf] %vm1079, %v3501
    %3548 = vst.msk [vmem:[#allocation5 + $0x18] sm:$0xf] %vm1079, %v3503
    %3549 = vst.msk [vmem:[#allocation5 + $0x24] sm:$0xf] %vm1079, %v3505
    %3550 = vst.msk [vmem:[#allocation5 + $0x30] sm:$0xf] %vm1079, %v3507
    %3551 = vst.msk [vmem:[#allocation5 + $0x3c] sm:$0xf] %vm1079, %v3509
    %3552 = vst.msk [vmem:[#allocation5 + $0x48] sm:$0xf] %vm1079, %v3511
    %3553 = vst.msk [vmem:[#allocation5 + $0x54] sm:$0xf] %vm1079, %v3513
    %3554 = vst.msk [vmem:[#allocation5 + $0x60] sm:$0xf] %vm1079, %v3515
    %3555 = vst.msk [vmem:[#allocation5 + $0x6c] sm:$0xf] %vm1079, %v3517
    %3556 = vst.msk [vmem:[#allocation5 + $0x78] sm:$0xf] %vm1079, %v3519
    %3557 = vst.msk [vmem:[#allocation5 + $0x84] sm:$0xf] %vm1079, %v3521
    %3558 = vst.msk [vmem:[#allocation5 + $0x90] sm:$0xf] %vm1079, %v3523
    %3559 = vst.msk [vmem:[#allocation5 + $0x9c] sm:$0xf] %vm1079, %v3525
    %3560 = vst.msk [vmem:[#allocation5 + $0xa8] sm:$0xf] %vm1079, %v3527
    %3561 = vst.msk [vmem:[#allocation5 + $0xb4] sm:$0xf] %vm1079, %v3529
    %v3562 = vld [vmem:[%s2825] sm:$0xf]
    %v3563 = vld [vmem:[%s2825 + $0x4] sm:$0x1]
    %v3564 = vld [vmem:[%s2825 + $0x8] sm:$0xf]
    %v3565 = vld [vmem:[%s2825 + $0xc] sm:$0x1]
    %v3566 = vld [vmem:[%s2825 + $0x10] sm:$0xf]
    %v3567 = vld [vmem:[%s2825 + $0x14] sm:$0x1]
    %v3568 = vld [vmem:[%s2825 + $0x18] sm:$0xf]
    %v3569 = vld [vmem:[%s2825 + $0x1c] sm:$0x1]
    %v3570 = vld [vmem:[%s2825 + $0x20] sm:$0xf]
    %v3571 = vld [vmem:[%s2825 + $0x24] sm:$0x1]
    %v3572 = vld [vmem:[%s2825 + $0x28] sm:$0xf]
    %v3573 = vld [vmem:[%s2825 + $0x2c] sm:$0x1]
    %v3574 = vld [vmem:[%s2825 + $0x30] sm:$0xf]
    %v3575 = vld [vmem:[%s2825 + $0x34] sm:$0x1]
    %v3576 = vld [vmem:[%s2825 + $0x38] sm:$0xf]
    %v3577 = vld [vmem:[%s2825 + $0x3c] sm:$0x1]
    %v3578 = vld [vmem:[%s2825 + $0x50] sm:$0xf]
    %v3579 = vld [vmem:[%s2825 + $0x54] sm:$0x1]
    %v3580 = vld [vmem:[%s2825 + $0x58] sm:$0xf]
    %v3581 = vld [vmem:[%s2825 + $0x5c] sm:$0x1]
    %v3582 = vld [vmem:[%s2825 + $0x60] sm:$0xf]
    %v3583 = vld [vmem:[%s2825 + $0x64] sm:$0x1]
    %v3584 = vld [vmem:[%s2825 + $0x68] sm:$0xf]
    %v3585 = vld [vmem:[%s2825 + $0x6c] sm:$0x1]
    %v3586 = vld [vmem:[%s2825 + $0x70] sm:$0xf]
    %v3587 = vld [vmem:[%s2825 + $0x74] sm:$0x1]
    %v3588 = vld [vmem:[%s2825 + $0x78] sm:$0xf]
    %v3589 = vld [vmem:[%s2825 + $0x7c] sm:$0x1]
    %v3590 = vld [vmem:[%s2825 + $0x80] sm:$0xf]
    %v3591 = vld [vmem:[%s2825 + $0x84] sm:$0x1]
    %v3592 = vld [vmem:[%s2825 + $0x88] sm:$0xf]
    %v3593 = vld [vmem:[%s2825 + $0x8c] sm:$0x1]
    %v3595 = vshrl.u32 %v3562, 16
    %v3597 = vrot.slane %v3595, 4
    %v3598 = vshll.u32 %v3562, 16
    %v3600 = vrot.slane %v3598, 5
    %v3601 = vor.u32 %v3597, %v3600
    %v3602 = vrot.slane %v3601, 4
    %v3604 = vshll.u32 %v3563, 16
    %v3606 = vrot.slane %v3604, 5
    %v3607 = vsel %vm513, %v3602, %v3606
    %v3609 = vshrl.u32 %v3564, 16
    %v3611 = vrot.slane %v3609, 4
    %v3612 = vshll.u32 %v3564, 16
    %v3614 = vrot.slane %v3612, 5
    %v3615 = vor.u32 %v3611, %v3614
    %v3616 = vrot.slane %v3615, 4
    %v3618 = vshll.u32 %v3565, 16
    %v3620 = vrot.slane %v3618, 5
    %v3621 = vsel %vm513, %v3616, %v3620
    %v3623 = vshrl.u32 %v3566, 16
    %v3625 = vrot.slane %v3623, 4
    %v3626 = vshll.u32 %v3566, 16
    %v3628 = vrot.slane %v3626, 5
    %v3629 = vor.u32 %v3625, %v3628
    %v3630 = vrot.slane %v3629, 4
    %v3632 = vshll.u32 %v3567, 16
    %v3634 = vrot.slane %v3632, 5
    %v3635 = vsel %vm513, %v3630, %v3634
    %v3637 = vshrl.u32 %v3568, 16
    %v3639 = vrot.slane %v3637, 4
    %v3640 = vshll.u32 %v3568, 16
    %v3642 = vrot.slane %v3640, 5
    %v3643 = vor.u32 %v3639, %v3642
    %v3644 = vrot.slane %v3643, 4
    %v3646 = vshll.u32 %v3569, 16
    %v3648 = vrot.slane %v3646, 5
    %v3649 = vsel %vm513, %v3644, %v3648
    %v3651 = vshrl.u32 %v3570, 16
    %v3653 = vrot.slane %v3651, 4
    %v3654 = vshll.u32 %v3570, 16
    %v3656 = vrot.slane %v3654, 5
    %v3657 = vor.u32 %v3653, %v3656
    %v3658 = vrot.slane %v3657, 4
    %v3660 = vshll.u32 %v3571, 16
    %v3662 = vrot.slane %v3660, 5
    %v3663 = vsel %vm513, %v3658, %v3662
    %v3665 = vshrl.u32 %v3572, 16
    %v3667 = vrot.slane %v3665, 4
    %v3668 = vshll.u32 %v3572, 16
    %v3670 = vrot.slane %v3668, 5
    %v3671 = vor.u32 %v3667, %v3670
    %v3672 = vrot.slane %v3671, 4
    %v3674 = vshll.u32 %v3573, 16
    %v3676 = vrot.slane %v3674, 5
    %v3677 = vsel %vm513, %v3672, %v3676
    %v3679 = vshrl.u32 %v3574, 16
    %v3681 = vrot.slane %v3679, 4
    %v3682 = vshll.u32 %v3574, 16
    %v3684 = vrot.slane %v3682, 5
    %v3685 = vor.u32 %v3681, %v3684
    %v3686 = vrot.slane %v3685, 4
    %v3688 = vshll.u32 %v3575, 16
    %v3690 = vrot.slane %v3688, 5
    %v3691 = vsel %vm513, %v3686, %v3690
    %v3693 = vshrl.u32 %v3576, 16
    %v3695 = vrot.slane %v3693, 4
    %v3696 = vshll.u32 %v3576, 16
    %v3698 = vrot.slane %v3696, 5
    %v3699 = vor.u32 %v3695, %v3698
    %v3700 = vrot.slane %v3699, 4
    %v3702 = vshll.u32 %v3577, 16
    %v3704 = vrot.slane %v3702, 5
    %v3705 = vsel %vm513, %v3700, %v3704
    %v3707 = vshrl.u32 %v3578, 16
    %v3709 = vrot.slane %v3707, 4
    %v3710 = vshll.u32 %v3578, 16
    %v3712 = vrot.slane %v3710, 5
    %v3713 = vor.u32 %v3709, %v3712
    %v3714 = vrot.slane %v3713, 4
    %v3716 = vshll.u32 %v3579, 16
    %v3718 = vrot.slane %v3716, 5
    %v3719 = vsel %vm513, %v3714, %v3718
    %v3721 = vshrl.u32 %v3580, 16
    %v3723 = vrot.slane %v3721, 4
    %v3724 = vshll.u32 %v3580, 16
    %v3726 = vrot.slane %v3724, 5
    %v3727 = vor.u32 %v3723, %v3726
    %v3728 = vrot.slane %v3727, 4
    %v3730 = vshll.u32 %v3581, 16
    %v3732 = vrot.slane %v3730, 5
    %v3733 = vsel %vm513, %v3728, %v3732
    %v3735 = vshrl.u32 %v3582, 16
    %v3737 = vrot.slane %v3735, 4
    %v3738 = vshll.u32 %v3582, 16
    %v3740 = vrot.slane %v3738, 5
    %v3741 = vor.u32 %v3737, %v3740
    %v3742 = vrot.slane %v3741, 4
    %v3744 = vshll.u32 %v3583, 16
    %v3746 = vrot.slane %v3744, 5
    %v3747 = vsel %vm513, %v3742, %v3746
    %v3749 = vshrl.u32 %v3584, 16
    %v3751 = vrot.slane %v3749, 4
    %v3752 = vshll.u32 %v3584, 16
    %v3754 = vrot.slane %v3752, 5
    %v3755 = vor.u32 %v3751, %v3754
    %v3756 = vrot.slane %v3755, 4
    %v3758 = vshll.u32 %v3585, 16
    %v3760 = vrot.slane %v3758, 5
    %v3761 = vsel %vm513, %v3756, %v3760
    %v3763 = vshrl.u32 %v3586, 16
    %v3765 = vrot.slane %v3763, 4
    %v3766 = vshll.u32 %v3586, 16
    %v3768 = vrot.slane %v3766, 5
    %v3769 = vor.u32 %v3765, %v3768
    %v3770 = vrot.slane %v3769, 4
    %v3772 = vshll.u32 %v3587, 16
    %v3774 = vrot.slane %v3772, 5
    %v3775 = vsel %vm513, %v3770, %v3774
    %v3777 = vshrl.u32 %v3588, 16
    %v3779 = vrot.slane %v3777, 4
    %v3780 = vshll.u32 %v3588, 16
    %v3782 = vrot.slane %v3780, 5
    %v3783 = vor.u32 %v3779, %v3782
    %v3784 = vrot.slane %v3783, 4
    %v3786 = vshll.u32 %v3589, 16
    %v3788 = vrot.slane %v3786, 5
    %v3789 = vsel %vm513, %v3784, %v3788
    %v3791 = vshrl.u32 %v3590, 16
    %v3793 = vrot.slane %v3791, 4
    %v3794 = vshll.u32 %v3590, 16
    %v3796 = vrot.slane %v3794, 5
    %v3797 = vor.u32 %v3793, %v3796
    %v3798 = vrot.slane %v3797, 4
    %v3800 = vshll.u32 %v3591, 16
    %v3802 = vrot.slane %v3800, 5
    %v3803 = vsel %vm513, %v3798, %v3802
    %v3805 = vshrl.u32 %v3592, 16
    %v3807 = vrot.slane %v3805, 4
    %v3808 = vshll.u32 %v3592, 16
    %v3810 = vrot.slane %v3808, 5
    %v3811 = vor.u32 %v3807, %v3810
    %v3812 = vrot.slane %v3811, 4
    %v3814 = vshll.u32 %v3593, 16
    %v3816 = vrot.slane %v3814, 5
    %v3817 = vsel %vm513, %v3812, %v3816
    %3834 = vst.msk [vmem:[#allocation5 + $0x4] sm:$0xf] %vm22, %v3607
    %3835 = vst.msk [vmem:[#allocation5 + $0x10] sm:$0xf] %vm22, %v3621
    %3836 = vst.msk [vmem:[#allocation5 + $0x1c] sm:$0xf] %vm22, %v3635
    %3837 = vst.msk [vmem:[#allocation5 + $0x28] sm:$0xf] %vm22, %v3649
    %3838 = vst.msk [vmem:[#allocation5 + $0x34] sm:$0xf] %vm22, %v3663
    %3839 = vst.msk [vmem:[#allocation5 + $0x40] sm:$0xf] %vm22, %v3677
    %3840 = vst.msk [vmem:[#allocation5 + $0x4c] sm:$0xf] %vm22, %v3691
    %3841 = vst.msk [vmem:[#allocation5 + $0x58] sm:$0xf] %vm22, %v3705
    %3842 = vst.msk [vmem:[#allocation5 + $0x64] sm:$0xf] %vm22, %v3719
    %3843 = vst.msk [vmem:[#allocation5 + $0x70] sm:$0xf] %vm22, %v3733
    %3844 = vst.msk [vmem:[#allocation5 + $0x7c] sm:$0xf] %vm22, %v3747
    %3845 = vst.msk [vmem:[#allocation5 + $0x88] sm:$0xf] %vm22, %v3761
    %3846 = vst.msk [vmem:[#allocation5 + $0x94] sm:$0xf] %vm22, %v3775
    %3847 = vst.msk [vmem:[#allocation5 + $0xa0] sm:$0xf] %vm22, %v3789
    %3848 = vst.msk [vmem:[#allocation5 + $0xac] sm:$0xf] %vm22, %v3803
    %3849 = vst.msk [vmem:[#allocation5 + $0xb8] sm:$0xf] %vm22, %v3817
    %v3850 = vld [vmem:[%s2825] sm:$0xe]
    %v3851 = vld [vmem:[%s2825 + $0x4] sm:$0x1]
    %v3852 = vld [vmem:[%s2825 + $0x8] sm:$0xe]
    %v3853 = vld [vmem:[%s2825 + $0xc] sm:$0x1]
    %v3854 = vld [vmem:[%s2825 + $0x10] sm:$0xe]
    %v3855 = vld [vmem:[%s2825 + $0x14] sm:$0x1]
    %v3856 = vld [vmem:[%s2825 + $0x18] sm:$0xe]
    %v3857 = vld [vmem:[%s2825 + $0x1c] sm:$0x1]
    %v3858 = vld [vmem:[%s2825 + $0x20] sm:$0xe]
    %v3859 = vld [vmem:[%s2825 + $0x24] sm:$0x1]
    %v3860 = vld [vmem:[%s2825 + $0x28] sm:$0xe]
    %v3861 = vld [vmem:[%s2825 + $0x2c] sm:$0x1]
    %v3862 = vld [vmem:[%s2825 + $0x30] sm:$0xe]
    %v3863 = vld [vmem:[%s2825 + $0x34] sm:$0x1]
    %v3864 = vld [vmem:[%s2825 + $0x38] sm:$0xe]
    %v3865 = vld [vmem:[%s2825 + $0x3c] sm:$0x1]
    %v3866 = vld [vmem:[%s2825 + $0x50] sm:$0xe]
    %v3867 = vld [vmem:[%s2825 + $0x54] sm:$0x1]
    %v3868 = vld [vmem:[%s2825 + $0x58] sm:$0xe]
    %v3869 = vld [vmem:[%s2825 + $0x5c] sm:$0x1]
    %v3870 = vld [vmem:[%s2825 + $0x60] sm:$0xe]
    %v3871 = vld [vmem:[%s2825 + $0x64] sm:$0x1]
    %v3872 = vld [vmem:[%s2825 + $0x68] sm:$0xe]
    %v3873 = vld [vmem:[%s2825 + $0x6c] sm:$0x1]
    %v3874 = vld [vmem:[%s2825 + $0x70] sm:$0xe]
    %v3875 = vld [vmem:[%s2825 + $0x74] sm:$0x1]
    %v3876 = vld [vmem:[%s2825 + $0x78] sm:$0xe]
    %v3877 = vld [vmem:[%s2825 + $0x7c] sm:$0x1]
    %v3878 = vld [vmem:[%s2825 + $0x80] sm:$0xe]
    %v3879 = vld [vmem:[%s2825 + $0x84] sm:$0x1]
    %v3880 = vld [vmem:[%s2825 + $0x88] sm:$0xe]
    %v3881 = vld [vmem:[%s2825 + $0x8c] sm:$0x1]
    %v3914 = vrot.slane %v3850, 5
    %v3915 = vrot.slane %v3914, 4
    %v3916 = vrot.slane %v3851, 5
    %v3917 = vsel %vm869, %v3915, %v3916
    %v3918 = vrot.slane %v3852, 5
    %v3919 = vrot.slane %v3918, 4
    %v3920 = vrot.slane %v3853, 5
    %v3921 = vsel %vm869, %v3919, %v3920
    %v3922 = vrot.slane %v3854, 5
    %v3923 = vrot.slane %v3922, 4
    %v3924 = vrot.slane %v3855, 5
    %v3925 = vsel %vm869, %v3923, %v3924
    %v3926 = vrot.slane %v3856, 5
    %v3927 = vrot.slane %v3926, 4
    %v3928 = vrot.slane %v3857, 5
    %v3929 = vsel %vm869, %v3927, %v3928
    %v3930 = vrot.slane %v3858, 5
    %v3931 = vrot.slane %v3930, 4
    %v3932 = vrot.slane %v3859, 5
    %v3933 = vsel %vm869, %v3931, %v3932
    %v3934 = vrot.slane %v3860, 5
    %v3935 = vrot.slane %v3934, 4
    %v3936 = vrot.slane %v3861, 5
    %v3937 = vsel %vm869, %v3935, %v3936
    %v3938 = vrot.slane %v3862, 5
    %v3939 = vrot.slane %v3938, 4
    %v3940 = vrot.slane %v3863, 5
    %v3941 = vsel %vm869, %v3939, %v3940
    %v3942 = vrot.slane %v3864, 5
    %v3943 = vrot.slane %v3942, 4
    %v3944 = vrot.slane %v3865, 5
    %v3945 = vsel %vm869, %v3943, %v3944
    %v3946 = vrot.slane %v3866, 5
    %v3947 = vrot.slane %v3946, 4
    %v3948 = vrot.slane %v3867, 5
    %v3949 = vsel %vm869, %v3947, %v3948
    %v3950 = vrot.slane %v3868, 5
    %v3951 = vrot.slane %v3950, 4
    %v3952 = vrot.slane %v3869, 5
    %v3953 = vsel %vm869, %v3951, %v3952
    %v3954 = vrot.slane %v3870, 5
    %v3955 = vrot.slane %v3954, 4
    %v3956 = vrot.slane %v3871, 5
    %v3957 = vsel %vm869, %v3955, %v3956
    %v3958 = vrot.slane %v3872, 5
    %v3959 = vrot.slane %v3958, 4
    %v3960 = vrot.slane %v3873, 5
    %v3961 = vsel %vm869, %v3959, %v3960
    %v3962 = vrot.slane %v3874, 5
    %v3963 = vrot.slane %v3962, 4
    %v3964 = vrot.slane %v3875, 5
    %v3965 = vsel %vm869, %v3963, %v3964
    %v3966 = vrot.slane %v3876, 5
    %v3967 = vrot.slane %v3966, 4
    %v3968 = vrot.slane %v3877, 5
    %v3969 = vsel %vm869, %v3967, %v3968
    %v3970 = vrot.slane %v3878, 5
    %v3971 = vrot.slane %v3970, 4
    %v3972 = vrot.slane %v3879, 5
    %v3973 = vsel %vm869, %v3971, %v3972
    %v3974 = vrot.slane %v3880, 5
    %v3975 = vrot.slane %v3974, 4
    %v3976 = vrot.slane %v3881, 5
    %v3977 = vsel %vm869, %v3975, %v3976
    %3978 = vrot.lane.b32.xlu0 %v3917, 32
    %v3979 = vpop.permute.xlu0 %3978
    %3980 = vrot.lane.b32.xlu0 %v3921, 32
    %v3981 = vpop.permute.xlu0 %3980
    %3982 = vrot.lane.b32.xlu0 %v3925, 32
    %v3983 = vpop.permute.xlu0 %3982
    %3984 = vrot.lane.b32.xlu0 %v3929, 32
    %v3985 = vpop.permute.xlu0 %3984
    %3986 = vrot.lane.b32.xlu0 %v3933, 32
    %v3987 = vpop.permute.xlu0 %3986
    %3988 = vrot.lane.b32.xlu0 %v3937, 32
    %v3989 = vpop.permute.xlu0 %3988
    %3990 = vrot.lane.b32.xlu0 %v3941, 32
    %v3991 = vpop.permute.xlu0 %3990
    %3992 = vrot.lane.b32.xlu0 %v3945, 32
    %v3993 = vpop.permute.xlu0 %3992
    %3994 = vrot.lane.b32.xlu0 %v3949, 32
    %v3995 = vpop.permute.xlu0 %3994
    %3996 = vrot.lane.b32.xlu0 %v3953, 32
    %v3997 = vpop.permute.xlu0 %3996
    %3998 = vrot.lane.b32.xlu0 %v3957, 32
    %v3999 = vpop.permute.xlu0 %3998
    %4000 = vrot.lane.b32.xlu0 %v3961, 32
    %v4001 = vpop.permute.xlu0 %4000
    %4002 = vrot.lane.b32.xlu0 %v3965, 32
    %v4003 = vpop.permute.xlu0 %4002
    %4004 = vrot.lane.b32.xlu0 %v3969, 32
    %v4005 = vpop.permute.xlu0 %4004
    %4006 = vrot.lane.b32.xlu0 %v3973, 32
    %v4007 = vpop.permute.xlu0 %4006
    %4008 = vrot.lane.b32.xlu0 %v3977, 32
    %v4009 = vpop.permute.xlu0 %4008
    %4026 = vst.msk [vmem:[#allocation5 + $0x4] sm:$0xf] %vm786, %v3979
    %4027 = vst.msk [vmem:[#allocation5 + $0x10] sm:$0xf] %vm786, %v3981
    %4028 = vst.msk [vmem:[#allocation5 + $0x1c] sm:$0xf] %vm786, %v3983
    %4029 = vst.msk [vmem:[#allocation5 + $0x28] sm:$0xf] %vm786, %v3985
    %4030 = vst.msk [vmem:[#allocation5 + $0x34] sm:$0xf] %vm786, %v3987
    %4031 = vst.msk [vmem:[#allocation5 + $0x40] sm:$0xf] %vm786, %v3989
    %4032 = vst.msk [vmem:[#allocation5 + $0x4c] sm:$0xf] %vm786, %v3991
    %4033 = vst.msk [vmem:[#allocation5 + $0x58] sm:$0xf] %vm786, %v3993
    %4034 = vst.msk [vmem:[#allocation5 + $0x64] sm:$0xf] %vm786, %v3995
    %4035 = vst.msk [vmem:[#allocation5 + $0x70] sm:$0xf] %vm786, %v3997
    %4036 = vst.msk [vmem:[#allocation5 + $0x7c] sm:$0xf] %vm786, %v3999
    %4037 = vst.msk [vmem:[#allocation5 + $0x88] sm:$0xf] %vm786, %v4001
    %4038 = vst.msk [vmem:[#allocation5 + $0x94] sm:$0xf] %vm786, %v4003
    %4039 = vst.msk [vmem:[#allocation5 + $0xa0] sm:$0xf] %vm786, %v4005
    %4040 = vst.msk [vmem:[#allocation5 + $0xac] sm:$0xf] %vm786, %v4007
    %4041 = vst.msk [vmem:[#allocation5 + $0xb8] sm:$0xf] %vm786, %v4009
    %s4042 = scalar_lea.vmem [#allocation4], 16
    %v4043 = vld [vmem:[%s4042] sm:$0xf]
    %v4044 = vld [vmem:[%s4042 + $0x8] sm:$0xf]
    %v4045 = vld [vmem:[%s4042 + $0x10] sm:$0xf]
    %v4046 = vld [vmem:[%s4042 + $0x18] sm:$0xf]
    %v4047 = vld [vmem:[%s4042 + $0x20] sm:$0xf]
    %v4048 = vld [vmem:[%s4042 + $0x28] sm:$0xf]
    %v4049 = vld [vmem:[%s4042 + $0x30] sm:$0xf]
    %v4050 = vld [vmem:[%s4042 + $0x38] sm:$0xf]
    %v4051 = vld [vmem:[%s4042 + $0x50] sm:$0xf]
    %v4052 = vld [vmem:[%s4042 + $0x58] sm:$0xf]
    %v4053 = vld [vmem:[%s4042 + $0x60] sm:$0xf]
    %v4054 = vld [vmem:[%s4042 + $0x68] sm:$0xf]
    %v4055 = vld [vmem:[%s4042 + $0x70] sm:$0xf]
    %v4056 = vld [vmem:[%s4042 + $0x78] sm:$0xf]
    %v4057 = vld [vmem:[%s4042 + $0x80] sm:$0xf]
    %v4058 = vld [vmem:[%s4042 + $0x88] sm:$0xf]
    %4075 = vrot.lane.b32.xlu0 %v4043, 64
    %v4076 = vpop.permute.xlu0 %4075
    %4077 = vrot.lane.b32.xlu0 %v4044, 64
    %v4078 = vpop.permute.xlu0 %4077
    %4079 = vrot.lane.b32.xlu0 %v4045, 64
    %v4080 = vpop.permute.xlu0 %4079
    %4081 = vrot.lane.b32.xlu0 %v4046, 64
    %v4082 = vpop.permute.xlu0 %4081
    %4083 = vrot.lane.b32.xlu0 %v4047, 64
    %v4084 = vpop.permute.xlu0 %4083
    %4085 = vrot.lane.b32.xlu0 %v4048, 64
    %v4086 = vpop.permute.xlu0 %4085
    %4087 = vrot.lane.b32.xlu0 %v4049, 64
    %v4088 = vpop.permute.xlu0 %4087
    %4089 = vrot.lane.b32.xlu0 %v4050, 64
    %v4090 = vpop.permute.xlu0 %4089
    %4091 = vrot.lane.b32.xlu0 %v4051, 64
    %v4092 = vpop.permute.xlu0 %4091
    %4093 = vrot.lane.b32.xlu0 %v4052, 64
    %v4094 = vpop.permute.xlu0 %4093
    %4095 = vrot.lane.b32.xlu0 %v4053, 64
    %v4096 = vpop.permute.xlu0 %4095
    %4097 = vrot.lane.b32.xlu0 %v4054, 64
    %v4098 = vpop.permute.xlu0 %4097
    %4099 = vrot.lane.b32.xlu0 %v4055, 64
    %v4100 = vpop.permute.xlu0 %4099
    %4101 = vrot.lane.b32.xlu0 %v4056, 64
    %v4102 = vpop.permute.xlu0 %4101
    %4103 = vrot.lane.b32.xlu0 %v4057, 64
    %v4104 = vpop.permute.xlu0 %4103
    %4105 = vrot.lane.b32.xlu0 %v4058, 64
    %v4106 = vpop.permute.xlu0 %4105
    %4123 = vst.msk [vmem:[#allocation5 + $0x4] sm:$0xf] %vm982, %v4076
    %4124 = vst.msk [vmem:[#allocation5 + $0x10] sm:$0xf] %vm982, %v4078
    %4125 = vst.msk [vmem:[#allocation5 + $0x1c] sm:$0xf] %vm982, %v4080
    %4126 = vst.msk [vmem:[#allocation5 + $0x28] sm:$0xf] %vm982, %v4082
    %4127 = vst.msk [vmem:[#allocation5 + $0x34] sm:$0xf] %vm982, %v4084
    %4128 = vst.msk [vmem:[#allocation5 + $0x40] sm:$0xf] %vm982, %v4086
    %4129 = vst.msk [vmem:[#allocation5 + $0x4c] sm:$0xf] %vm982, %v4088
    %4130 = vst.msk [vmem:[#allocation5 + $0x58] sm:$0xf] %vm982, %v4090
    %4131 = vst.msk [vmem:[#allocation5 + $0x64] sm:$0xf] %vm982, %v4092
    %4132 = vst.msk [vmem:[#allocation5 + $0x70] sm:$0xf] %vm982, %v4094
    %4133 = vst.msk [vmem:[#allocation5 + $0x7c] sm:$0xf] %vm982, %v4096
    %4134 = vst.msk [vmem:[#allocation5 + $0x88] sm:$0xf] %vm982, %v4098
    %4135 = vst.msk [vmem:[#allocation5 + $0x94] sm:$0xf] %vm982, %v4100
    %4136 = vst.msk [vmem:[#allocation5 + $0xa0] sm:$0xf] %vm982, %v4102
    %4137 = vst.msk [vmem:[#allocation5 + $0xac] sm:$0xf] %vm982, %v4104
    %4138 = vst.msk [vmem:[#allocation5 + $0xb8] sm:$0xf] %vm982, %v4106
    %v4139 = vld [vmem:[%s4042] sm:$0xf]
    %v4140 = vld [vmem:[%s4042 + $0x4] sm:$0x1]
    %v4141 = vld [vmem:[%s4042 + $0x8] sm:$0xf]
    %v4142 = vld [vmem:[%s4042 + $0xc] sm:$0x1]
    %v4143 = vld [vmem:[%s4042 + $0x10] sm:$0xf]
    %v4144 = vld [vmem:[%s4042 + $0x14] sm:$0x1]
    %v4145 = vld [vmem:[%s4042 + $0x18] sm:$0xf]
    %v4146 = vld [vmem:[%s4042 + $0x1c] sm:$0x1]
    %v4147 = vld [vmem:[%s4042 + $0x20] sm:$0xf]
    %v4148 = vld [vmem:[%s4042 + $0x24] sm:$0x1]
    %v4149 = vld [vmem:[%s4042 + $0x28] sm:$0xf]
    %v4150 = vld [vmem:[%s4042 + $0x2c] sm:$0x1]
    %v4151 = vld [vmem:[%s4042 + $0x30] sm:$0xf]
    %v4152 = vld [vmem:[%s4042 + $0x34] sm:$0x1]
    %v4153 = vld [vmem:[%s4042 + $0x38] sm:$0xf]
    %v4154 = vld [vmem:[%s4042 + $0x3c] sm:$0x1]
    %v4155 = vld [vmem:[%s4042 + $0x50] sm:$0xf]
    %v4156 = vld [vmem:[%s4042 + $0x54] sm:$0x1]
    %v4157 = vld [vmem:[%s4042 + $0x58] sm:$0xf]
    %v4158 = vld [vmem:[%s4042 + $0x5c] sm:$0x1]
    %v4159 = vld [vmem:[%s4042 + $0x60] sm:$0xf]
    %v4160 = vld [vmem:[%s4042 + $0x64] sm:$0x1]
    %v4161 = vld [vmem:[%s4042 + $0x68] sm:$0xf]
    %v4162 = vld [vmem:[%s4042 + $0x6c] sm:$0x1]
    %v4163 = vld [vmem:[%s4042 + $0x70] sm:$0xf]
    %v4164 = vld [vmem:[%s4042 + $0x74] sm:$0x1]
    %v4165 = vld [vmem:[%s4042 + $0x78] sm:$0xf]
    %v4166 = vld [vmem:[%s4042 + $0x7c] sm:$0x1]
    %v4167 = vld [vmem:[%s4042 + $0x80] sm:$0xf]
    %v4168 = vld [vmem:[%s4042 + $0x84] sm:$0x1]
    %v4169 = vld [vmem:[%s4042 + $0x88] sm:$0xf]
    %v4170 = vld [vmem:[%s4042 + $0x8c] sm:$0x1]
    %v4172 = vshrl.u32 %v4139, 16
    %v4174 = vrot.slane %v4172, 4
    %v4175 = vshll.u32 %v4139, 16
    %v4177 = vrot.slane %v4175, 5
    %v4178 = vor.u32 %v4174, %v4177
    %v4179 = vrot.slane %v4178, 4
    %v4181 = vshll.u32 %v4140, 16
    %v4183 = vrot.slane %v4181, 5
    %v4184 = vsel %vm513, %v4179, %v4183
    %v4186 = vshrl.u32 %v4141, 16
    %v4188 = vrot.slane %v4186, 4
    %v4189 = vshll.u32 %v4141, 16
    %v4191 = vrot.slane %v4189, 5
    %v4192 = vor.u32 %v4188, %v4191
    %v4193 = vrot.slane %v4192, 4
    %v4195 = vshll.u32 %v4142, 16
    %v4197 = vrot.slane %v4195, 5
    %v4198 = vsel %vm513, %v4193, %v4197
    %v4200 = vshrl.u32 %v4143, 16
    %v4202 = vrot.slane %v4200, 4
    %v4203 = vshll.u32 %v4143, 16
    %v4205 = vrot.slane %v4203, 5
    %v4206 = vor.u32 %v4202, %v4205
    %v4207 = vrot.slane %v4206, 4
    %v4209 = vshll.u32 %v4144, 16
    %v4211 = vrot.slane %v4209, 5
    %v4212 = vsel %vm513, %v4207, %v4211
    %v4214 = vshrl.u32 %v4145, 16
    %v4216 = vrot.slane %v4214, 4
    %v4217 = vshll.u32 %v4145, 16
    %v4219 = vrot.slane %v4217, 5
    %v4220 = vor.u32 %v4216, %v4219
    %v4221 = vrot.slane %v4220, 4
    %v4223 = vshll.u32 %v4146, 16
    %v4225 = vrot.slane %v4223, 5
    %v4226 = vsel %vm513, %v4221, %v4225
    %v4228 = vshrl.u32 %v4147, 16
    %v4230 = vrot.slane %v4228, 4
    %v4231 = vshll.u32 %v4147, 16
    %v4233 = vrot.slane %v4231, 5
    %v4234 = vor.u32 %v4230, %v4233
    %v4235 = vrot.slane %v4234, 4
    %v4237 = vshll.u32 %v4148, 16
    %v4239 = vrot.slane %v4237, 5
    %v4240 = vsel %vm513, %v4235, %v4239
    %v4242 = vshrl.u32 %v4149, 16
    %v4244 = vrot.slane %v4242, 4
    %v4245 = vshll.u32 %v4149, 16
    %v4247 = vrot.slane %v4245, 5
    %v4248 = vor.u32 %v4244, %v4247
    %v4249 = vrot.slane %v4248, 4
    %v4251 = vshll.u32 %v4150, 16
    %v4253 = vrot.slane %v4251, 5
    %v4254 = vsel %vm513, %v4249, %v4253
    %v4256 = vshrl.u32 %v4151, 16
    %v4258 = vrot.slane %v4256, 4
    %v4259 = vshll.u32 %v4151, 16
    %v4261 = vrot.slane %v4259, 5
    %v4262 = vor.u32 %v4258, %v4261
    %v4263 = vrot.slane %v4262, 4
    %v4265 = vshll.u32 %v4152, 16
    %v4267 = vrot.slane %v4265, 5
    %v4268 = vsel %vm513, %v4263, %v4267
    %v4270 = vshrl.u32 %v4153, 16
    %v4272 = vrot.slane %v4270, 4
    %v4273 = vshll.u32 %v4153, 16
    %v4275 = vrot.slane %v4273, 5
    %v4276 = vor.u32 %v4272, %v4275
    %v4277 = vrot.slane %v4276, 4
    %v4279 = vshll.u32 %v4154, 16
    %v4281 = vrot.slane %v4279, 5
    %v4282 = vsel %vm513, %v4277, %v4281
    %v4284 = vshrl.u32 %v4155, 16
    %v4286 = vrot.slane %v4284, 4
    %v4287 = vshll.u32 %v4155, 16
    %v4289 = vrot.slane %v4287, 5
    %v4290 = vor.u32 %v4286, %v4289
    %v4291 = vrot.slane %v4290, 4
    %v4293 = vshll.u32 %v4156, 16
    %v4295 = vrot.slane %v4293, 5
    %v4296 = vsel %vm513, %v4291, %v4295
    %v4298 = vshrl.u32 %v4157, 16
    %v4300 = vrot.slane %v4298, 4
    %v4301 = vshll.u32 %v4157, 16
    %v4303 = vrot.slane %v4301, 5
    %v4304 = vor.u32 %v4300, %v4303
    %v4305 = vrot.slane %v4304, 4
    %v4307 = vshll.u32 %v4158, 16
    %v4309 = vrot.slane %v4307, 5
    %v4310 = vsel %vm513, %v4305, %v4309
    %v4312 = vshrl.u32 %v4159, 16
    %v4314 = vrot.slane %v4312, 4
    %v4315 = vshll.u32 %v4159, 16
    %v4317 = vrot.slane %v4315, 5
    %v4318 = vor.u32 %v4314, %v4317
    %v4319 = vrot.slane %v4318, 4
    %v4321 = vshll.u32 %v4160, 16
    %v4323 = vrot.slane %v4321, 5
    %v4324 = vsel %vm513, %v4319, %v4323
    %v4326 = vshrl.u32 %v4161, 16
    %v4328 = vrot.slane %v4326, 4
    %v4329 = vshll.u32 %v4161, 16
    %v4331 = vrot.slane %v4329, 5
    %v4332 = vor.u32 %v4328, %v4331
    %v4333 = vrot.slane %v4332, 4
    %v4335 = vshll.u32 %v4162, 16
    %v4337 = vrot.slane %v4335, 5
    %v4338 = vsel %vm513, %v4333, %v4337
    %v4340 = vshrl.u32 %v4163, 16
    %v4342 = vrot.slane %v4340, 4
    %v4343 = vshll.u32 %v4163, 16
    %v4345 = vrot.slane %v4343, 5
    %v4346 = vor.u32 %v4342, %v4345
    %v4347 = vrot.slane %v4346, 4
    %v4349 = vshll.u32 %v4164, 16
    %v4351 = vrot.slane %v4349, 5
    %v4352 = vsel %vm513, %v4347, %v4351
    %v4354 = vshrl.u32 %v4165, 16
    %v4356 = vrot.slane %v4354, 4
    %v4357 = vshll.u32 %v4165, 16
    %v4359 = vrot.slane %v4357, 5
    %v4360 = vor.u32 %v4356, %v4359
    %v4361 = vrot.slane %v4360, 4
    %v4363 = vshll.u32 %v4166, 16
    %v4365 = vrot.slane %v4363, 5
    %v4366 = vsel %vm513, %v4361, %v4365
    %v4368 = vshrl.u32 %v4167, 16
    %v4370 = vrot.slane %v4368, 4
    %v4371 = vshll.u32 %v4167, 16
    %v4373 = vrot.slane %v4371, 5
    %v4374 = vor.u32 %v4370, %v4373
    %v4375 = vrot.slane %v4374, 4
    %v4377 = vshll.u32 %v4168, 16
    %v4379 = vrot.slane %v4377, 5
    %v4380 = vsel %vm513, %v4375, %v4379
    %v4382 = vshrl.u32 %v4169, 16
    %v4384 = vrot.slane %v4382, 4
    %v4385 = vshll.u32 %v4169, 16
    %v4387 = vrot.slane %v4385, 5
    %v4388 = vor.u32 %v4384, %v4387
    %v4389 = vrot.slane %v4388, 4
    %v4391 = vshll.u32 %v4170, 16
    %v4393 = vrot.slane %v4391, 5
    %v4394 = vsel %vm513, %v4389, %v4393
    %4395 = vrot.lane.b32.xlu0 %v4184, 96
    %v4396 = vpop.permute.xlu0 %4395
    %4397 = vrot.lane.b32.xlu0 %v4198, 96
    %v4398 = vpop.permute.xlu0 %4397
    %4399 = vrot.lane.b32.xlu0 %v4212, 96
    %v4400 = vpop.permute.xlu0 %4399
    %4401 = vrot.lane.b32.xlu0 %v4226, 96
    %v4402 = vpop.permute.xlu0 %4401
    %4403 = vrot.lane.b32.xlu0 %v4240, 96
    %v4404 = vpop.permute.xlu0 %4403
    %4405 = vrot.lane.b32.xlu0 %v4254, 96
    %v4406 = vpop.permute.xlu0 %4405
    %4407 = vrot.lane.b32.xlu0 %v4268, 96
    %v4408 = vpop.permute.xlu0 %4407
    %4409 = vrot.lane.b32.xlu0 %v4282, 96
    %v4410 = vpop.permute.xlu0 %4409
    %4411 = vrot.lane.b32.xlu0 %v4296, 96
    %v4412 = vpop.permute.xlu0 %4411
    %4413 = vrot.lane.b32.xlu0 %v4310, 96
    %v4414 = vpop.permute.xlu0 %4413
    %4415 = vrot.lane.b32.xlu0 %v4324, 96
    %v4416 = vpop.permute.xlu0 %4415
    %4417 = vrot.lane.b32.xlu0 %v4338, 96
    %v4418 = vpop.permute.xlu0 %4417
    %4419 = vrot.lane.b32.xlu0 %v4352, 96
    %v4420 = vpop.permute.xlu0 %4419
    %4421 = vrot.lane.b32.xlu0 %v4366, 96
    %v4422 = vpop.permute.xlu0 %4421
    %4423 = vrot.lane.b32.xlu0 %v4380, 96
    %v4424 = vpop.permute.xlu0 %4423
    %4425 = vrot.lane.b32.xlu0 %v4394, 96
    %v4426 = vpop.permute.xlu0 %4425
    %4443 = vst.msk [vmem:[#allocation5 + $0x4] sm:$0xf] %vm1079, %v4396
    %4444 = vst.msk [vmem:[#allocation5 + $0x10] sm:$0xf] %vm1079, %v4398
    %4445 = vst.msk [vmem:[#allocation5 + $0x1c] sm:$0xf] %vm1079, %v4400
    %4446 = vst.msk [vmem:[#allocation5 + $0x28] sm:$0xf] %vm1079, %v4402
    %4447 = vst.msk [vmem:[#allocation5 + $0x34] sm:$0xf] %vm1079, %v4404
    %4448 = vst.msk [vmem:[#allocation5 + $0x40] sm:$0xf] %vm1079, %v4406
    %4449 = vst.msk [vmem:[#allocation5 + $0x4c] sm:$0xf] %vm1079, %v4408
    %4450 = vst.msk [vmem:[#allocation5 + $0x58] sm:$0xf] %vm1079, %v4410
    %4451 = vst.msk [vmem:[#allocation5 + $0x64] sm:$0xf] %vm1079, %v4412
    %4452 = vst.msk [vmem:[#allocation5 + $0x70] sm:$0xf] %vm1079, %v4414
    %4453 = vst.msk [vmem:[#allocation5 + $0x7c] sm:$0xf] %vm1079, %v4416
    %4454 = vst.msk [vmem:[#allocation5 + $0x88] sm:$0xf] %vm1079, %v4418
    %4455 = vst.msk [vmem:[#allocation5 + $0x94] sm:$0xf] %vm1079, %v4420
    %4456 = vst.msk [vmem:[#allocation5 + $0xa0] sm:$0xf] %vm1079, %v4422
    %4457 = vst.msk [vmem:[#allocation5 + $0xac] sm:$0xf] %vm1079, %v4424
    %4458 = vst.msk [vmem:[#allocation5 + $0xb8] sm:$0xf] %vm1079, %v4426
    %v4459 = vld [vmem:[%s4042] sm:$0xe]
    %v4460 = vld [vmem:[%s4042 + $0x4] sm:$0x1]
    %v4461 = vld [vmem:[%s4042 + $0x8] sm:$0xe]
    %v4462 = vld [vmem:[%s4042 + $0xc] sm:$0x1]
    %v4463 = vld [vmem:[%s4042 + $0x10] sm:$0xe]
    %v4464 = vld [vmem:[%s4042 + $0x14] sm:$0x1]
    %v4465 = vld [vmem:[%s4042 + $0x18] sm:$0xe]
    %v4466 = vld [vmem:[%s4042 + $0x1c] sm:$0x1]
    %v4467 = vld [vmem:[%s4042 + $0x20] sm:$0xe]
    %v4468 = vld [vmem:[%s4042 + $0x24] sm:$0x1]
    %v4469 = vld [vmem:[%s4042 + $0x28] sm:$0xe]
    %v4470 = vld [vmem:[%s4042 + $0x2c] sm:$0x1]
    %v4471 = vld [vmem:[%s4042 + $0x30] sm:$0xe]
    %v4472 = vld [vmem:[%s4042 + $0x34] sm:$0x1]
    %v4473 = vld [vmem:[%s4042 + $0x38] sm:$0xe]
    %v4474 = vld [vmem:[%s4042 + $0x3c] sm:$0x1]
    %v4475 = vld [vmem:[%s4042 + $0x50] sm:$0xe]
    %v4476 = vld [vmem:[%s4042 + $0x54] sm:$0x1]
    %v4477 = vld [vmem:[%s4042 + $0x58] sm:$0xe]
    %v4478 = vld [vmem:[%s4042 + $0x5c] sm:$0x1]
    %v4479 = vld [vmem:[%s4042 + $0x60] sm:$0xe]
    %v4480 = vld [vmem:[%s4042 + $0x64] sm:$0x1]
    %v4481 = vld [vmem:[%s4042 + $0x68] sm:$0xe]
    %v4482 = vld [vmem:[%s4042 + $0x6c] sm:$0x1]
    %v4483 = vld [vmem:[%s4042 + $0x70] sm:$0xe]
    %v4484 = vld [vmem:[%s4042 + $0x74] sm:$0x1]
    %v4485 = vld [vmem:[%s4042 + $0x78] sm:$0xe]
    %v4486 = vld [vmem:[%s4042 + $0x7c] sm:$0x1]
    %v4487 = vld [vmem:[%s4042 + $0x80] sm:$0xe]
    %v4488 = vld [vmem:[%s4042 + $0x84] sm:$0x1]
    %v4489 = vld [vmem:[%s4042 + $0x88] sm:$0xe]
    %v4490 = vld [vmem:[%s4042 + $0x8c] sm:$0x1]
    %v4523 = vrot.slane %v4459, 5
    %v4524 = vrot.slane %v4523, 4
    %v4525 = vrot.slane %v4460, 5
    %v4526 = vsel %vm869, %v4524, %v4525
    %v4527 = vrot.slane %v4461, 5
    %v4528 = vrot.slane %v4527, 4
    %v4529 = vrot.slane %v4462, 5
    %v4530 = vsel %vm869, %v4528, %v4529
    %v4531 = vrot.slane %v4463, 5
    %v4532 = vrot.slane %v4531, 4
    %v4533 = vrot.slane %v4464, 5
    %v4534 = vsel %vm869, %v4532, %v4533
    %v4535 = vrot.slane %v4465, 5
    %v4536 = vrot.slane %v4535, 4
    %v4537 = vrot.slane %v4466, 5
    %v4538 = vsel %vm869, %v4536, %v4537
    %v4539 = vrot.slane %v4467, 5
    %v4540 = vrot.slane %v4539, 4
    %v4541 = vrot.slane %v4468, 5
    %v4542 = vsel %vm869, %v4540, %v4541
    %v4543 = vrot.slane %v4469, 5
    %v4544 = vrot.slane %v4543, 4
    %v4545 = vrot.slane %v4470, 5
    %v4546 = vsel %vm869, %v4544, %v4545
    %v4547 = vrot.slane %v4471, 5
    %v4548 = vrot.slane %v4547, 4
    %v4549 = vrot.slane %v4472, 5
    %v4550 = vsel %vm869, %v4548, %v4549
    %v4551 = vrot.slane %v4473, 5
    %v4552 = vrot.slane %v4551, 4
    %v4553 = vrot.slane %v4474, 5
    %v4554 = vsel %vm869, %v4552, %v4553
    %v4555 = vrot.slane %v4475, 5
    %v4556 = vrot.slane %v4555, 4
    %v4557 = vrot.slane %v4476, 5
    %v4558 = vsel %vm869, %v4556, %v4557
    %v4559 = vrot.slane %v4477, 5
    %v4560 = vrot.slane %v4559, 4
    %v4561 = vrot.slane %v4478, 5
    %v4562 = vsel %vm869, %v4560, %v4561
    %v4563 = vrot.slane %v4479, 5
    %v4564 = vrot.slane %v4563, 4
    %v4565 = vrot.slane %v4480, 5
    %v4566 = vsel %vm869, %v4564, %v4565
    %v4567 = vrot.slane %v4481, 5
    %v4568 = vrot.slane %v4567, 4
    %v4569 = vrot.slane %v4482, 5
    %v4570 = vsel %vm869, %v4568, %v4569
    %v4571 = vrot.slane %v4483, 5
    %v4572 = vrot.slane %v4571, 4
    %v4573 = vrot.slane %v4484, 5
    %v4574 = vsel %vm869, %v4572, %v4573
    %v4575 = vrot.slane %v4485, 5
    %v4576 = vrot.slane %v4575, 4
    %v4577 = vrot.slane %v4486, 5
    %v4578 = vsel %vm869, %v4576, %v4577
    %v4579 = vrot.slane %v4487, 5
    %v4580 = vrot.slane %v4579, 4
    %v4581 = vrot.slane %v4488, 5
    %v4582 = vsel %vm869, %v4580, %v4581
    %v4583 = vrot.slane %v4489, 5
    %v4584 = vrot.slane %v4583, 4
    %v4585 = vrot.slane %v4490, 5
    %v4586 = vsel %vm869, %v4584, %v4585
    %4603 = vst.msk [vmem:[#allocation5 + $0x8] sm:$0xf] %vm22, %v4526
    %4604 = vst.msk [vmem:[#allocation5 + $0x14] sm:$0xf] %vm22, %v4530
    %4605 = vst.msk [vmem:[#allocation5 + $0x20] sm:$0xf] %vm22, %v4534
    %4606 = vst.msk [vmem:[#allocation5 + $0x2c] sm:$0xf] %vm22, %v4538
    %4607 = vst.msk [vmem:[#allocation5 + $0x38] sm:$0xf] %vm22, %v4542
    %4608 = vst.msk [vmem:[#allocation5 + $0x44] sm:$0xf] %vm22, %v4546
    %4609 = vst.msk [vmem:[#allocation5 + $0x50] sm:$0xf] %vm22, %v4550
    %4610 = vst.msk [vmem:[#allocation5 + $0x5c] sm:$0xf] %vm22, %v4554
    %4611 = vst.msk [vmem:[#allocation5 + $0x68] sm:$0xf] %vm22, %v4558
    %4612 = vst.msk [vmem:[#allocation5 + $0x74] sm:$0xf] %vm22, %v4562
    %4613 = vst.msk [vmem:[#allocation5 + $0x80] sm:$0xf] %vm22, %v4566
    %4614 = vst.msk [vmem:[#allocation5 + $0x8c] sm:$0xf] %vm22, %v4570
    %4615 = vst.msk [vmem:[#allocation5 + $0x98] sm:$0xf] %vm22, %v4574
    %4616 = vst.msk [vmem:[#allocation5 + $0xa4] sm:$0xf] %vm22, %v4578
    %4617 = vst.msk [vmem:[#allocation5 + $0xb0] sm:$0xf] %vm22, %v4582
    %4618 = vst.msk [vmem:[#allocation5 + $0xbc] sm:$0xf] %vm22, %v4586
    %v4619 = vld [vmem:[%s3] sm:$0xff]
    %v4620 = vld [vmem:[%s3 + $0x8] sm:$0xff]
    %v4621 = vld [vmem:[%s3 + $0x10] sm:$0xff]
    %v4622 = vld [vmem:[%s3 + $0x18] sm:$0xff]
    %v4623 = vld [vmem:[%s3 + $0x20] sm:$0xff]
    %v4624 = vld [vmem:[%s3 + $0x28] sm:$0xff]
    %v4625 = vld [vmem:[%s3 + $0x30] sm:$0xff]
    %v4626 = vld [vmem:[%s3 + $0x38] sm:$0xff]
    %v4627 = vld [vmem:[%s3 + $0x40] sm:$0xff]
    %v4628 = vld [vmem:[%s3 + $0x48] sm:$0xff]
    %v4629 = vld [vmem:[%s3 + $0x50] sm:$0xff]
    %v4630 = vld [vmem:[%s3 + $0x58] sm:$0xff]
    %v4631 = vld [vmem:[%s3 + $0x60] sm:$0xff]
    %v4632 = vld [vmem:[%s3 + $0x68] sm:$0xff]
    %v4633 = vld [vmem:[%s3 + $0x70] sm:$0xff]
    %v4634 = vld [vmem:[%s3 + $0x78] sm:$0xff]
    %v4635 = vld [vmem:[%s3 + $0x80] sm:$0xff]
    %v4636 = vld [vmem:[%s3 + $0x88] sm:$0xff]
    %v4637 = vld [vmem:[%s3 + $0x90] sm:$0xff]
    %v4638 = vld [vmem:[%s3 + $0x98] sm:$0xff]
    %v4639 = vld [vmem:[%s3 + $0xa0] sm:$0xff]
    %v4640 = vld [vmem:[%s3 + $0xa8] sm:$0xff]
    %v4641 = vld [vmem:[%s3 + $0xb0] sm:$0xff]
    %v4642 = vld [vmem:[%s3 + $0xb8] sm:$0xff]
    %v4643 = vld [vmem:[%s3 + $0xc0] sm:$0xff]
    %v4644 = vld [vmem:[%s3 + $0xc8] sm:$0xff]
    %v4645 = vld [vmem:[%s3 + $0xd0] sm:$0xff]
    %v4646 = vld [vmem:[%s3 + $0xd8] sm:$0xff]
    %v4647 = vld [vmem:[%s3 + $0xe0] sm:$0xff]
    %v4648 = vld [vmem:[%s3 + $0xe8] sm:$0xff]
    %v4649 = vld [vmem:[%s3 + $0xf0] sm:$0xff]
    %v4650 = vld [vmem:[%s3 + $0xf8] sm:$0xff]
    %v4651 = vld [vmem:[%s3 + $0x100] sm:$0xff]
    %v4652 = vld [vmem:[%s3 + $0x108] sm:$0xff]
    %v4653 = vld [vmem:[%s3 + $0x110] sm:$0xff]
    %v4654 = vld [vmem:[%s3 + $0x118] sm:$0xff]
    %v4655 = vpack.c.bf16 %v4620, %v4619
    %v4656 = vpack.c.bf16 %v4622, %v4621
    %v4657 = vpack.c.bf16 %v4624, %v4623
    %v4658 = vpack.c.bf16 %v4626, %v4625
    %v4659 = vpack.c.bf16 %v4628, %v4627
    %v4660 = vpack.c.bf16 %v4630, %v4629
    %v4661 = vpack.c.bf16 %v4632, %v4631
    %v4662 = vpack.c.bf16 %v4634, %v4633
    %v4663 = vpack.c.bf16 %v4636, %v4635
    %v4664 = vpack.c.bf16 %v4638, %v4637
    %v4665 = vpack.c.bf16 %v4640, %v4639
    %v4666 = vpack.c.bf16 %v4642, %v4641
    %v4667 = vpack.c.bf16 %v4644, %v4643
    %v4668 = vpack.c.bf16 %v4646, %v4645
    %v4669 = vpack.c.bf16 %v4648, %v4647
    %v4670 = vpack.c.bf16 %v4650, %v4649
    %v4671 = vpack.c.bf16 %v4652, %v4651
    %v4672 = vpack.c.bf16 %v4654, %v4653
    %v4673 = vld [vmem:[#allocation5] sm:$0xff]
    %v4674 = vld [vmem:[#allocation5 + $0x8] sm:$0xf]
    %v4675 = vld [vmem:[#allocation5 + $0xc] sm:$0xff]
    %v4676 = vld [vmem:[#allocation5 + $0x14] sm:$0xf]
    %v4677 = vld [vmem:[#allocation5 + $0x18] sm:$0xff]
    %v4678 = vld [vmem:[#allocation5 + $0x20] sm:$0xf]
    %v4679 = vld [vmem:[#allocation5 + $0x24] sm:$0xff]
    %v4680 = vld [vmem:[#allocation5 + $0x2c] sm:$0xf]
    %v4681 = vld [vmem:[#allocation5 + $0x30] sm:$0xff]
    %v4682 = vld [vmem:[#allocation5 + $0x38] sm:$0xf]
    %v4683 = vld [vmem:[#allocation5 + $0x3c] sm:$0xff]
    %v4684 = vld [vmem:[#allocation5 + $0x44] sm:$0xf]
    %v4685 = vld [vmem:[#allocation5 + $0x48] sm:$0xff]
    %v4686 = vld [vmem:[#allocation5 + $0x50] sm:$0xf]
    %v4687 = vld [vmem:[#allocation5 + $0x54] sm:$0xff]
    %v4688 = vld [vmem:[#allocation5 + $0x5c] sm:$0xf]
    %v4689 = vld [vmem:[#allocation5 + $0x60] sm:$0xff]
    %v4690 = vld [vmem:[#allocation5 + $0x68] sm:$0xf]
    %v4691 = vld [vmem:[#allocation5 + $0x6c] sm:$0xff]
    %v4692 = vld [vmem:[#allocation5 + $0x74] sm:$0xf]
    %v4693 = vld [vmem:[#allocation5 + $0x78] sm:$0xff]
    %v4694 = vld [vmem:[#allocation5 + $0x80] sm:$0xf]
    %v4695 = vld [vmem:[#allocation5 + $0x84] sm:$0xff]
    %v4696 = vld [vmem:[#allocation5 + $0x8c] sm:$0xf]
    %v4697 = vld [vmem:[#allocation5 + $0x90] sm:$0xff]
    %v4698 = vld [vmem:[#allocation5 + $0x98] sm:$0xf]
    %v4699 = vld [vmem:[#allocation5 + $0x9c] sm:$0xff]
    %v4700 = vld [vmem:[#allocation5 + $0xa4] sm:$0xf]
    %v4701 = vld [vmem:[#allocation5 + $0xa8] sm:$0xff]
    %v4702 = vld [vmem:[#allocation5 + $0xb0] sm:$0xf]
    %v4703 = vld [vmem:[#allocation5 + $0xb4] sm:$0xff]
    %v4704 = vld [vmem:[#allocation5 + $0xbc] sm:$0xf]
    %v4705 = vld [vmem:[%s4] sm:$0x1]
    %v4707 = vlaneseq
    %v4708 = vshrl.u32 %v4707, 7
    %v4709 = vsub.s32 0, %v4708
    %v4710 = vrot.slane %v4705, %v4709
    %v4744 = vunpack.c.l.b16 %v4673
    %v4745 = vunpack.c.h.b16 %v4673
    %v4746 = vunpack.c.l.b16 %v4674
    %v4747 = vunpack.c.l.b16 %v4675
    %v4748 = vunpack.c.h.b16 %v4675
    %v4749 = vunpack.c.l.b16 %v4676
    %v4750 = vunpack.c.l.b16 %v4677
    %v4751 = vunpack.c.h.b16 %v4677
    %v4752 = vunpack.c.l.b16 %v4678
    %v4753 = vunpack.c.l.b16 %v4679
    %v4754 = vunpack.c.h.b16 %v4679
    %v4755 = vunpack.c.l.b16 %v4680
    %v4756 = vunpack.c.l.b16 %v4681
    %v4757 = vunpack.c.h.b16 %v4681
    %v4758 = vunpack.c.l.b16 %v4682
    %v4759 = vunpack.c.l.b16 %v4683
    %v4760 = vunpack.c.h.b16 %v4683
    %v4761 = vunpack.c.l.b16 %v4684
    %v4762 = vunpack.c.l.b16 %v4685
    %v4763 = vunpack.c.h.b16 %v4685
    %v4764 = vunpack.c.l.b16 %v4686
    %v4765 = vunpack.c.l.b16 %v4687
    %v4766 = vunpack.c.h.b16 %v4687
    %v4767 = vunpack.c.l.b16 %v4688
    %v4768 = vunpack.c.l.b16 %v4689
    %v4769 = vunpack.c.h.b16 %v4689
    %v4770 = vunpack.c.l.b16 %v4690
    %v4771 = vunpack.c.l.b16 %v4691
    %v4772 = vunpack.c.h.b16 %v4691
    %v4773 = vunpack.c.l.b16 %v4692
    %v4774 = vunpack.c.l.b16 %v4693
    %v4775 = vunpack.c.h.b16 %v4693
    %v4776 = vunpack.c.l.b16 %v4694
    %v4777 = vunpack.c.l.b16 %v4695
    %v4778 = vunpack.c.h.b16 %v4695
    %v4779 = vunpack.c.l.b16 %v4696
    %v4780 = vunpack.c.l.b16 %v4697
    %v4781 = vunpack.c.h.b16 %v4697
    %v4782 = vunpack.c.l.b16 %v4698
    %v4783 = vunpack.c.l.b16 %v4699
    %v4784 = vunpack.c.h.b16 %v4699
    %v4785 = vunpack.c.l.b16 %v4700
    %v4786 = vunpack.c.l.b16 %v4701
    %v4787 = vunpack.c.h.b16 %v4701
    %v4788 = vunpack.c.l.b16 %v4702
    %v4789 = vunpack.c.l.b16 %v4703
    %v4790 = vunpack.c.h.b16 %v4703
    %v4791 = vunpack.c.l.b16 %v4704
    %v4792 = vpack.c.b16 %v4747, %v4744
    %v4793 = vpack.c.b16 %v4748, %v4745
    %v4794 = vpack.c.b16 %v4749, %v4746
    %v4795 = vpack.c.b16 %v4753, %v4750
    %v4796 = vpack.c.b16 %v4754, %v4751
    %v4797 = vpack.c.b16 %v4755, %v4752
    %v4798 = vpack.c.b16 %v4759, %v4756
    %v4799 = vpack.c.b16 %v4760, %v4757
    %v4800 = vpack.c.b16 %v4761, %v4758
    %v4801 = vpack.c.b16 %v4765, %v4762
    %v4802 = vpack.c.b16 %v4766, %v4763
    %v4803 = vpack.c.b16 %v4767, %v4764
    %v4804 = vpack.c.b16 %v4771, %v4768
    %v4805 = vpack.c.b16 %v4772, %v4769
    %v4806 = vpack.c.b16 %v4773, %v4770
    %v4807 = vpack.c.b16 %v4777, %v4774
    %v4808 = vpack.c.b16 %v4778, %v4775
    %v4809 = vpack.c.b16 %v4779, %v4776
    %v4810 = vpack.c.b16 %v4783, %v4780
    %v4811 = vpack.c.b16 %v4784, %v4781
    %v4812 = vpack.c.b16 %v4785, %v4782
    %v4813 = vpack.c.b16 %v4789, %v4786
    %v4814 = vpack.c.b16 %v4790, %v4787
    %v4815 = vpack.c.b16 %v4791, %v4788
    %v4833 = vsel %vm2366, %v4794, 0
    %v4836 = vsel %vm2366, %v4797, 0
    %v4839 = vsel %vm2366, %v4800, 0
    %v4842 = vsel %vm2366, %v4803, 0
    %v4845 = vsel %vm2366, %v4806, 0
    %v4848 = vsel %vm2366, %v4809, 0
    %v4851 = vsel %vm2366, %v4812, 0
    %v4854 = vsel %vm2366, %v4815, 0
    %4856 = vmatprep.subr.bf16.mxu0 0
    %4857 = vmatpush1.bf16.msra.mxu0 %v4655
    %4858 = vmatprep.subr.bf16.mxu0 0
    %4859 = vmatpush1.bf16.msra.mxu0 %v4656
    %4860 = vmatprep.subr.bf16.mxu0 0
    %4861 = vmatpush1.bf16.msra.mxu0 %v4657
    %4862 = vmatprep.subr.bf16.mxu0 0
    %4863 = vmatpush1.bf16.msra.mxu0 %v4658
    %4864 = vmatprep.subr.bf16.mxu0 0
    %4865 = vmatpush1.bf16.msra.mxu0 %v4659
    %4866 = vmatprep.subr.bf16.mxu0 0
    %4867 = vmatpush1.bf16.msra.mxu0 %v4660
    %4868 = vmatprep.subr.bf16.mxu0 0
    %4869 = vmatpush1.bf16.msra.mxu0 %v4661
    %4870 = vmatprep.subr.bf16.mxu0 0
    %4871 = vmatpush1.bf16.msra.mxu0 %v4662
    %4872 = vmatprep.subr.bf16.mxu0 0
    %4873 = vmatpush1.bf16.msra.mxu0 %v4663
    %4874 = vmatprep.subr.bf16.mxu0 0
    %4875 = vmatpush1.bf16.msra.mxu0 %v4664
    %4876 = vmatprep.subr.bf16.mxu0 0
    %4877 = vmatpush1.bf16.msra.mxu0 %v4665
    %4878 = vmatprep.subr.bf16.mxu0 0
    %4879 = vmatpush1.bf16.msra.mxu0 %v4666
    %4880 = vmatprep.subr.bf16.mxu0 0
    %4881 = vmatpush1.bf16.msra.mxu0 %v4667
    %4882 = vmatprep.subr.bf16.mxu0 0
    %4883 = vmatpush1.bf16.msra.mxu0 %v4668
    %4884 = vmatprep.subr.bf16.mxu0 0
    %4885 = vmatpush1.bf16.msra.mxu0 %v4669
    %4886 = vmatprep.subr.bf16.mxu0 0
    %4887 = vmatpush1.bf16.msra.mxu0 %v4670
    %4888 = vmatprep.mubr.bf16.mxu0 %v4793
    %4889 = vmatmul.mubr.bf16.gmra.mrb[0].mxu0 %v4792
    %v4890 = vpop.f32.mrb[0].mxu0
    %v4891 = vadd.f32 %v4710, %v4890
    %v4892 = vpop.f32.mrb[0].mxu0
    %v4893 = vpop.f32.mrb[0].mxu0
    %v4894 = vadd.f32 %v4710, %v4893
    %v4895 = vpop.f32.mrb[0].mxu0
    %4896 = vmatprep.mubr.bf16.mxu0 %v4796
    %4897 = vmatmul.mubr.bf16.gmra.mrb[0].mxu0 %v4795
    %v4898 = vpop.f32.mrb[0].mxu0
    %v4899 = vadd.f32 %v4710, %v4898
    %v4900 = vpop.f32.mrb[0].mxu0
    %v4901 = vpop.f32.mrb[0].mxu0
    %v4902 = vadd.f32 %v4710, %v4901
    %v4903 = vpop.f32.mrb[0].mxu0
    %4904 = vmatprep.mubr.bf16.mxu0 %v4799
    %4905 = vmatmul.mubr.bf16.gmra.mrb[0].mxu0 %v4798
    %v4906 = vpop.f32.mrb[0].mxu0
    %v4907 = vadd.f32 %v4710, %v4906
    %v4908 = vpop.f32.mrb[0].mxu0
    %v4909 = vpop.f32.mrb[0].mxu0
    %v4910 = vadd.f32 %v4710, %v4909
    %v4911 = vpop.f32.mrb[0].mxu0
    %4912 = vmatprep.mubr.bf16.mxu0 %v4802
    %4913 = vmatmul.mubr.bf16.gmra.mrb[0].mxu0 %v4801
    %v4914 = vpop.f32.mrb[0].mxu0
    %v4915 = vadd.f32 %v4710, %v4914
    %v4916 = vpop.f32.mrb[0].mxu0
    %v4917 = vpop.f32.mrb[0].mxu0
    %v4918 = vadd.f32 %v4710, %v4917
    %v4919 = vpop.f32.mrb[0].mxu0
    %4920 = vmatprep.mubr.bf16.mxu0 %v4805
    %4921 = vmatmul.mubr.bf16.gmra.mrb[0].mxu0 %v4804
    %v4922 = vpop.f32.mrb[0].mxu0
    %v4923 = vadd.f32 %v4710, %v4922
    %v4924 = vpop.f32.mrb[0].mxu0
    %v4925 = vpop.f32.mrb[0].mxu0
    %v4926 = vadd.f32 %v4710, %v4925
    %v4927 = vpop.f32.mrb[0].mxu0
    %4928 = vmatprep.mubr.bf16.mxu0 %v4808
    %4929 = vmatmul.mubr.bf16.gmra.mrb[0].mxu0 %v4807
    %v4930 = vpop.f32.mrb[0].mxu0
    %v4931 = vadd.f32 %v4710, %v4930
    %v4932 = vpop.f32.mrb[0].mxu0
    %v4933 = vpop.f32.mrb[0].mxu0
    %v4934 = vadd.f32 %v4710, %v4933
    %v4935 = vpop.f32.mrb[0].mxu0
    %4936 = vmatprep.mubr.bf16.mxu0 %v4811
    %4937 = vmatmul.mubr.bf16.gmra.mrb[0].mxu0 %v4810
    %v4938 = vpop.f32.mrb[0].mxu0
    %v4939 = vadd.f32 %v4710, %v4938
    %v4940 = vpop.f32.mrb[0].mxu0
    %v4941 = vpop.f32.mrb[0].mxu0
    %v4942 = vadd.f32 %v4710, %v4941
    %v4943 = vpop.f32.mrb[0].mxu0
    %4944 = vmatprep.mubr.bf16.mxu0 %v4814
    %4945 = vmatmul.mubr.bf16.gmra.mrb[0].mxu0 %v4813
    %v4946 = vpop.f32.mrb[0].mxu0
    %v4947 = vadd.f32 %v4710, %v4946
    %v4948 = vpop.f32.mrb[0].mxu0
    %v4949 = vpop.f32.mrb[0].mxu0
    %v4950 = vadd.f32 %v4710, %v4949
    %v4951 = vpop.f32.mrb[0].mxu0
    %4952 = vdwg.mxu0
    %4953 = vmatprep.subr.bf16.mxu0 0
    %4954 = vmatpush1.bf16.msra.mxu0 %v4671
    %4955 = vmatprep.subr.bf16.mxu0 0
    %4956 = vmatpush1.bf16.msra.mxu0 %v4672
    %4957 = vmatprep.subr.bf16.mxu0 0
    %4958 = vmatpush1.bf16.msra.mxu0 0
    %4959 = vmatprep.subr.bf16.mxu0 0
    %4960 = vmatpush1.bf16.msra.mxu0 0
    %4961 = vmatprep.subr.bf16.mxu0 0
    %4962 = vmatpush1.bf16.msra.mxu0 0
    %4963 = vmatprep.subr.bf16.mxu0 0
    %4964 = vmatpush1.bf16.msra.mxu0 0
    %4965 = vmatprep.subr.bf16.mxu0 0
    %4966 = vmatpush1.bf16.msra.mxu0 0
    %4967 = vmatprep.subr.bf16.mxu0 0
    %4968 = vmatpush1.bf16.msra.mxu0 0
    %4969 = vmatprep.subr.bf16.mxu0 0
    %4970 = vmatpush1.bf16.msra.mxu0 0
    %4971 = vmatprep.subr.bf16.mxu0 0
    %4972 = vmatpush1.bf16.msra.mxu0 0
    %4973 = vmatprep.subr.bf16.mxu0 0
    %4974 = vmatpush1.bf16.msra.mxu0 0
    %4975 = vmatprep.subr.bf16.mxu0 0
    %4976 = vmatpush1.bf16.msra.mxu0 0
    %4977 = vmatprep.subr.bf16.mxu0 0
    %4978 = vmatpush1.bf16.msra.mxu0 0
    %4979 = vmatprep.subr.bf16.mxu0 0
    %4980 = vmatpush1.bf16.msra.mxu0 0
    %4981 = vmatprep.subr.bf16.mxu0 0
    %4982 = vmatpush1.bf16.msra.mxu0 0
    %4983 = vmatprep.subr.bf16.mxu0 0
    %4984 = vmatpush1.bf16.msra.mxu0 0
    %4985 = vmatprep.mubr.bf16.mxu0 0
    %4986 = vmatmul.mubr.bf16.gmra.mrb[0].mxu0 %v4833
    %v4987 = vpop.f32.mrb[0].mxu0
    %v4988 = vadd.f32 %v4891, %v4987
    %v4989 = vpop.f32.mrb[0].mxu0
    %v4990 = vpop.f32.mrb[0].mxu0
    %v4991 = vadd.f32 %v4894, %v4990
    %v4992 = vpop.f32.mrb[0].mxu0
    %4993 = vmatprep.mubr.bf16.mxu0 0
    %4994 = vmatmul.mubr.bf16.gmra.mrb[0].mxu0 %v4836
    %v4995 = vpop.f32.mrb[0].mxu0
    %v4996 = vadd.f32 %v4899, %v4995
    %v4997 = vpop.f32.mrb[0].mxu0
    %v4998 = vpop.f32.mrb[0].mxu0
    %v4999 = vadd.f32 %v4902, %v4998
    %v5000 = vpop.f32.mrb[0].mxu0
    %5001 = vmatprep.mubr.bf16.mxu0 0
    %5002 = vmatmul.mubr.bf16.gmra.mrb[0].mxu0 %v4839
    %v5003 = vpop.f32.mrb[0].mxu0
    %v5004 = vadd.f32 %v4907, %v5003
    %v5005 = vpop.f32.mrb[0].mxu0
    %v5006 = vpop.f32.mrb[0].mxu0
    %v5007 = vadd.f32 %v4910, %v5006
    %v5008 = vpop.f32.mrb[0].mxu0
    %5009 = vmatprep.mubr.bf16.mxu0 0
    %5010 = vmatmul.mubr.bf16.gmra.mrb[0].mxu0 %v4842
    %v5011 = vpop.f32.mrb[0].mxu0
    %v5012 = vadd.f32 %v4915, %v5011
    %v5013 = vpop.f32.mrb[0].mxu0
    %v5014 = vpop.f32.mrb[0].mxu0
    %v5015 = vadd.f32 %v4918, %v5014
    %v5016 = vpop.f32.mrb[0].mxu0
    %5017 = vmatprep.mubr.bf16.mxu0 0
    %5018 = vmatmul.mubr.bf16.gmra.mrb[0].mxu0 %v4845
    %v5019 = vpop.f32.mrb[0].mxu0
    %v5020 = vadd.f32 %v4923, %v5019
    %v5021 = vpop.f32.mrb[0].mxu0
    %v5022 = vpop.f32.mrb[0].mxu0
    %v5023 = vadd.f32 %v4926, %v5022
    %v5024 = vpop.f32.mrb[0].mxu0
    %5025 = vmatprep.mubr.bf16.mxu0 0
    %5026 = vmatmul.mubr.bf16.gmra.mrb[0].mxu0 %v4848
    %v5027 = vpop.f32.mrb[0].mxu0
    %v5028 = vadd.f32 %v4931, %v5027
    %v5029 = vpop.f32.mrb[0].mxu0
    %v5030 = vpop.f32.mrb[0].mxu0
    %v5031 = vadd.f32 %v4934, %v5030
    %v5032 = vpop.f32.mrb[0].mxu0
    %5033 = vmatprep.mubr.bf16.mxu0 0
    %5034 = vmatmul.mubr.bf16.gmra.mrb[0].mxu0 %v4851
    %v5035 = vpop.f32.mrb[0].mxu0
    %v5036 = vadd.f32 %v4939, %v5035
    %v5037 = vpop.f32.mrb[0].mxu0
    %v5038 = vpop.f32.mrb[0].mxu0
    %v5039 = vadd.f32 %v4942, %v5038
    %v5040 = vpop.f32.mrb[0].mxu0
    %5041 = vmatprep.mubr.bf16.mxu0 0
    %5042 = vmatmul.mubr.bf16.gmra.mrb[0].mxu0 %v4854
    %v5043 = vpop.f32.mrb[0].mxu0
    %v5044 = vadd.f32 %v4947, %v5043
    %v5045 = vpop.f32.mrb[0].mxu0
    %v5046 = vpop.f32.mrb[0].mxu0
    %v5047 = vadd.f32 %v4950, %v5046
    %v5048 = vpop.f32.mrb[0].mxu0
    %5049 = vdwg.mxu0
    %vm5050 = vcmask 130048
    %5051 = vst.msk [vmem:[#allocation6] sm:$0xff] %vm5050, %v4988
    %5052 = vst.msk [vmem:[#allocation6 + $0x8] sm:$0xff] %vm5050, %v4991
    %5053 = vst.msk [vmem:[#allocation6 + $0x10] sm:$0xff] %vm5050, %v4996
    %5054 = vst.msk [vmem:[#allocation6 + $0x18] sm:$0xff] %vm5050, %v4999
    %5055 = vst.msk [vmem:[#allocation6 + $0x20] sm:$0xff] %vm5050, %v5004
    %5056 = vst.msk [vmem:[#allocation6 + $0x28] sm:$0xff] %vm5050, %v5007
    %5057 = vst.msk [vmem:[#allocation6 + $0x30] sm:$0xff] %vm5050, %v5012
    %5058 = vst.msk [vmem:[#allocation6 + $0x38] sm:$0xff] %vm5050, %v5015
    %5059 = vst.msk [vmem:[#allocation6 + $0x40] sm:$0xff] %vm5050, %v5020
    %5060 = vst.msk [vmem:[#allocation6 + $0x48] sm:$0xff] %vm5050, %v5023
    %5061 = vst.msk [vmem:[#allocation6 + $0x50] sm:$0xff] %vm5050, %v5028
    %5062 = vst.msk [vmem:[#allocation6 + $0x58] sm:$0xff] %vm5050, %v5031
    %5063 = vst.msk [vmem:[#allocation6 + $0x60] sm:$0xff] %vm5050, %v5036
    %5064 = vst.msk [vmem:[#allocation6 + $0x68] sm:$0xff] %vm5050, %v5039
    %5065 = vst.msk [vmem:[#allocation6 + $0x70] sm:$0xff] %vm5050, %v5044
    %5066 = vst.msk [vmem:[#allocation6 + $0x78] sm:$0xff] %vm5050, %v5047
    // Predicated region
    $region22: #{position_aware_forward.3} parent=1 // pred_check
      _
    $region23: #{position_aware_forward.3} parent=1 // pred_check_branch
      %5068 = sbr.rel (0) target = $region25
    $region24: #{position_aware_forward.3} parent=1 // pred_region
      %s5070 = ssub.s32 2048, 2048
      %5071 = vsyncadd [#allocation7], %s5070
      %s5072 = sshll.u32 [#allocation6], 4
      %s5073 = int_to_ptr.vmem [resolvable:$true] %s5072
      %5078 = dma.vmem_to_hbm [thread:$0]  %s5073, 2048, %s5, [#allocation7], 128, 128, 8
    $region25: #{position_aware_forward.3} parent=1 // pred_fallthru
      _
    // Predicated region
    $region26: #{position_aware_forward.3} parent=1 // pred_check
      _
    $region27: #{position_aware_forward.3} parent=1 // pred_check_branch
      %5080 = sbr.rel (0) target = $region29
    $region28: #{position_aware_forward.3} parent=1 // pred_region
      %5081 = dma.done [#allocation7], 2048
    $region29: #{position_aware_forward.3} parent=1 // pred_fallthru
      _
    %5082 = vsyncpa [#allocation7], 1

</llo_original>
